<compile_context>
chip_gen: v7x
topology: tpu7x:2x2x1
jax: 0.10.0
libtpu: 0.0.40
codegen_flags: <defaults>
</compile_context>

<pallas_src>
import jax
import jax.numpy as jnp
from jax import lax
from jax.experimental import pallas as pl
from jax.experimental.pallas import tpu as pltpu

# Original model: num_classes = len(train_dataset.classes); dataset unavailable,
# so fix a deterministic small value.
NUM_CLASSES = 4

# Explicit scoped-VMEM budget: fits under physical VMEM on v5e/v6e (128 MiB)
# and v7x (64 MiB) while giving the double-buffered pipeline headroom.
VMEM_LIMIT = 48 * 1024 * 1024


def _round_up(a, b):
    return (a + b - 1) // b * b


# ----------------------------------------------------------------------------
# Tiled linear kernel:  y = relu?(x @ w + b)
# ----------------------------------------------------------------------------
def _make_linear_kernel(apply_relu: bool):
    def kernel(x_ref, w_ref, b_ref, o_ref, acc_ref):
        k = pl.program_id(2)

        @pl.when(k == 0)
        def _():
            acc_ref[...] = jnp.zeros_like(acc_ref)

        acc_ref[...] += jnp.dot(x_ref[...], w_ref[...],
                                preferred_element_type=jnp.float32)

        @pl.when(k == pl.num_programs(2) - 1)
        def _():
            y = acc_ref[...] + b_ref[...]          # bias only in the finalize step
            if apply_relu:
                y = jnp.maximum(y, 0.0)
            o_ref[...] = y.astype(o_ref.dtype)

    return kernel


def linear(x, w, b, *, relu=False):
    """y = relu?(x @ w + b); x:(M,K) w:(K,Nout) b:(Nout,) -> (M,Nout) f32."""
    M, K = x.shape
    K2, Nout = w.shape
    assert K == K2

    # Tile sizes (pad dims up so tiles divide evenly and stores are lane-dense).
    tm = min(_round_up(M, 8), 256)
    tn = min(_round_up(Nout, 128), 256)
    tk_cap = 2048 if K > 4096 else 512          # big K-tile for the real fc1 stream
    tk = min(_round_up(K, 128), tk_cap)
    Mp, Np, Kp = _round_up(M, tm), _round_up(Nout, tn), _round_up(K, tk)

    xb = x.astype(jnp.bfloat16)
    wb = w.astype(jnp.bfloat16)
    bb = b.astype(jnp.float32).reshape(1, Nout)
    if (Mp, Kp) != (M, K):
        xb = jnp.pad(xb, ((0, Mp - M), (0, Kp - K)))
    if (Kp, Np) != (K, Nout):
        wb = jnp.pad(wb, ((0, Kp - K), (0, Np - Nout)))
    if Np != Nout:
        bb = jnp.pad(bb, ((0, 0), (0, Np - Nout)))

    grid = (Mp // tm, Np // tn, Kp // tk)
    flops = 2 * Mp * Kp * Np
    bytes_accessed = Mp * Kp * 2 + Kp * Np * 2 + Mp * Np * 4 + Np * 4

    out = pl.pallas_call(
        _make_linear_kernel(relu),
        out_shape=jax.ShapeDtypeStruct((Mp, Np), jnp.float32),
        grid=grid,
        in_specs=[
            pl.BlockSpec((tm, tk), lambda i, j, k: (i, k)),
            pl.BlockSpec((tk, tn), lambda i, j, k: (k, j)),
            pl.BlockSpec((1, tn), lambda i, j, k: (0, j)),
        ],
        out_specs=pl.BlockSpec((tm, tn), lambda i, j, k: (i, j)),
        scratch_shapes=[pltpu.VMEM((tm, tn), jnp.float32)],
        compiler_params=pltpu.CompilerParams(
            dimension_semantics=("parallel", "parallel", "arbitrary"),
            vmem_limit_bytes=VMEM_LIMIT),
        cost_estimate=pl.CostEstimate(flops=flops, transcendentals=0,
                                      bytes_accessed=bytes_accessed),
    )(xb, wb, bb)
    return out[:M, :Nout]


# ----------------------------------------------------------------------------
# Fused conv3x3 (pad=1, stride=1) + bias + ReLU kernel: 9 shifted matmuls
# accumulated in an f32 VMEM scratch -- no im2col tensor in HBM.
# ----------------------------------------------------------------------------
def _conv3x3_kernel(x_ref, w_ref, b_ref, o_ref, acc_ref):
    # x_ref : (1, H+2, W+2, Cin)  bf16, full padded image (resident across row-tiles)
    # w_ref : (9, Cin, Cout)      bf16
    # b_ref : (1, Cout)           f32
    # o_ref : (1, TH, W, Cout)    bf16 output row-tile
    # acc_ref: (TH*W, Cout)       f32 VMEM accumulator
    h = pl.program_id(1)
    TH, W, Cout = o_ref.shape[1], o_ref.shape[2], o_ref.shape[3]
    Cin = x_ref.shape[3]

    acc_ref[...] = jnp.zeros_like(acc_ref)
    row0 = h * TH
    for dy in range(3):                                   # static, unrolled
        rows = x_ref[0, pl.ds(row0 + dy, TH), :, :]       # (TH, W+2, Cin)
        for dx in range(3):                               # static, unrolled
            patch = rows[:, dx:dx + W, :].reshape(TH * W, Cin)
            acc_ref[...] += jnp.dot(patch, w_ref[dy * 3 + dx],
                                    preferred_element_type=jnp.float32)

    y = jnp.maximum(acc_ref[...] + b_ref[...], 0.0)       # bias + ReLU in f32
    o_ref[...] = y.reshape(1, TH, W, Cout).astype(o_ref.dtype)


def conv3x3_relu(x, w_torch, b):
    """x: (N,H,W,Cin) NHWC; w_torch: (Cout,Cin,3,3) PyTorch layout; pad=1, stride=1."""
    N, H, W, Cin = x.shape
    Cout = w_torch.shape[0]
    Cin_p = _round_up(Cin, 8)                 # pad contraction dim for clean MXU tiles

    xp = jnp.pad(x.astype(jnp.bfloat16),
                 ((0, 0), (1, 1), (1, 1), (0, Cin_p - Cin)))
    # (Cout,Cin,3,3) -> (ky,kx,cin,cout) -> (9,Cin,Cout), matching (dy,dx) in-kernel order
    w9 = jnp.transpose(w_torch, (2, 3, 1, 0)).reshape(9, Cin, Cout)
    w9 = jnp.pad(w9, ((0, 0), (0, Cin_p - Cin), (0, 0))).astype(jnp.bfloat16)
    b2 = b.reshape(1, Cout).astype(jnp.float32)

    TH = 8 if H % 8 == 0 else H               # output rows per grid step
    grid = (N, H // TH)

    flops = 2 * N * H * W * 9 * Cin_p * Cout
    bytes_accessed = xp.size * 2 + w9.size * 2 + N * H * W * Cout * 2 + Cout * 4

    return pl.pallas_call(
        _conv3x3_kernel,
        out_shape=jax.ShapeDtypeStruct((N, H, W, Cout), jnp.bfloat16),
        grid=grid,
        in_specs=[
            # full padded image; index ignores h -> DMA'd once per n, revisited
            pl.BlockSpec((1, H + 2, W + 2, Cin_p), lambda n, h: (n, 0, 0, 0)),
            pl.BlockSpec((9, Cin_p, Cout), lambda n, h: (0, 0, 0)),
            pl.BlockSpec((1, Cout), lambda n, h: (0, 0)),
        ],
        out_specs=pl.BlockSpec((1, TH, W, Cout), lambda n, h: (n, h, 0, 0)),
        scratch_shapes=[pltpu.VMEM((TH * W, Cout), jnp.float32)],
        compiler_params=pltpu.CompilerParams(
            dimension_semantics=("parallel", "arbitrary"),
            vmem_limit_bytes=VMEM_LIMIT),
        cost_estimate=pl.CostEstimate(flops=flops, transcendentals=0,
                                      bytes_accessed=bytes_accessed),
    )(xp, w9, b2)


# ----------------------------------------------------------------------------
# 2x2 / stride-2 max pool (NHWC), R row-pairs per grid step
# ----------------------------------------------------------------------------
def _maxpool_kernel(x_ref, o_ref):
    # x_ref: (1, 2R, W2, 2C)  -- adjacent columns pre-packed onto the lane dim
    # o_ref: (1, R,  W2, C)
    R, C = o_ref.shape[1], o_ref.shape[3]
    for r in range(R):                                    # static, unrolled (R <= 8)
        m = jnp.maximum(x_ref[0, 2 * r], x_ref[0, 2 * r + 1])   # row pair
        o_ref[0, r] = jnp.maximum(m[:, :C], m[:, C:])           # column pair


def maxpool2x2(x):
    N, H, W, C = x.shape
    H2, W2 = H // 2, W // 2
    # (n,h,w,c) -> (n,h,w//2,(w%2)*C + c): pure reshape, free in XLA glue
    xr = x.reshape(N, H, W2, 2 * C)
    R = min(H2, 8)
    while H2 % R:
        R -= 1
    return pl.pallas_call(
        _maxpool_kernel,
        out_shape=jax.ShapeDtypeStruct((N, H2, W2, C), x.dtype),
        grid=(N, H2 // R),
        in_specs=[pl.BlockSpec((1, 2 * R, W2, 2 * C), lambda n, h: (n, h, 0, 0))],
        out_specs=pl.BlockSpec((1, R, W2, C), lambda n, h: (n, h, 0, 0)),
        compiler_params=pltpu.CompilerParams(
            dimension_semantics=("parallel", "arbitrary"),
            vmem_limit_bytes=VMEM_LIMIT),
    )(xr)


# ----------------------------------------------------------------------------
# Full forward pass (matches CNNModel.forward)
# ----------------------------------------------------------------------------
def cnn_forward(x_nchw, params):
    x = jnp.transpose(x_nchw, (0, 2, 3, 1))                      # NCHW -> NHWC
    N = x.shape[0]
    y = conv3x3_relu(x, params["conv1_w"], params["conv1_b"])    # relu(conv1)
    y = maxpool2x2(y)                                            # pool 2x2
    y = conv3x3_relu(y, params["conv2_w"], params["conv2_b"])    # relu(conv2)
    y = maxpool2x2(y)                                            # pool 2x2
    # flatten in PyTorch NCHW order: x.view(N, -1) on an NCHW tensor
    flat = jnp.transpose(y, (0, 3, 1, 2)).reshape(N, -1)
    h = linear(flat, params["fc1_w"].T, params["fc1_b"], relu=True)   # relu(fc1)
    out = linear(h, params["fc2_w"].T, params["fc2_b"], relu=False)   # fc2
    return out


# ----------------------------------------------------------------------------
# Pure-JAX reference (sanity check)
# ----------------------------------------------------------------------------
def cnn_forward_ref(x_nchw, params):
    x = jnp.transpose(x_nchw, (0, 2, 3, 1))
    N = x.shape[0]

    def conv(x, w_torch, b):
        w = jnp.transpose(w_torch, (2, 3, 1, 0))  # HWIO
        y = lax.conv_general_dilated(x, w, (1, 1), "SAME",
                                     dimension_numbers=("NHWC", "HWIO", "NHWC"))
        return jnp.maximum(y + b[None, None, None, :], 0.0)

    def pool(x):
        return lax.reduce_window(x, -jnp.inf, lax.max,
                                 (1, 2, 2, 1), (1, 2, 2, 1), "VALID")

    y = pool(conv(x, params["conv1_w"], params["conv1_b"]))
    y = pool(conv(y, params["conv2_w"], params["conv2_b"]))
    flat = jnp.transpose(y, (0, 3, 1, 2)).reshape(N, -1)
    h = jnp.maximum(flat @ params["fc1_w"].T + params["fc1_b"], 0.0)
    return h @ params["fc2_w"].T + params["fc2_b"]


# ----------------------------------------------------------------------------
def init_params(key, h, w):
    # Original model: fc1 in-features = 64*56*56 for 224x224 input.
    # Here it is 64 * (h//4) * (w//4) for the small test spatial size.
    d_flat = 64 * (h // 4) * (w // 4)
    ks = jax.random.split(key, 8)
    return {
        "conv1_w": jax.random.normal(ks[0], (32, 3, 3, 3), jnp.float32) * 0.1,
        "conv1_b": jax.random.normal(ks[1], (32,), jnp.float32) * 0.1,
        "conv2_w": jax.random.normal(ks[2], (64, 32, 3, 3), jnp.float32) * 0.05,
        "conv2_b": jax.random.normal(ks[3], (64,), jnp.float32) * 0.05,
        "fc1_w": jax.random.normal(ks[4], (128, d_flat), jnp.float32) * 0.02,
        "fc1_b": jax.random.normal(ks[5], (128,), jnp.float32) * 0.02,
        "fc2_w": jax.random.normal(ks[6], (NUM_CLASSES, 128), jnp.float32) * 0.05,
        "fc2_b": jax.random.normal(ks[7], (NUM_CLASSES,), jnp.float32) * 0.05,
    }


if __name__ == "__main__":
    key = jax.random.PRNGKey(0)
    N, C, H, W = 2, 3, 16, 16                      # small shapes (original: 3x224x224)
    xkey, pkey = jax.random.split(key)
    x = jax.random.normal(xkey, (N, C, H, W), jnp.float32)
    params = init_params(pkey, H, W)

    fwd = jax.jit(cnn_forward)
    out = jax.block_until_ready(fwd(x, params))
    ref = jax.block_until_ready(cnn_forward_ref(x, params))

    assert out.shape == (N, NUM_CLASSES), out.shape
    assert bool(jnp.all(jnp.isfinite(out)))
    assert jnp.allclose(out, ref, rtol=5e-2, atol=5e-2), (out, ref)
    print("KERNEL_OK")
</pallas_src>

<mosaic_0001>
module attributes {stable_mosaic.version = 11 : i64} {
  func.func @_conv3x3_kernel(%arg0: i32, %arg1: i32, %arg2: memref<1x18x18x8xbf16, #tpu.memory_space<vmem>>, %arg3: memref<9x8x32xbf16, #tpu.memory_space<vmem>>, %arg4: memref<1x32xf32, #tpu.memory_space<vmem>>, %arg5: memref<1x8x16x32xbf16, #tpu.memory_space<vmem>>, %arg6: memref<128x32xf32, #tpu.memory_space<vmem>>) attributes {dimension_semantics = [#tpu.dimension_semantics<parallel>, #tpu.dimension_semantics<arbitrary>], iteration_bounds = array<i64: 2, 2>, scalar_prefetch = 0 : i64, scratch_operands = 1 : i64, tpu.core_type = #tpu.core_type<tc>, window_params = [{transform_indices = @transform_0, window_bounds = array<i64: 1, 18, 18, 8>}, {pipeline_mode = #tpu.pipeline_mode<synchronous>, transform_indices = @transform_1, window_bounds = array<i64: 9, 8, 32>}, {pipeline_mode = #tpu.pipeline_mode<synchronous>, transform_indices = @transform_2, window_bounds = array<i64: 1, 32>}, {transform_indices = @transform_3, window_bounds = array<i64: 1, 8, 16, 32>}]} {
    %cst = arith.constant 0.000000e+00 : f32
    %0 = vector.broadcast %cst : f32 to vector<128x32xf32>
    %c0 = arith.constant 0 : index
    %c0_0 = arith.constant 0 : index
    %1 = vector.load %arg6[%c0, %c0_0] : memref<128x32xf32, #tpu.memory_space<vmem>>, vector<128x32xf32>
    tpu.vector_store %arg6[%c0, %c0_0], %0 {strides = array<i32>} : memref<128x32xf32, #tpu.memory_space<vmem>>, vector<128x32xf32>,
    %c8_i32 = arith.constant 8 : i32
    %2 = arith.muli %arg1, %c8_i32 : i32
    %c0_i32 = arith.constant 0 : i32
    %3 = arith.addi %2, %c0_i32 : i32
    %c0_1 = arith.constant 0 : index
    %4 = arith.index_cast %3 : i32 to index
    %c0_2 = arith.constant 0 : index
    %c0_3 = arith.constant 0 : index
    %5 = vector.load %arg2[%c0_1, %4, %c0_2, %c0_3] : memref<1x18x18x8xbf16, #tpu.memory_space<vmem>>, vector<1x8x18x8xbf16>
    %6 = vector.shape_cast %5 : vector<1x8x18x8xbf16> to vector<8x18x8xbf16>
    %7 = vector.extract_strided_slice %6 {offsets = [0, 0, 0], sizes = [8, 16, 8], strides = [1, 1, 1]} : vector<8x18x8xbf16> to vector<8x16x8xbf16>
    %8 = vector.shape_cast %7 : vector<8x16x8xbf16> to vector<128x8xbf16>
    %c0_4 = arith.constant 0 : index
    %c0_5 = arith.constant 0 : index
    %9 = vector.load %arg6[%c0_4, %c0_5] : memref<128x32xf32, #tpu.memory_space<vmem>>, vector<128x32xf32>
    %c0_6 = arith.constant 0 : index
    %c0_7 = arith.constant 0 : index
    %c0_8 = arith.constant 0 : index
    %10 = vector.load %arg3[%c0_6, %c0_7, %c0_8] : memref<9x8x32xbf16, #tpu.memory_space<vmem>>, vector<1x8x32xbf16>
    %11 = vector.shape_cast %10 : vector<1x8x32xbf16> to vector<8x32xbf16>
    %cst_9 = arith.constant dense<0.000000e+00> : vector<128x32xf32>
    %12 = tpu.matmul %8, %11, %cst_9 {dimension_numbers = #tpu.dot_dimension_numbers<[1], [0], [0], [1], [0, 0, 1, 1], [], []>} : vector<128x8xbf16>, vector<8x32xbf16>, vector<128x32xf32> -> vector<128x32xf32>
    %13 = arith.addf %9, %12 : vector<128x32xf32>
    %c0_10 = arith.constant 0 : index
    %c0_11 = arith.constant 0 : index
    %14 = vector.load %arg6[%c0_10, %c0_11] : memref<128x32xf32, #tpu.memory_space<vmem>>, vector<128x32xf32>
    tpu.vector_store %arg6[%c0_10, %c0_11], %13 {strides = array<i32>} : memref<128x32xf32, #tpu.memory_space<vmem>>, vector<128x32xf32>,
    %15 = vector.extract_strided_slice %6 {offsets = [0, 1, 0], sizes = [8, 16, 8], strides = [1, 1, 1]} : vector<8x18x8xbf16> to vector<8x16x8xbf16>
    %16 = vector.shape_cast %15 : vector<8x16x8xbf16> to vector<128x8xbf16>
    %c0_12 = arith.constant 0 : index
    %c0_13 = arith.constant 0 : index
    %17 = vector.load %arg6[%c0_12, %c0_13] : memref<128x32xf32, #tpu.memory_space<vmem>>, vector<128x32xf32>
    %c1 = arith.constant 1 : index
    %c0_14 = arith.constant 0 : index
    %c0_15 = arith.constant 0 : index
    %18 = vector.load %arg3[%c1, %c0_14, %c0_15] : memref<9x8x32xbf16, #tpu.memory_space<vmem>>, vector<1x8x32xbf16>
    %19 = vector.shape_cast %18 : vector<1x8x32xbf16> to vector<8x32xbf16>
    %cst_16 = arith.constant dense<0.000000e+00> : vector<128x32xf32>
    %20 = tpu.matmul %16, %19, %cst_16 {dimension_numbers = #tpu.dot_dimension_numbers<[1], [0], [0], [1], [0, 0, 1, 1], [], []>} : vector<128x8xbf16>, vector<8x32xbf16>, vector<128x32xf32> -> vector<128x32xf32>
    %21 = arith.addf %17, %20 : vector<128x32xf32>
    %c0_17 = arith.constant 0 : index
    %c0_18 = arith.constant 0 : index
    %22 = vector.load %arg6[%c0_17, %c0_18] : memref<128x32xf32, #tpu.memory_space<vmem>>, vector<128x32xf32>
    tpu.vector_store %arg6[%c0_17, %c0_18], %21 {strides = array<i32>} : memref<128x32xf32, #tpu.memory_space<vmem>>, vector<128x32xf32>,
    %23 = vector.extract_strided_slice %6 {offsets = [0, 2, 0], sizes = [8, 16, 8], strides = [1, 1, 1]} : vector<8x18x8xbf16> to vector<8x16x8xbf16>
    %24 = vector.shape_cast %23 : vector<8x16x8xbf16> to vector<128x8xbf16>
    %c0_19 = arith.constant 0 : index
    %c0_20 = arith.constant 0 : index
    %25 = vector.load %arg6[%c0_19, %c0_20] : memref<128x32xf32, #tpu.memory_space<vmem>>, vector<128x32xf32>
    %c2 = arith.constant 2 : index
    %c0_21 = arith.constant 0 : index
    %c0_22 = arith.constant 0 : index
    %26 = vector.load %arg3[%c2, %c0_21, %c0_22] : memref<9x8x32xbf16, #tpu.memory_space<vmem>>, vector<1x8x32xbf16>
    %27 = vector.shape_cast %26 : vector<1x8x32xbf16> to vector<8x32xbf16>
    %cst_23 = arith.constant dense<0.000000e+00> : vector<128x32xf32>
    %28 = tpu.matmul %24, %27, %cst_23 {dimension_numbers = #tpu.dot_dimension_numbers<[1], [0], [0], [1], [0, 0, 1, 1], [], []>} : vector<128x8xbf16>, vector<8x32xbf16>, vector<128x32xf32> -> vector<128x32xf32>
    %29 = arith.addf %25, %28 : vector<128x32xf32>
    %c0_24 = arith.constant 0 : index
    %c0_25 = arith.constant 0 : index
    %30 = vector.load %arg6[%c0_24, %c0_25] : memref<128x32xf32, #tpu.memory_space<vmem>>, vector<128x32xf32>
    tpu.vector_store %arg6[%c0_24, %c0_25], %29 {strides = array<i32>} : memref<128x32xf32, #tpu.memory_space<vmem>>, vector<128x32xf32>,
    %c1_i32 = arith.constant 1 : i32
    %31 = arith.addi %2, %c1_i32 : i32
    %c0_26 = arith.constant 0 : index
    %32 = arith.index_cast %31 : i32 to index
    %c0_27 = arith.constant 0 : index
    %c0_28 = arith.constant 0 : index
    %33 = vector.load %arg2[%c0_26, %32, %c0_27, %c0_28] : memref<1x18x18x8xbf16, #tpu.memory_space<vmem>>, vector<1x8x18x8xbf16>
    %34 = vector.shape_cast %33 : vector<1x8x18x8xbf16> to vector<8x18x8xbf16>
    %35 = vector.extract_strided_slice %34 {offsets = [0, 0, 0], sizes = [8, 16, 8], strides = [1, 1, 1]} : vector<8x18x8xbf16> to vector<8x16x8xbf16>
    %36 = vector.shape_cast %35 : vector<8x16x8xbf16> to vector<128x8xbf16>
    %c0_29 = arith.constant 0 : index
    %c0_30 = arith.constant 0 : index
    %37 = vector.load %arg6[%c0_29, %c0_30] : memref<128x32xf32, #tpu.memory_space<vmem>>, vector<128x32xf32>
    %c3 = arith.constant 3 : index
    %c0_31 = arith.constant 0 : index
    %c0_32 = arith.constant 0 : index
    %38 = vector.load %arg3[%c3, %c0_31, %c0_32] : memref<9x8x32xbf16, #tpu.memory_space<vmem>>, vector<1x8x32xbf16>
    %39 = vector.shape_cast %38 : vector<1x8x32xbf16> to vector<8x32xbf16>
    %cst_33 = arith.constant dense<0.000000e+00> : vector<128x32xf32>
    %40 = tpu.matmul %36, %39, %cst_33 {dimension_numbers = #tpu.dot_dimension_numbers<[1], [0], [0], [1], [0, 0, 1, 1], [], []>} : vector<128x8xbf16>, vector<8x32xbf16>, vector<128x32xf32> -> vector<128x32xf32>
    %41 = arith.addf %37, %40 : vector<128x32xf32>
    %c0_34 = arith.constant 0 : index
    %c0_35 = arith.constant 0 : index
    %42 = vector.load %arg6[%c0_34, %c0_35] : memref<128x32xf32, #tpu.memory_space<vmem>>, vector<128x32xf32>
    tpu.vector_store %arg6[%c0_34, %c0_35], %41 {strides = array<i32>} : memref<128x32xf32, #tpu.memory_space<vmem>>, vector<128x32xf32>,
    %43 = vector.extract_strided_slice %34 {offsets = [0, 1, 0], sizes = [8, 16, 8], strides = [1, 1, 1]} : vector<8x18x8xbf16> to vector<8x16x8xbf16>
    %44 = vector.shape_cast %43 : vector<8x16x8xbf16> to vector<128x8xbf16>
    %c0_36 = arith.constant 0 : index
    %c0_37 = arith.constant 0 : index
    %45 = vector.load %arg6[%c0_36, %c0_37] : memref<128x32xf32, #tpu.memory_space<vmem>>, vector<128x32xf32>
    %c4 = arith.constant 4 : index
    %c0_38 = arith.constant 0 : index
    %c0_39 = arith.constant 0 : index
    %46 = vector.load %arg3[%c4, %c0_38, %c0_39] : memref<9x8x32xbf16, #tpu.memory_space<vmem>>, vector<1x8x32xbf16>
    %47 = vector.shape_cast %46 : vector<1x8x32xbf16> to vector<8x32xbf16>
    %cst_40 = arith.constant dense<0.000000e+00> : vector<128x32xf32>
    %48 = tpu.matmul %44, %47, %cst_40 {dimension_numbers = #tpu.dot_dimension_numbers<[1], [0], [0], [1], [0, 0, 1, 1], [], []>} : vector<128x8xbf16>, vector<8x32xbf16>, vector<128x32xf32> -> vector<128x32xf32>
    %49 = arith.addf %45, %48 : vector<128x32xf32>
    %c0_41 = arith.constant 0 : index
    %c0_42 = arith.constant 0 : index
    %50 = vector.load %arg6[%c0_41, %c0_42] : memref<128x32xf32, #tpu.memory_space<vmem>>, vector<128x32xf32>
    tpu.vector_store %arg6[%c0_41, %c0_42], %49 {strides = array<i32>} : memref<128x32xf32, #tpu.memory_space<vmem>>, vector<128x32xf32>,
    %51 = vector.extract_strided_slice %34 {offsets = [0, 2, 0], sizes = [8, 16, 8], strides = [1, 1, 1]} : vector<8x18x8xbf16> to vector<8x16x8xbf16>
    %52 = vector.shape_cast %51 : vector<8x16x8xbf16> to vector<128x8xbf16>
    %c0_43 = arith.constant 0 : index
    %c0_44 = arith.constant 0 : index
    %53 = vector.load %arg6[%c0_43, %c0_44] : memref<128x32xf32, #tpu.memory_space<vmem>>, vector<128x32xf32>
    %c5 = arith.constant 5 : index
    %c0_45 = arith.constant 0 : index
    %c0_46 = arith.constant 0 : index
    %54 = vector.load %arg3[%c5, %c0_45, %c0_46] : memref<9x8x32xbf16, #tpu.memory_space<vmem>>, vector<1x8x32xbf16>
    %55 = vector.shape_cast %54 : vector<1x8x32xbf16> to vector<8x32xbf16>
    %cst_47 = arith.constant dense<0.000000e+00> : vector<128x32xf32>
    %56 = tpu.matmul %52, %55, %cst_47 {dimension_numbers = #tpu.dot_dimension_numbers<[1], [0], [0], [1], [0, 0, 1, 1], [], []>} : vector<128x8xbf16>, vector<8x32xbf16>, vector<128x32xf32> -> vector<128x32xf32>
    %57 = arith.addf %53, %56 : vector<128x32xf32>
    %c0_48 = arith.constant 0 : index
    %c0_49 = arith.constant 0 : index
    %58 = vector.load %arg6[%c0_48, %c0_49] : memref<128x32xf32, #tpu.memory_space<vmem>>, vector<128x32xf32>
    tpu.vector_store %arg6[%c0_48, %c0_49], %57 {strides = array<i32>} : memref<128x32xf32, #tpu.memory_space<vmem>>, vector<128x32xf32>,
    %c2_i32 = arith.constant 2 : i32
    %59 = arith.addi %2, %c2_i32 : i32
    %c0_50 = arith.constant 0 : index
    %60 = arith.index_cast %59 : i32 to index
    %c0_51 = arith.constant 0 : index
    %c0_52 = arith.constant 0 : index
    %61 = vector.load %arg2[%c0_50, %60, %c0_51, %c0_52] : memref<1x18x18x8xbf16, #tpu.memory_space<vmem>>, vector<1x8x18x8xbf16>
    %62 = vector.shape_cast %61 : vector<1x8x18x8xbf16> to vector<8x18x8xbf16>
    %63 = vector.extract_strided_slice %62 {offsets = [0, 0, 0], sizes = [8, 16, 8], strides = [1, 1, 1]} : vector<8x18x8xbf16> to vector<8x16x8xbf16>
    %64 = vector.shape_cast %63 : vector<8x16x8xbf16> to vector<128x8xbf16>
    %c0_53 = arith.constant 0 : index
    %c0_54 = arith.constant 0 : index
    %65 = vector.load %arg6[%c0_53, %c0_54] : memref<128x32xf32, #tpu.memory_space<vmem>>, vector<128x32xf32>
    %c6 = arith.constant 6 : index
    %c0_55 = arith.constant 0 : index
    %c0_56 = arith.constant 0 : index
    %66 = vector.load %arg3[%c6, %c0_55, %c0_56] : memref<9x8x32xbf16, #tpu.memory_space<vmem>>, vector<1x8x32xbf16>
    %67 = vector.shape_cast %66 : vector<1x8x32xbf16> to vector<8x32xbf16>
    %cst_57 = arith.constant dense<0.000000e+00> : vector<128x32xf32>
    %68 = tpu.matmul %64, %67, %cst_57 {dimension_numbers = #tpu.dot_dimension_numbers<[1], [0], [0], [1], [0, 0, 1, 1], [], []>} : vector<128x8xbf16>, vector<8x32xbf16>, vector<128x32xf32> -> vector<128x32xf32>
    %69 = arith.addf %65, %68 : vector<128x32xf32>
    %c0_58 = arith.constant 0 : index
    %c0_59 = arith.constant 0 : index
    %70 = vector.load %arg6[%c0_58, %c0_59] : memref<128x32xf32, #tpu.memory_space<vmem>>, vector<128x32xf32>
    tpu.vector_store %arg6[%c0_58, %c0_59], %69 {strides = array<i32>} : memref<128x32xf32, #tpu.memory_space<vmem>>, vector<128x32xf32>,
    %71 = vector.extract_strided_slice %62 {offsets = [0, 1, 0], sizes = [8, 16, 8], strides = [1, 1, 1]} : vector<8x18x8xbf16> to vector<8x16x8xbf16>
    %72 = vector.shape_cast %71 : vector<8x16x8xbf16> to vector<128x8xbf16>
    %c0_60 = arith.constant 0 : index
    %c0_61 = arith.constant 0 : index
    %73 = vector.load %arg6[%c0_60, %c0_61] : memref<128x32xf32, #tpu.memory_space<vmem>>, vector<128x32xf32>
    %c7 = arith.constant 7 : index
    %c0_62 = arith.constant 0 : index
    %c0_63 = arith.constant 0 : index
    %74 = vector.load %arg3[%c7, %c0_62, %c0_63] : memref<9x8x32xbf16, #tpu.memory_space<vmem>>, vector<1x8x32xbf16>
    %75 = vector.shape_cast %74 : vector<1x8x32xbf16> to vector<8x32xbf16>
    %cst_64 = arith.constant dense<0.000000e+00> : vector<128x32xf32>
    %76 = tpu.matmul %72, %75, %cst_64 {dimension_numbers = #tpu.dot_dimension_numbers<[1], [0], [0], [1], [0, 0, 1, 1], [], []>} : vector<128x8xbf16>, vector<8x32xbf16>, vector<128x32xf32> -> vector<128x32xf32>
    %77 = arith.addf %73, %76 : vector<128x32xf32>
    %c0_65 = arith.constant 0 : index
    %c0_66 = arith.constant 0 : index
    %78 = vector.load %arg6[%c0_65, %c0_66] : memref<128x32xf32, #tpu.memory_space<vmem>>, vector<128x32xf32>
    tpu.vector_store %arg6[%c0_65, %c0_66], %77 {strides = array<i32>} : memref<128x32xf32, #tpu.memory_space<vmem>>, vector<128x32xf32>,
    %79 = vector.extract_strided_slice %62 {offsets = [0, 2, 0], sizes = [8, 16, 8], strides = [1, 1, 1]} : vector<8x18x8xbf16> to vector<8x16x8xbf16>
    %80 = vector.shape_cast %79 : vector<8x16x8xbf16> to vector<128x8xbf16>
    %c0_67 = arith.constant 0 : index
    %c0_68 = arith.constant 0 : index
    %81 = vector.load %arg6[%c0_67, %c0_68] : memref<128x32xf32, #tpu.memory_space<vmem>>, vector<128x32xf32>
    %c8 = arith.constant 8 : index
    %c0_69 = arith.constant 0 : index
    %c0_70 = arith.constant 0 : index
    %82 = vector.load %arg3[%c8, %c0_69, %c0_70] : memref<9x8x32xbf16, #tpu.memory_space<vmem>>, vector<1x8x32xbf16>
    %83 = vector.shape_cast %82 : vector<1x8x32xbf16> to vector<8x32xbf16>
    %cst_71 = arith.constant dense<0.000000e+00> : vector<128x32xf32>
    %84 = tpu.matmul %80, %83, %cst_71 {dimension_numbers = #tpu.dot_dimension_numbers<[1], [0], [0], [1], [0, 0, 1, 1], [], []>} : vector<128x8xbf16>, vector<8x32xbf16>, vector<128x32xf32> -> vector<128x32xf32>
    %85 = arith.addf %81, %84 : vector<128x32xf32>
    %c0_72 = arith.constant 0 : index
    %c0_73 = arith.constant 0 : index
    %86 = vector.load %arg6[%c0_72, %c0_73] : memref<128x32xf32, #tpu.memory_space<vmem>>, vector<128x32xf32>
    tpu.vector_store %arg6[%c0_72, %c0_73], %85 {strides = array<i32>} : memref<128x32xf32, #tpu.memory_space<vmem>>, vector<128x32xf32>,
    %c0_74 = arith.constant 0 : index
    %c0_75 = arith.constant 0 : index
    %87 = vector.load %arg6[%c0_74, %c0_75] : memref<128x32xf32, #tpu.memory_space<vmem>>, vector<128x32xf32>
    %c0_76 = arith.constant 0 : index
    %c0_77 = arith.constant 0 : index
    %88 = vector.load %arg4[%c0_76, %c0_77] : memref<1x32xf32, #tpu.memory_space<vmem>>, vector<1x32xf32>
    %89 = vector.broadcast %88 : vector<1x32xf32> to vector<128x32xf32>
    %90 = arith.addf %87, %89 : vector<128x32xf32>
    %cst_78 = arith.constant 0.000000e+00 : f32
    %91 = vector.broadcast %cst_78 : f32 to vector<128x32xf32>
    %92 = arith.maximumf %90, %91 : vector<128x32xf32>
    %93 = vector.shape_cast %92 : vector<128x32xf32> to vector<1x8x16x32xf32>
    %94 = arith.truncf %93 : vector<1x8x16x32xf32> to vector<1x8x16x32xbf16>
    %c0_79 = arith.constant 0 : index
    %c0_80 = arith.constant 0 : index
    %c0_81 = arith.constant 0 : index
    %c0_82 = arith.constant 0 : index
    %95 = vector.load %arg5[%c0_79, %c0_80, %c0_81, %c0_82] : memref<1x8x16x32xbf16, #tpu.memory_space<vmem>>, vector<1x8x16x32xbf16>
    tpu.vector_store %arg5[%c0_79, %c0_80, %c0_81, %c0_82], %94 {strides = array<i32>} : memref<1x8x16x32xbf16, #tpu.memory_space<vmem>>, vector<1x8x16x32xbf16>,
    return
  }
  func.func @transform_0(%arg0: i32, %arg1: i32) -> (i32, i32, i32, i32) {
    %c0_i32 = arith.constant 0 : i32
    %c0_i32_0 = arith.constant 0 : i32
    %c0_i32_1 = arith.constant 0 : i32
    %c0_i32_2 = arith.constant 0 : i32
    return %arg0, %c0_i32, %c0_i32_0, %c0_i32_1 : i32, i32, i32, i32
  }
  func.func @transform_1(%arg0: i32, %arg1: i32) -> (i32, i32, i32) {
    %c0_i32 = arith.constant 0 : i32
    %c0_i32_0 = arith.constant 0 : i32
    %c0_i32_1 = arith.constant 0 : i32
    %c0_i32_2 = arith.constant 0 : i32
    return %c0_i32, %c0_i32_0, %c0_i32_1 : i32, i32, i32
  }
  func.func @transform_2(%arg0: i32, %arg1: i32) -> (i32, i32) {
    %c0_i32 = arith.constant 0 : i32
    %c0_i32_0 = arith.constant 0 : i32
    %c0_i32_1 = arith.constant 0 : i32
    return %c0_i32, %c0_i32_0 : i32, i32
  }
  func.func @transform_3(%arg0: i32, %arg1: i32) -> (i32, i32, i32, i32) {
    %c0_i32 = arith.constant 0 : i32
    %c0_i32_0 = arith.constant 0 : i32
    %c0_i32_1 = arith.constant 0 : i32
    return %arg0, %arg1, %c0_i32, %c0_i32_0 : i32, i32, i32, i32
  }
}

module attributes {stable_mosaic.version = 11 : i64} {
  func.func @_maxpool_kernel(%arg0: i32, %arg1: i32, %arg2: memref<1x16x8x64xbf16, #tpu.memory_space<vmem>>, %arg3: memref<1x8x8x32xbf16, #tpu.memory_space<vmem>>) attributes {dimension_semantics = [#tpu.dimension_semantics<parallel>, #tpu.dimension_semantics<arbitrary>], iteration_bounds = array<i64: 2, 1>, scalar_prefetch = 0 : i64, scratch_operands = 0 : i64, tpu.core_type = #tpu.core_type<tc>, window_params = [{transform_indices = @transform_0, window_bounds = array<i64: 1, 16, 8, 64>}, {transform_indices = @transform_1, window_bounds = array<i64: 1, 8, 8, 32>}]} {
    %c0 = arith.constant 0 : index
    %c0_0 = arith.constant 0 : index
    %c0_1 = arith.constant 0 : index
    %c0_2 = arith.constant 0 : index
    %0 = vector.load %arg2[%c0, %c0_0, %c0_1, %c0_2] : memref<1x16x8x64xbf16, #tpu.memory_space<vmem>>, vector<1x1x8x64xbf16>
    %1 = vector.shape_cast %0 : vector<1x1x8x64xbf16> to vector<8x64xbf16>
    %c0_3 = arith.constant 0 : index
    %c1 = arith.constant 1 : index
    %c0_4 = arith.constant 0 : index
    %c0_5 = arith.constant 0 : index
    %2 = vector.load %arg2[%c0_3, %c1, %c0_4, %c0_5] : memref<1x16x8x64xbf16, #tpu.memory_space<vmem>>, vector<1x1x8x64xbf16>
    %3 = vector.shape_cast %2 : vector<1x1x8x64xbf16> to vector<8x64xbf16>
    %4 = arith.maximumf %1, %3 : vector<8x64xbf16>
    %5 = vector.extract_strided_slice %4 {offsets = [0, 0], sizes = [8, 32], strides = [1, 1]} : vector<8x64xbf16> to vector<8x32xbf16>
    %6 = vector.extract_strided_slice %4 {offsets = [0, 32], sizes = [8, 32], strides = [1, 1]} : vector<8x64xbf16> to vector<8x32xbf16>
    %7 = arith.maximumf %5, %6 : vector<8x32xbf16>
    %c0_6 = arith.constant 0 : index
    %c0_7 = arith.constant 0 : index
    %c0_8 = arith.constant 0 : index
    %c0_9 = arith.constant 0 : index
    %8 = vector.load %arg3[%c0_6, %c0_7, %c0_8, %c0_9] : memref<1x8x8x32xbf16, #tpu.memory_space<vmem>>, vector<1x1x8x32xbf16>
    %9 = vector.shape_cast %8 : vector<1x1x8x32xbf16> to vector<8x32xbf16>
    %10 = vector.shape_cast %7 : vector<8x32xbf16> to vector<1x1x8x32xbf16>
    tpu.vector_store %arg3[%c0_6, %c0_7, %c0_8, %c0_9], %10 {strides = array<i32>} : memref<1x8x8x32xbf16, #tpu.memory_space<vmem>>, vector<1x1x8x32xbf16>,
    %c0_10 = arith.constant 0 : index
    %c2 = arith.constant 2 : index
    %c0_11 = arith.constant 0 : index
    %c0_12 = arith.constant 0 : index
    %11 = vector.load %arg2[%c0_10, %c2, %c0_11, %c0_12] : memref<1x16x8x64xbf16, #tpu.memory_space<vmem>>, vector<1x1x8x64xbf16>
    %12 = vector.shape_cast %11 : vector<1x1x8x64xbf16> to vector<8x64xbf16>
    %c0_13 = arith.constant 0 : index
    %c3 = arith.constant 3 : index
    %c0_14 = arith.constant 0 : index
    %c0_15 = arith.constant 0 : index
    %13 = vector.load %arg2[%c0_13, %c3, %c0_14, %c0_15] : memref<1x16x8x64xbf16, #tpu.memory_space<vmem>>, vector<1x1x8x64xbf16>
    %14 = vector.shape_cast %13 : vector<1x1x8x64xbf16> to vector<8x64xbf16>
    %15 = arith.maximumf %12, %14 : vector<8x64xbf16>
    %16 = vector.extract_strided_slice %15 {offsets = [0, 0], sizes = [8, 32], strides = [1, 1]} : vector<8x64xbf16> to vector<8x32xbf16>
    %17 = vector.extract_strided_slice %15 {offsets = [0, 32], sizes = [8, 32], strides = [1, 1]} : vector<8x64xbf16> to vector<8x32xbf16>
    %18 = arith.maximumf %16, %17 : vector<8x32xbf16>
    %c0_16 = arith.constant 0 : index
    %c1_17 = arith.constant 1 : index
    %c0_18 = arith.constant 0 : index
    %c0_19 = arith.constant 0 : index
    %19 = vector.load %arg3[%c0_16, %c1_17, %c0_18, %c0_19] : memref<1x8x8x32xbf16, #tpu.memory_space<vmem>>, vector<1x1x8x32xbf16>
    %20 = vector.shape_cast %19 : vector<1x1x8x32xbf16> to vector<8x32xbf16>
    %21 = vector.shape_cast %18 : vector<8x32xbf16> to vector<1x1x8x32xbf16>
    tpu.vector_store %arg3[%c0_16, %c1_17, %c0_18, %c0_19], %21 {strides = array<i32>} : memref<1x8x8x32xbf16, #tpu.memory_space<vmem>>, vector<1x1x8x32xbf16>,
    %c0_20 = arith.constant 0 : index
    %c4 = arith.constant 4 : index
    %c0_21 = arith.constant 0 : index
    %c0_22 = arith.constant 0 : index
    %22 = vector.load %arg2[%c0_20, %c4, %c0_21, %c0_22] : memref<1x16x8x64xbf16, #tpu.memory_space<vmem>>, vector<1x1x8x64xbf16>
    %23 = vector.shape_cast %22 : vector<1x1x8x64xbf16> to vector<8x64xbf16>
    %c0_23 = arith.constant 0 : index
    %c5 = arith.constant 5 : index
    %c0_24 = arith.constant 0 : index
    %c0_25 = arith.constant 0 : index
    %24 = vector.load %arg2[%c0_23, %c5, %c0_24, %c0_25] : memref<1x16x8x64xbf16, #tpu.memory_space<vmem>>, vector<1x1x8x64xbf16>
    %25 = vector.shape_cast %24 : vector<1x1x8x64xbf16> to vector<8x64xbf16>
    %26 = arith.maximumf %23, %25 : vector<8x64xbf16>
    %27 = vector.extract_strided_slice %26 {offsets = [0, 0], sizes = [8, 32], strides = [1, 1]} : vector<8x64xbf16> to vector<8x32xbf16>
    %28 = vector.extract_strided_slice %26 {offsets = [0, 32], sizes = [8, 32], strides = [1, 1]} : vector<8x64xbf16> to vector<8x32xbf16>
    %29 = arith.maximumf %27, %28 : vector<8x32xbf16>
    %c0_26 = arith.constant 0 : index
    %c2_27 = arith.constant 2 : index
    %c0_28 = arith.constant 0 : index
    %c0_29 = arith.constant 0 : index
    %30 = vector.load %arg3[%c0_26, %c2_27, %c0_28, %c0_29] : memref<1x8x8x32xbf16, #tpu.memory_space<vmem>>, vector<1x1x8x32xbf16>
    %31 = vector.shape_cast %30 : vector<1x1x8x32xbf16> to vector<8x32xbf16>
    %32 = vector.shape_cast %29 : vector<8x32xbf16> to vector<1x1x8x32xbf16>
    tpu.vector_store %arg3[%c0_26, %c2_27, %c0_28, %c0_29], %32 {strides = array<i32>} : memref<1x8x8x32xbf16, #tpu.memory_space<vmem>>, vector<1x1x8x32xbf16>,
    %c0_30 = arith.constant 0 : index
    %c6 = arith.constant 6 : index
    %c0_31 = arith.constant 0 : index
    %c0_32 = arith.constant 0 : index
    %33 = vector.load %arg2[%c0_30, %c6, %c0_31, %c0_32] : memref<1x16x8x64xbf16, #tpu.memory_space<vmem>>, vector<1x1x8x64xbf16>
    %34 = vector.shape_cast %33 : vector<1x1x8x64xbf16> to vector<8x64xbf16>
    %c0_33 = arith.constant 0 : index
    %c7 = arith.constant 7 : index
    %c0_34 = arith.constant 0 : index
    %c0_35 = arith.constant 0 : index
    %35 = vector.load %arg2[%c0_33, %c7, %c0_34, %c0_35] : memref<1x16x8x64xbf16, #tpu.memory_space<vmem>>, vector<1x1x8x64xbf16>
    %36 = vector.shape_cast %35 : vector<1x1x8x64xbf16> to vector<8x64xbf16>
    %37 = arith.maximumf %34, %36 : vector<8x64xbf16>
    %38 = vector.extract_strided_slice %37 {offsets = [0, 0], sizes = [8, 32], strides = [1, 1]} : vector<8x64xbf16> to vector<8x32xbf16>
    %39 = vector.extract_strided_slice %37 {offsets = [0, 32], sizes = [8, 32], strides = [1, 1]} : vector<8x64xbf16> to vector<8x32xbf16>
    %40 = arith.maximumf %38, %39 : vector<8x32xbf16>
    %c0_36 = arith.constant 0 : index
    %c3_37 = arith.constant 3 : index
    %c0_38 = arith.constant 0 : index
    %c0_39 = arith.constant 0 : index
    %41 = vector.load %arg3[%c0_36, %c3_37, %c0_38, %c0_39] : memref<1x8x8x32xbf16, #tpu.memory_space<vmem>>, vector<1x1x8x32xbf16>
    %42 = vector.shape_cast %41 : vector<1x1x8x32xbf16> to vector<8x32xbf16>
    %43 = vector.shape_cast %40 : vector<8x32xbf16> to vector<1x1x8x32xbf16>
    tpu.vector_store %arg3[%c0_36, %c3_37, %c0_38, %c0_39], %43 {strides = array<i32>} : memref<1x8x8x32xbf16, #tpu.memory_space<vmem>>, vector<1x1x8x32xbf16>,
    %c0_40 = arith.constant 0 : index
    %c8 = arith.constant 8 : index
    %c0_41 = arith.constant 0 : index
    %c0_42 = arith.constant 0 : index
    %44 = vector.load %arg2[%c0_40, %c8, %c0_41, %c0_42] : memref<1x16x8x64xbf16, #tpu.memory_space<vmem>>, vector<1x1x8x64xbf16>
    %45 = vector.shape_cast %44 : vector<1x1x8x64xbf16> to vector<8x64xbf16>
    %c0_43 = arith.constant 0 : index
    %c9 = arith.constant 9 : index
    %c0_44 = arith.constant 0 : index
    %c0_45 = arith.constant 0 : index
    %46 = vector.load %arg2[%c0_43, %c9, %c0_44, %c0_45] : memref<1x16x8x64xbf16, #tpu.memory_space<vmem>>, vector<1x1x8x64xbf16>
    %47 = vector.shape_cast %46 : vector<1x1x8x64xbf16> to vector<8x64xbf16>
    %48 = arith.maximumf %45, %47 : vector<8x64xbf16>
    %49 = vector.extract_strided_slice %48 {offsets = [0, 0], sizes = [8, 32], strides = [1, 1]} : vector<8x64xbf16> to vector<8x32xbf16>
    %50 = vector.extract_strided_slice %48 {offsets = [0, 32], sizes = [8, 32], strides = [1, 1]} : vector<8x64xbf16> to vector<8x32xbf16>
    %51 = arith.maximumf %49, %50 : vector<8x32xbf16>
    %c0_46 = arith.constant 0 : index
    %c4_47 = arith.constant 4 : index
    %c0_48 = arith.constant 0 : index
    %c0_49 = arith.constant 0 : index
    %52 = vector.load %arg3[%c0_46, %c4_47, %c0_48, %c0_49] : memref<1x8x8x32xbf16, #tpu.memory_space<vmem>>, vector<1x1x8x32xbf16>
    %53 = vector.shape_cast %52 : vector<1x1x8x32xbf16> to vector<8x32xbf16>
    %54 = vector.shape_cast %51 : vector<8x32xbf16> to vector<1x1x8x32xbf16>
    tpu.vector_store %arg3[%c0_46, %c4_47, %c0_48, %c0_49], %54 {strides = array<i32>} : memref<1x8x8x32xbf16, #tpu.memory_space<vmem>>, vector<1x1x8x32xbf16>,
    %c0_50 = arith.constant 0 : index
    %c10 = arith.constant 10 : index
    %c0_51 = arith.constant 0 : index
    %c0_52 = arith.constant 0 : index
    %55 = vector.load %arg2[%c0_50, %c10, %c0_51, %c0_52] : memref<1x16x8x64xbf16, #tpu.memory_space<vmem>>, vector<1x1x8x64xbf16>
    %56 = vector.shape_cast %55 : vector<1x1x8x64xbf16> to vector<8x64xbf16>
    %c0_53 = arith.constant 0 : index
    %c11 = arith.constant 11 : index
    %c0_54 = arith.constant 0 : index
    %c0_55 = arith.constant 0 : index
    %57 = vector.load %arg2[%c0_53, %c11, %c0_54, %c0_55] : memref<1x16x8x64xbf16, #tpu.memory_space<vmem>>, vector<1x1x8x64xbf16>
    %58 = vector.shape_cast %57 : vector<1x1x8x64xbf16> to vector<8x64xbf16>
    %59 = arith.maximumf %56, %58 : vector<8x64xbf16>
    %60 = vector.extract_strided_slice %59 {offsets = [0, 0], sizes = [8, 32], strides = [1, 1]} : vector<8x64xbf16> to vector<8x32xbf16>
    %61 = vector.extract_strided_slice %59 {offsets = [0, 32], sizes = [8, 32], strides = [1, 1]} : vector<8x64xbf16> to vector<8x32xbf16>
    %62 = arith.maximumf %60, %61 : vector<8x32xbf16>
    %c0_56 = arith.constant 0 : index
    %c5_57 = arith.constant 5 : index
    %c0_58 = arith.constant 0 : index
    %c0_59 = arith.constant 0 : index
    %63 = vector.load %arg3[%c0_56, %c5_57, %c0_58, %c0_59] : memref<1x8x8x32xbf16, #tpu.memory_space<vmem>>, vector<1x1x8x32xbf16>
    %64 = vector.shape_cast %63 : vector<1x1x8x32xbf16> to vector<8x32xbf16>
    %65 = vector.shape_cast %62 : vector<8x32xbf16> to vector<1x1x8x32xbf16>
    tpu.vector_store %arg3[%c0_56, %c5_57, %c0_58, %c0_59], %65 {strides = array<i32>} : memref<1x8x8x32xbf16, #tpu.memory_space<vmem>>, vector<1x1x8x32xbf16>,
    %c0_60 = arith.constant 0 : index
    %c12 = arith.constant 12 : index
    %c0_61 = arith.constant 0 : index
    %c0_62 = arith.constant 0 : index
    %66 = vector.load %arg2[%c0_60, %c12, %c0_61, %c0_62] : memref<1x16x8x64xbf16, #tpu.memory_space<vmem>>, vector<1x1x8x64xbf16>
    %67 = vector.shape_cast %66 : vector<1x1x8x64xbf16> to vector<8x64xbf16>
    %c0_63 = arith.constant 0 : index
    %c13 = arith.constant 13 : index
    %c0_64 = arith.constant 0 : index
    %c0_65 = arith.constant 0 : index
    %68 = vector.load %arg2[%c0_63, %c13, %c0_64, %c0_65] : memref<1x16x8x64xbf16, #tpu.memory_space<vmem>>, vector<1x1x8x64xbf16>
    %69 = vector.shape_cast %68 : vector<1x1x8x64xbf16> to vector<8x64xbf16>
    %70 = arith.maximumf %67, %69 : vector<8x64xbf16>
    %71 = vector.extract_strided_slice %70 {offsets = [0, 0], sizes = [8, 32], strides = [1, 1]} : vector<8x64xbf16> to vector<8x32xbf16>
    %72 = vector.extract_strided_slice %70 {offsets = [0, 32], sizes = [8, 32], strides = [1, 1]} : vector<8x64xbf16> to vector<8x32xbf16>
    %73 = arith.maximumf %71, %72 : vector<8x32xbf16>
    %c0_66 = arith.constant 0 : index
    %c6_67 = arith.constant 6 : index
    %c0_68 = arith.constant 0 : index
    %c0_69 = arith.constant 0 : index
    %74 = vector.load %arg3[%c0_66, %c6_67, %c0_68, %c0_69] : memref<1x8x8x32xbf16, #tpu.memory_space<vmem>>, vector<1x1x8x32xbf16>
    %75 = vector.shape_cast %74 : vector<1x1x8x32xbf16> to vector<8x32xbf16>
    %76 = vector.shape_cast %73 : vector<8x32xbf16> to vector<1x1x8x32xbf16>
    tpu.vector_store %arg3[%c0_66, %c6_67, %c0_68, %c0_69], %76 {strides = array<i32>} : memref<1x8x8x32xbf16, #tpu.memory_space<vmem>>, vector<1x1x8x32xbf16>,
    %c0_70 = arith.constant 0 : index
    %c14 = arith.constant 14 : index
    %c0_71 = arith.constant 0 : index
    %c0_72 = arith.constant 0 : index
    %77 = vector.load %arg2[%c0_70, %c14, %c0_71, %c0_72] : memref<1x16x8x64xbf16, #tpu.memory_space<vmem>>, vector<1x1x8x64xbf16>
    %78 = vector.shape_cast %77 : vector<1x1x8x64xbf16> to vector<8x64xbf16>
    %c0_73 = arith.constant 0 : index
    %c15 = arith.constant 15 : index
    %c0_74 = arith.constant 0 : index
    %c0_75 = arith.constant 0 : index
    %79 = vector.load %arg2[%c0_73, %c15, %c0_74, %c0_75] : memref<1x16x8x64xbf16, #tpu.memory_space<vmem>>, vector<1x1x8x64xbf16>
    %80 = vector.shape_cast %79 : vector<1x1x8x64xbf16> to vector<8x64xbf16>
    %81 = arith.maximumf %78, %80 : vector<8x64xbf16>
    %82 = vector.extract_strided_slice %81 {offsets = [0, 0], sizes = [8, 32], strides = [1, 1]} : vector<8x64xbf16> to vector<8x32xbf16>
    %83 = vector.extract_strided_slice %81 {offsets = [0, 32], sizes = [8, 32], strides = [1, 1]} : vector<8x64xbf16> to vector<8x32xbf16>
    %84 = arith.maximumf %82, %83 : vector<8x32xbf16>
    %c0_76 = arith.constant 0 : index
    %c7_77 = arith.constant 7 : index
    %c0_78 = arith.constant 0 : index
    %c0_79 = arith.constant 0 : index
    %85 = vector.load %arg3[%c0_76, %c7_77, %c0_78, %c0_79] : memref<1x8x8x32xbf16, #tpu.memory_space<vmem>>, vector<1x1x8x32xbf16>
    %86 = vector.shape_cast %85 : vector<1x1x8x32xbf16> to vector<8x32xbf16>
    %87 = vector.shape_cast %84 : vector<8x32xbf16> to vector<1x1x8x32xbf16>
    tpu.vector_store %arg3[%c0_76, %c7_77, %c0_78, %c0_79], %87 {strides = array<i32>} : memref<1x8x8x32xbf16, #tpu.memory_space<vmem>>, vector<1x1x8x32xbf16>,
    return
  }
  func.func @transform_0(%arg0: i32, %arg1: i32) -> (i32, i32, i32, i32) {
    %c0_i32 = arith.constant 0 : i32
    %c0_i32_0 = arith.constant 0 : i32
    %c0_i32_1 = arith.constant 0 : i32
    return %arg0, %arg1, %c0_i32, %c0_i32_0 : i32, i32, i32, i32
  }
  func.func @transform_1(%arg0: i32, %arg1: i32) -> (i32, i32, i32, i32) {
    %c0_i32 = arith.constant 0 : i32
    %c0_i32_0 = arith.constant 0 : i32
    %c0_i32_1 = arith.constant 0 : i32
    return %arg0, %arg1, %c0_i32, %c0_i32_0 : i32, i32, i32, i32
  }
}

module attributes {stable_mosaic.version = 11 : i64} {
  func.func @_conv3x3_kernel(%arg0: i32, %arg1: i32, %arg2: memref<1x10x10x32xbf16, #tpu.memory_space<vmem>>, %arg3: memref<9x32x64xbf16, #tpu.memory_space<vmem>>, %arg4: memref<1x64xf32, #tpu.memory_space<vmem>>, %arg5: memref<1x8x8x64xbf16, #tpu.memory_space<vmem>>, %arg6: memref<64x64xf32, #tpu.memory_space<vmem>>) attributes {dimension_semantics = [#tpu.dimension_semantics<parallel>, #tpu.dimension_semantics<arbitrary>], iteration_bounds = array<i64: 2, 1>, scalar_prefetch = 0 : i64, scratch_operands = 1 : i64, tpu.core_type = #tpu.core_type<tc>, window_params = [{transform_indices = @transform_0, window_bounds = array<i64: 1, 10, 10, 32>}, {pipeline_mode = #tpu.pipeline_mode<synchronous>, transform_indices = @transform_1, window_bounds = array<i64: 9, 32, 64>}, {pipeline_mode = #tpu.pipeline_mode<synchronous>, transform_indices = @transform_2, window_bounds = array<i64: 1, 64>}, {transform_indices = @transform_3, window_bounds = array<i64: 1, 8, 8, 64>}]} {
    %cst = arith.constant 0.000000e+00 : f32
    %0 = vector.broadcast %cst : f32 to vector<64x64xf32>
    %c0 = arith.constant 0 : index
    %c0_0 = arith.constant 0 : index
    %1 = vector.load %arg6[%c0, %c0_0] : memref<64x64xf32, #tpu.memory_space<vmem>>, vector<64x64xf32>
    tpu.vector_store %arg6[%c0, %c0_0], %0 {strides = array<i32>} : memref<64x64xf32, #tpu.memory_space<vmem>>, vector<64x64xf32>,
    %c8_i32 = arith.constant 8 : i32
    %2 = arith.muli %arg1, %c8_i32 : i32
    %c0_i32 = arith.constant 0 : i32
    %3 = arith.addi %2, %c0_i32 : i32
    %c0_1 = arith.constant 0 : index
    %4 = arith.index_cast %3 : i32 to index
    %c0_2 = arith.constant 0 : index
    %c0_3 = arith.constant 0 : index
    %5 = vector.load %arg2[%c0_1, %4, %c0_2, %c0_3] : memref<1x10x10x32xbf16, #tpu.memory_space<vmem>>, vector<1x8x10x32xbf16>
    %6 = vector.shape_cast %5 : vector<1x8x10x32xbf16> to vector<8x10x32xbf16>
    %7 = vector.extract_strided_slice %6 {offsets = [0, 0, 0], sizes = [8, 8, 32], strides = [1, 1, 1]} : vector<8x10x32xbf16> to vector<8x8x32xbf16>
    %8 = vector.shape_cast %7 : vector<8x8x32xbf16> to vector<64x32xbf16>
    %c0_4 = arith.constant 0 : index
    %c0_5 = arith.constant 0 : index
    %9 = vector.load %arg6[%c0_4, %c0_5] : memref<64x64xf32, #tpu.memory_space<vmem>>, vector<64x64xf32>
    %c0_6 = arith.constant 0 : index
    %c0_7 = arith.constant 0 : index
    %c0_8 = arith.constant 0 : index
    %10 = vector.load %arg3[%c0_6, %c0_7, %c0_8] : memref<9x32x64xbf16, #tpu.memory_space<vmem>>, vector<1x32x64xbf16>
    %11 = vector.shape_cast %10 : vector<1x32x64xbf16> to vector<32x64xbf16>
    %cst_9 = arith.constant dense<0.000000e+00> : vector<64x64xf32>
    %12 = tpu.matmul %8, %11, %cst_9 {dimension_numbers = #tpu.dot_dimension_numbers<[1], [0], [0], [1], [0, 0, 1, 1], [], []>} : vector<64x32xbf16>, vector<32x64xbf16>, vector<64x64xf32> -> vector<64x64xf32>
    %13 = arith.addf %9, %12 : vector<64x64xf32>
    %c0_10 = arith.constant 0 : index
    %c0_11 = arith.constant 0 : index
    %14 = vector.load %arg6[%c0_10, %c0_11] : memref<64x64xf32, #tpu.memory_space<vmem>>, vector<64x64xf32>
    tpu.vector_store %arg6[%c0_10, %c0_11], %13 {strides = array<i32>} : memref<64x64xf32, #tpu.memory_space<vmem>>, vector<64x64xf32>,
    %15 = vector.extract_strided_slice %6 {offsets = [0, 1, 0], sizes = [8, 8, 32], strides = [1, 1, 1]} : vector<8x10x32xbf16> to vector<8x8x32xbf16>
    %16 = vector.shape_cast %15 : vector<8x8x32xbf16> to vector<64x32xbf16>
    %c0_12 = arith.constant 0 : index
    %c0_13 = arith.constant 0 : index
    %17 = vector.load %arg6[%c0_12, %c0_13] : memref<64x64xf32, #tpu.memory_space<vmem>>, vector<64x64xf32>
    %c1 = arith.constant 1 : index
    %c0_14 = arith.constant 0 : index
    %c0_15 = arith.constant 0 : index
    %18 = vector.load %arg3[%c1, %c0_14, %c0_15] : memref<9x32x64xbf16, #tpu.memory_space<vmem>>, vector<1x32x64xbf16>
    %19 = vector.shape_cast %18 : vector<1x32x64xbf16> to vector<32x64xbf16>
    %cst_16 = arith.constant dense<0.000000e+00> : vector<64x64xf32>
    %20 = tpu.matmul %16, %19, %cst_16 {dimension_numbers = #tpu.dot_dimension_numbers<[1], [0], [0], [1], [0, 0, 1, 1], [], []>} : vector<64x32xbf16>, vector<32x64xbf16>, vector<64x64xf32> -> vector<64x64xf32>
    %21 = arith.addf %17, %20 : vector<64x64xf32>
    %c0_17 = arith.constant 0 : index
    %c0_18 = arith.constant 0 : index
    %22 = vector.load %arg6[%c0_17, %c0_18] : memref<64x64xf32, #tpu.memory_space<vmem>>, vector<64x64xf32>
    tpu.vector_store %arg6[%c0_17, %c0_18], %21 {strides = array<i32>} : memref<64x64xf32, #tpu.memory_space<vmem>>, vector<64x64xf32>,
    %23 = vector.extract_strided_slice %6 {offsets = [0, 2, 0], sizes = [8, 8, 32], strides = [1, 1, 1]} : vector<8x10x32xbf16> to vector<8x8x32xbf16>
    %24 = vector.shape_cast %23 : vector<8x8x32xbf16> to vector<64x32xbf16>
    %c0_19 = arith.constant 0 : index
    %c0_20 = arith.constant 0 : index
    %25 = vector.load %arg6[%c0_19, %c0_20] : memref<64x64xf32, #tpu.memory_space<vmem>>, vector<64x64xf32>
    %c2 = arith.constant 2 : index
    %c0_21 = arith.constant 0 : index
    %c0_22 = arith.constant 0 : index
    %26 = vector.load %arg3[%c2, %c0_21, %c0_22] : memref<9x32x64xbf16, #tpu.memory_space<vmem>>, vector<1x32x64xbf16>
    %27 = vector.shape_cast %26 : vector<1x32x64xbf16> to vector<32x64xbf16>
    %cst_23 = arith.constant dense<0.000000e+00> : vector<64x64xf32>
    %28 = tpu.matmul %24, %27, %cst_23 {dimension_numbers = #tpu.dot_dimension_numbers<[1], [0], [0], [1], [0, 0, 1, 1], [], []>} : vector<64x32xbf16>, vector<32x64xbf16>, vector<64x64xf32> -> vector<64x64xf32>
    %29 = arith.addf %25, %28 : vector<64x64xf32>
    %c0_24 = arith.constant 0 : index
    %c0_25 = arith.constant 0 : index
    %30 = vector.load %arg6[%c0_24, %c0_25] : memref<64x64xf32, #tpu.memory_space<vmem>>, vector<64x64xf32>
    tpu.vector_store %arg6[%c0_24, %c0_25], %29 {strides = array<i32>} : memref<64x64xf32, #tpu.memory_space<vmem>>, vector<64x64xf32>,
    %c1_i32 = arith.constant 1 : i32
    %31 = arith.addi %2, %c1_i32 : i32
    %c0_26 = arith.constant 0 : index
    %32 = arith.index_cast %31 : i32 to index
    %c0_27 = arith.constant 0 : index
    %c0_28 = arith.constant 0 : index
    %33 = vector.load %arg2[%c0_26, %32, %c0_27, %c0_28] : memref<1x10x10x32xbf16, #tpu.memory_space<vmem>>, vector<1x8x10x32xbf16>
    %34 = vector.shape_cast %33 : vector<1x8x10x32xbf16> to vector<8x10x32xbf16>
    %35 = vector.extract_strided_slice %34 {offsets = [0, 0, 0], sizes = [8, 8, 32], strides = [1, 1, 1]} : vector<8x10x32xbf16> to vector<8x8x32xbf16>
    %36 = vector.shape_cast %35 : vector<8x8x32xbf16> to vector<64x32xbf16>
    %c0_29 = arith.constant 0 : index
    %c0_30 = arith.constant 0 : index
    %37 = vector.load %arg6[%c0_29, %c0_30] : memref<64x64xf32, #tpu.memory_space<vmem>>, vector<64x64xf32>
    %c3 = arith.constant 3 : index
    %c0_31 = arith.constant 0 : index
    %c0_32 = arith.constant 0 : index
    %38 = vector.load %arg3[%c3, %c0_31, %c0_32] : memref<9x32x64xbf16, #tpu.memory_space<vmem>>, vector<1x32x64xbf16>
    %39 = vector.shape_cast %38 : vector<1x32x64xbf16> to vector<32x64xbf16>
    %cst_33 = arith.constant dense<0.000000e+00> : vector<64x64xf32>
    %40 = tpu.matmul %36, %39, %cst_33 {dimension_numbers = #tpu.dot_dimension_numbers<[1], [0], [0], [1], [0, 0, 1, 1], [], []>} : vector<64x32xbf16>, vector<32x64xbf16>, vector<64x64xf32> -> vector<64x64xf32>
    %41 = arith.addf %37, %40 : vector<64x64xf32>
    %c0_34 = arith.constant 0 : index
    %c0_35 = arith.constant 0 : index
    %42 = vector.load %arg6[%c0_34, %c0_35] : memref<64x64xf32, #tpu.memory_space<vmem>>, vector<64x64xf32>
    tpu.vector_store %arg6[%c0_34, %c0_35], %41 {strides = array<i32>} : memref<64x64xf32, #tpu.memory_space<vmem>>, vector<64x64xf32>,
    %43 = vector.extract_strided_slice %34 {offsets = [0, 1, 0], sizes = [8, 8, 32], strides = [1, 1, 1]} : vector<8x10x32xbf16> to vector<8x8x32xbf16>
    %44 = vector.shape_cast %43 : vector<8x8x32xbf16> to vector<64x32xbf16>
    %c0_36 = arith.constant 0 : index
    %c0_37 = arith.constant 0 : index
    %45 = vector.load %arg6[%c0_36, %c0_37] : memref<64x64xf32, #tpu.memory_space<vmem>>, vector<64x64xf32>
    %c4 = arith.constant 4 : index
    %c0_38 = arith.constant 0 : index
    %c0_39 = arith.constant 0 : index
    %46 = vector.load %arg3[%c4, %c0_38, %c0_39] : memref<9x32x64xbf16, #tpu.memory_space<vmem>>, vector<1x32x64xbf16>
    %47 = vector.shape_cast %46 : vector<1x32x64xbf16> to vector<32x64xbf16>
    %cst_40 = arith.constant dense<0.000000e+00> : vector<64x64xf32>
    %48 = tpu.matmul %44, %47, %cst_40 {dimension_numbers = #tpu.dot_dimension_numbers<[1], [0], [0], [1], [0, 0, 1, 1], [], []>} : vector<64x32xbf16>, vector<32x64xbf16>, vector<64x64xf32> -> vector<64x64xf32>
    %49 = arith.addf %45, %48 : vector<64x64xf32>
    %c0_41 = arith.constant 0 : index
    %c0_42 = arith.constant 0 : index
    %50 = vector.load %arg6[%c0_41, %c0_42] : memref<64x64xf32, #tpu.memory_space<vmem>>, vector<64x64xf32>
    tpu.vector_store %arg6[%c0_41, %c0_42], %49 {strides = array<i32>} : memref<64x64xf32, #tpu.memory_space<vmem>>, vector<64x64xf32>,
    %51 = vector.extract_strided_slice %34 {offsets = [0, 2, 0], sizes = [8, 8, 32], strides = [1, 1, 1]} : vector<8x10x32xbf16> to vector<8x8x32xbf16>
    %52 = vector.shape_cast %51 : vector<8x8x32xbf16> to vector<64x32xbf16>
    %c0_43 = arith.constant 0 : index
    %c0_44 = arith.constant 0 : index
    %53 = vector.load %arg6[%c0_43, %c0_44] : memref<64x64xf32, #tpu.memory_space<vmem>>, vector<64x64xf32>
    %c5 = arith.constant 5 : index
    %c0_45 = arith.constant 0 : index
    %c0_46 = arith.constant 0 : index
    %54 = vector.load %arg3[%c5, %c0_45, %c0_46] : memref<9x32x64xbf16, #tpu.memory_space<vmem>>, vector<1x32x64xbf16>
    %55 = vector.shape_cast %54 : vector<1x32x64xbf16> to vector<32x64xbf16>
    %cst_47 = arith.constant dense<0.000000e+00> : vector<64x64xf32>
    %56 = tpu.matmul %52, %55, %cst_47 {dimension_numbers = #tpu.dot_dimension_numbers<[1], [0], [0], [1], [0, 0, 1, 1], [], []>} : vector<64x32xbf16>, vector<32x64xbf16>, vector<64x64xf32> -> vector<64x64xf32>
    %57 = arith.addf %53, %56 : vector<64x64xf32>
    %c0_48 = arith.constant 0 : index
    %c0_49 = arith.constant 0 : index
    %58 = vector.load %arg6[%c0_48, %c0_49] : memref<64x64xf32, #tpu.memory_space<vmem>>, vector<64x64xf32>
    tpu.vector_store %arg6[%c0_48, %c0_49], %57 {strides = array<i32>} : memref<64x64xf32, #tpu.memory_space<vmem>>, vector<64x64xf32>,
    %c2_i32 = arith.constant 2 : i32
    %59 = arith.addi %2, %c2_i32 : i32
    %c0_50 = arith.constant 0 : index
    %60 = arith.index_cast %59 : i32 to index
    %c0_51 = arith.constant 0 : index
    %c0_52 = arith.constant 0 : index
    %61 = vector.load %arg2[%c0_50, %60, %c0_51, %c0_52] : memref<1x10x10x32xbf16, #tpu.memory_space<vmem>>, vector<1x8x10x32xbf16>
    %62 = vector.shape_cast %61 : vector<1x8x10x32xbf16> to vector<8x10x32xbf16>
    %63 = vector.extract_strided_slice %62 {offsets = [0, 0, 0], sizes = [8, 8, 32], strides = [1, 1, 1]} : vector<8x10x32xbf16> to vector<8x8x32xbf16>
    %64 = vector.shape_cast %63 : vector<8x8x32xbf16> to vector<64x32xbf16>
    %c0_53 = arith.constant 0 : index
    %c0_54 = arith.constant 0 : index
    %65 = vector.load %arg6[%c0_53, %c0_54] : memref<64x64xf32, #tpu.memory_space<vmem>>, vector<64x64xf32>
    %c6 = arith.constant 6 : index
    %c0_55 = arith.constant 0 : index
    %c0_56 = arith.constant 0 : index
    %66 = vector.load %arg3[%c6, %c0_55, %c0_56] : memref<9x32x64xbf16, #tpu.memory_space<vmem>>, vector<1x32x64xbf16>
    %67 = vector.shape_cast %66 : vector<1x32x64xbf16> to vector<32x64xbf16>
    %cst_57 = arith.constant dense<0.000000e+00> : vector<64x64xf32>
    %68 = tpu.matmul %64, %67, %cst_57 {dimension_numbers = #tpu.dot_dimension_numbers<[1], [0], [0], [1], [0, 0, 1, 1], [], []>} : vector<64x32xbf16>, vector<32x64xbf16>, vector<64x64xf32> -> vector<64x64xf32>
    %69 = arith.addf %65, %68 : vector<64x64xf32>
    %c0_58 = arith.constant 0 : index
    %c0_59 = arith.constant 0 : index
    %70 = vector.load %arg6[%c0_58, %c0_59] : memref<64x64xf32, #tpu.memory_space<vmem>>, vector<64x64xf32>
    tpu.vector_store %arg6[%c0_58, %c0_59], %69 {strides = array<i32>} : memref<64x64xf32, #tpu.memory_space<vmem>>, vector<64x64xf32>,
    %71 = vector.extract_strided_slice %62 {offsets = [0, 1, 0], sizes = [8, 8, 32], strides = [1, 1, 1]} : vector<8x10x32xbf16> to vector<8x8x32xbf16>
    %72 = vector.shape_cast %71 : vector<8x8x32xbf16> to vector<64x32xbf16>
    %c0_60 = arith.constant 0 : index
    %c0_61 = arith.constant 0 : index
    %73 = vector.load %arg6[%c0_60, %c0_61] : memref<64x64xf32, #tpu.memory_space<vmem>>, vector<64x64xf32>
    %c7 = arith.constant 7 : index
    %c0_62 = arith.constant 0 : index
    %c0_63 = arith.constant 0 : index
    %74 = vector.load %arg3[%c7, %c0_62, %c0_63] : memref<9x32x64xbf16, #tpu.memory_space<vmem>>, vector<1x32x64xbf16>
    %75 = vector.shape_cast %74 : vector<1x32x64xbf16> to vector<32x64xbf16>
    %cst_64 = arith.constant dense<0.000000e+00> : vector<64x64xf32>
    %76 = tpu.matmul %72, %75, %cst_64 {dimension_numbers = #tpu.dot_dimension_numbers<[1], [0], [0], [1], [0, 0, 1, 1], [], []>} : vector<64x32xbf16>, vector<32x64xbf16>, vector<64x64xf32> -> vector<64x64xf32>
    %77 = arith.addf %73, %76 : vector<64x64xf32>
    %c0_65 = arith.constant 0 : index
    %c0_66 = arith.constant 0 : index
    %78 = vector.load %arg6[%c0_65, %c0_66] : memref<64x64xf32, #tpu.memory_space<vmem>>, vector<64x64xf32>
    tpu.vector_store %arg6[%c0_65, %c0_66], %77 {strides = array<i32>} : memref<64x64xf32, #tpu.memory_space<vmem>>, vector<64x64xf32>,
    %79 = vector.extract_strided_slice %62 {offsets = [0, 2, 0], sizes = [8, 8, 32], strides = [1, 1, 1]} : vector<8x10x32xbf16> to vector<8x8x32xbf16>
    %80 = vector.shape_cast %79 : vector<8x8x32xbf16> to vector<64x32xbf16>
    %c0_67 = arith.constant 0 : index
    %c0_68 = arith.constant 0 : index
    %81 = vector.load %arg6[%c0_67, %c0_68] : memref<64x64xf32, #tpu.memory_space<vmem>>, vector<64x64xf32>
    %c8 = arith.constant 8 : index
    %c0_69 = arith.constant 0 : index
    %c0_70 = arith.constant 0 : index
    %82 = vector.load %arg3[%c8, %c0_69, %c0_70] : memref<9x32x64xbf16, #tpu.memory_space<vmem>>, vector<1x32x64xbf16>
    %83 = vector.shape_cast %82 : vector<1x32x64xbf16> to vector<32x64xbf16>
    %cst_71 = arith.constant dense<0.000000e+00> : vector<64x64xf32>
    %84 = tpu.matmul %80, %83, %cst_71 {dimension_numbers = #tpu.dot_dimension_numbers<[1], [0], [0], [1], [0, 0, 1, 1], [], []>} : vector<64x32xbf16>, vector<32x64xbf16>, vector<64x64xf32> -> vector<64x64xf32>
    %85 = arith.addf %81, %84 : vector<64x64xf32>
    %c0_72 = arith.constant 0 : index
    %c0_73 = arith.constant 0 : index
    %86 = vector.load %arg6[%c0_72, %c0_73] : memref<64x64xf32, #tpu.memory_space<vmem>>, vector<64x64xf32>
    tpu.vector_store %arg6[%c0_72, %c0_73], %85 {strides = array<i32>} : memref<64x64xf32, #tpu.memory_space<vmem>>, vector<64x64xf32>,
    %c0_74 = arith.constant 0 : index
    %c0_75 = arith.constant 0 : index
    %87 = vector.load %arg6[%c0_74, %c0_75] : memref<64x64xf32, #tpu.memory_space<vmem>>, vector<64x64xf32>
    %c0_76 = arith.constant 0 : index
    %c0_77 = arith.constant 0 : index
    %88 = vector.load %arg4[%c0_76, %c0_77] : memref<1x64xf32, #tpu.memory_space<vmem>>, vector<1x64xf32>
    %89 = vector.broadcast %88 : vector<1x64xf32> to vector<64x64xf32>
    %90 = arith.addf %87, %89 : vector<64x64xf32>
    %cst_78 = arith.constant 0.000000e+00 : f32
    %91 = vector.broadcast %cst_78 : f32 to vector<64x64xf32>
    %92 = arith.maximumf %90, %91 : vector<64x64xf32>
    %93 = vector.shape_cast %92 : vector<64x64xf32> to vector<1x8x8x64xf32>
    %94 = arith.truncf %93 : vector<1x8x8x64xf32> to vector<1x8x8x64xbf16>
    %c0_79 = arith.constant 0 : index
    %c0_80 = arith.constant 0 : index
    %c0_81 = arith.constant 0 : index
    %c0_82 = arith.constant 0 : index
    %95 = vector.load %arg5[%c0_79, %c0_80, %c0_81, %c0_82] : memref<1x8x8x64xbf16, #tpu.memory_space<vmem>>, vector<1x8x8x64xbf16>
    tpu.vector_store %arg5[%c0_79, %c0_80, %c0_81, %c0_82], %94 {strides = array<i32>} : memref<1x8x8x64xbf16, #tpu.memory_space<vmem>>, vector<1x8x8x64xbf16>,
    return
  }
  func.func @transform_0(%arg0: i32, %arg1: i32) -> (i32, i32, i32, i32) {
    %c0_i32 = arith.constant 0 : i32
    %c0_i32_0 = arith.constant 0 : i32
    %c0_i32_1 = arith.constant 0 : i32
    %c0_i32_2 = arith.constant 0 : i32
    return %arg0, %c0_i32, %c0_i32_0, %c0_i32_1 : i32, i32, i32, i32
  }
  func.func @transform_1(%arg0: i32, %arg1: i32) -> (i32, i32, i32) {
    %c0_i32 = arith.constant 0 : i32
    %c0_i32_0 = arith.constant 0 : i32
    %c0_i32_1 = arith.constant 0 : i32
    %c0_i32_2 = arith.constant 0 : i32
    return %c0_i32, %c0_i32_0, %c0_i32_1 : i32, i32, i32
  }
  func.func @transform_2(%arg0: i32, %arg1: i32) -> (i32, i32) {
    %c0_i32 = arith.constant 0 : i32
    %c0_i32_0 = arith.constant 0 : i32
    %c0_i32_1 = arith.constant 0 : i32
    return %c0_i32, %c0_i32_0 : i32, i32
  }
  func.func @transform_3(%arg0: i32, %arg1: i32) -> (i32, i32, i32, i32) {
    %c0_i32 = arith.constant 0 : i32
    %c0_i32_0 = arith.constant 0 : i32
    %c0_i32_1 = arith.constant 0 : i32
    return %arg0, %arg1, %c0_i32, %c0_i32_0 : i32, i32, i32, i32
  }
}

module attributes {stable_mosaic.version = 11 : i64} {
  func.func @_maxpool_kernel(%arg0: i32, %arg1: i32, %arg2: memref<1x8x4x128xbf16, #tpu.memory_space<vmem>>, %arg3: memref<1x4x4x64xbf16, #tpu.memory_space<vmem>>) attributes {dimension_semantics = [#tpu.dimension_semantics<parallel>, #tpu.dimension_semantics<arbitrary>], iteration_bounds = array<i64: 2, 1>, scalar_prefetch = 0 : i64, scratch_operands = 0 : i64, tpu.core_type = #tpu.core_type<tc>, window_params = [{transform_indices = @transform_0, window_bounds = array<i64: 1, 8, 4, 128>}, {transform_indices = @transform_1, window_bounds = array<i64: 1, 4, 4, 64>}]} {
    %c0 = arith.constant 0 : index
    %c0_0 = arith.constant 0 : index
    %c0_1 = arith.constant 0 : index
    %c0_2 = arith.constant 0 : index
    %0 = vector.load %arg2[%c0, %c0_0, %c0_1, %c0_2] : memref<1x8x4x128xbf16, #tpu.memory_space<vmem>>, vector<1x1x4x128xbf16>
    %1 = vector.shape_cast %0 : vector<1x1x4x128xbf16> to vector<4x128xbf16>
    %c0_3 = arith.constant 0 : index
    %c1 = arith.constant 1 : index
    %c0_4 = arith.constant 0 : index
    %c0_5 = arith.constant 0 : index
    %2 = vector.load %arg2[%c0_3, %c1, %c0_4, %c0_5] : memref<1x8x4x128xbf16, #tpu.memory_space<vmem>>, vector<1x1x4x128xbf16>
    %3 = vector.shape_cast %2 : vector<1x1x4x128xbf16> to vector<4x128xbf16>
    %4 = arith.maximumf %1, %3 : vector<4x128xbf16>
    %5 = vector.extract_strided_slice %4 {offsets = [0, 0], sizes = [4, 64], strides = [1, 1]} : vector<4x128xbf16> to vector<4x64xbf16>
    %6 = vector.extract_strided_slice %4 {offsets = [0, 64], sizes = [4, 64], strides = [1, 1]} : vector<4x128xbf16> to vector<4x64xbf16>
    %7 = arith.maximumf %5, %6 : vector<4x64xbf16>
    %c0_6 = arith.constant 0 : index
    %c0_7 = arith.constant 0 : index
    %c0_8 = arith.constant 0 : index
    %c0_9 = arith.constant 0 : index
    %8 = vector.load %arg3[%c0_6, %c0_7, %c0_8, %c0_9] : memref<1x4x4x64xbf16, #tpu.memory_space<vmem>>, vector<1x1x4x64xbf16>
    %9 = vector.shape_cast %8 : vector<1x1x4x64xbf16> to vector<4x64xbf16>
    %10 = vector.shape_cast %7 : vector<4x64xbf16> to vector<1x1x4x64xbf16>
    tpu.vector_store %arg3[%c0_6, %c0_7, %c0_8, %c0_9], %10 {strides = array<i32>} : memref<1x4x4x64xbf16, #tpu.memory_space<vmem>>, vector<1x1x4x64xbf16>,
    %c0_10 = arith.constant 0 : index
    %c2 = arith.constant 2 : index
    %c0_11 = arith.constant 0 : index
    %c0_12 = arith.constant 0 : index
    %11 = vector.load %arg2[%c0_10, %c2, %c0_11, %c0_12] : memref<1x8x4x128xbf16, #tpu.memory_space<vmem>>, vector<1x1x4x128xbf16>
    %12 = vector.shape_cast %11 : vector<1x1x4x128xbf16> to vector<4x128xbf16>
    %c0_13 = arith.constant 0 : index
    %c3 = arith.constant 3 : index
    %c0_14 = arith.constant 0 : index
    %c0_15 = arith.constant 0 : index
    %13 = vector.load %arg2[%c0_13, %c3, %c0_14, %c0_15] : memref<1x8x4x128xbf16, #tpu.memory_space<vmem>>, vector<1x1x4x128xbf16>
    %14 = vector.shape_cast %13 : vector<1x1x4x128xbf16> to vector<4x128xbf16>
    %15 = arith.maximumf %12, %14 : vector<4x128xbf16>
    %16 = vector.extract_strided_slice %15 {offsets = [0, 0], sizes = [4, 64], strides = [1, 1]} : vector<4x128xbf16> to vector<4x64xbf16>
    %17 = vector.extract_strided_slice %15 {offsets = [0, 64], sizes = [4, 64], strides = [1, 1]} : vector<4x128xbf16> to vector<4x64xbf16>
    %18 = arith.maximumf %16, %17 : vector<4x64xbf16>
    %c0_16 = arith.constant 0 : index
    %c1_17 = arith.constant 1 : index
    %c0_18 = arith.constant 0 : index
    %c0_19 = arith.constant 0 : index
    %19 = vector.load %arg3[%c0_16, %c1_17, %c0_18, %c0_19] : memref<1x4x4x64xbf16, #tpu.memory_space<vmem>>, vector<1x1x4x64xbf16>
    %20 = vector.shape_cast %19 : vector<1x1x4x64xbf16> to vector<4x64xbf16>
    %21 = vector.shape_cast %18 : vector<4x64xbf16> to vector<1x1x4x64xbf16>
    tpu.vector_store %arg3[%c0_16, %c1_17, %c0_18, %c0_19], %21 {strides = array<i32>} : memref<1x4x4x64xbf16, #tpu.memory_space<vmem>>, vector<1x1x4x64xbf16>,
    %c0_20 = arith.constant 0 : index
    %c4 = arith.constant 4 : index
    %c0_21 = arith.constant 0 : index
    %c0_22 = arith.constant 0 : index
    %22 = vector.load %arg2[%c0_20, %c4, %c0_21, %c0_22] : memref<1x8x4x128xbf16, #tpu.memory_space<vmem>>, vector<1x1x4x128xbf16>
    %23 = vector.shape_cast %22 : vector<1x1x4x128xbf16> to vector<4x128xbf16>
    %c0_23 = arith.constant 0 : index
    %c5 = arith.constant 5 : index
    %c0_24 = arith.constant 0 : index
    %c0_25 = arith.constant 0 : index
    %24 = vector.load %arg2[%c0_23, %c5, %c0_24, %c0_25] : memref<1x8x4x128xbf16, #tpu.memory_space<vmem>>, vector<1x1x4x128xbf16>
    %25 = vector.shape_cast %24 : vector<1x1x4x128xbf16> to vector<4x128xbf16>
    %26 = arith.maximumf %23, %25 : vector<4x128xbf16>
    %27 = vector.extract_strided_slice %26 {offsets = [0, 0], sizes = [4, 64], strides = [1, 1]} : vector<4x128xbf16> to vector<4x64xbf16>
    %28 = vector.extract_strided_slice %26 {offsets = [0, 64], sizes = [4, 64], strides = [1, 1]} : vector<4x128xbf16> to vector<4x64xbf16>
    %29 = arith.maximumf %27, %28 : vector<4x64xbf16>
    %c0_26 = arith.constant 0 : index
    %c2_27 = arith.constant 2 : index
    %c0_28 = arith.constant 0 : index
    %c0_29 = arith.constant 0 : index
    %30 = vector.load %arg3[%c0_26, %c2_27, %c0_28, %c0_29] : memref<1x4x4x64xbf16, #tpu.memory_space<vmem>>, vector<1x1x4x64xbf16>
    %31 = vector.shape_cast %30 : vector<1x1x4x64xbf16> to vector<4x64xbf16>
    %32 = vector.shape_cast %29 : vector<4x64xbf16> to vector<1x1x4x64xbf16>
    tpu.vector_store %arg3[%c0_26, %c2_27, %c0_28, %c0_29], %32 {strides = array<i32>} : memref<1x4x4x64xbf16, #tpu.memory_space<vmem>>, vector<1x1x4x64xbf16>,
    %c0_30 = arith.constant 0 : index
    %c6 = arith.constant 6 : index
    %c0_31 = arith.constant 0 : index
    %c0_32 = arith.constant 0 : index
    %33 = vector.load %arg2[%c0_30, %c6, %c0_31, %c0_32] : memref<1x8x4x128xbf16, #tpu.memory_space<vmem>>, vector<1x1x4x128xbf16>
    %34 = vector.shape_cast %33 : vector<1x1x4x128xbf16> to vector<4x128xbf16>
    %c0_33 = arith.constant 0 : index
    %c7 = arith.constant 7 : index
    %c0_34 = arith.constant 0 : index
    %c0_35 = arith.constant 0 : index
    %35 = vector.load %arg2[%c0_33, %c7, %c0_34, %c0_35] : memref<1x8x4x128xbf16, #tpu.memory_space<vmem>>, vector<1x1x4x128xbf16>
    %36 = vector.shape_cast %35 : vector<1x1x4x128xbf16> to vector<4x128xbf16>
    %37 = arith.maximumf %34, %36 : vector<4x128xbf16>
    %38 = vector.extract_strided_slice %37 {offsets = [0, 0], sizes = [4, 64], strides = [1, 1]} : vector<4x128xbf16> to vector<4x64xbf16>
    %39 = vector.extract_strided_slice %37 {offsets = [0, 64], sizes = [4, 64], strides = [1, 1]} : vector<4x128xbf16> to vector<4x64xbf16>
    %40 = arith.maximumf %38, %39 : vector<4x64xbf16>
    %c0_36 = arith.constant 0 : index
    %c3_37 = arith.constant 3 : index
    %c0_38 = arith.constant 0 : index
    %c0_39 = arith.constant 0 : index
    %41 = vector.load %arg3[%c0_36, %c3_37, %c0_38, %c0_39] : memref<1x4x4x64xbf16, #tpu.memory_space<vmem>>, vector<1x1x4x64xbf16>
    %42 = vector.shape_cast %41 : vector<1x1x4x64xbf16> to vector<4x64xbf16>
    %43 = vector.shape_cast %40 : vector<4x64xbf16> to vector<1x1x4x64xbf16>
    tpu.vector_store %arg3[%c0_36, %c3_37, %c0_38, %c0_39], %43 {strides = array<i32>} : memref<1x4x4x64xbf16, #tpu.memory_space<vmem>>, vector<1x1x4x64xbf16>,
    return
  }
  func.func @transform_0(%arg0: i32, %arg1: i32) -> (i32, i32, i32, i32) {
    %c0_i32 = arith.constant 0 : i32
    %c0_i32_0 = arith.constant 0 : i32
    %c0_i32_1 = arith.constant 0 : i32
    return %arg0, %arg1, %c0_i32, %c0_i32_0 : i32, i32, i32, i32
  }
  func.func @transform_1(%arg0: i32, %arg1: i32) -> (i32, i32, i32, i32) {
    %c0_i32 = arith.constant 0 : i32
    %c0_i32_0 = arith.constant 0 : i32
    %c0_i32_1 = arith.constant 0 : i32
    return %arg0, %arg1, %c0_i32, %c0_i32_0 : i32, i32, i32, i32
  }
}

module attributes {stable_mosaic.version = 11 : i64} {
  func.func @kernel(%arg0: i32, %arg1: i32, %arg2: i32, %arg3: memref<8x512xbf16, #tpu.memory_space<vmem>>, %arg4: memref<512x128xbf16, #tpu.memory_space<vmem>>, %arg5: memref<1x128xf32, #tpu.memory_space<vmem>>, %arg6: memref<8x128xf32, #tpu.memory_space<vmem>>, %arg7: memref<8x128xf32, #tpu.memory_space<vmem>>) attributes {dimension_semantics = [#tpu.dimension_semantics<parallel>, #tpu.dimension_semantics<parallel>, #tpu.dimension_semantics<arbitrary>], iteration_bounds = array<i64: 1, 1, 2>, scalar_prefetch = 0 : i64, scratch_operands = 1 : i64, tpu.core_type = #tpu.core_type<tc>, window_params = [{transform_indices = @transform_0, window_bounds = array<i64: 8, 512>}, {transform_indices = @transform_1, window_bounds = array<i64: 512, 128>}, {transform_indices = @transform_2, window_bounds = array<i64: 1, 128>}, {transform_indices = @transform_3, window_bounds = array<i64: 8, 128>}]} {
    %c0_i32 = arith.constant 0 : i32
    %0 = arith.cmpi eq, %arg2, %c0_i32 : i32
    %1 = arith.extui %0 : i1 to i32
    %c0_i32_0 = arith.constant 0 : i32
    %2 = arith.cmpi ne, %1, %c0_i32_0 : i32
    scf.if %2 {
      %cst_9 = arith.constant 0.000000e+00 : f32
      %12 = vector.broadcast %cst_9 : f32 to vector<8x128xf32>
      %c0_10 = arith.constant 0 : index
      %c0_11 = arith.constant 0 : index
      %13 = vector.load %arg7[%c0_10, %c0_11] : memref<8x128xf32, #tpu.memory_space<vmem>>, vector<8x128xf32>
      tpu.vector_store %arg7[%c0_10, %c0_11], %12 {strides = array<i32>} : memref<8x128xf32, #tpu.memory_space<vmem>>, vector<8x128xf32>,
    } else {
    }
    %c0 = arith.constant 0 : index
    %c0_1 = arith.constant 0 : index
    %3 = vector.load %arg7[%c0, %c0_1] : memref<8x128xf32, #tpu.memory_space<vmem>>, vector<8x128xf32>
    %c0_2 = arith.constant 0 : index
    %c0_3 = arith.constant 0 : index
    %4 = vector.load %arg3[%c0_2, %c0_3] : memref<8x512xbf16, #tpu.memory_space<vmem>>, vector<8x512xbf16>
    %c0_4 = arith.constant 0 : index
    %c0_5 = arith.constant 0 : index
    %5 = vector.load %arg4[%c0_4, %c0_5] : memref<512x128xbf16, #tpu.memory_space<vmem>>, vector<512x128xbf16>
    %cst = arith.constant dense<0.000000e+00> : vector<8x128xf32>
    %6 = tpu.matmul %4, %5, %cst {dimension_numbers = #tpu.dot_dimension_numbers<[1], [0], [0], [1], [0, 0, 1, 1], [], []>} : vector<8x512xbf16>, vector<512x128xbf16>, vector<8x128xf32> -> vector<8x128xf32>
    %7 = arith.addf %3, %6 : vector<8x128xf32>
    %c0_6 = arith.constant 0 : index
    %c0_7 = arith.constant 0 : index
    %8 = vector.load %arg7[%c0_6, %c0_7] : memref<8x128xf32, #tpu.memory_space<vmem>>, vector<8x128xf32>
    tpu.vector_store %arg7[%c0_6, %c0_7], %7 {strides = array<i32>} : memref<8x128xf32, #tpu.memory_space<vmem>>, vector<8x128xf32>,
    %c1_i32 = arith.constant 1 : i32
    %9 = arith.cmpi eq, %arg2, %c1_i32 : i32
    %10 = arith.extui %9 : i1 to i32
    %c0_i32_8 = arith.constant 0 : i32
    %11 = arith.cmpi ne, %10, %c0_i32_8 : i32
    scf.if %11 {
      %c0_9 = arith.constant 0 : index
      %c0_10 = arith.constant 0 : index
      %12 = vector.load %arg7[%c0_9, %c0_10] : memref<8x128xf32, #tpu.memory_space<vmem>>, vector<8x128xf32>
      %c0_11 = arith.constant 0 : index
      %c0_12 = arith.constant 0 : index
      %13 = vector.load %arg5[%c0_11, %c0_12] : memref<1x128xf32, #tpu.memory_space<vmem>>, vector<1x128xf32>
      %14 = vector.broadcast %13 : vector<1x128xf32> to vector<8x128xf32>
      %15 = arith.addf %12, %14 : vector<8x128xf32>
      %cst_13 = arith.constant 0.000000e+00 : f32
      %16 = vector.broadcast %cst_13 : f32 to vector<8x128xf32>
      %17 = arith.maximumf %15, %16 : vector<8x128xf32>
      %c0_14 = arith.constant 0 : index
      %c0_15 = arith.constant 0 : index
      %18 = vector.load %arg6[%c0_14, %c0_15] : memref<8x128xf32, #tpu.memory_space<vmem>>, vector<8x128xf32>
      tpu.vector_store %arg6[%c0_14, %c0_15], %17 {strides = array<i32>} : memref<8x128xf32, #tpu.memory_space<vmem>>, vector<8x128xf32>,
    } else {
    }
    return
  }
  func.func @transform_0(%arg0: i32, %arg1: i32, %arg2: i32) -> (i32, i32) {
    %c0_i32 = arith.constant 0 : i32
    return %arg0, %arg2 : i32, i32
  }
  func.func @transform_1(%arg0: i32, %arg1: i32, %arg2: i32) -> (i32, i32) {
    %c0_i32 = arith.constant 0 : i32
    return %arg2, %arg1 : i32, i32
  }
  func.func @transform_2(%arg0: i32, %arg1: i32, %arg2: i32) -> (i32, i32) {
    %c0_i32 = arith.constant 0 : i32
    %c0_i32_0 = arith.constant 0 : i32
    return %c0_i32, %arg1 : i32, i32
  }
  func.func @transform_3(%arg0: i32, %arg1: i32, %arg2: i32) -> (i32, i32) {
    %c0_i32 = arith.constant 0 : i32
    return %arg0, %arg1 : i32, i32
  }
}

module attributes {stable_mosaic.version = 11 : i64} {
  func.func @kernel(%arg0: i32, %arg1: i32, %arg2: i32, %arg3: memref<8x128xbf16, #tpu.memory_space<vmem>>, %arg4: memref<128x128xbf16, #tpu.memory_space<vmem>>, %arg5: memref<1x128xf32, #tpu.memory_space<vmem>>, %arg6: memref<8x128xf32, #tpu.memory_space<vmem>>, %arg7: memref<8x128xf32, #tpu.memory_space<vmem>>) attributes {dimension_semantics = [#tpu.dimension_semantics<parallel>, #tpu.dimension_semantics<parallel>, #tpu.dimension_semantics<arbitrary>], iteration_bounds = array<i64: 1, 1, 1>, scalar_prefetch = 0 : i64, scratch_operands = 1 : i64, tpu.core_type = #tpu.core_type<tc>, window_params = [{transform_indices = @transform_0, window_bounds = array<i64: 8, 128>}, {transform_indices = @transform_1, window_bounds = array<i64: 128, 128>}, {transform_indices = @transform_2, window_bounds = array<i64: 1, 128>}, {transform_indices = @transform_3, window_bounds = array<i64: 8, 128>}]} {
    %c0_i32 = arith.constant 0 : i32
    %0 = arith.cmpi eq, %arg2, %c0_i32 : i32
    %1 = arith.extui %0 : i1 to i32
    %c0_i32_0 = arith.constant 0 : i32
    %2 = arith.cmpi ne, %1, %c0_i32_0 : i32
    scf.if %2 {
      %cst_10 = arith.constant 0.000000e+00 : f32
      %12 = vector.broadcast %cst_10 : f32 to vector<8x128xf32>
      %c0_11 = arith.constant 0 : index
      %c0_12 = arith.constant 0 : index
      %13 = vector.load %arg7[%c0_11, %c0_12] : memref<8x128xf32, #tpu.memory_space<vmem>>, vector<8x128xf32>
      tpu.vector_store %arg7[%c0_11, %c0_12], %12 {strides = array<i32>} : memref<8x128xf32, #tpu.memory_space<vmem>>, vector<8x128xf32>,
    } else {
    }
    %c0 = arith.constant 0 : index
    %c0_1 = arith.constant 0 : index
    %3 = vector.load %arg7[%c0, %c0_1] : memref<8x128xf32, #tpu.memory_space<vmem>>, vector<8x128xf32>
    %c0_2 = arith.constant 0 : index
    %c0_3 = arith.constant 0 : index
    %4 = vector.load %arg3[%c0_2, %c0_3] : memref<8x128xbf16, #tpu.memory_space<vmem>>, vector<8x128xbf16>
    %c0_4 = arith.constant 0 : index
    %c0_5 = arith.constant 0 : index
    %5 = vector.load %arg4[%c0_4, %c0_5] : memref<128x128xbf16, #tpu.memory_space<vmem>>, vector<128x128xbf16>
    %cst = arith.constant dense<0.000000e+00> : vector<8x128xf32>
    %6 = tpu.matmul %4, %5, %cst {dimension_numbers = #tpu.dot_dimension_numbers<[1], [0], [0], [1], [0, 0, 1, 1], [], []>} : vector<8x128xbf16>, vector<128x128xbf16>, vector<8x128xf32> -> vector<8x128xf32>
    %7 = arith.addf %3, %6 : vector<8x128xf32>
    %c0_6 = arith.constant 0 : index
    %c0_7 = arith.constant 0 : index
    %8 = vector.load %arg7[%c0_6, %c0_7] : memref<8x128xf32, #tpu.memory_space<vmem>>, vector<8x128xf32>
    tpu.vector_store %arg7[%c0_6, %c0_7], %7 {strides = array<i32>} : memref<8x128xf32, #tpu.memory_space<vmem>>, vector<8x128xf32>,
    %c0_i32_8 = arith.constant 0 : i32
    %9 = arith.cmpi eq, %arg2, %c0_i32_8 : i32
    %10 = arith.extui %9 : i1 to i32
    %c0_i32_9 = arith.constant 0 : i32
    %11 = arith.cmpi ne, %10, %c0_i32_9 : i32
    scf.if %11 {
      %c0_10 = arith.constant 0 : index
      %c0_11 = arith.constant 0 : index
      %12 = vector.load %arg7[%c0_10, %c0_11] : memref<8x128xf32, #tpu.memory_space<vmem>>, vector<8x128xf32>
      %c0_12 = arith.constant 0 : index
      %c0_13 = arith.constant 0 : index
      %13 = vector.load %arg5[%c0_12, %c0_13] : memref<1x128xf32, #tpu.memory_space<vmem>>, vector<1x128xf32>
      %14 = vector.broadcast %13 : vector<1x128xf32> to vector<8x128xf32>
      %15 = arith.addf %12, %14 : vector<8x128xf32>
      %c0_14 = arith.constant 0 : index
      %c0_15 = arith.constant 0 : index
      %16 = vector.load %arg6[%c0_14, %c0_15] : memref<8x128xf32, #tpu.memory_space<vmem>>, vector<8x128xf32>
      tpu.vector_store %arg6[%c0_14, %c0_15], %15 {strides = array<i32>} : memref<8x128xf32, #tpu.memory_space<vmem>>, vector<8x128xf32>,
    } else {
    }
    return
  }
  func.func @transform_0(%arg0: i32, %arg1: i32, %arg2: i32) -> (i32, i32) {
    %c0_i32 = arith.constant 0 : i32
    return %arg0, %arg2 : i32, i32
  }
  func.func @transform_1(%arg0: i32, %arg1: i32, %arg2: i32) -> (i32, i32) {
    %c0_i32 = arith.constant 0 : i32
    return %arg2, %arg1 : i32, i32
  }
  func.func @transform_2(%arg0: i32, %arg1: i32, %arg2: i32) -> (i32, i32) {
    %c0_i32 = arith.constant 0 : i32
    %c0_i32_0 = arith.constant 0 : i32
    return %c0_i32, %arg1 : i32, i32
  }
  func.func @transform_3(%arg0: i32, %arg1: i32, %arg2: i32) -> (i32, i32) {
    %c0_i32 = arith.constant 0 : i32
    return %arg0, %arg1 : i32, i32
  }
}

</mosaic_0001>

<llo_original>
// kernel: cnn_forward.7
$region0: #{cnn_forward.7}
  #allocation0 [shape = 'u32[]', space=smem, size = 0x4, offset = 0x4, fixed_abs, tag = 'smem constant byte address 0x4 - core index']
  #allocation1 [shape = 'u32[144,128]{1,0:T(1,128)}', space=vmem, size = 0x12000, scoped, tag = 'internal scratch']
  %s0 = inlined_call_operand.vmem [shape: bf16[2,16,8,64], index: 0, kind: input, shape index: {}]
  %s1 = inlined_call_operand.vmem [shape: bf16[2,8,8,32], index: 1, kind: output, shape index: {}]
  %s2 = sld [smem:[#allocation0]]
  $region37: #{cnn_forward.7} parent=0
    _
  %s4 = ssub.s32 1, %s2
  %s5 = scalar_select 0, %s4, %s2
  loop: start=0, step=1, limit=4
  $region2: #{cnn_forward.7} parent=0 // loop_pre_header
    _
  $region3: #{cnn_forward.7} parent=0 // loop_header
    %s7 = sphi 0, %s11
    %p8 = scmp.ge.s32.totalorder %s7, 4
    %s14 = sphi 0, %s26
    %s15 = sphi 0, %s22
    %s16 = sphi 0, %s14
    %s17 = sphi 0, %s15
    %s18 = sphi 0, %s16
    %s19 = sphi 0, %s17
    %s31 = sphi 0, %s33
    %s34 = sphi 0, %s31
    %s35 = sphi 0, %s34
    %s51 = sphi 0, %s35
    %s59 = sphi 0, %s61
    %s62 = sphi 0, %s59
    %s63 = sphi 0, %s62
    %s79 = sphi 0, %s63
  $region4: #{cnn_forward.7} parent=0 // loop_header_branch
    %10 = sbr.rel (%p8) target = $region8
  $region5: #{cnn_forward.7} parent=0 // loop_body
    %s12 = ssub.s32 %s7, 1
    %s13 = ssub.s32 %s7, 2
    %s20 = sadd.s32 1, %s15
    %p21 = scmp.ge.s32.totalorder %s20, 1
    %s22 = scalar_select %p21, 0, %s20
    %s23 = sadd.s32 1, %s14
    %s24 = scalar_select %p21, %s23, %s14
    %p25 = scmp.ge.s32.totalorder %s24, 2
    %s26 = scalar_select %p25, 0, %s24
    %s27 = ssub.s32 %s14, %s26
    %s28 = ssub.s32 %s15, %s22
    %s29 = sor.u32 %s27, %s28
    %p30 = scmp.eq.s32.totalorder %s29, 0
    %s32 = sadd.s32 %s31, 1
    %s33 = scalar_select %p30, %s31, %s32
    %p36 = pneg %p30
    %p37 = scmp.eq.s32.totalorder %s7, 1
    %p38 = por %p36, %p37
    %p39 = scmp.ne.s32.totalorder %s31, %s34
    %p40 = scmp.eq.s32.totalorder %s7, 0
    %p41 = por %p39, %p40
    %p42 = scmp.ne.s32.totalorder %s31, %s34
    %p43 = scmp.eq.s32.totalorder %s12, 1
    %p44 = por %p42, %p43
    %p45 = scmp.ne.s32.totalorder %s34, %s35
    %p46 = scmp.eq.s32.totalorder %s12, 0
    %p47 = por %p45, %p46
    %p48 = scmp.ne.s32.totalorder %s34, %s35
    %p49 = scmp.eq.s32.totalorder %s13, 1
    %p50 = por %p48, %p49
    %p52 = scmp.ne.s32.totalorder %s35, %s51
    %p53 = scmp.eq.s32.totalorder %s13, 0
    %p54 = por %p52, %p53
    %s55 = ssub.s32 %s14, %s26
    %s56 = ssub.s32 %s15, %s22
    %s57 = sor.u32 %s55, %s56
    %p58 = scmp.eq.s32.totalorder %s57, 0
    %s60 = sadd.s32 %s59, 1
    %s61 = scalar_select %p58, %s59, %s60
    %p64 = pneg %p58
    %p65 = scmp.eq.s32.totalorder %s7, 1
    %p66 = por %p64, %p65
    %p67 = scmp.ne.s32.totalorder %s59, %s62
    %p68 = scmp.eq.s32.totalorder %s7, 0
    %p69 = por %p67, %p68
    %p70 = scmp.ne.s32.totalorder %s59, %s62
    %p71 = scmp.eq.s32.totalorder %s12, 1
    %p72 = por %p70, %p71
    %p73 = scmp.ne.s32.totalorder %s62, %s63
    %p74 = scmp.eq.s32.totalorder %s12, 0
    %p75 = por %p73, %p74
    %p76 = scmp.ne.s32.totalorder %s62, %s63
    %p77 = scmp.eq.s32.totalorder %s13, 1
    %p78 = por %p76, %p77
    %p80 = scmp.ne.s32.totalorder %s63, %s79
    %p81 = scmp.eq.s32.totalorder %s13, 0
    %p82 = por %p80, %p81
    %p83 = scmp.le.s32.totalorder 1, %s7
    %p84 = scmp.lt.s32.totalorder %s7, 3
    %p85 = pnand %p83, %p84
    %p86 = pneg %p85
    // Predicated region
    $region9: #{cnn_forward.7} parent=5 // pred_check
      _
    $region10: #{cnn_forward.7} parent=5 // pred_check_branch
      %88 = sbr.rel (%p85) target = $region12
    $region11: #{cnn_forward.7} parent=5 // pred_region
      %s89 = ssub.s32 %s7, 1
    $region12: #{cnn_forward.7} parent=5 // pred_fallthru
      _
    %p90 = scmp.lt.s32.totalorder %s7, 2
    // Predicated region
    $region13: #{cnn_forward.7} parent=5 // pred_check
      %p91 = pneg %p90
    $region14: #{cnn_forward.7} parent=5 // pred_check_branch
      %93 = sbr.rel (%p91) target = $region16
    $region15: #{cnn_forward.7} parent=5 // pred_region
      // Predicated region
      $region17: #{cnn_forward.7} parent=15 // pred_check
        %p94 = pneg %p41
      $region18: #{cnn_forward.7} parent=15 // pred_check_branch
        %96 = sbr.rel (%p94) target = $region20
      $region19: #{cnn_forward.7} parent=15 // pred_region
        %s97 = smul.u32 16, %s15
        %p98 = scmp.lt.s32.totalorder %s14, 1
        %s99 = scalar_select %p98, %s14, 1
        %p100 = scmp.lt.s32.totalorder %s97, 15
        %s101 = scalar_select %p100, %s97, 15
        %s102 = smul.addr %s99, 16
        %s103 = sadd.s32 %s101, %s102
        %s104 = smul.addr %s103, 4
        %s105 = scalar_lea.vmem %s0, %s104
        %s106 = smul.u32 16, %s15
      $region20: #{cnn_forward.7} parent=15 // pred_fallthru
        _
    $region16: #{cnn_forward.7} parent=5 // pred_fallthru
      _
    %p107 = scmp.le.s32.totalorder 1, %s7
    %p108 = scmp.lt.s32.totalorder %s7, 3
    %p109 = pnand %p107, %p108
    %p110 = pneg %p109
    // Predicated region
    $region21: #{cnn_forward.7} parent=5 // pred_check
      _
    $region22: #{cnn_forward.7} parent=5 // pred_check_branch
      %112 = sbr.rel (%p109) target = $region24
    $region23: #{cnn_forward.7} parent=5 // pred_region
      %s113 = ssub.s32 %s7, 1
      %s114 = smul.u32 16, %s17
      %p115 = scmp.lt.s32.totalorder %s16, 1
      %s116 = scalar_select %p115, %s16, 1
      %p117 = scmp.lt.s32.totalorder %s114, 15
      %s118 = scalar_select %p117, %s114, 15
      %s119 = smul.addr %s116, 16
      %s120 = sadd.s32 %s118, %s119
      %s121 = smul.addr %s120, 4
      %s122 = scalar_lea.vmem %s0, %s121
      %p123 = pneg %p47
      %p124 = pneg %p44
      %p125 = pneg %p75
      %p126 = pneg %p72
      %s127 = smul.u32 8, %s17
      %p128 = scmp.lt.s32.totalorder %s16, 1
      %s129 = scalar_select %p128, %s16, 1
      %p130 = scmp.lt.s32.totalorder %s127, 7
      %s131 = scalar_select %p130, %s127, 7
      %s132 = smul.addr %s129, 8
      %s133 = sadd.s32 %s131, %s132
      %s134 = smul.addr %s133, 4
      %s135 = scalar_lea.vmem %s1, %s134
      %s136 = smul.u32 16, %s17
      %p137 = scmp.lt.s32.totalorder %s16, 1
      %s138 = scalar_select %p137, %s16, 1
      %p139 = scmp.lt.s32.totalorder %s136, 15
      %s140 = scalar_select %p139, %s136, 15
      %s141 = smul.addr %s138, 16
      %s142 = sadd.s32 %s140, %s141
      %s143 = smul.addr %s142, 4
      %s144 = scalar_lea.vmem %s0, %s143
      %s145 = smul.u32 16, %s17
      %s146 = smul.u32 8, %s17
      %p147 = scmp.lt.s32.totalorder %s16, 1
      %s148 = scalar_select %p147, %s16, 1
      %p149 = scmp.lt.s32.totalorder %s146, 7
      %s150 = scalar_select %p149, %s146, 7
      %s151 = smul.addr %s148, 8
      %s152 = sadd.s32 %s150, %s151
      %s153 = smul.addr %s152, 4
      %s154 = scalar_lea.vmem %s1, %s153
      %s155 = smul.u32 8, %s17
      %v156 = vld [vmem:[%s144] sm:$0xf]
      %s157 = scalar_lea.vmem %s144, 4
      %v158 = vld [vmem:[%s157] sm:$0xf]
      %v159 = vmax.bf16 %v156, %v158
      %161 = vrot.lane.b32.xlu0 %v159, 96
      %v162 = vpop.permute.xlu0 %161
      %v164 = vmax.bf16 %v159, %v162
      %vm165 = vcmask 257024
      %166 = vst.msk [vmem:[%s154] sm:$0xf] %vm165, %v164
      %s167 = scalar_lea.vmem %s144, 8
      %v168 = vld [vmem:[%s167] sm:$0xf]
      %s169 = scalar_lea.vmem %s144, 12
      %v170 = vld [vmem:[%s169] sm:$0xf]
      %v171 = vmax.bf16 %v168, %v170
      %173 = vrot.lane.b32.xlu0 %v171, 96
      %v174 = vpop.permute.xlu0 %173
      %v176 = vmax.bf16 %v171, %v174
      %s177 = scalar_lea.vmem %s154, 4
      %178 = vst.msk [vmem:[%s177] sm:$0xf] %vm165, %v176
      %s179 = scalar_lea.vmem %s144, 16
      %v180 = vld [vmem:[%s179] sm:$0xf]
      %s181 = scalar_lea.vmem %s144, 20
      %v182 = vld [vmem:[%s181] sm:$0xf]
      %v183 = vmax.bf16 %v180, %v182
      %185 = vrot.lane.b32.xlu0 %v183, 96
      %v186 = vpop.permute.xlu0 %185
      %v188 = vmax.bf16 %v183, %v186
      %s189 = scalar_lea.vmem %s154, 8
      %190 = vst.msk [vmem:[%s189] sm:$0xf] %vm165, %v188
      %s191 = scalar_lea.vmem %s144, 24
      %v192 = vld [vmem:[%s191] sm:$0xf]
      %s193 = scalar_lea.vmem %s144, 28
      %v194 = vld [vmem:[%s193] sm:$0xf]
      %v195 = vmax.bf16 %v192, %v194
      %197 = vrot.lane.b32.xlu0 %v195, 96
      %v198 = vpop.permute.xlu0 %197
      %v200 = vmax.bf16 %v195, %v198
      %s201 = scalar_lea.vmem %s154, 12
      %202 = vst.msk [vmem:[%s201] sm:$0xf] %vm165, %v200
      %s203 = scalar_lea.vmem %s144, 32
      %v204 = vld [vmem:[%s203] sm:$0xf]
      %s205 = scalar_lea.vmem %s144, 36
      %v206 = vld [vmem:[%s205] sm:$0xf]
      %v207 = vmax.bf16 %v204, %v206
      %209 = vrot.lane.b32.xlu0 %v207, 96
      %v210 = vpop.permute.xlu0 %209
      %v212 = vmax.bf16 %v207, %v210
      %s213 = scalar_lea.vmem %s154, 16
      %214 = vst.msk [vmem:[%s213] sm:$0xf] %vm165, %v212
      %s215 = scalar_lea.vmem %s144, 40
      %v216 = vld [vmem:[%s215] sm:$0xf]
      %s217 = scalar_lea.vmem %s144, 44
      %v218 = vld [vmem:[%s217] sm:$0xf]
      %v219 = vmax.bf16 %v216, %v218
      %221 = vrot.lane.b32.xlu0 %v219, 96
      %v222 = vpop.permute.xlu0 %221
      %v224 = vmax.bf16 %v219, %v222
      %s225 = scalar_lea.vmem %s154, 20
      %226 = vst.msk [vmem:[%s225] sm:$0xf] %vm165, %v224
      %s227 = scalar_lea.vmem %s144, 48
      %v228 = vld [vmem:[%s227] sm:$0xf]
      %s229 = scalar_lea.vmem %s144, 52
      %v230 = vld [vmem:[%s229] sm:$0xf]
      %v231 = vmax.bf16 %v228, %v230
      %233 = vrot.lane.b32.xlu0 %v231, 96
      %v234 = vpop.permute.xlu0 %233
      %v236 = vmax.bf16 %v231, %v234
      %s237 = scalar_lea.vmem %s154, 24
      %238 = vst.msk [vmem:[%s237] sm:$0xf] %vm165, %v236
      %s239 = scalar_lea.vmem %s144, 56
      %v240 = vld [vmem:[%s239] sm:$0xf]
      %s241 = scalar_lea.vmem %s144, 60
      %v242 = vld [vmem:[%s241] sm:$0xf]
      %v243 = vmax.bf16 %v240, %v242
      %245 = vrot.lane.b32.xlu0 %v243, 96
      %v246 = vpop.permute.xlu0 %245
      %v248 = vmax.bf16 %v243, %v246
      %s249 = scalar_lea.vmem %s154, 28
      %250 = vst.msk [vmem:[%s249] sm:$0xf] %vm165, %v248
      %s251 = smul.u32 8, %s17
      %p252 = scmp.lt.s32.totalorder %s16, 1
      %s253 = scalar_select %p252, %s16, 1
      %p254 = scmp.lt.s32.totalorder %s251, 7
      %s255 = scalar_select %p254, %s251, 7
      %s256 = smul.addr %s253, 8
      %s257 = sadd.s32 %s255, %s256
      %s258 = smul.addr %s257, 4
      %s259 = scalar_lea.vmem %s1, %s258
      // Predicated region
      $region25: #{cnn_forward.7} parent=23 // pred_check
        %p260 = pneg %p72
      $region26: #{cnn_forward.7} parent=23 // pred_check_branch
        %262 = sbr.rel (%p260) target = $region28
      $region27: #{cnn_forward.7} parent=23 // pred_region
        %s263 = smul.u32 8, %s17
      $region28: #{cnn_forward.7} parent=23 // pred_fallthru
        _
    $region24: #{cnn_forward.7} parent=5 // pred_fallthru
      _
    %p264 = scmp.le.s32.totalorder 2, %s7
    // Predicated region
    $region29: #{cnn_forward.7} parent=5 // pred_check
      %p265 = pneg %p264
    $region30: #{cnn_forward.7} parent=5 // pred_check_branch
      %267 = sbr.rel (%p265) target = $region32
    $region31: #{cnn_forward.7} parent=5 // pred_region
      %s268 = ssub.s32 %s7, 2
      // Predicated region
      $region33: #{cnn_forward.7} parent=31 // pred_check
        %p269 = pneg %p78
      $region34: #{cnn_forward.7} parent=31 // pred_check_branch
        %271 = sbr.rel (%p269) target = $region36
      $region35: #{cnn_forward.7} parent=31 // pred_region
        %s272 = smul.u32 8, %s19
        %p273 = scmp.lt.s32.totalorder %s18, 1
        %s274 = scalar_select %p273, %s18, 1
        %p275 = scmp.lt.s32.totalorder %s272, 7
        %s276 = scalar_select %p275, %s272, 7
        %s277 = smul.addr %s274, 8
        %s278 = sadd.s32 %s276, %s277
        %s279 = smul.addr %s278, 4
        %s280 = scalar_lea.vmem %s1, %s279
      $region36: #{cnn_forward.7} parent=31 // pred_fallthru
        _
    $region32: #{cnn_forward.7} parent=5 // pred_fallthru
      _
  $region6: #{cnn_forward.7} parent=0 // loop_footer
    %s11 = sadd.s32 1, %s7
  $region7: #{cnn_forward.7} parent=0 // loop_footer_branch
    %6 = sbr.rel target = $region3
  $region8: #{cnn_forward.7} parent=0 // loop_exit
    _

// kernel: cnn_forward.9
$region0: #{cnn_forward.9}
  #allocation0 [shape = 'u32[]', space=smem, size = 0x4, offset = 0x4, fixed_abs, tag = 'smem constant byte address 0x4 - core index']
  #allocation1 [shape = 'u32[144,128]{1,0:T(1,128)}', space=vmem, size = 0x12000, scoped, tag = 'internal scratch']
  %s0 = inlined_call_operand.vmem [shape: bf16[2,8,4,128], index: 0, kind: input, shape index: {}]
  %s1 = inlined_call_operand.vmem [shape: bf16[2,4,4,64], index: 1, kind: output, shape index: {}]
  %s2 = sld [smem:[#allocation0]]
  $region37: #{cnn_forward.9} parent=0
    _
  %s4 = ssub.s32 1, %s2
  %s5 = scalar_select 0, %s4, %s2
  loop: start=0, step=1, limit=4
  $region2: #{cnn_forward.9} parent=0 // loop_pre_header
    _
  $region3: #{cnn_forward.9} parent=0 // loop_header
    %s7 = sphi 0, %s11
    %p8 = scmp.ge.s32.totalorder %s7, 4
    %s14 = sphi 0, %s26
    %s15 = sphi 0, %s22
    %s16 = sphi 0, %s14
    %s17 = sphi 0, %s15
    %s18 = sphi 0, %s16
    %s19 = sphi 0, %s17
    %s31 = sphi 0, %s33
    %s34 = sphi 0, %s31
    %s35 = sphi 0, %s34
    %s51 = sphi 0, %s35
    %s59 = sphi 0, %s61
    %s62 = sphi 0, %s59
    %s63 = sphi 0, %s62
    %s79 = sphi 0, %s63
  $region4: #{cnn_forward.9} parent=0 // loop_header_branch
    %10 = sbr.rel (%p8) target = $region8
  $region5: #{cnn_forward.9} parent=0 // loop_body
    %s12 = ssub.s32 %s7, 1
    %s13 = ssub.s32 %s7, 2
    %s20 = sadd.s32 1, %s15
    %p21 = scmp.ge.s32.totalorder %s20, 1
    %s22 = scalar_select %p21, 0, %s20
    %s23 = sadd.s32 1, %s14
    %s24 = scalar_select %p21, %s23, %s14
    %p25 = scmp.ge.s32.totalorder %s24, 2
    %s26 = scalar_select %p25, 0, %s24
    %s27 = ssub.s32 %s14, %s26
    %s28 = ssub.s32 %s15, %s22
    %s29 = sor.u32 %s27, %s28
    %p30 = scmp.eq.s32.totalorder %s29, 0
    %s32 = sadd.s32 %s31, 1
    %s33 = scalar_select %p30, %s31, %s32
    %p36 = pneg %p30
    %p37 = scmp.eq.s32.totalorder %s7, 1
    %p38 = por %p36, %p37
    %p39 = scmp.ne.s32.totalorder %s31, %s34
    %p40 = scmp.eq.s32.totalorder %s7, 0
    %p41 = por %p39, %p40
    %p42 = scmp.ne.s32.totalorder %s31, %s34
    %p43 = scmp.eq.s32.totalorder %s12, 1
    %p44 = por %p42, %p43
    %p45 = scmp.ne.s32.totalorder %s34, %s35
    %p46 = scmp.eq.s32.totalorder %s12, 0
    %p47 = por %p45, %p46
    %p48 = scmp.ne.s32.totalorder %s34, %s35
    %p49 = scmp.eq.s32.totalorder %s13, 1
    %p50 = por %p48, %p49
    %p52 = scmp.ne.s32.totalorder %s35, %s51
    %p53 = scmp.eq.s32.totalorder %s13, 0
    %p54 = por %p52, %p53
    %s55 = ssub.s32 %s14, %s26
    %s56 = ssub.s32 %s15, %s22
    %s57 = sor.u32 %s55, %s56
    %p58 = scmp.eq.s32.totalorder %s57, 0
    %s60 = sadd.s32 %s59, 1
    %s61 = scalar_select %p58, %s59, %s60
    %p64 = pneg %p58
    %p65 = scmp.eq.s32.totalorder %s7, 1
    %p66 = por %p64, %p65
    %p67 = scmp.ne.s32.totalorder %s59, %s62
    %p68 = scmp.eq.s32.totalorder %s7, 0
    %p69 = por %p67, %p68
    %p70 = scmp.ne.s32.totalorder %s59, %s62
    %p71 = scmp.eq.s32.totalorder %s12, 1
    %p72 = por %p70, %p71
    %p73 = scmp.ne.s32.totalorder %s62, %s63
    %p74 = scmp.eq.s32.totalorder %s12, 0
    %p75 = por %p73, %p74
    %p76 = scmp.ne.s32.totalorder %s62, %s63
    %p77 = scmp.eq.s32.totalorder %s13, 1
    %p78 = por %p76, %p77
    %p80 = scmp.ne.s32.totalorder %s63, %s79
    %p81 = scmp.eq.s32.totalorder %s13, 0
    %p82 = por %p80, %p81
    %p83 = scmp.le.s32.totalorder 1, %s7
    %p84 = scmp.lt.s32.totalorder %s7, 3
    %p85 = pnand %p83, %p84
    %p86 = pneg %p85
    // Predicated region
    $region9: #{cnn_forward.9} parent=5 // pred_check
      _
    $region10: #{cnn_forward.9} parent=5 // pred_check_branch
      %88 = sbr.rel (%p85) target = $region12
    $region11: #{cnn_forward.9} parent=5 // pred_region
      %s89 = ssub.s32 %s7, 1
    $region12: #{cnn_forward.9} parent=5 // pred_fallthru
      _
    %p90 = scmp.lt.s32.totalorder %s7, 2
    // Predicated region
    $region13: #{cnn_forward.9} parent=5 // pred_check
      %p91 = pneg %p90
    $region14: #{cnn_forward.9} parent=5 // pred_check_branch
      %93 = sbr.rel (%p91) target = $region16
    $region15: #{cnn_forward.9} parent=5 // pred_region
      // Predicated region
      $region17: #{cnn_forward.9} parent=15 // pred_check
        %p94 = pneg %p41
      $region18: #{cnn_forward.9} parent=15 // pred_check_branch
        %96 = sbr.rel (%p94) target = $region20
      $region19: #{cnn_forward.9} parent=15 // pred_region
        %s97 = smul.u32 8, %s15
        %p98 = scmp.lt.s32.totalorder %s14, 1
        %s99 = scalar_select %p98, %s14, 1
        %p100 = scmp.lt.s32.totalorder %s97, 7
        %s101 = scalar_select %p100, %s97, 7
        %s102 = smul.addr %s99, 8
        %s103 = sadd.s32 %s101, %s102
        %s104 = smul.addr %s103, 2
        %s105 = scalar_lea.vmem %s0, %s104
        %s106 = smul.u32 8, %s15
      $region20: #{cnn_forward.9} parent=15 // pred_fallthru
        _
    $region16: #{cnn_forward.9} parent=5 // pred_fallthru
      _
    %p107 = scmp.le.s32.totalorder 1, %s7
    %p108 = scmp.lt.s32.totalorder %s7, 3
    %p109 = pnand %p107, %p108
    %p110 = pneg %p109
    // Predicated region
    $region21: #{cnn_forward.9} parent=5 // pred_check
      _
    $region22: #{cnn_forward.9} parent=5 // pred_check_branch
      %112 = sbr.rel (%p109) target = $region24
    $region23: #{cnn_forward.9} parent=5 // pred_region
      %s113 = ssub.s32 %s7, 1
      %s114 = smul.u32 8, %s17
      %p115 = scmp.lt.s32.totalorder %s16, 1
      %s116 = scalar_select %p115, %s16, 1
      %p117 = scmp.lt.s32.totalorder %s114, 7
      %s118 = scalar_select %p117, %s114, 7
      %s119 = smul.addr %s116, 8
      %s120 = sadd.s32 %s118, %s119
      %s121 = smul.addr %s120, 2
      %s122 = scalar_lea.vmem %s0, %s121
      %p123 = pneg %p47
      %p124 = pneg %p44
      %p125 = pneg %p75
      %p126 = pneg %p72
      %s127 = smul.u32 4, %s17
      %p128 = scmp.lt.s32.totalorder %s16, 1
      %s129 = scalar_select %p128, %s16, 1
      %p130 = scmp.lt.s32.totalorder %s127, 3
      %s131 = scalar_select %p130, %s127, 3
      %s132 = smul.addr %s129, 4
      %s133 = sadd.s32 %s131, %s132
      %s134 = smul.addr %s133, 2
      %s135 = scalar_lea.vmem %s1, %s134
      %s136 = smul.u32 8, %s17
      %p137 = scmp.lt.s32.totalorder %s16, 1
      %s138 = scalar_select %p137, %s16, 1
      %p139 = scmp.lt.s32.totalorder %s136, 7
      %s140 = scalar_select %p139, %s136, 7
      %s141 = smul.addr %s138, 8
      %s142 = sadd.s32 %s140, %s141
      %s143 = smul.addr %s142, 2
      %s144 = scalar_lea.vmem %s0, %s143
      %s145 = smul.u32 8, %s17
      %s146 = smul.u32 4, %s17
      %p147 = scmp.lt.s32.totalorder %s16, 1
      %s148 = scalar_select %p147, %s16, 1
      %p149 = scmp.lt.s32.totalorder %s146, 3
      %s150 = scalar_select %p149, %s146, 3
      %s151 = smul.addr %s148, 4
      %s152 = sadd.s32 %s150, %s151
      %s153 = smul.addr %s152, 2
      %s154 = scalar_lea.vmem %s1, %s153
      %s155 = smul.u32 4, %s17
      %v156 = vld [vmem:[%s144] sm:$0x3]
      %s157 = scalar_lea.vmem %s144, 2
      %v158 = vld [vmem:[%s157] sm:$0x3]
      %v159 = vmax.bf16 %v156, %v158
      %161 = vrot.lane.b32.xlu0 %v159, 64
      %v162 = vpop.permute.xlu0 %161
      %v164 = vmax.bf16 %v159, %v162
      %vm165 = vcmask 517120
      %166 = vst.msk [vmem:[%s154] sm:$0x3] %vm165, %v164
      %s167 = scalar_lea.vmem %s144, 4
      %v168 = vld [vmem:[%s167] sm:$0x3]
      %s169 = scalar_lea.vmem %s144, 6
      %v170 = vld [vmem:[%s169] sm:$0x3]
      %v171 = vmax.bf16 %v168, %v170
      %173 = vrot.lane.b32.xlu0 %v171, 64
      %v174 = vpop.permute.xlu0 %173
      %v176 = vmax.bf16 %v171, %v174
      %s177 = scalar_lea.vmem %s154, 2
      %178 = vst.msk [vmem:[%s177] sm:$0x3] %vm165, %v176
      %s179 = scalar_lea.vmem %s144, 8
      %v180 = vld [vmem:[%s179] sm:$0x3]
      %s181 = scalar_lea.vmem %s144, 10
      %v182 = vld [vmem:[%s181] sm:$0x3]
      %v183 = vmax.bf16 %v180, %v182
      %185 = vrot.lane.b32.xlu0 %v183, 64
      %v186 = vpop.permute.xlu0 %185
      %v188 = vmax.bf16 %v183, %v186
      %s189 = scalar_lea.vmem %s154, 4
      %190 = vst.msk [vmem:[%s189] sm:$0x3] %vm165, %v188
      %s191 = scalar_lea.vmem %s144, 12
      %v192 = vld [vmem:[%s191] sm:$0x3]
      %s193 = scalar_lea.vmem %s144, 14
      %v194 = vld [vmem:[%s193] sm:$0x3]
      %v195 = vmax.bf16 %v192, %v194
      %197 = vrot.lane.b32.xlu0 %v195, 64
      %v198 = vpop.permute.xlu0 %197
      %v200 = vmax.bf16 %v195, %v198
      %s201 = scalar_lea.vmem %s154, 6
      %202 = vst.msk [vmem:[%s201] sm:$0x3] %vm165, %v200
      %s203 = smul.u32 4, %s17
      %p204 = scmp.lt.s32.totalorder %s16, 1
      %s205 = scalar_select %p204, %s16, 1
      %p206 = scmp.lt.s32.totalorder %s203, 3
      %s207 = scalar_select %p206, %s203, 3
      %s208 = smul.addr %s205, 4
      %s209 = sadd.s32 %s207, %s208
      %s210 = smul.addr %s209, 2
      %s211 = scalar_lea.vmem %s1, %s210
      // Predicated region
      $region25: #{cnn_forward.9} parent=23 // pred_check
        %p212 = pneg %p72
      $region26: #{cnn_forward.9} parent=23 // pred_check_branch
        %214 = sbr.rel (%p212) target = $region28
      $region27: #{cnn_forward.9} parent=23 // pred_region
        %s215 = smul.u32 4, %s17
      $region28: #{cnn_forward.9} parent=23 // pred_fallthru
        _
    $region24: #{cnn_forward.9} parent=5 // pred_fallthru
      _
    %p216 = scmp.le.s32.totalorder 2, %s7
    // Predicated region
    $region29: #{cnn_forward.9} parent=5 // pred_check
      %p217 = pneg %p216
    $region30: #{cnn_forward.9} parent=5 // pred_check_branch
      %219 = sbr.rel (%p217) target = $region32
    $region31: #{cnn_forward.9} parent=5 // pred_region
      %s220 = ssub.s32 %s7, 2
      // Predicated region
      $region33: #{cnn_forward.9} parent=31 // pred_check
        %p221 = pneg %p78
      $region34: #{cnn_forward.9} parent=31 // pred_check_branch
        %223 = sbr.rel (%p221) target = $region36
      $region35: #{cnn_forward.9} parent=31 // pred_region
        %s224 = smul.u32 4, %s19
        %p225 = scmp.lt.s32.totalorder %s18, 1
        %s226 = scalar_select %p225, %s18, 1
        %p227 = scmp.lt.s32.totalorder %s224, 3
        %s228 = scalar_select %p227, %s224, 3
        %s229 = smul.addr %s226, 4
        %s230 = sadd.s32 %s228, %s229
        %s231 = smul.addr %s230, 2
        %s232 = scalar_lea.vmem %s1, %s231
      $region36: #{cnn_forward.9} parent=31 // pred_fallthru
        _
    $region32: #{cnn_forward.9} parent=5 // pred_fallthru
      _
  $region6: #{cnn_forward.9} parent=0 // loop_footer
    %s11 = sadd.s32 1, %s7
  $region7: #{cnn_forward.9} parent=0 // loop_footer_branch
    %6 = sbr.rel target = $region3
  $region8: #{cnn_forward.9} parent=0 // loop_exit
    _

// kernel: cnn_forward.8
$region0: #{cnn_forward.8}
  #allocation0 [shape = 'u32[]', space=smem, size = 0x4, offset = 0x4, fixed_abs, tag = 'smem constant byte address 0x4 - core index']
  #allocation1 [shape = 'u32[144,128]{1,0:T(1,128)}', space=vmem, size = 0x12000, scoped, tag = 'internal scratch']
  #allocation2 [shape = 'f32[64,64]{1,0:T(8,128)}', space=vmem, size = 0x8000, scoped, tag = 'scratch operand']
  %s0 = inlined_call_operand.vmem [shape: bf16[2,10,10,32], index: 0, kind: input, shape index: {}]
  %s1 = inlined_call_operand.vmem [shape: bf16[9,32,64], index: 1, kind: input, shape index: {}]
  %s2 = inlined_call_operand.vmem [shape: f32[1,64], index: 2, kind: input, shape index: {}]
  %s3 = inlined_call_operand.vmem [shape: bf16[2,8,8,64], index: 3, kind: output, shape index: {}]
  %s4 = sld [smem:[#allocation0]]
  $region45: #{cnn_forward.8} parent=0
    _
  %s6 = ssub.s32 1, %s4
  %s7 = scalar_select 0, %s6, %s4
  loop: start=0, step=1, limit=4
  $region2: #{cnn_forward.8} parent=0 // loop_pre_header
    _
  $region3: #{cnn_forward.8} parent=0 // loop_header
    %s9 = sphi 0, %s13
    %p10 = scmp.ge.s32.totalorder %s9, 4
    %s16 = sphi 0, %s28
    %s17 = sphi 0, %s24
    %s18 = sphi 0, %s16
    %s19 = sphi 0, %s17
    %s20 = sphi 0, %s18
    %s21 = sphi 0, %s19
    %s31 = sphi 0, %s33
    %s34 = sphi 0, %s31
    %s35 = sphi 0, %s34
    %s51 = sphi 0, %s35
    %s55 = sphi 0, %s55
    %s57 = sphi 0, %s55
    %s58 = sphi 0, %s57
    %s72 = sphi 0, %s58
    %s76 = sphi 0, %s76
    %s78 = sphi 0, %s76
    %s79 = sphi 0, %s78
    %s93 = sphi 0, %s79
    %s101 = sphi 0, %s103
    %s104 = sphi 0, %s101
    %s105 = sphi 0, %s104
    %s121 = sphi 0, %s105
  $region4: #{cnn_forward.8} parent=0 // loop_header_branch
    %12 = sbr.rel (%p10) target = $region8
  $region5: #{cnn_forward.8} parent=0 // loop_body
    %s14 = ssub.s32 %s9, 1
    %s15 = ssub.s32 %s9, 2
    %s22 = sadd.s32 1, %s17
    %p23 = scmp.ge.s32.totalorder %s22, 1
    %s24 = scalar_select %p23, 0, %s22
    %s25 = sadd.s32 1, %s16
    %s26 = scalar_select %p23, %s25, %s16
    %p27 = scmp.ge.s32.totalorder %s26, 2
    %s28 = scalar_select %p27, 0, %s26
    %s29 = ssub.s32 %s16, %s28
    %p30 = scmp.eq.s32.totalorder %s29, 0
    %s32 = sadd.s32 %s31, 1
    %s33 = scalar_select %p30, %s31, %s32
    %p36 = pneg %p30
    %p37 = scmp.eq.s32.totalorder %s9, 1
    %p38 = por %p36, %p37
    %p39 = scmp.ne.s32.totalorder %s31, %s34
    %p40 = scmp.eq.s32.totalorder %s9, 0
    %p41 = por %p39, %p40
    %p42 = scmp.ne.s32.totalorder %s31, %s34
    %p43 = scmp.eq.s32.totalorder %s14, 1
    %p44 = por %p42, %p43
    %p45 = scmp.ne.s32.totalorder %s34, %s35
    %p46 = scmp.eq.s32.totalorder %s14, 0
    %p47 = por %p45, %p46
    %p48 = scmp.ne.s32.totalorder %s34, %s35
    %p49 = scmp.eq.s32.totalorder %s15, 1
    %p50 = por %p48, %p49
    %p52 = scmp.ne.s32.totalorder %s35, %s51
    %p53 = scmp.eq.s32.totalorder %s15, 0
    %p54 = por %p52, %p53
    %s56 = sadd.s32 %s55, 1
    %p59 = scmp.eq.s32.totalorder %s9, 1
    %p60 = scmp.ne.s32.totalorder %s55, %s57
    %p61 = scmp.eq.s32.totalorder %s9, 0
    %p62 = por %p60, %p61
    %p63 = scmp.ne.s32.totalorder %s55, %s57
    %p64 = scmp.eq.s32.totalorder %s14, 1
    %p65 = por %p63, %p64
    %p66 = scmp.ne.s32.totalorder %s57, %s58
    %p67 = scmp.eq.s32.totalorder %s14, 0
    %p68 = por %p66, %p67
    %p69 = scmp.ne.s32.totalorder %s57, %s58
    %p70 = scmp.eq.s32.totalorder %s15, 1
    %p71 = por %p69, %p70
    %p73 = scmp.ne.s32.totalorder %s58, %s72
    %p74 = scmp.eq.s32.totalorder %s15, 0
    %p75 = por %p73, %p74
    %s77 = sadd.s32 %s76, 1
    %p80 = scmp.eq.s32.totalorder %s9, 1
    %p81 = scmp.ne.s32.totalorder %s76, %s78
    %p82 = scmp.eq.s32.totalorder %s9, 0
    %p83 = por %p81, %p82
    %p84 = scmp.ne.s32.totalorder %s76, %s78
    %p85 = scmp.eq.s32.totalorder %s14, 1
    %p86 = por %p84, %p85
    %p87 = scmp.ne.s32.totalorder %s78, %s79
    %p88 = scmp.eq.s32.totalorder %s14, 0
    %p89 = por %p87, %p88
    %p90 = scmp.ne.s32.totalorder %s78, %s79
    %p91 = scmp.eq.s32.totalorder %s15, 1
    %p92 = por %p90, %p91
    %p94 = scmp.ne.s32.totalorder %s79, %s93
    %p95 = scmp.eq.s32.totalorder %s15, 0
    %p96 = por %p94, %p95
    %s97 = ssub.s32 %s16, %s28
    %s98 = ssub.s32 %s17, %s24
    %s99 = sor.u32 %s97, %s98
    %p100 = scmp.eq.s32.totalorder %s99, 0
    %s102 = sadd.s32 %s101, 1
    %s103 = scalar_select %p100, %s101, %s102
    %p106 = pneg %p100
    %p107 = scmp.eq.s32.totalorder %s9, 1
    %p108 = por %p106, %p107
    %p109 = scmp.ne.s32.totalorder %s101, %s104
    %p110 = scmp.eq.s32.totalorder %s9, 0
    %p111 = por %p109, %p110
    %p112 = scmp.ne.s32.totalorder %s101, %s104
    %p113 = scmp.eq.s32.totalorder %s14, 1
    %p114 = por %p112, %p113
    %p115 = scmp.ne.s32.totalorder %s104, %s105
    %p116 = scmp.eq.s32.totalorder %s14, 0
    %p117 = por %p115, %p116
    %p118 = scmp.ne.s32.totalorder %s104, %s105
    %p119 = scmp.eq.s32.totalorder %s15, 1
    %p120 = por %p118, %p119
    %p122 = scmp.ne.s32.totalorder %s105, %s121
    %p123 = scmp.eq.s32.totalorder %s15, 0
    %p124 = por %p122, %p123
    %p125 = scmp.le.s32.totalorder 1, %s9
    %p126 = scmp.lt.s32.totalorder %s9, 3
    %p127 = pnand %p125, %p126
    %p128 = pneg %p127
    // Predicated region
    $region9: #{cnn_forward.8} parent=5 // pred_check
      _
    $region10: #{cnn_forward.8} parent=5 // pred_check_branch
      %130 = sbr.rel (%p127) target = $region12
    $region11: #{cnn_forward.8} parent=5 // pred_region
      %s131 = ssub.s32 %s9, 1
      // Predicated region
      $region13: #{cnn_forward.8} parent=11 // pred_check
        %p132 = pneg %p68
      $region14: #{cnn_forward.8} parent=11 // pred_check_branch
        %134 = sbr.rel (%p132) target = $region16
      $region15: #{cnn_forward.8} parent=11 // pred_region
        _
      $region16: #{cnn_forward.8} parent=11 // pred_fallthru
        _
      // Predicated region
      $region17: #{cnn_forward.8} parent=11 // pred_check
        %p135 = pneg %p89
      $region18: #{cnn_forward.8} parent=11 // pred_check_branch
        %137 = sbr.rel (%p135) target = $region20
      $region19: #{cnn_forward.8} parent=11 // pred_region
        _
      $region20: #{cnn_forward.8} parent=11 // pred_fallthru
        _
    $region12: #{cnn_forward.8} parent=5 // pred_fallthru
      _
    %p138 = scmp.lt.s32.totalorder %s9, 2
    // Predicated region
    $region21: #{cnn_forward.8} parent=5 // pred_check
      %p139 = pneg %p138
    $region22: #{cnn_forward.8} parent=5 // pred_check_branch
      %141 = sbr.rel (%p139) target = $region24
    $region23: #{cnn_forward.8} parent=5 // pred_region
      // Predicated region
      $region25: #{cnn_forward.8} parent=23 // pred_check
        %p142 = pneg %p41
      $region26: #{cnn_forward.8} parent=23 // pred_check_branch
        %144 = sbr.rel (%p142) target = $region28
      $region27: #{cnn_forward.8} parent=23 // pred_region
        %p145 = scmp.lt.s32.totalorder %s16, 1
        %s146 = scalar_select %p145, %s16, 1
        %s147 = smul.addr %s146, 20
        %s148 = smul.addr %s147, 4
        %s149 = scalar_lea.vmem %s0, %s148
      $region28: #{cnn_forward.8} parent=23 // pred_fallthru
        _
    $region24: #{cnn_forward.8} parent=5 // pred_fallthru
      _
    %p150 = scmp.le.s32.totalorder 1, %s9
    %p151 = scmp.lt.s32.totalorder %s9, 3
    %p152 = pnand %p150, %p151
    %p153 = pneg %p152
    // Predicated region
    $region29: #{cnn_forward.8} parent=5 // pred_check
      _
    $region30: #{cnn_forward.8} parent=5 // pred_check_branch
      %155 = sbr.rel (%p152) target = $region32
    $region31: #{cnn_forward.8} parent=5 // pred_region
      %s156 = ssub.s32 %s9, 1
      %p157 = scmp.lt.s32.totalorder %s18, 1
      %s158 = scalar_select %p157, %s18, 1
      %s159 = smul.addr %s158, 20
      %s160 = smul.addr %s159, 4
      %s161 = scalar_lea.vmem %s0, %s160
      %p162 = pneg %p47
      %p163 = pneg %p44
      %p164 = pneg %p68
      %p165 = pneg %p65
      %p166 = pneg %p89
      %p167 = pneg %p86
      %p168 = pneg %p117
      %p169 = pneg %p114
      %s170 = smul.u32 8, %s19
      %p171 = scmp.lt.s32.totalorder %s18, 1
      %s172 = scalar_select %p171, %s18, 1
      %p173 = scmp.lt.s32.totalorder %s170, 7
      %s174 = scalar_select %p173, %s170, 7
      %s175 = smul.addr %s172, 8
      %s176 = sadd.s32 %s174, %s175
      %s177 = smul.addr %s176, 4
      %s178 = scalar_lea.vmem %s3, %s177
      %p179 = scmp.lt.s32.totalorder %s18, 1
      %s180 = scalar_select %p179, %s18, 1
      %s181 = smul.addr %s180, 20
      %s182 = smul.addr %s181, 4
      %s183 = scalar_lea.vmem %s0, %s182
      %s184 = smul.u32 8, %s19
      %p185 = scmp.lt.s32.totalorder %s18, 1
      %s186 = scalar_select %p185, %s18, 1
      %p187 = scmp.lt.s32.totalorder %s184, 7
      %s188 = scalar_select %p187, %s184, 7
      %s189 = smul.addr %s186, 8
      %s190 = sadd.s32 %s188, %s189
      %s191 = smul.addr %s190, 4
      %s192 = scalar_lea.vmem %s3, %s191
      %s193 = smul.u32 8, %s19
      %vm195 = vcmask 523264
      %196 = vst.msk [vmem:[#allocation2] sm:$0xff] %vm195, 0.0
      %197 = vst.msk [vmem:[#allocation2 + $0x8] sm:$0xff] %vm195, 0.0
      %198 = vst.msk [vmem:[#allocation2 + $0x10] sm:$0xff] %vm195, 0.0
      %199 = vst.msk [vmem:[#allocation2 + $0x18] sm:$0xff] %vm195, 0.0
      %200 = vst.msk [vmem:[#allocation2 + $0x20] sm:$0xff] %vm195, 0.0
      %201 = vst.msk [vmem:[#allocation2 + $0x28] sm:$0xff] %vm195, 0.0
      %202 = vst.msk [vmem:[#allocation2 + $0x30] sm:$0xff] %vm195, 0.0
      %203 = vst.msk [vmem:[#allocation2 + $0x38] sm:$0xff] %vm195, 0.0
      %s204 = smul.u32 %s19, 8
      %s205 = smul.u32 %s204, 2
      %s206 = smul.addr %s205, 4
      %s207 = scalar_lea.vmem %s183, %s206
      %v208 = vld [vmem:[%s207] sm:$0xf]
      %v209 = vld [vmem:[%s207 + $0x4] sm:$0x1]
      %v210 = vld [vmem:[%s207 + $0x8] sm:$0xf]
      %v211 = vld [vmem:[%s207 + $0xc] sm:$0x1]
      %v212 = vld [vmem:[%s207 + $0x10] sm:$0xf]
      %v213 = vld [vmem:[%s207 + $0x14] sm:$0x1]
      %v214 = vld [vmem:[%s207 + $0x18] sm:$0xf]
      %v215 = vld [vmem:[%s207 + $0x1c] sm:$0x1]
      %v216 = vld [vmem:[%s207 + $0x20] sm:$0xf]
      %v217 = vld [vmem:[%s207 + $0x24] sm:$0x1]
      %v218 = vld [vmem:[%s207 + $0x28] sm:$0xf]
      %v219 = vld [vmem:[%s207 + $0x2c] sm:$0x1]
      %v220 = vld [vmem:[%s207 + $0x30] sm:$0xf]
      %v221 = vld [vmem:[%s207 + $0x34] sm:$0x1]
      %v222 = vld [vmem:[%s207 + $0x38] sm:$0xf]
      %v223 = vld [vmem:[%s207 + $0x3c] sm:$0x1]
      %v224 = vld [vmem:[#allocation2] sm:$0xff]
      %v225 = vld [vmem:[#allocation2 + $0x8] sm:$0xff]
      %v226 = vld [vmem:[#allocation2 + $0x10] sm:$0xff]
      %v227 = vld [vmem:[#allocation2 + $0x18] sm:$0xff]
      %v228 = vld [vmem:[#allocation2 + $0x20] sm:$0xff]
      %v229 = vld [vmem:[#allocation2 + $0x28] sm:$0xff]
      %v230 = vld [vmem:[#allocation2 + $0x30] sm:$0xff]
      %v231 = vld [vmem:[#allocation2 + $0x38] sm:$0xff]
      %v232 = vld [vmem:[%s1] sm:$0xf]
      %v233 = vld [vmem:[%s1 + $0x4] sm:$0xf]
      %v234 = vld [vmem:[%s1 + $0x8] sm:$0xf]
      %v235 = vld [vmem:[%s1 + $0xc] sm:$0xf]
      %v244 = vunpack.c.l.b16 %v208
      %v245 = vunpack.c.l.b16 %v210
      %v246 = vunpack.c.l.b16 %v212
      %v247 = vunpack.c.l.b16 %v214
      %v248 = vunpack.c.l.b16 %v216
      %v249 = vunpack.c.l.b16 %v218
      %v250 = vunpack.c.l.b16 %v220
      %v251 = vunpack.c.l.b16 %v222
      %v252 = vpack.c.b16 %v245, %v244
      %v253 = vpack.c.b16 %v247, %v246
      %v254 = vpack.c.b16 %v249, %v248
      %v255 = vpack.c.b16 %v251, %v250
      %v260 = vunpack.c.l.b16 %v232
      %v261 = vunpack.c.l.b16 %v233
      %v262 = vunpack.c.l.b16 %v234
      %v263 = vunpack.c.l.b16 %v235
      %v264 = vpack.c.b16 %v261, %v260
      %v265 = vpack.c.b16 %v263, %v262
      %vm268 = vcmask 261120
      %v270 = vsel %vm268, %v252, 0
      %v273 = vsel %vm268, %v253, 0
      %v276 = vsel %vm268, %v254, 0
      %v279 = vsel %vm268, %v255, 0
      %281 = vmatprep.subr.bf16.mxu0 0
      %282 = vmatpush1.bf16.msra.mxu0 %v264
      %283 = vmatprep.subr.bf16.mxu0 0
      %284 = vmatpush1.bf16.msra.mxu0 %v265
      %285 = vmatprep.subr.bf16.mxu0 0
      %286 = vmatpush1.bf16.msra.mxu0 0
      %287 = vmatprep.subr.bf16.mxu0 0
      %288 = vmatpush1.bf16.msra.mxu0 0
      %289 = vmatprep.subr.bf16.mxu0 0
      %290 = vmatpush1.bf16.msra.mxu0 0
      %291 = vmatprep.subr.bf16.mxu0 0
      %292 = vmatpush1.bf16.msra.mxu0 0
      %293 = vmatprep.subr.bf16.mxu0 0
      %294 = vmatpush1.bf16.msra.mxu0 0
      %295 = vmatprep.subr.bf16.mxu0 0
      %296 = vmatpush1.bf16.msra.mxu0 0
      %297 = vmatprep.subr.bf16.mxu0 0
      %298 = vmatpush1.bf16.msra.mxu0 0
      %299 = vmatprep.subr.bf16.mxu0 0
      %300 = vmatpush1.bf16.msra.mxu0 0
      %301 = vmatprep.subr.bf16.mxu0 0
      %302 = vmatpush1.bf16.msra.mxu0 0
      %303 = vmatprep.subr.bf16.mxu0 0
      %304 = vmatpush1.bf16.msra.mxu0 0
      %305 = vmatprep.subr.bf16.mxu0 0
      %306 = vmatpush1.bf16.msra.mxu0 0
      %307 = vmatprep.subr.bf16.mxu0 0
      %308 = vmatpush1.bf16.msra.mxu0 0
      %309 = vmatprep.subr.bf16.mxu0 0
      %310 = vmatpush1.bf16.msra.mxu0 0
      %311 = vmatprep.subr.bf16.mxu0 0
      %312 = vmatpush1.bf16.msra.mxu0 0
      %313 = vmatprep.mubr.bf16.mxu0 0
      %314 = vmatmul.mubr.bf16.gmra.mrb[0].mxu0 %v270
      %v315 = vpop.f32.mrb[0].mxu0
      %v316 = vadd.f32 0.0, %v315
      %v317 = vpop.f32.mrb[0].mxu0
      %v318 = vpop.f32.mrb[0].mxu0
      %v319 = vadd.f32 0.0, %v318
      %v320 = vpop.f32.mrb[0].mxu0
      %321 = vmatprep.mubr.bf16.mxu0 0
      %322 = vmatmul.mubr.bf16.gmra.mrb[0].mxu0 %v273
      %v323 = vpop.f32.mrb[0].mxu0
      %v324 = vadd.f32 0.0, %v323
      %v325 = vpop.f32.mrb[0].mxu0
      %v326 = vpop.f32.mrb[0].mxu0
      %v327 = vadd.f32 0.0, %v326
      %v328 = vpop.f32.mrb[0].mxu0
      %329 = vmatprep.mubr.bf16.mxu0 0
      %330 = vmatmul.mubr.bf16.gmra.mrb[0].mxu0 %v276
      %v331 = vpop.f32.mrb[0].mxu0
      %v332 = vadd.f32 0.0, %v331
      %v333 = vpop.f32.mrb[0].mxu0
      %v334 = vpop.f32.mrb[0].mxu0
      %v335 = vadd.f32 0.0, %v334
      %v336 = vpop.f32.mrb[0].mxu0
      %337 = vmatprep.mubr.bf16.mxu0 0
      %338 = vmatmul.mubr.bf16.gmra.mrb[0].mxu0 %v279
      %v339 = vpop.f32.mrb[0].mxu0
      %v340 = vadd.f32 0.0, %v339
      %v341 = vpop.f32.mrb[0].mxu0
      %v342 = vpop.f32.mrb[0].mxu0
      %v343 = vadd.f32 0.0, %v342
      %v344 = vpop.f32.mrb[0].mxu0
      %345 = vdwg.mxu0
      %v346 = vadd.f32 %v224, %v316
      %v347 = vadd.f32 %v225, %v319
      %v348 = vadd.f32 %v226, %v324
      %v349 = vadd.f32 %v227, %v327
      %v350 = vadd.f32 %v228, %v332
      %v351 = vadd.f32 %v229, %v335
      %v352 = vadd.f32 %v230, %v340
      %v353 = vadd.f32 %v231, %v343
      %354 = vst.msk [vmem:[#allocation2] sm:$0xff] %vm195, %v346
      %355 = vst.msk [vmem:[#allocation2 + $0x8] sm:$0xff] %vm195, %v347
      %356 = vst.msk [vmem:[#allocation2 + $0x10] sm:$0xff] %vm195, %v348
      %357 = vst.msk [vmem:[#allocation2 + $0x18] sm:$0xff] %vm195, %v349
      %358 = vst.msk [vmem:[#allocation2 + $0x20] sm:$0xff] %vm195, %v350
      %359 = vst.msk [vmem:[#allocation2 + $0x28] sm:$0xff] %vm195, %v351
      %360 = vst.msk [vmem:[#allocation2 + $0x30] sm:$0xff] %vm195, %v352
      %361 = vst.msk [vmem:[#allocation2 + $0x38] sm:$0xff] %vm195, %v353
      %vm362 = vsmask.f32 3328
      %vm363 = vsmask.f32 7440
      %vm364 = vmor %vm362, %vm363
      %v366 = vshrl.u32 %v208, 16
      %v368 = vrot.slane %v366, 4
      %v369 = vshll.u32 %v208, 16
      %v371 = vrot.slane %v369, 5
      %v372 = vor.u32 %v368, %v371
      %v373 = vrot.slane %v372, 4
      %v375 = vshll.u32 %v209, 16
      %v377 = vrot.slane %v375, 5
      %v378 = vsel %vm364, %v373, %v377
      %v380 = vshrl.u32 %v210, 16
      %v382 = vrot.slane %v380, 4
      %v383 = vshll.u32 %v210, 16
      %v385 = vrot.slane %v383, 5
      %v386 = vor.u32 %v382, %v385
      %v387 = vrot.slane %v386, 4
      %v389 = vshll.u32 %v211, 16
      %v391 = vrot.slane %v389, 5
      %v392 = vsel %vm364, %v387, %v391
      %v394 = vshrl.u32 %v212, 16
      %v396 = vrot.slane %v394, 4
      %v397 = vshll.u32 %v212, 16
      %v399 = vrot.slane %v397, 5
      %v400 = vor.u32 %v396, %v399
      %v401 = vrot.slane %v400, 4
      %v403 = vshll.u32 %v213, 16
      %v405 = vrot.slane %v403, 5
      %v406 = vsel %vm364, %v401, %v405
      %v408 = vshrl.u32 %v214, 16
      %v410 = vrot.slane %v408, 4
      %v411 = vshll.u32 %v214, 16
      %v413 = vrot.slane %v411, 5
      %v414 = vor.u32 %v410, %v413
      %v415 = vrot.slane %v414, 4
      %v417 = vshll.u32 %v215, 16
      %v419 = vrot.slane %v417, 5
      %v420 = vsel %vm364, %v415, %v419
      %v422 = vshrl.u32 %v216, 16
      %v424 = vrot.slane %v422, 4
      %v425 = vshll.u32 %v216, 16
      %v427 = vrot.slane %v425, 5
      %v428 = vor.u32 %v424, %v427
      %v429 = vrot.slane %v428, 4
      %v431 = vshll.u32 %v217, 16
      %v433 = vrot.slane %v431, 5
      %v434 = vsel %vm364, %v429, %v433
      %v436 = vshrl.u32 %v218, 16
      %v438 = vrot.slane %v436, 4
      %v439 = vshll.u32 %v218, 16
      %v441 = vrot.slane %v439, 5
      %v442 = vor.u32 %v438, %v441
      %v443 = vrot.slane %v442, 4
      %v445 = vshll.u32 %v219, 16
      %v447 = vrot.slane %v445, 5
      %v448 = vsel %vm364, %v443, %v447
      %v450 = vshrl.u32 %v220, 16
      %v452 = vrot.slane %v450, 4
      %v453 = vshll.u32 %v220, 16
      %v455 = vrot.slane %v453, 5
      %v456 = vor.u32 %v452, %v455
      %v457 = vrot.slane %v456, 4
      %v459 = vshll.u32 %v221, 16
      %v461 = vrot.slane %v459, 5
      %v462 = vsel %vm364, %v457, %v461
      %v464 = vshrl.u32 %v222, 16
      %v466 = vrot.slane %v464, 4
      %v467 = vshll.u32 %v222, 16
      %v469 = vrot.slane %v467, 5
      %v470 = vor.u32 %v466, %v469
      %v471 = vrot.slane %v470, 4
      %v473 = vshll.u32 %v223, 16
      %v475 = vrot.slane %v473, 5
      %v476 = vsel %vm364, %v471, %v475
      %v477 = vld [vmem:[#allocation2] sm:$0xff]
      %v478 = vld [vmem:[#allocation2 + $0x8] sm:$0xff]
      %v479 = vld [vmem:[#allocation2 + $0x10] sm:$0xff]
      %v480 = vld [vmem:[#allocation2 + $0x18] sm:$0xff]
      %v481 = vld [vmem:[#allocation2 + $0x20] sm:$0xff]
      %v482 = vld [vmem:[#allocation2 + $0x28] sm:$0xff]
      %v483 = vld [vmem:[#allocation2 + $0x30] sm:$0xff]
      %v484 = vld [vmem:[#allocation2 + $0x38] sm:$0xff]
      %s485 = scalar_lea.vmem %s1, 16
      %v486 = vld [vmem:[%s485] sm:$0xf]
      %v487 = vld [vmem:[%s485 + $0x4] sm:$0xf]
      %v488 = vld [vmem:[%s485 + $0x8] sm:$0xf]
      %v489 = vld [vmem:[%s485 + $0xc] sm:$0xf]
      %v490 = vunpack.c.l.b16 %v378
      %v491 = vunpack.c.l.b16 %v392
      %v492 = vunpack.c.l.b16 %v406
      %v493 = vunpack.c.l.b16 %v420
      %v494 = vunpack.c.l.b16 %v434
      %v495 = vunpack.c.l.b16 %v448
      %v496 = vunpack.c.l.b16 %v462
      %v497 = vunpack.c.l.b16 %v476
      %v498 = vpack.c.b16 %v491, %v490
      %v499 = vpack.c.b16 %v493, %v492
      %v500 = vpack.c.b16 %v495, %v494
      %v501 = vpack.c.b16 %v497, %v496
      %v506 = vunpack.c.l.b16 %v486
      %v507 = vunpack.c.l.b16 %v487
      %v508 = vunpack.c.l.b16 %v488
      %v509 = vunpack.c.l.b16 %v489
      %v510 = vpack.c.b16 %v507, %v506
      %v511 = vpack.c.b16 %v509, %v508
      %v515 = vsel %vm268, %v498, 0
      %v518 = vsel %vm268, %v499, 0
      %v521 = vsel %vm268, %v500, 0
      %v524 = vsel %vm268, %v501, 0
      %526 = vmatprep.subr.bf16.mxu0 0
      %527 = vmatpush1.bf16.msra.mxu0 %v510
      %528 = vmatprep.subr.bf16.mxu0 0
      %529 = vmatpush1.bf16.msra.mxu0 %v511
      %530 = vmatprep.subr.bf16.mxu0 0
      %531 = vmatpush1.bf16.msra.mxu0 0
      %532 = vmatprep.subr.bf16.mxu0 0
      %533 = vmatpush1.bf16.msra.mxu0 0
      %534 = vmatprep.subr.bf16.mxu0 0
      %535 = vmatpush1.bf16.msra.mxu0 0
      %536 = vmatprep.subr.bf16.mxu0 0
      %537 = vmatpush1.bf16.msra.mxu0 0
      %538 = vmatprep.subr.bf16.mxu0 0
      %539 = vmatpush1.bf16.msra.mxu0 0
      %540 = vmatprep.subr.bf16.mxu0 0
      %541 = vmatpush1.bf16.msra.mxu0 0
      %542 = vmatprep.subr.bf16.mxu0 0
      %543 = vmatpush1.bf16.msra.mxu0 0
      %544 = vmatprep.subr.bf16.mxu0 0
      %545 = vmatpush1.bf16.msra.mxu0 0
      %546 = vmatprep.subr.bf16.mxu0 0
      %547 = vmatpush1.bf16.msra.mxu0 0
      %548 = vmatprep.subr.bf16.mxu0 0
      %549 = vmatpush1.bf16.msra.mxu0 0
      %550 = vmatprep.subr.bf16.mxu0 0
      %551 = vmatpush1.bf16.msra.mxu0 0
      %552 = vmatprep.subr.bf16.mxu0 0
      %553 = vmatpush1.bf16.msra.mxu0 0
      %554 = vmatprep.subr.bf16.mxu0 0
      %555 = vmatpush1.bf16.msra.mxu0 0
      %556 = vmatprep.subr.bf16.mxu0 0
      %557 = vmatpush1.bf16.msra.mxu0 0
      %558 = vmatprep.mubr.bf16.mxu0 0
      %559 = vmatmul.mubr.bf16.gmra.mrb[0].mxu0 %v515
      %v560 = vpop.f32.mrb[0].mxu0
      %v561 = vadd.f32 0.0, %v560
      %v562 = vpop.f32.mrb[0].mxu0
      %v563 = vpop.f32.mrb[0].mxu0
      %v564 = vadd.f32 0.0, %v563
      %v565 = vpop.f32.mrb[0].mxu0
      %566 = vmatprep.mubr.bf16.mxu0 0
      %567 = vmatmul.mubr.bf16.gmra.mrb[0].mxu0 %v518
      %v568 = vpop.f32.mrb[0].mxu0
      %v569 = vadd.f32 0.0, %v568
      %v570 = vpop.f32.mrb[0].mxu0
      %v571 = vpop.f32.mrb[0].mxu0
      %v572 = vadd.f32 0.0, %v571
      %v573 = vpop.f32.mrb[0].mxu0
      %574 = vmatprep.mubr.bf16.mxu0 0
      %575 = vmatmul.mubr.bf16.gmra.mrb[0].mxu0 %v521
      %v576 = vpop.f32.mrb[0].mxu0
      %v577 = vadd.f32 0.0, %v576
      %v578 = vpop.f32.mrb[0].mxu0
      %v579 = vpop.f32.mrb[0].mxu0
      %v580 = vadd.f32 0.0, %v579
      %v581 = vpop.f32.mrb[0].mxu0
      %582 = vmatprep.mubr.bf16.mxu0 0
      %583 = vmatmul.mubr.bf16.gmra.mrb[0].mxu0 %v524
      %v584 = vpop.f32.mrb[0].mxu0
      %v585 = vadd.f32 0.0, %v584
      %v586 = vpop.f32.mrb[0].mxu0
      %v587 = vpop.f32.mrb[0].mxu0
      %v588 = vadd.f32 0.0, %v587
      %v589 = vpop.f32.mrb[0].mxu0
      %590 = vdwg.mxu0
      %v591 = vadd.f32 %v477, %v561
      %v592 = vadd.f32 %v478, %v564
      %v593 = vadd.f32 %v479, %v569
      %v594 = vadd.f32 %v480, %v572
      %v595 = vadd.f32 %v481, %v577
      %v596 = vadd.f32 %v482, %v580
      %v597 = vadd.f32 %v483, %v585
      %v598 = vadd.f32 %v484, %v588
      %599 = vst.msk [vmem:[#allocation2] sm:$0xff] %vm195, %v591
      %600 = vst.msk [vmem:[#allocation2 + $0x8] sm:$0xff] %vm195, %v592
      %601 = vst.msk [vmem:[#allocation2 + $0x10] sm:$0xff] %vm195, %v593
      %602 = vst.msk [vmem:[#allocation2 + $0x18] sm:$0xff] %vm195, %v594
      %603 = vst.msk [vmem:[#allocation2 + $0x20] sm:$0xff] %vm195, %v595
      %604 = vst.msk [vmem:[#allocation2 + $0x28] sm:$0xff] %vm195, %v596
      %605 = vst.msk [vmem:[#allocation2 + $0x30] sm:$0xff] %vm195, %v597
      %606 = vst.msk [vmem:[#allocation2 + $0x38] sm:$0xff] %vm195, %v598
      %vm615 = vcmask 1042432
      %vm616 = vcmask 1046532
      %vm617 = vmor %vm615, %vm616
      %v618 = vrot.slane %v208, 5
      %v619 = vrot.slane %v618, 4
      %v620 = vrot.slane %v209, 5
      %v621 = vsel %vm617, %v619, %v620
      %v622 = vrot.slane %v210, 5
      %v623 = vrot.slane %v622, 4
      %v624 = vrot.slane %v211, 5
      %v625 = vsel %vm617, %v623, %v624
      %v626 = vrot.slane %v212, 5
      %v627 = vrot.slane %v626, 4
      %v628 = vrot.slane %v213, 5
      %v629 = vsel %vm617, %v627, %v628
      %v630 = vrot.slane %v214, 5
      %v631 = vrot.slane %v630, 4
      %v632 = vrot.slane %v215, 5
      %v633 = vsel %vm617, %v631, %v632
      %v634 = vrot.slane %v216, 5
      %v635 = vrot.slane %v634, 4
      %v636 = vrot.slane %v217, 5
      %v637 = vsel %vm617, %v635, %v636
      %v638 = vrot.slane %v218, 5
      %v639 = vrot.slane %v638, 4
      %v640 = vrot.slane %v219, 5
      %v641 = vsel %vm617, %v639, %v640
      %v642 = vrot.slane %v220, 5
      %v643 = vrot.slane %v642, 4
      %v644 = vrot.slane %v221, 5
      %v645 = vsel %vm617, %v643, %v644
      %v646 = vrot.slane %v222, 5
      %v647 = vrot.slane %v646, 4
      %v648 = vrot.slane %v223, 5
      %v649 = vsel %vm617, %v647, %v648
      %v650 = vld [vmem:[#allocation2] sm:$0xff]
      %v651 = vld [vmem:[#allocation2 + $0x8] sm:$0xff]
      %v652 = vld [vmem:[#allocation2 + $0x10] sm:$0xff]
      %v653 = vld [vmem:[#allocation2 + $0x18] sm:$0xff]
      %v654 = vld [vmem:[#allocation2 + $0x20] sm:$0xff]
      %v655 = vld [vmem:[#allocation2 + $0x28] sm:$0xff]
      %v656 = vld [vmem:[#allocation2 + $0x30] sm:$0xff]
      %v657 = vld [vmem:[#allocation2 + $0x38] sm:$0xff]
      %s658 = scalar_lea.vmem %s1, 32
      %v659 = vld [vmem:[%s658] sm:$0xf]
      %v660 = vld [vmem:[%s658 + $0x4] sm:$0xf]
      %v661 = vld [vmem:[%s658 + $0x8] sm:$0xf]
      %v662 = vld [vmem:[%s658 + $0xc] sm:$0xf]
      %v663 = vunpack.c.l.b16 %v621
      %v664 = vunpack.c.l.b16 %v625
      %v665 = vunpack.c.l.b16 %v629
      %v666 = vunpack.c.l.b16 %v633
      %v667 = vunpack.c.l.b16 %v637
      %v668 = vunpack.c.l.b16 %v641
      %v669 = vunpack.c.l.b16 %v645
      %v670 = vunpack.c.l.b16 %v649
      %v671 = vpack.c.b16 %v664, %v663
      %v672 = vpack.c.b16 %v666, %v665
      %v673 = vpack.c.b16 %v668, %v667
      %v674 = vpack.c.b16 %v670, %v669
      %v679 = vunpack.c.l.b16 %v659
      %v680 = vunpack.c.l.b16 %v660
      %v681 = vunpack.c.l.b16 %v661
      %v682 = vunpack.c.l.b16 %v662
      %v683 = vpack.c.b16 %v680, %v679
      %v684 = vpack.c.b16 %v682, %v681
      %v688 = vsel %vm268, %v671, 0
      %v691 = vsel %vm268, %v672, 0
      %v694 = vsel %vm268, %v673, 0
      %v697 = vsel %vm268, %v674, 0
      %699 = vmatprep.subr.bf16.mxu0 0
      %700 = vmatpush1.bf16.msra.mxu0 %v683
      %701 = vmatprep.subr.bf16.mxu0 0
      %702 = vmatpush1.bf16.msra.mxu0 %v684
      %703 = vmatprep.subr.bf16.mxu0 0
      %704 = vmatpush1.bf16.msra.mxu0 0
      %705 = vmatprep.subr.bf16.mxu0 0
      %706 = vmatpush1.bf16.msra.mxu0 0
      %707 = vmatprep.subr.bf16.mxu0 0
      %708 = vmatpush1.bf16.msra.mxu0 0
      %709 = vmatprep.subr.bf16.mxu0 0
      %710 = vmatpush1.bf16.msra.mxu0 0
      %711 = vmatprep.subr.bf16.mxu0 0
      %712 = vmatpush1.bf16.msra.mxu0 0
      %713 = vmatprep.subr.bf16.mxu0 0
      %714 = vmatpush1.bf16.msra.mxu0 0
      %715 = vmatprep.subr.bf16.mxu0 0
      %716 = vmatpush1.bf16.msra.mxu0 0
      %717 = vmatprep.subr.bf16.mxu0 0
      %718 = vmatpush1.bf16.msra.mxu0 0
      %719 = vmatprep.subr.bf16.mxu0 0
      %720 = vmatpush1.bf16.msra.mxu0 0
      %721 = vmatprep.subr.bf16.mxu0 0
      %722 = vmatpush1.bf16.msra.mxu0 0
      %723 = vmatprep.subr.bf16.mxu0 0
      %724 = vmatpush1.bf16.msra.mxu0 0
      %725 = vmatprep.subr.bf16.mxu0 0
      %726 = vmatpush1.bf16.msra.mxu0 0
      %727 = vmatprep.subr.bf16.mxu0 0
      %728 = vmatpush1.bf16.msra.mxu0 0
      %729 = vmatprep.subr.bf16.mxu0 0
      %730 = vmatpush1.bf16.msra.mxu0 0
      %731 = vmatprep.mubr.bf16.mxu0 0
      %732 = vmatmul.mubr.bf16.gmra.mrb[0].mxu0 %v688
      %v733 = vpop.f32.mrb[0].mxu0
      %v734 = vadd.f32 0.0, %v733
      %v735 = vpop.f32.mrb[0].mxu0
      %v736 = vpop.f32.mrb[0].mxu0
      %v737 = vadd.f32 0.0, %v736
      %v738 = vpop.f32.mrb[0].mxu0
      %739 = vmatprep.mubr.bf16.mxu0 0
      %740 = vmatmul.mubr.bf16.gmra.mrb[0].mxu0 %v691
      %v741 = vpop.f32.mrb[0].mxu0
      %v742 = vadd.f32 0.0, %v741
      %v743 = vpop.f32.mrb[0].mxu0
      %v744 = vpop.f32.mrb[0].mxu0
      %v745 = vadd.f32 0.0, %v744
      %v746 = vpop.f32.mrb[0].mxu0
      %747 = vmatprep.mubr.bf16.mxu0 0
      %748 = vmatmul.mubr.bf16.gmra.mrb[0].mxu0 %v694
      %v749 = vpop.f32.mrb[0].mxu0
      %v750 = vadd.f32 0.0, %v749
      %v751 = vpop.f32.mrb[0].mxu0
      %v752 = vpop.f32.mrb[0].mxu0
      %v753 = vadd.f32 0.0, %v752
      %v754 = vpop.f32.mrb[0].mxu0
      %755 = vmatprep.mubr.bf16.mxu0 0
      %756 = vmatmul.mubr.bf16.gmra.mrb[0].mxu0 %v697
      %v757 = vpop.f32.mrb[0].mxu0
      %v758 = vadd.f32 0.0, %v757
      %v759 = vpop.f32.mrb[0].mxu0
      %v760 = vpop.f32.mrb[0].mxu0
      %v761 = vadd.f32 0.0, %v760
      %v762 = vpop.f32.mrb[0].mxu0
      %763 = vdwg.mxu0
      %v764 = vadd.f32 %v650, %v734
      %v765 = vadd.f32 %v651, %v737
      %v766 = vadd.f32 %v652, %v742
      %v767 = vadd.f32 %v653, %v745
      %v768 = vadd.f32 %v654, %v750
      %v769 = vadd.f32 %v655, %v753
      %v770 = vadd.f32 %v656, %v758
      %v771 = vadd.f32 %v657, %v761
      %772 = vst.msk [vmem:[#allocation2] sm:$0xff] %vm195, %v764
      %773 = vst.msk [vmem:[#allocation2 + $0x8] sm:$0xff] %vm195, %v765
      %774 = vst.msk [vmem:[#allocation2 + $0x10] sm:$0xff] %vm195, %v766
      %775 = vst.msk [vmem:[#allocation2 + $0x18] sm:$0xff] %vm195, %v767
      %776 = vst.msk [vmem:[#allocation2 + $0x20] sm:$0xff] %vm195, %v768
      %777 = vst.msk [vmem:[#allocation2 + $0x28] sm:$0xff] %vm195, %v769
      %778 = vst.msk [vmem:[#allocation2 + $0x30] sm:$0xff] %vm195, %v770
      %779 = vst.msk [vmem:[#allocation2 + $0x38] sm:$0xff] %vm195, %v771
      %s780 = sadd.s32 %s204, 1
      %s781 = smul.u32 %s780, 2
      %s782 = smul.addr %s781, 4
      %s783 = scalar_lea.vmem %s183, %s782
      %v784 = vld [vmem:[%s783] sm:$0xf]
      %v785 = vld [vmem:[%s783 + $0x4] sm:$0x1]
      %v786 = vld [vmem:[%s783 + $0x8] sm:$0xf]
      %v787 = vld [vmem:[%s783 + $0xc] sm:$0x1]
      %v788 = vld [vmem:[%s783 + $0x10] sm:$0xf]
      %v789 = vld [vmem:[%s783 + $0x14] sm:$0x1]
      %v790 = vld [vmem:[%s783 + $0x18] sm:$0xf]
      %v791 = vld [vmem:[%s783 + $0x1c] sm:$0x1]
      %v792 = vld [vmem:[%s783 + $0x20] sm:$0xf]
      %v793 = vld [vmem:[%s783 + $0x24] sm:$0x1]
      %v794 = vld [vmem:[%s783 + $0x28] sm:$0xf]
      %v795 = vld [vmem:[%s783 + $0x2c] sm:$0x1]
      %v796 = vld [vmem:[%s783 + $0x30] sm:$0xf]
      %v797 = vld [vmem:[%s783 + $0x34] sm:$0x1]
      %v798 = vld [vmem:[%s783 + $0x38] sm:$0xf]
      %v799 = vld [vmem:[%s783 + $0x3c] sm:$0x1]
      %v800 = vld [vmem:[#allocation2] sm:$0xff]
      %v801 = vld [vmem:[#allocation2 + $0x8] sm:$0xff]
      %v802 = vld [vmem:[#allocation2 + $0x10] sm:$0xff]
      %v803 = vld [vmem:[#allocation2 + $0x18] sm:$0xff]
      %v804 = vld [vmem:[#allocation2 + $0x20] sm:$0xff]
      %v805 = vld [vmem:[#allocation2 + $0x28] sm:$0xff]
      %v806 = vld [vmem:[#allocation2 + $0x30] sm:$0xff]
      %v807 = vld [vmem:[#allocation2 + $0x38] sm:$0xff]
      %s808 = scalar_lea.vmem %s1, 48
      %v809 = vld [vmem:[%s808] sm:$0xf]
      %v810 = vld [vmem:[%s808 + $0x4] sm:$0xf]
      %v811 = vld [vmem:[%s808 + $0x8] sm:$0xf]
      %v812 = vld [vmem:[%s808 + $0xc] sm:$0xf]
      %v821 = vunpack.c.l.b16 %v784
      %v822 = vunpack.c.l.b16 %v786
      %v823 = vunpack.c.l.b16 %v788
      %v824 = vunpack.c.l.b16 %v790
      %v825 = vunpack.c.l.b16 %v792
      %v826 = vunpack.c.l.b16 %v794
      %v827 = vunpack.c.l.b16 %v796
      %v828 = vunpack.c.l.b16 %v798
      %v829 = vpack.c.b16 %v822, %v821
      %v830 = vpack.c.b16 %v824, %v823
      %v831 = vpack.c.b16 %v826, %v825
      %v832 = vpack.c.b16 %v828, %v827
      %v837 = vunpack.c.l.b16 %v809
      %v838 = vunpack.c.l.b16 %v810
      %v839 = vunpack.c.l.b16 %v811
      %v840 = vunpack.c.l.b16 %v812
      %v841 = vpack.c.b16 %v838, %v837
      %v842 = vpack.c.b16 %v840, %v839
      %v846 = vsel %vm268, %v829, 0
      %v849 = vsel %vm268, %v830, 0
      %v852 = vsel %vm268, %v831, 0
      %v855 = vsel %vm268, %v832, 0
      %857 = vmatprep.subr.bf16.mxu0 0
      %858 = vmatpush1.bf16.msra.mxu0 %v841
      %859 = vmatprep.subr.bf16.mxu0 0
      %860 = vmatpush1.bf16.msra.mxu0 %v842
      %861 = vmatprep.subr.bf16.mxu0 0
      %862 = vmatpush1.bf16.msra.mxu0 0
      %863 = vmatprep.subr.bf16.mxu0 0
      %864 = vmatpush1.bf16.msra.mxu0 0
      %865 = vmatprep.subr.bf16.mxu0 0
      %866 = vmatpush1.bf16.msra.mxu0 0
      %867 = vmatprep.subr.bf16.mxu0 0
      %868 = vmatpush1.bf16.msra.mxu0 0
      %869 = vmatprep.subr.bf16.mxu0 0
      %870 = vmatpush1.bf16.msra.mxu0 0
      %871 = vmatprep.subr.bf16.mxu0 0
      %872 = vmatpush1.bf16.msra.mxu0 0
      %873 = vmatprep.subr.bf16.mxu0 0
      %874 = vmatpush1.bf16.msra.mxu0 0
      %875 = vmatprep.subr.bf16.mxu0 0
      %876 = vmatpush1.bf16.msra.mxu0 0
      %877 = vmatprep.subr.bf16.mxu0 0
      %878 = vmatpush1.bf16.msra.mxu0 0
      %879 = vmatprep.subr.bf16.mxu0 0
      %880 = vmatpush1.bf16.msra.mxu0 0
      %881 = vmatprep.subr.bf16.mxu0 0
      %882 = vmatpush1.bf16.msra.mxu0 0
      %883 = vmatprep.subr.bf16.mxu0 0
      %884 = vmatpush1.bf16.msra.mxu0 0
      %885 = vmatprep.subr.bf16.mxu0 0
      %886 = vmatpush1.bf16.msra.mxu0 0
      %887 = vmatprep.subr.bf16.mxu0 0
      %888 = vmatpush1.bf16.msra.mxu0 0
      %889 = vmatprep.mubr.bf16.mxu0 0
      %890 = vmatmul.mubr.bf16.gmra.mrb[0].mxu0 %v846
      %v891 = vpop.f32.mrb[0].mxu0
      %v892 = vadd.f32 0.0, %v891
      %v893 = vpop.f32.mrb[0].mxu0
      %v894 = vpop.f32.mrb[0].mxu0
      %v895 = vadd.f32 0.0, %v894
      %v896 = vpop.f32.mrb[0].mxu0
      %897 = vmatprep.mubr.bf16.mxu0 0
      %898 = vmatmul.mubr.bf16.gmra.mrb[0].mxu0 %v849
      %v899 = vpop.f32.mrb[0].mxu0
      %v900 = vadd.f32 0.0, %v899
      %v901 = vpop.f32.mrb[0].mxu0
      %v902 = vpop.f32.mrb[0].mxu0
      %v903 = vadd.f32 0.0, %v902
      %v904 = vpop.f32.mrb[0].mxu0
      %905 = vmatprep.mubr.bf16.mxu0 0
      %906 = vmatmul.mubr.bf16.gmra.mrb[0].mxu0 %v852
      %v907 = vpop.f32.mrb[0].mxu0
      %v908 = vadd.f32 0.0, %v907
      %v909 = vpop.f32.mrb[0].mxu0
      %v910 = vpop.f32.mrb[0].mxu0
      %v911 = vadd.f32 0.0, %v910
      %v912 = vpop.f32.mrb[0].mxu0
      %913 = vmatprep.mubr.bf16.mxu0 0
      %914 = vmatmul.mubr.bf16.gmra.mrb[0].mxu0 %v855
      %v915 = vpop.f32.mrb[0].mxu0
      %v916 = vadd.f32 0.0, %v915
      %v917 = vpop.f32.mrb[0].mxu0
      %v918 = vpop.f32.mrb[0].mxu0
      %v919 = vadd.f32 0.0, %v918
      %v920 = vpop.f32.mrb[0].mxu0
      %921 = vdwg.mxu0
      %v922 = vadd.f32 %v800, %v892
      %v923 = vadd.f32 %v801, %v895
      %v924 = vadd.f32 %v802, %v900
      %v925 = vadd.f32 %v803, %v903
      %v926 = vadd.f32 %v804, %v908
      %v927 = vadd.f32 %v805, %v911
      %v928 = vadd.f32 %v806, %v916
      %v929 = vadd.f32 %v807, %v919
      %930 = vst.msk [vmem:[#allocation2] sm:$0xff] %vm195, %v922
      %931 = vst.msk [vmem:[#allocation2 + $0x8] sm:$0xff] %vm195, %v923
      %932 = vst.msk [vmem:[#allocation2 + $0x10] sm:$0xff] %vm195, %v924
      %933 = vst.msk [vmem:[#allocation2 + $0x18] sm:$0xff] %vm195, %v925
      %934 = vst.msk [vmem:[#allocation2 + $0x20] sm:$0xff] %vm195, %v926
      %935 = vst.msk [vmem:[#allocation2 + $0x28] sm:$0xff] %vm195, %v927
      %936 = vst.msk [vmem:[#allocation2 + $0x30] sm:$0xff] %vm195, %v928
      %937 = vst.msk [vmem:[#allocation2 + $0x38] sm:$0xff] %vm195, %v929
      %v939 = vshrl.u32 %v784, 16
      %v941 = vrot.slane %v939, 4
      %v942 = vshll.u32 %v784, 16
      %v944 = vrot.slane %v942, 5
      %v945 = vor.u32 %v941, %v944
      %v946 = vrot.slane %v945, 4
      %v948 = vshll.u32 %v785, 16
      %v950 = vrot.slane %v948, 5
      %v951 = vsel %vm364, %v946, %v950
      %v953 = vshrl.u32 %v786, 16
      %v955 = vrot.slane %v953, 4
      %v956 = vshll.u32 %v786, 16
      %v958 = vrot.slane %v956, 5
      %v959 = vor.u32 %v955, %v958
      %v960 = vrot.slane %v959, 4
      %v962 = vshll.u32 %v787, 16
      %v964 = vrot.slane %v962, 5
      %v965 = vsel %vm364, %v960, %v964
      %v967 = vshrl.u32 %v788, 16
      %v969 = vrot.slane %v967, 4
      %v970 = vshll.u32 %v788, 16
      %v972 = vrot.slane %v970, 5
      %v973 = vor.u32 %v969, %v972
      %v974 = vrot.slane %v973, 4
      %v976 = vshll.u32 %v789, 16
      %v978 = vrot.slane %v976, 5
      %v979 = vsel %vm364, %v974, %v978
      %v981 = vshrl.u32 %v790, 16
      %v983 = vrot.slane %v981, 4
      %v984 = vshll.u32 %v790, 16
      %v986 = vrot.slane %v984, 5
      %v987 = vor.u32 %v983, %v986
      %v988 = vrot.slane %v987, 4
      %v990 = vshll.u32 %v791, 16
      %v992 = vrot.slane %v990, 5
      %v993 = vsel %vm364, %v988, %v992
      %v995 = vshrl.u32 %v792, 16
      %v997 = vrot.slane %v995, 4
      %v998 = vshll.u32 %v792, 16
      %v1000 = vrot.slane %v998, 5
      %v1001 = vor.u32 %v997, %v1000
      %v1002 = vrot.slane %v1001, 4
      %v1004 = vshll.u32 %v793, 16
      %v1006 = vrot.slane %v1004, 5
      %v1007 = vsel %vm364, %v1002, %v1006
      %v1009 = vshrl.u32 %v794, 16
      %v1011 = vrot.slane %v1009, 4
      %v1012 = vshll.u32 %v794, 16
      %v1014 = vrot.slane %v1012, 5
      %v1015 = vor.u32 %v1011, %v1014
      %v1016 = vrot.slane %v1015, 4
      %v1018 = vshll.u32 %v795, 16
      %v1020 = vrot.slane %v1018, 5
      %v1021 = vsel %vm364, %v1016, %v1020
      %v1023 = vshrl.u32 %v796, 16
      %v1025 = vrot.slane %v1023, 4
      %v1026 = vshll.u32 %v796, 16
      %v1028 = vrot.slane %v1026, 5
      %v1029 = vor.u32 %v1025, %v1028
      %v1030 = vrot.slane %v1029, 4
      %v1032 = vshll.u32 %v797, 16
      %v1034 = vrot.slane %v1032, 5
      %v1035 = vsel %vm364, %v1030, %v1034
      %v1037 = vshrl.u32 %v798, 16
      %v1039 = vrot.slane %v1037, 4
      %v1040 = vshll.u32 %v798, 16
      %v1042 = vrot.slane %v1040, 5
      %v1043 = vor.u32 %v1039, %v1042
      %v1044 = vrot.slane %v1043, 4
      %v1046 = vshll.u32 %v799, 16
      %v1048 = vrot.slane %v1046, 5
      %v1049 = vsel %vm364, %v1044, %v1048
      %v1050 = vld [vmem:[#allocation2] sm:$0xff]
      %v1051 = vld [vmem:[#allocation2 + $0x8] sm:$0xff]
      %v1052 = vld [vmem:[#allocation2 + $0x10] sm:$0xff]
      %v1053 = vld [vmem:[#allocation2 + $0x18] sm:$0xff]
      %v1054 = vld [vmem:[#allocation2 + $0x20] sm:$0xff]
      %v1055 = vld [vmem:[#allocation2 + $0x28] sm:$0xff]
      %v1056 = vld [vmem:[#allocation2 + $0x30] sm:$0xff]
      %v1057 = vld [vmem:[#allocation2 + $0x38] sm:$0xff]
      %s1058 = scalar_lea.vmem %s1, 64
      %v1059 = vld [vmem:[%s1058] sm:$0xf]
      %v1060 = vld [vmem:[%s1058 + $0x4] sm:$0xf]
      %v1061 = vld [vmem:[%s1058 + $0x8] sm:$0xf]
      %v1062 = vld [vmem:[%s1058 + $0xc] sm:$0xf]
      %v1063 = vunpack.c.l.b16 %v951
      %v1064 = vunpack.c.l.b16 %v965
      %v1065 = vunpack.c.l.b16 %v979
      %v1066 = vunpack.c.l.b16 %v993
      %v1067 = vunpack.c.l.b16 %v1007
      %v1068 = vunpack.c.l.b16 %v1021
      %v1069 = vunpack.c.l.b16 %v1035
      %v1070 = vunpack.c.l.b16 %v1049
      %v1071 = vpack.c.b16 %v1064, %v1063
      %v1072 = vpack.c.b16 %v1066, %v1065
      %v1073 = vpack.c.b16 %v1068, %v1067
      %v1074 = vpack.c.b16 %v1070, %v1069
      %v1079 = vunpack.c.l.b16 %v1059
      %v1080 = vunpack.c.l.b16 %v1060
      %v1081 = vunpack.c.l.b16 %v1061
      %v1082 = vunpack.c.l.b16 %v1062
      %v1083 = vpack.c.b16 %v1080, %v1079
      %v1084 = vpack.c.b16 %v1082, %v1081
      %v1088 = vsel %vm268, %v1071, 0
      %v1091 = vsel %vm268, %v1072, 0
      %v1094 = vsel %vm268, %v1073, 0
      %v1097 = vsel %vm268, %v1074, 0
      %1099 = vmatprep.subr.bf16.mxu0 0
      %1100 = vmatpush1.bf16.msra.mxu0 %v1083
      %1101 = vmatprep.subr.bf16.mxu0 0
      %1102 = vmatpush1.bf16.msra.mxu0 %v1084
      %1103 = vmatprep.subr.bf16.mxu0 0
      %1104 = vmatpush1.bf16.msra.mxu0 0
      %1105 = vmatprep.subr.bf16.mxu0 0
      %1106 = vmatpush1.bf16.msra.mxu0 0
      %1107 = vmatprep.subr.bf16.mxu0 0
      %1108 = vmatpush1.bf16.msra.mxu0 0
      %1109 = vmatprep.subr.bf16.mxu0 0
      %1110 = vmatpush1.bf16.msra.mxu0 0
      %1111 = vmatprep.subr.bf16.mxu0 0
      %1112 = vmatpush1.bf16.msra.mxu0 0
      %1113 = vmatprep.subr.bf16.mxu0 0
      %1114 = vmatpush1.bf16.msra.mxu0 0
      %1115 = vmatprep.subr.bf16.mxu0 0
      %1116 = vmatpush1.bf16.msra.mxu0 0
      %1117 = vmatprep.subr.bf16.mxu0 0
      %1118 = vmatpush1.bf16.msra.mxu0 0
      %1119 = vmatprep.subr.bf16.mxu0 0
      %1120 = vmatpush1.bf16.msra.mxu0 0
      %1121 = vmatprep.subr.bf16.mxu0 0
      %1122 = vmatpush1.bf16.msra.mxu0 0
      %1123 = vmatprep.subr.bf16.mxu0 0
      %1124 = vmatpush1.bf16.msra.mxu0 0
      %1125 = vmatprep.subr.bf16.mxu0 0
      %1126 = vmatpush1.bf16.msra.mxu0 0
      %1127 = vmatprep.subr.bf16.mxu0 0
      %1128 = vmatpush1.bf16.msra.mxu0 0
      %1129 = vmatprep.subr.bf16.mxu0 0
      %1130 = vmatpush1.bf16.msra.mxu0 0
      %1131 = vmatprep.mubr.bf16.mxu0 0
      %1132 = vmatmul.mubr.bf16.gmra.mrb[0].mxu0 %v1088
      %v1133 = vpop.f32.mrb[0].mxu0
      %v1134 = vadd.f32 0.0, %v1133
      %v1135 = vpop.f32.mrb[0].mxu0
      %v1136 = vpop.f32.mrb[0].mxu0
      %v1137 = vadd.f32 0.0, %v1136
      %v1138 = vpop.f32.mrb[0].mxu0
      %1139 = vmatprep.mubr.bf16.mxu0 0
      %1140 = vmatmul.mubr.bf16.gmra.mrb[0].mxu0 %v1091
      %v1141 = vpop.f32.mrb[0].mxu0
      %v1142 = vadd.f32 0.0, %v1141
      %v1143 = vpop.f32.mrb[0].mxu0
      %v1144 = vpop.f32.mrb[0].mxu0
      %v1145 = vadd.f32 0.0, %v1144
      %v1146 = vpop.f32.mrb[0].mxu0
      %1147 = vmatprep.mubr.bf16.mxu0 0
      %1148 = vmatmul.mubr.bf16.gmra.mrb[0].mxu0 %v1094
      %v1149 = vpop.f32.mrb[0].mxu0
      %v1150 = vadd.f32 0.0, %v1149
      %v1151 = vpop.f32.mrb[0].mxu0
      %v1152 = vpop.f32.mrb[0].mxu0
      %v1153 = vadd.f32 0.0, %v1152
      %v1154 = vpop.f32.mrb[0].mxu0
      %1155 = vmatprep.mubr.bf16.mxu0 0
      %1156 = vmatmul.mubr.bf16.gmra.mrb[0].mxu0 %v1097
      %v1157 = vpop.f32.mrb[0].mxu0
      %v1158 = vadd.f32 0.0, %v1157
      %v1159 = vpop.f32.mrb[0].mxu0
      %v1160 = vpop.f32.mrb[0].mxu0
      %v1161 = vadd.f32 0.0, %v1160
      %v1162 = vpop.f32.mrb[0].mxu0
      %1163 = vdwg.mxu0
      %v1164 = vadd.f32 %v1050, %v1134
      %v1165 = vadd.f32 %v1051, %v1137
      %v1166 = vadd.f32 %v1052, %v1142
      %v1167 = vadd.f32 %v1053, %v1145
      %v1168 = vadd.f32 %v1054, %v1150
      %v1169 = vadd.f32 %v1055, %v1153
      %v1170 = vadd.f32 %v1056, %v1158
      %v1171 = vadd.f32 %v1057, %v1161
      %1172 = vst.msk [vmem:[#allocation2] sm:$0xff] %vm195, %v1164
      %1173 = vst.msk [vmem:[#allocation2 + $0x8] sm:$0xff] %vm195, %v1165
      %1174 = vst.msk [vmem:[#allocation2 + $0x10] sm:$0xff] %vm195, %v1166
      %1175 = vst.msk [vmem:[#allocation2 + $0x18] sm:$0xff] %vm195, %v1167
      %1176 = vst.msk [vmem:[#allocation2 + $0x20] sm:$0xff] %vm195, %v1168
      %1177 = vst.msk [vmem:[#allocation2 + $0x28] sm:$0xff] %vm195, %v1169
      %1178 = vst.msk [vmem:[#allocation2 + $0x30] sm:$0xff] %vm195, %v1170
      %1179 = vst.msk [vmem:[#allocation2 + $0x38] sm:$0xff] %vm195, %v1171
      %v1188 = vrot.slane %v784, 5
      %v1189 = vrot.slane %v1188, 4
      %v1190 = vrot.slane %v785, 5
      %v1191 = vsel %vm617, %v1189, %v1190
      %v1192 = vrot.slane %v786, 5
      %v1193 = vrot.slane %v1192, 4
      %v1194 = vrot.slane %v787, 5
      %v1195 = vsel %vm617, %v1193, %v1194
      %v1196 = vrot.slane %v788, 5
      %v1197 = vrot.slane %v1196, 4
      %v1198 = vrot.slane %v789, 5
      %v1199 = vsel %vm617, %v1197, %v1198
      %v1200 = vrot.slane %v790, 5
      %v1201 = vrot.slane %v1200, 4
      %v1202 = vrot.slane %v791, 5
      %v1203 = vsel %vm617, %v1201, %v1202
      %v1204 = vrot.slane %v792, 5
      %v1205 = vrot.slane %v1204, 4
      %v1206 = vrot.slane %v793, 5
      %v1207 = vsel %vm617, %v1205, %v1206
      %v1208 = vrot.slane %v794, 5
      %v1209 = vrot.slane %v1208, 4
      %v1210 = vrot.slane %v795, 5
      %v1211 = vsel %vm617, %v1209, %v1210
      %v1212 = vrot.slane %v796, 5
      %v1213 = vrot.slane %v1212, 4
      %v1214 = vrot.slane %v797, 5
      %v1215 = vsel %vm617, %v1213, %v1214
      %v1216 = vrot.slane %v798, 5
      %v1217 = vrot.slane %v1216, 4
      %v1218 = vrot.slane %v799, 5
      %v1219 = vsel %vm617, %v1217, %v1218
      %v1220 = vld [vmem:[#allocation2] sm:$0xff]
      %v1221 = vld [vmem:[#allocation2 + $0x8] sm:$0xff]
      %v1222 = vld [vmem:[#allocation2 + $0x10] sm:$0xff]
      %v1223 = vld [vmem:[#allocation2 + $0x18] sm:$0xff]
      %v1224 = vld [vmem:[#allocation2 + $0x20] sm:$0xff]
      %v1225 = vld [vmem:[#allocation2 + $0x28] sm:$0xff]
      %v1226 = vld [vmem:[#allocation2 + $0x30] sm:$0xff]
      %v1227 = vld [vmem:[#allocation2 + $0x38] sm:$0xff]
      %s1228 = scalar_lea.vmem %s1, 80
      %v1229 = vld [vmem:[%s1228] sm:$0xf]
      %v1230 = vld [vmem:[%s1228 + $0x4] sm:$0xf]
      %v1231 = vld [vmem:[%s1228 + $0x8] sm:$0xf]
      %v1232 = vld [vmem:[%s1228 + $0xc] sm:$0xf]
      %v1233 = vunpack.c.l.b16 %v1191
      %v1234 = vunpack.c.l.b16 %v1195
      %v1235 = vunpack.c.l.b16 %v1199
      %v1236 = vunpack.c.l.b16 %v1203
      %v1237 = vunpack.c.l.b16 %v1207
      %v1238 = vunpack.c.l.b16 %v1211
      %v1239 = vunpack.c.l.b16 %v1215
      %v1240 = vunpack.c.l.b16 %v1219
      %v1241 = vpack.c.b16 %v1234, %v1233
      %v1242 = vpack.c.b16 %v1236, %v1235
      %v1243 = vpack.c.b16 %v1238, %v1237
      %v1244 = vpack.c.b16 %v1240, %v1239
      %v1249 = vunpack.c.l.b16 %v1229
      %v1250 = vunpack.c.l.b16 %v1230
      %v1251 = vunpack.c.l.b16 %v1231
      %v1252 = vunpack.c.l.b16 %v1232
      %v1253 = vpack.c.b16 %v1250, %v1249
      %v1254 = vpack.c.b16 %v1252, %v1251
      %v1258 = vsel %vm268, %v1241, 0
      %v1261 = vsel %vm268, %v1242, 0
      %v1264 = vsel %vm268, %v1243, 0
      %v1267 = vsel %vm268, %v1244, 0
      %1269 = vmatprep.subr.bf16.mxu0 0
      %1270 = vmatpush1.bf16.msra.mxu0 %v1253
      %1271 = vmatprep.subr.bf16.mxu0 0
      %1272 = vmatpush1.bf16.msra.mxu0 %v1254
      %1273 = vmatprep.subr.bf16.mxu0 0
      %1274 = vmatpush1.bf16.msra.mxu0 0
      %1275 = vmatprep.subr.bf16.mxu0 0
      %1276 = vmatpush1.bf16.msra.mxu0 0
      %1277 = vmatprep.subr.bf16.mxu0 0
      %1278 = vmatpush1.bf16.msra.mxu0 0
      %1279 = vmatprep.subr.bf16.mxu0 0
      %1280 = vmatpush1.bf16.msra.mxu0 0
      %1281 = vmatprep.subr.bf16.mxu0 0
      %1282 = vmatpush1.bf16.msra.mxu0 0
      %1283 = vmatprep.subr.bf16.mxu0 0
      %1284 = vmatpush1.bf16.msra.mxu0 0
      %1285 = vmatprep.subr.bf16.mxu0 0
      %1286 = vmatpush1.bf16.msra.mxu0 0
      %1287 = vmatprep.subr.bf16.mxu0 0
      %1288 = vmatpush1.bf16.msra.mxu0 0
      %1289 = vmatprep.subr.bf16.mxu0 0
      %1290 = vmatpush1.bf16.msra.mxu0 0
      %1291 = vmatprep.subr.bf16.mxu0 0
      %1292 = vmatpush1.bf16.msra.mxu0 0
      %1293 = vmatprep.subr.bf16.mxu0 0
      %1294 = vmatpush1.bf16.msra.mxu0 0
      %1295 = vmatprep.subr.bf16.mxu0 0
      %1296 = vmatpush1.bf16.msra.mxu0 0
      %1297 = vmatprep.subr.bf16.mxu0 0
      %1298 = vmatpush1.bf16.msra.mxu0 0
      %1299 = vmatprep.subr.bf16.mxu0 0
      %1300 = vmatpush1.bf16.msra.mxu0 0
      %1301 = vmatprep.mubr.bf16.mxu0 0
      %1302 = vmatmul.mubr.bf16.gmra.mrb[0].mxu0 %v1258
      %v1303 = vpop.f32.mrb[0].mxu0
      %v1304 = vadd.f32 0.0, %v1303
      %v1305 = vpop.f32.mrb[0].mxu0
      %v1306 = vpop.f32.mrb[0].mxu0
      %v1307 = vadd.f32 0.0, %v1306
      %v1308 = vpop.f32.mrb[0].mxu0
      %1309 = vmatprep.mubr.bf16.mxu0 0
      %1310 = vmatmul.mubr.bf16.gmra.mrb[0].mxu0 %v1261
      %v1311 = vpop.f32.mrb[0].mxu0
      %v1312 = vadd.f32 0.0, %v1311
      %v1313 = vpop.f32.mrb[0].mxu0
      %v1314 = vpop.f32.mrb[0].mxu0
      %v1315 = vadd.f32 0.0, %v1314
      %v1316 = vpop.f32.mrb[0].mxu0
      %1317 = vmatprep.mubr.bf16.mxu0 0
      %1318 = vmatmul.mubr.bf16.gmra.mrb[0].mxu0 %v1264
      %v1319 = vpop.f32.mrb[0].mxu0
      %v1320 = vadd.f32 0.0, %v1319
      %v1321 = vpop.f32.mrb[0].mxu0
      %v1322 = vpop.f32.mrb[0].mxu0
      %v1323 = vadd.f32 0.0, %v1322
      %v1324 = vpop.f32.mrb[0].mxu0
      %1325 = vmatprep.mubr.bf16.mxu0 0
      %1326 = vmatmul.mubr.bf16.gmra.mrb[0].mxu0 %v1267
      %v1327 = vpop.f32.mrb[0].mxu0
      %v1328 = vadd.f32 0.0, %v1327
      %v1329 = vpop.f32.mrb[0].mxu0
      %v1330 = vpop.f32.mrb[0].mxu0
      %v1331 = vadd.f32 0.0, %v1330
      %v1332 = vpop.f32.mrb[0].mxu0
      %1333 = vdwg.mxu0
      %v1334 = vadd.f32 %v1220, %v1304
      %v1335 = vadd.f32 %v1221, %v1307
      %v1336 = vadd.f32 %v1222, %v1312
      %v1337 = vadd.f32 %v1223, %v1315
      %v1338 = vadd.f32 %v1224, %v1320
      %v1339 = vadd.f32 %v1225, %v1323
      %v1340 = vadd.f32 %v1226, %v1328
      %v1341 = vadd.f32 %v1227, %v1331
      %1342 = vst.msk [vmem:[#allocation2] sm:$0xff] %vm195, %v1334
      %1343 = vst.msk [vmem:[#allocation2 + $0x8] sm:$0xff] %vm195, %v1335
      %1344 = vst.msk [vmem:[#allocation2 + $0x10] sm:$0xff] %vm195, %v1336
      %1345 = vst.msk [vmem:[#allocation2 + $0x18] sm:$0xff] %vm195, %v1337
      %1346 = vst.msk [vmem:[#allocation2 + $0x20] sm:$0xff] %vm195, %v1338
      %1347 = vst.msk [vmem:[#allocation2 + $0x28] sm:$0xff] %vm195, %v1339
      %1348 = vst.msk [vmem:[#allocation2 + $0x30] sm:$0xff] %vm195, %v1340
      %1349 = vst.msk [vmem:[#allocation2 + $0x38] sm:$0xff] %vm195, %v1341
      %s1350 = sadd.s32 %s204, 2
      %s1351 = smul.u32 %s1350, 2
      %s1352 = smul.addr %s1351, 4
      %s1353 = scalar_lea.vmem %s183, %s1352
      %v1354 = vld [vmem:[%s1353] sm:$0xf]
      %v1355 = vld [vmem:[%s1353 + $0x4] sm:$0x1]
      %v1356 = vld [vmem:[%s1353 + $0x8] sm:$0xf]
      %v1357 = vld [vmem:[%s1353 + $0xc] sm:$0x1]
      %v1358 = vld [vmem:[%s1353 + $0x10] sm:$0xf]
      %v1359 = vld [vmem:[%s1353 + $0x14] sm:$0x1]
      %v1360 = vld [vmem:[%s1353 + $0x18] sm:$0xf]
      %v1361 = vld [vmem:[%s1353 + $0x1c] sm:$0x1]
      %v1362 = vld [vmem:[%s1353 + $0x20] sm:$0xf]
      %v1363 = vld [vmem:[%s1353 + $0x24] sm:$0x1]
      %v1364 = vld [vmem:[%s1353 + $0x28] sm:$0xf]
      %v1365 = vld [vmem:[%s1353 + $0x2c] sm:$0x1]
      %v1366 = vld [vmem:[%s1353 + $0x30] sm:$0xf]
      %v1367 = vld [vmem:[%s1353 + $0x34] sm:$0x1]
      %v1368 = vld [vmem:[%s1353 + $0x38] sm:$0xf]
      %v1369 = vld [vmem:[%s1353 + $0x3c] sm:$0x1]
      %v1370 = vld [vmem:[#allocation2] sm:$0xff]
      %v1371 = vld [vmem:[#allocation2 + $0x8] sm:$0xff]
      %v1372 = vld [vmem:[#allocation2 + $0x10] sm:$0xff]
      %v1373 = vld [vmem:[#allocation2 + $0x18] sm:$0xff]
      %v1374 = vld [vmem:[#allocation2 + $0x20] sm:$0xff]
      %v1375 = vld [vmem:[#allocation2 + $0x28] sm:$0xff]
      %v1376 = vld [vmem:[#allocation2 + $0x30] sm:$0xff]
      %v1377 = vld [vmem:[#allocation2 + $0x38] sm:$0xff]
      %s1378 = scalar_lea.vmem %s1, 96
      %v1379 = vld [vmem:[%s1378] sm:$0xf]
      %v1380 = vld [vmem:[%s1378 + $0x4] sm:$0xf]
      %v1381 = vld [vmem:[%s1378 + $0x8] sm:$0xf]
      %v1382 = vld [vmem:[%s1378 + $0xc] sm:$0xf]
      %v1391 = vunpack.c.l.b16 %v1354
      %v1392 = vunpack.c.l.b16 %v1356
      %v1393 = vunpack.c.l.b16 %v1358
      %v1394 = vunpack.c.l.b16 %v1360
      %v1395 = vunpack.c.l.b16 %v1362
      %v1396 = vunpack.c.l.b16 %v1364
      %v1397 = vunpack.c.l.b16 %v1366
      %v1398 = vunpack.c.l.b16 %v1368
      %v1399 = vpack.c.b16 %v1392, %v1391
      %v1400 = vpack.c.b16 %v1394, %v1393
      %v1401 = vpack.c.b16 %v1396, %v1395
      %v1402 = vpack.c.b16 %v1398, %v1397
      %v1407 = vunpack.c.l.b16 %v1379
      %v1408 = vunpack.c.l.b16 %v1380
      %v1409 = vunpack.c.l.b16 %v1381
      %v1410 = vunpack.c.l.b16 %v1382
      %v1411 = vpack.c.b16 %v1408, %v1407
      %v1412 = vpack.c.b16 %v1410, %v1409
      %v1416 = vsel %vm268, %v1399, 0
      %v1419 = vsel %vm268, %v1400, 0
      %v1422 = vsel %vm268, %v1401, 0
      %v1425 = vsel %vm268, %v1402, 0
      %1427 = vmatprep.subr.bf16.mxu0 0
      %1428 = vmatpush1.bf16.msra.mxu0 %v1411
      %1429 = vmatprep.subr.bf16.mxu0 0
      %1430 = vmatpush1.bf16.msra.mxu0 %v1412
      %1431 = vmatprep.subr.bf16.mxu0 0
      %1432 = vmatpush1.bf16.msra.mxu0 0
      %1433 = vmatprep.subr.bf16.mxu0 0
      %1434 = vmatpush1.bf16.msra.mxu0 0
      %1435 = vmatprep.subr.bf16.mxu0 0
      %1436 = vmatpush1.bf16.msra.mxu0 0
      %1437 = vmatprep.subr.bf16.mxu0 0
      %1438 = vmatpush1.bf16.msra.mxu0 0
      %1439 = vmatprep.subr.bf16.mxu0 0
      %1440 = vmatpush1.bf16.msra.mxu0 0
      %1441 = vmatprep.subr.bf16.mxu0 0
      %1442 = vmatpush1.bf16.msra.mxu0 0
      %1443 = vmatprep.subr.bf16.mxu0 0
      %1444 = vmatpush1.bf16.msra.mxu0 0
      %1445 = vmatprep.subr.bf16.mxu0 0
      %1446 = vmatpush1.bf16.msra.mxu0 0
      %1447 = vmatprep.subr.bf16.mxu0 0
      %1448 = vmatpush1.bf16.msra.mxu0 0
      %1449 = vmatprep.subr.bf16.mxu0 0
      %1450 = vmatpush1.bf16.msra.mxu0 0
      %1451 = vmatprep.subr.bf16.mxu0 0
      %1452 = vmatpush1.bf16.msra.mxu0 0
      %1453 = vmatprep.subr.bf16.mxu0 0
      %1454 = vmatpush1.bf16.msra.mxu0 0
      %1455 = vmatprep.subr.bf16.mxu0 0
      %1456 = vmatpush1.bf16.msra.mxu0 0
      %1457 = vmatprep.subr.bf16.mxu0 0
      %1458 = vmatpush1.bf16.msra.mxu0 0
      %1459 = vmatprep.mubr.bf16.mxu0 0
      %1460 = vmatmul.mubr.bf16.gmra.mrb[0].mxu0 %v1416
      %v1461 = vpop.f32.mrb[0].mxu0
      %v1462 = vadd.f32 0.0, %v1461
      %v1463 = vpop.f32.mrb[0].mxu0
      %v1464 = vpop.f32.mrb[0].mxu0
      %v1465 = vadd.f32 0.0, %v1464
      %v1466 = vpop.f32.mrb[0].mxu0
      %1467 = vmatprep.mubr.bf16.mxu0 0
      %1468 = vmatmul.mubr.bf16.gmra.mrb[0].mxu0 %v1419
      %v1469 = vpop.f32.mrb[0].mxu0
      %v1470 = vadd.f32 0.0, %v1469
      %v1471 = vpop.f32.mrb[0].mxu0
      %v1472 = vpop.f32.mrb[0].mxu0
      %v1473 = vadd.f32 0.0, %v1472
      %v1474 = vpop.f32.mrb[0].mxu0
      %1475 = vmatprep.mubr.bf16.mxu0 0
      %1476 = vmatmul.mubr.bf16.gmra.mrb[0].mxu0 %v1422
      %v1477 = vpop.f32.mrb[0].mxu0
      %v1478 = vadd.f32 0.0, %v1477
      %v1479 = vpop.f32.mrb[0].mxu0
      %v1480 = vpop.f32.mrb[0].mxu0
      %v1481 = vadd.f32 0.0, %v1480
      %v1482 = vpop.f32.mrb[0].mxu0
      %1483 = vmatprep.mubr.bf16.mxu0 0
      %1484 = vmatmul.mubr.bf16.gmra.mrb[0].mxu0 %v1425
      %v1485 = vpop.f32.mrb[0].mxu0
      %v1486 = vadd.f32 0.0, %v1485
      %v1487 = vpop.f32.mrb[0].mxu0
      %v1488 = vpop.f32.mrb[0].mxu0
      %v1489 = vadd.f32 0.0, %v1488
      %v1490 = vpop.f32.mrb[0].mxu0
      %1491 = vdwg.mxu0
      %v1492 = vadd.f32 %v1370, %v1462
      %v1493 = vadd.f32 %v1371, %v1465
      %v1494 = vadd.f32 %v1372, %v1470
      %v1495 = vadd.f32 %v1373, %v1473
      %v1496 = vadd.f32 %v1374, %v1478
      %v1497 = vadd.f32 %v1375, %v1481
      %v1498 = vadd.f32 %v1376, %v1486
      %v1499 = vadd.f32 %v1377, %v1489
      %1500 = vst.msk [vmem:[#allocation2] sm:$0xff] %vm195, %v1492
      %1501 = vst.msk [vmem:[#allocation2 + $0x8] sm:$0xff] %vm195, %v1493
      %1502 = vst.msk [vmem:[#allocation2 + $0x10] sm:$0xff] %vm195, %v1494
      %1503 = vst.msk [vmem:[#allocation2 + $0x18] sm:$0xff] %vm195, %v1495
      %1504 = vst.msk [vmem:[#allocation2 + $0x20] sm:$0xff] %vm195, %v1496
      %1505 = vst.msk [vmem:[#allocation2 + $0x28] sm:$0xff] %vm195, %v1497
      %1506 = vst.msk [vmem:[#allocation2 + $0x30] sm:$0xff] %vm195, %v1498
      %1507 = vst.msk [vmem:[#allocation2 + $0x38] sm:$0xff] %vm195, %v1499
      %v1509 = vshrl.u32 %v1354, 16
      %v1511 = vrot.slane %v1509, 4
      %v1512 = vshll.u32 %v1354, 16
      %v1514 = vrot.slane %v1512, 5
      %v1515 = vor.u32 %v1511, %v1514
      %v1516 = vrot.slane %v1515, 4
      %v1518 = vshll.u32 %v1355, 16
      %v1520 = vrot.slane %v1518, 5
      %v1521 = vsel %vm364, %v1516, %v1520
      %v1523 = vshrl.u32 %v1356, 16
      %v1525 = vrot.slane %v1523, 4
      %v1526 = vshll.u32 %v1356, 16
      %v1528 = vrot.slane %v1526, 5
      %v1529 = vor.u32 %v1525, %v1528
      %v1530 = vrot.slane %v1529, 4
      %v1532 = vshll.u32 %v1357, 16
      %v1534 = vrot.slane %v1532, 5
      %v1535 = vsel %vm364, %v1530, %v1534
      %v1537 = vshrl.u32 %v1358, 16
      %v1539 = vrot.slane %v1537, 4
      %v1540 = vshll.u32 %v1358, 16
      %v1542 = vrot.slane %v1540, 5
      %v1543 = vor.u32 %v1539, %v1542
      %v1544 = vrot.slane %v1543, 4
      %v1546 = vshll.u32 %v1359, 16
      %v1548 = vrot.slane %v1546, 5
      %v1549 = vsel %vm364, %v1544, %v1548
      %v1551 = vshrl.u32 %v1360, 16
      %v1553 = vrot.slane %v1551, 4
      %v1554 = vshll.u32 %v1360, 16
      %v1556 = vrot.slane %v1554, 5
      %v1557 = vor.u32 %v1553, %v1556
      %v1558 = vrot.slane %v1557, 4
      %v1560 = vshll.u32 %v1361, 16
      %v1562 = vrot.slane %v1560, 5
      %v1563 = vsel %vm364, %v1558, %v1562
      %v1565 = vshrl.u32 %v1362, 16
      %v1567 = vrot.slane %v1565, 4
      %v1568 = vshll.u32 %v1362, 16
      %v1570 = vrot.slane %v1568, 5
      %v1571 = vor.u32 %v1567, %v1570
      %v1572 = vrot.slane %v1571, 4
      %v1574 = vshll.u32 %v1363, 16
      %v1576 = vrot.slane %v1574, 5
      %v1577 = vsel %vm364, %v1572, %v1576
      %v1579 = vshrl.u32 %v1364, 16
      %v1581 = vrot.slane %v1579, 4
      %v1582 = vshll.u32 %v1364, 16
      %v1584 = vrot.slane %v1582, 5
      %v1585 = vor.u32 %v1581, %v1584
      %v1586 = vrot.slane %v1585, 4
      %v1588 = vshll.u32 %v1365, 16
      %v1590 = vrot.slane %v1588, 5
      %v1591 = vsel %vm364, %v1586, %v1590
      %v1593 = vshrl.u32 %v1366, 16
      %v1595 = vrot.slane %v1593, 4
      %v1596 = vshll.u32 %v1366, 16
      %v1598 = vrot.slane %v1596, 5
      %v1599 = vor.u32 %v1595, %v1598
      %v1600 = vrot.slane %v1599, 4
      %v1602 = vshll.u32 %v1367, 16
      %v1604 = vrot.slane %v1602, 5
      %v1605 = vsel %vm364, %v1600, %v1604
      %v1607 = vshrl.u32 %v1368, 16
      %v1609 = vrot.slane %v1607, 4
      %v1610 = vshll.u32 %v1368, 16
      %v1612 = vrot.slane %v1610, 5
      %v1613 = vor.u32 %v1609, %v1612
      %v1614 = vrot.slane %v1613, 4
      %v1616 = vshll.u32 %v1369, 16
      %v1618 = vrot.slane %v1616, 5
      %v1619 = vsel %vm364, %v1614, %v1618
      %v1620 = vld [vmem:[#allocation2] sm:$0xff]
      %v1621 = vld [vmem:[#allocation2 + $0x8] sm:$0xff]
      %v1622 = vld [vmem:[#allocation2 + $0x10] sm:$0xff]
      %v1623 = vld [vmem:[#allocation2 + $0x18] sm:$0xff]
      %v1624 = vld [vmem:[#allocation2 + $0x20] sm:$0xff]
      %v1625 = vld [vmem:[#allocation2 + $0x28] sm:$0xff]
      %v1626 = vld [vmem:[#allocation2 + $0x30] sm:$0xff]
      %v1627 = vld [vmem:[#allocation2 + $0x38] sm:$0xff]
      %s1628 = scalar_lea.vmem %s1, 112
      %v1629 = vld [vmem:[%s1628] sm:$0xf]
      %v1630 = vld [vmem:[%s1628 + $0x4] sm:$0xf]
      %v1631 = vld [vmem:[%s1628 + $0x8] sm:$0xf]
      %v1632 = vld [vmem:[%s1628 + $0xc] sm:$0xf]
      %v1633 = vunpack.c.l.b16 %v1521
      %v1634 = vunpack.c.l.b16 %v1535
      %v1635 = vunpack.c.l.b16 %v1549
      %v1636 = vunpack.c.l.b16 %v1563
      %v1637 = vunpack.c.l.b16 %v1577
      %v1638 = vunpack.c.l.b16 %v1591
      %v1639 = vunpack.c.l.b16 %v1605
      %v1640 = vunpack.c.l.b16 %v1619
      %v1641 = vpack.c.b16 %v1634, %v1633
      %v1642 = vpack.c.b16 %v1636, %v1635
      %v1643 = vpack.c.b16 %v1638, %v1637
      %v1644 = vpack.c.b16 %v1640, %v1639
      %v1649 = vunpack.c.l.b16 %v1629
      %v1650 = vunpack.c.l.b16 %v1630
      %v1651 = vunpack.c.l.b16 %v1631
      %v1652 = vunpack.c.l.b16 %v1632
      %v1653 = vpack.c.b16 %v1650, %v1649
      %v1654 = vpack.c.b16 %v1652, %v1651
      %v1658 = vsel %vm268, %v1641, 0
      %v1661 = vsel %vm268, %v1642, 0
      %v1664 = vsel %vm268, %v1643, 0
      %v1667 = vsel %vm268, %v1644, 0
      %1669 = vmatprep.subr.bf16.mxu0 0
      %1670 = vmatpush1.bf16.msra.mxu0 %v1653
      %1671 = vmatprep.subr.bf16.mxu0 0
      %1672 = vmatpush1.bf16.msra.mxu0 %v1654
      %1673 = vmatprep.subr.bf16.mxu0 0
      %1674 = vmatpush1.bf16.msra.mxu0 0
      %1675 = vmatprep.subr.bf16.mxu0 0
      %1676 = vmatpush1.bf16.msra.mxu0 0
      %1677 = vmatprep.subr.bf16.mxu0 0
      %1678 = vmatpush1.bf16.msra.mxu0 0
      %1679 = vmatprep.subr.bf16.mxu0 0
      %1680 = vmatpush1.bf16.msra.mxu0 0
      %1681 = vmatprep.subr.bf16.mxu0 0
      %1682 = vmatpush1.bf16.msra.mxu0 0
      %1683 = vmatprep.subr.bf16.mxu0 0
      %1684 = vmatpush1.bf16.msra.mxu0 0
      %1685 = vmatprep.subr.bf16.mxu0 0
      %1686 = vmatpush1.bf16.msra.mxu0 0
      %1687 = vmatprep.subr.bf16.mxu0 0
      %1688 = vmatpush1.bf16.msra.mxu0 0
      %1689 = vmatprep.subr.bf16.mxu0 0
      %1690 = vmatpush1.bf16.msra.mxu0 0
      %1691 = vmatprep.subr.bf16.mxu0 0
      %1692 = vmatpush1.bf16.msra.mxu0 0
      %1693 = vmatprep.subr.bf16.mxu0 0
      %1694 = vmatpush1.bf16.msra.mxu0 0
      %1695 = vmatprep.subr.bf16.mxu0 0
      %1696 = vmatpush1.bf16.msra.mxu0 0
      %1697 = vmatprep.subr.bf16.mxu0 0
      %1698 = vmatpush1.bf16.msra.mxu0 0
      %1699 = vmatprep.subr.bf16.mxu0 0
      %1700 = vmatpush1.bf16.msra.mxu0 0
      %1701 = vmatprep.mubr.bf16.mxu0 0
      %1702 = vmatmul.mubr.bf16.gmra.mrb[0].mxu0 %v1658
      %v1703 = vpop.f32.mrb[0].mxu0
      %v1704 = vadd.f32 0.0, %v1703
      %v1705 = vpop.f32.mrb[0].mxu0
      %v1706 = vpop.f32.mrb[0].mxu0
      %v1707 = vadd.f32 0.0, %v1706
      %v1708 = vpop.f32.mrb[0].mxu0
      %1709 = vmatprep.mubr.bf16.mxu0 0
      %1710 = vmatmul.mubr.bf16.gmra.mrb[0].mxu0 %v1661
      %v1711 = vpop.f32.mrb[0].mxu0
      %v1712 = vadd.f32 0.0, %v1711
      %v1713 = vpop.f32.mrb[0].mxu0
      %v1714 = vpop.f32.mrb[0].mxu0
      %v1715 = vadd.f32 0.0, %v1714
      %v1716 = vpop.f32.mrb[0].mxu0
      %1717 = vmatprep.mubr.bf16.mxu0 0
      %1718 = vmatmul.mubr.bf16.gmra.mrb[0].mxu0 %v1664
      %v1719 = vpop.f32.mrb[0].mxu0
      %v1720 = vadd.f32 0.0, %v1719
      %v1721 = vpop.f32.mrb[0].mxu0
      %v1722 = vpop.f32.mrb[0].mxu0
      %v1723 = vadd.f32 0.0, %v1722
      %v1724 = vpop.f32.mrb[0].mxu0
      %1725 = vmatprep.mubr.bf16.mxu0 0
      %1726 = vmatmul.mubr.bf16.gmra.mrb[0].mxu0 %v1667
      %v1727 = vpop.f32.mrb[0].mxu0
      %v1728 = vadd.f32 0.0, %v1727
      %v1729 = vpop.f32.mrb[0].mxu0
      %v1730 = vpop.f32.mrb[0].mxu0
      %v1731 = vadd.f32 0.0, %v1730
      %v1732 = vpop.f32.mrb[0].mxu0
      %1733 = vdwg.mxu0
      %v1734 = vadd.f32 %v1620, %v1704
      %v1735 = vadd.f32 %v1621, %v1707
      %v1736 = vadd.f32 %v1622, %v1712
      %v1737 = vadd.f32 %v1623, %v1715
      %v1738 = vadd.f32 %v1624, %v1720
      %v1739 = vadd.f32 %v1625, %v1723
      %v1740 = vadd.f32 %v1626, %v1728
      %v1741 = vadd.f32 %v1627, %v1731
      %1742 = vst.msk [vmem:[#allocation2] sm:$0xff] %vm195, %v1734
      %1743 = vst.msk [vmem:[#allocation2 + $0x8] sm:$0xff] %vm195, %v1735
      %1744 = vst.msk [vmem:[#allocation2 + $0x10] sm:$0xff] %vm195, %v1736
      %1745 = vst.msk [vmem:[#allocation2 + $0x18] sm:$0xff] %vm195, %v1737
      %1746 = vst.msk [vmem:[#allocation2 + $0x20] sm:$0xff] %vm195, %v1738
      %1747 = vst.msk [vmem:[#allocation2 + $0x28] sm:$0xff] %vm195, %v1739
      %1748 = vst.msk [vmem:[#allocation2 + $0x30] sm:$0xff] %vm195, %v1740
      %1749 = vst.msk [vmem:[#allocation2 + $0x38] sm:$0xff] %vm195, %v1741
      %v1758 = vrot.slane %v1354, 5
      %v1759 = vrot.slane %v1758, 4
      %v1760 = vrot.slane %v1355, 5
      %v1761 = vsel %vm617, %v1759, %v1760
      %v1762 = vrot.slane %v1356, 5
      %v1763 = vrot.slane %v1762, 4
      %v1764 = vrot.slane %v1357, 5
      %v1765 = vsel %vm617, %v1763, %v1764
      %v1766 = vrot.slane %v1358, 5
      %v1767 = vrot.slane %v1766, 4
      %v1768 = vrot.slane %v1359, 5
      %v1769 = vsel %vm617, %v1767, %v1768
      %v1770 = vrot.slane %v1360, 5
      %v1771 = vrot.slane %v1770, 4
      %v1772 = vrot.slane %v1361, 5
      %v1773 = vsel %vm617, %v1771, %v1772
      %v1774 = vrot.slane %v1362, 5
      %v1775 = vrot.slane %v1774, 4
      %v1776 = vrot.slane %v1363, 5
      %v1777 = vsel %vm617, %v1775, %v1776
      %v1778 = vrot.slane %v1364, 5
      %v1779 = vrot.slane %v1778, 4
      %v1780 = vrot.slane %v1365, 5
      %v1781 = vsel %vm617, %v1779, %v1780
      %v1782 = vrot.slane %v1366, 5
      %v1783 = vrot.slane %v1782, 4
      %v1784 = vrot.slane %v1367, 5
      %v1785 = vsel %vm617, %v1783, %v1784
      %v1786 = vrot.slane %v1368, 5
      %v1787 = vrot.slane %v1786, 4
      %v1788 = vrot.slane %v1369, 5
      %v1789 = vsel %vm617, %v1787, %v1788
      %v1790 = vld [vmem:[#allocation2] sm:$0xff]
      %v1791 = vld [vmem:[#allocation2 + $0x8] sm:$0xff]
      %v1792 = vld [vmem:[#allocation2 + $0x10] sm:$0xff]
      %v1793 = vld [vmem:[#allocation2 + $0x18] sm:$0xff]
      %v1794 = vld [vmem:[#allocation2 + $0x20] sm:$0xff]
      %v1795 = vld [vmem:[#allocation2 + $0x28] sm:$0xff]
      %v1796 = vld [vmem:[#allocation2 + $0x30] sm:$0xff]
      %v1797 = vld [vmem:[#allocation2 + $0x38] sm:$0xff]
      %s1798 = scalar_lea.vmem %s1, 128
      %v1799 = vld [vmem:[%s1798] sm:$0xf]
      %v1800 = vld [vmem:[%s1798 + $0x4] sm:$0xf]
      %v1801 = vld [vmem:[%s1798 + $0x8] sm:$0xf]
      %v1802 = vld [vmem:[%s1798 + $0xc] sm:$0xf]
      %v1803 = vunpack.c.l.b16 %v1761
      %v1804 = vunpack.c.l.b16 %v1765
      %v1805 = vunpack.c.l.b16 %v1769
      %v1806 = vunpack.c.l.b16 %v1773
      %v1807 = vunpack.c.l.b16 %v1777
      %v1808 = vunpack.c.l.b16 %v1781
      %v1809 = vunpack.c.l.b16 %v1785
      %v1810 = vunpack.c.l.b16 %v1789
      %v1811 = vpack.c.b16 %v1804, %v1803
      %v1812 = vpack.c.b16 %v1806, %v1805
      %v1813 = vpack.c.b16 %v1808, %v1807
      %v1814 = vpack.c.b16 %v1810, %v1809
      %v1819 = vunpack.c.l.b16 %v1799
      %v1820 = vunpack.c.l.b16 %v1800
      %v1821 = vunpack.c.l.b16 %v1801
      %v1822 = vunpack.c.l.b16 %v1802
      %v1823 = vpack.c.b16 %v1820, %v1819
      %v1824 = vpack.c.b16 %v1822, %v1821
      %v1828 = vsel %vm268, %v1811, 0
      %v1831 = vsel %vm268, %v1812, 0
      %v1834 = vsel %vm268, %v1813, 0
      %v1837 = vsel %vm268, %v1814, 0
      %1839 = vmatprep.subr.bf16.mxu0 0
      %1840 = vmatpush1.bf16.msra.mxu0 %v1823
      %1841 = vmatprep.subr.bf16.mxu0 0
      %1842 = vmatpush1.bf16.msra.mxu0 %v1824
      %1843 = vmatprep.subr.bf16.mxu0 0
      %1844 = vmatpush1.bf16.msra.mxu0 0
      %1845 = vmatprep.subr.bf16.mxu0 0
      %1846 = vmatpush1.bf16.msra.mxu0 0
      %1847 = vmatprep.subr.bf16.mxu0 0
      %1848 = vmatpush1.bf16.msra.mxu0 0
      %1849 = vmatprep.subr.bf16.mxu0 0
      %1850 = vmatpush1.bf16.msra.mxu0 0
      %1851 = vmatprep.subr.bf16.mxu0 0
      %1852 = vmatpush1.bf16.msra.mxu0 0
      %1853 = vmatprep.subr.bf16.mxu0 0
      %1854 = vmatpush1.bf16.msra.mxu0 0
      %1855 = vmatprep.subr.bf16.mxu0 0
      %1856 = vmatpush1.bf16.msra.mxu0 0
      %1857 = vmatprep.subr.bf16.mxu0 0
      %1858 = vmatpush1.bf16.msra.mxu0 0
      %1859 = vmatprep.subr.bf16.mxu0 0
      %1860 = vmatpush1.bf16.msra.mxu0 0
      %1861 = vmatprep.subr.bf16.mxu0 0
      %1862 = vmatpush1.bf16.msra.mxu0 0
      %1863 = vmatprep.subr.bf16.mxu0 0
      %1864 = vmatpush1.bf16.msra.mxu0 0
      %1865 = vmatprep.subr.bf16.mxu0 0
      %1866 = vmatpush1.bf16.msra.mxu0 0
      %1867 = vmatprep.subr.bf16.mxu0 0
      %1868 = vmatpush1.bf16.msra.mxu0 0
      %1869 = vmatprep.subr.bf16.mxu0 0
      %1870 = vmatpush1.bf16.msra.mxu0 0
      %1871 = vmatprep.mubr.bf16.mxu0 0
      %1872 = vmatmul.mubr.bf16.gmra.mrb[0].mxu0 %v1828
      %v1873 = vpop.f32.mrb[0].mxu0
      %v1874 = vadd.f32 0.0, %v1873
      %v1875 = vpop.f32.mrb[0].mxu0
      %v1876 = vpop.f32.mrb[0].mxu0
      %v1877 = vadd.f32 0.0, %v1876
      %v1878 = vpop.f32.mrb[0].mxu0
      %1879 = vmatprep.mubr.bf16.mxu0 0
      %1880 = vmatmul.mubr.bf16.gmra.mrb[0].mxu0 %v1831
      %v1881 = vpop.f32.mrb[0].mxu0
      %v1882 = vadd.f32 0.0, %v1881
      %v1883 = vpop.f32.mrb[0].mxu0
      %v1884 = vpop.f32.mrb[0].mxu0
      %v1885 = vadd.f32 0.0, %v1884
      %v1886 = vpop.f32.mrb[0].mxu0
      %1887 = vmatprep.mubr.bf16.mxu0 0
      %1888 = vmatmul.mubr.bf16.gmra.mrb[0].mxu0 %v1834
      %v1889 = vpop.f32.mrb[0].mxu0
      %v1890 = vadd.f32 0.0, %v1889
      %v1891 = vpop.f32.mrb[0].mxu0
      %v1892 = vpop.f32.mrb[0].mxu0
      %v1893 = vadd.f32 0.0, %v1892
      %v1894 = vpop.f32.mrb[0].mxu0
      %1895 = vmatprep.mubr.bf16.mxu0 0
      %1896 = vmatmul.mubr.bf16.gmra.mrb[0].mxu0 %v1837
      %v1897 = vpop.f32.mrb[0].mxu0
      %v1898 = vadd.f32 0.0, %v1897
      %v1899 = vpop.f32.mrb[0].mxu0
      %v1900 = vpop.f32.mrb[0].mxu0
      %v1901 = vadd.f32 0.0, %v1900
      %v1902 = vpop.f32.mrb[0].mxu0
      %1903 = vdwg.mxu0
      %v1904 = vadd.f32 %v1790, %v1874
      %v1905 = vadd.f32 %v1791, %v1877
      %v1906 = vadd.f32 %v1792, %v1882
      %v1907 = vadd.f32 %v1793, %v1885
      %v1908 = vadd.f32 %v1794, %v1890
      %v1909 = vadd.f32 %v1795, %v1893
      %v1910 = vadd.f32 %v1796, %v1898
      %v1911 = vadd.f32 %v1797, %v1901
      %1912 = vst.msk [vmem:[#allocation2] sm:$0xff] %vm195, %v1904
      %1913 = vst.msk [vmem:[#allocation2 + $0x8] sm:$0xff] %vm195, %v1905
      %1914 = vst.msk [vmem:[#allocation2 + $0x10] sm:$0xff] %vm195, %v1906
      %1915 = vst.msk [vmem:[#allocation2 + $0x18] sm:$0xff] %vm195, %v1907
      %1916 = vst.msk [vmem:[#allocation2 + $0x20] sm:$0xff] %vm195, %v1908
      %1917 = vst.msk [vmem:[#allocation2 + $0x28] sm:$0xff] %vm195, %v1909
      %1918 = vst.msk [vmem:[#allocation2 + $0x30] sm:$0xff] %vm195, %v1910
      %1919 = vst.msk [vmem:[#allocation2 + $0x38] sm:$0xff] %vm195, %v1911
      %v1920 = vld [vmem:[#allocation2] sm:$0xff]
      %v1921 = vld [vmem:[#allocation2 + $0x8] sm:$0xff]
      %v1922 = vld [vmem:[#allocation2 + $0x10] sm:$0xff]
      %v1923 = vld [vmem:[#allocation2 + $0x18] sm:$0xff]
      %v1924 = vld [vmem:[#allocation2 + $0x20] sm:$0xff]
      %v1925 = vld [vmem:[#allocation2 + $0x28] sm:$0xff]
      %v1926 = vld [vmem:[#allocation2 + $0x30] sm:$0xff]
      %v1927 = vld [vmem:[#allocation2 + $0x38] sm:$0xff]
      %v1928 = vld [vmem:[%s2] sm:$0x1]
      %v1930 = vlaneseq
      %v1931 = vshrl.u32 %v1930, 7
      %v1932 = vsub.s32 0, %v1931
      %v1933 = vrot.slane %v1928, %v1932
      %v1935 = vadd.f32 %v1920, %v1933
      %v1936 = vadd.f32 %v1921, %v1933
      %v1937 = vadd.f32 %v1922, %v1933
      %v1938 = vadd.f32 %v1923, %v1933
      %v1939 = vadd.f32 %v1924, %v1933
      %v1940 = vadd.f32 %v1925, %v1933
      %v1941 = vadd.f32 %v1926, %v1933
      %v1942 = vadd.f32 %v1927, %v1933
      %v1943 = vmax.f32 %v1935, 0.0
      %v1944 = vmax.f32 %v1936, 0.0
      %v1945 = vmax.f32 %v1937, 0.0
      %v1946 = vmax.f32 %v1938, 0.0
      %v1947 = vmax.f32 %v1939, 0.0
      %v1948 = vmax.f32 %v1940, 0.0
      %v1949 = vmax.f32 %v1941, 0.0
      %v1950 = vmax.f32 %v1942, 0.0
      %v1951 = vpack.c.bf16 %v1943, %v1943
      %v1952 = vpack.c.bf16 %v1944, %v1944
      %v1953 = vpack.c.bf16 %v1945, %v1945
      %v1954 = vpack.c.bf16 %v1946, %v1946
      %v1955 = vpack.c.bf16 %v1947, %v1947
      %v1956 = vpack.c.bf16 %v1948, %v1948
      %v1957 = vpack.c.bf16 %v1949, %v1949
      %v1958 = vpack.c.bf16 %v1950, %v1950
      %vm1959 = vcmask 519168
      %1960 = vst.msk [vmem:[%s192] sm:$0xf] %vm1959, %v1951
      %1961 = vst.msk [vmem:[%s192 + $0x4] sm:$0xf] %vm1959, %v1952
      %1962 = vst.msk [vmem:[%s192 + $0x8] sm:$0xf] %vm1959, %v1953
      %1963 = vst.msk [vmem:[%s192 + $0xc] sm:$0xf] %vm1959, %v1954
      %1964 = vst.msk [vmem:[%s192 + $0x10] sm:$0xf] %vm1959, %v1955
      %1965 = vst.msk [vmem:[%s192 + $0x14] sm:$0xf] %vm1959, %v1956
      %1966 = vst.msk [vmem:[%s192 + $0x18] sm:$0xf] %vm1959, %v1957
      %1967 = vst.msk [vmem:[%s192 + $0x1c] sm:$0xf] %vm1959, %v1958
      %s1968 = smul.u32 8, %s19
      %p1969 = scmp.lt.s32.totalorder %s18, 1
      %s1970 = scalar_select %p1969, %s18, 1
      %p1971 = scmp.lt.s32.totalorder %s1968, 7
      %s1972 = scalar_select %p1971, %s1968, 7
      %s1973 = smul.addr %s1970, 8
      %s1974 = sadd.s32 %s1972, %s1973
      %s1975 = smul.addr %s1974, 4
      %s1976 = scalar_lea.vmem %s3, %s1975
      // Predicated region
      $region33: #{cnn_forward.8} parent=31 // pred_check
        %p1977 = pneg %p114
      $region34: #{cnn_forward.8} parent=31 // pred_check_branch
        %1979 = sbr.rel (%p1977) target = $region36
      $region35: #{cnn_forward.8} parent=31 // pred_region
        %s1980 = smul.u32 8, %s19
      $region36: #{cnn_forward.8} parent=31 // pred_fallthru
        _
    $region32: #{cnn_forward.8} parent=5 // pred_fallthru
      _
    %p1981 = scmp.le.s32.totalorder 2, %s9
    // Predicated region
    $region37: #{cnn_forward.8} parent=5 // pred_check
      %p1982 = pneg %p1981
    $region38: #{cnn_forward.8} parent=5 // pred_check_branch
      %1984 = sbr.rel (%p1982) target = $region40
    $region39: #{cnn_forward.8} parent=5 // pred_region
      %s1985 = ssub.s32 %s9, 2
      // Predicated region
      $region41: #{cnn_forward.8} parent=39 // pred_check
        %p1986 = pneg %p120
      $region42: #{cnn_forward.8} parent=39 // pred_check_branch
        %1988 = sbr.rel (%p1986) target = $region44
      $region43: #{cnn_forward.8} parent=39 // pred_region
        %s1989 = smul.u32 8, %s21
        %p1990 = scmp.lt.s32.totalorder %s20, 1
        %s1991 = scalar_select %p1990, %s20, 1
        %p1992 = scmp.lt.s32.totalorder %s1989, 7
        %s1993 = scalar_select %p1992, %s1989, 7
        %s1994 = smul.addr %s1991, 8
        %s1995 = sadd.s32 %s1993, %s1994
        %s1996 = smul.addr %s1995, 4
        %s1997 = scalar_lea.vmem %s3, %s1996
      $region44: #{cnn_forward.8} parent=39 // pred_fallthru
        _
    $region40: #{cnn_forward.8} parent=5 // pred_fallthru
      _
  $region6: #{cnn_forward.8} parent=0 // loop_footer
    %s13 = sadd.s32 1, %s9
  $region7: #{cnn_forward.8} parent=0 // loop_footer_branch
    %8 = sbr.rel target = $region3
  $region8: #{cnn_forward.8} parent=0 // loop_exit
    _

// kernel: cnn_forward.6
$region0: #{cnn_forward.6}
  #allocation0 [shape = 'u32[]', space=smem, size = 0x4, offset = 0x4, fixed_abs, tag = 'smem constant byte address 0x4 - core index']
  #allocation1 [shape = 'u32[144,128]{1,0:T(1,128)}', space=vmem, size = 0x12000, scoped, tag = 'internal scratch']
  #allocation2 [shape = 'f32[128,32]{1,0:T(8,128)}', space=vmem, size = 0x10000, scoped, tag = 'scratch operand']
  %s0 = inlined_call_operand.vmem [shape: bf16[2,18,18,8], index: 0, kind: input, shape index: {}]
  %s1 = inlined_call_operand.vmem [shape: bf16[9,8,32], index: 1, kind: input, shape index: {}]
  %s2 = inlined_call_operand.vmem [shape: f32[1,32], index: 2, kind: input, shape index: {}]
  %s3 = inlined_call_operand.vmem [shape: bf16[2,16,16,32], index: 3, kind: output, shape index: {}]
  %s4 = sld [smem:[#allocation0]]
  $region45: #{cnn_forward.6} parent=0
    _
  %s6 = ssub.s32 1, %s4
  %s7 = scalar_select 0, %s6, %s4
  loop: start=0, step=1, limit=6
  $region2: #{cnn_forward.6} parent=0 // loop_pre_header
    _
  $region3: #{cnn_forward.6} parent=0 // loop_header
    %s9 = sphi 0, %s13
    %p10 = scmp.ge.s32.totalorder %s9, 6
    %s16 = sphi 0, %s28
    %s17 = sphi 0, %s24
    %s18 = sphi 0, %s16
    %s19 = sphi 0, %s17
    %s20 = sphi 0, %s18
    %s21 = sphi 0, %s19
    %s31 = sphi 0, %s33
    %s34 = sphi 0, %s31
    %s35 = sphi 0, %s34
    %s51 = sphi 0, %s35
    %s55 = sphi 0, %s55
    %s57 = sphi 0, %s55
    %s58 = sphi 0, %s57
    %s72 = sphi 0, %s58
    %s76 = sphi 0, %s76
    %s78 = sphi 0, %s76
    %s79 = sphi 0, %s78
    %s93 = sphi 0, %s79
    %s101 = sphi 0, %s103
    %s104 = sphi 0, %s101
    %s105 = sphi 0, %s104
    %s121 = sphi 0, %s105
  $region4: #{cnn_forward.6} parent=0 // loop_header_branch
    %12 = sbr.rel (%p10) target = $region8
  $region5: #{cnn_forward.6} parent=0 // loop_body
    %s14 = ssub.s32 %s9, 1
    %s15 = ssub.s32 %s9, 2
    %s22 = sadd.s32 1, %s17
    %p23 = scmp.ge.s32.totalorder %s22, 2
    %s24 = scalar_select %p23, 0, %s22
    %s25 = sadd.s32 1, %s16
    %s26 = scalar_select %p23, %s25, %s16
    %p27 = scmp.ge.s32.totalorder %s26, 2
    %s28 = scalar_select %p27, 0, %s26
    %s29 = ssub.s32 %s16, %s28
    %p30 = scmp.eq.s32.totalorder %s29, 0
    %s32 = sadd.s32 %s31, 1
    %s33 = scalar_select %p30, %s31, %s32
    %p36 = pneg %p30
    %p37 = scmp.eq.s32.totalorder %s9, 3
    %p38 = por %p36, %p37
    %p39 = scmp.ne.s32.totalorder %s31, %s34
    %p40 = scmp.eq.s32.totalorder %s9, 0
    %p41 = por %p39, %p40
    %p42 = scmp.ne.s32.totalorder %s31, %s34
    %p43 = scmp.eq.s32.totalorder %s14, 3
    %p44 = por %p42, %p43
    %p45 = scmp.ne.s32.totalorder %s34, %s35
    %p46 = scmp.eq.s32.totalorder %s14, 0
    %p47 = por %p45, %p46
    %p48 = scmp.ne.s32.totalorder %s34, %s35
    %p49 = scmp.eq.s32.totalorder %s15, 3
    %p50 = por %p48, %p49
    %p52 = scmp.ne.s32.totalorder %s35, %s51
    %p53 = scmp.eq.s32.totalorder %s15, 0
    %p54 = por %p52, %p53
    %s56 = sadd.s32 %s55, 1
    %p59 = scmp.eq.s32.totalorder %s9, 3
    %p60 = scmp.ne.s32.totalorder %s55, %s57
    %p61 = scmp.eq.s32.totalorder %s9, 0
    %p62 = por %p60, %p61
    %p63 = scmp.ne.s32.totalorder %s55, %s57
    %p64 = scmp.eq.s32.totalorder %s14, 3
    %p65 = por %p63, %p64
    %p66 = scmp.ne.s32.totalorder %s57, %s58
    %p67 = scmp.eq.s32.totalorder %s14, 0
    %p68 = por %p66, %p67
    %p69 = scmp.ne.s32.totalorder %s57, %s58
    %p70 = scmp.eq.s32.totalorder %s15, 3
    %p71 = por %p69, %p70
    %p73 = scmp.ne.s32.totalorder %s58, %s72
    %p74 = scmp.eq.s32.totalorder %s15, 0
    %p75 = por %p73, %p74
    %s77 = sadd.s32 %s76, 1
    %p80 = scmp.eq.s32.totalorder %s9, 3
    %p81 = scmp.ne.s32.totalorder %s76, %s78
    %p82 = scmp.eq.s32.totalorder %s9, 0
    %p83 = por %p81, %p82
    %p84 = scmp.ne.s32.totalorder %s76, %s78
    %p85 = scmp.eq.s32.totalorder %s14, 3
    %p86 = por %p84, %p85
    %p87 = scmp.ne.s32.totalorder %s78, %s79
    %p88 = scmp.eq.s32.totalorder %s14, 0
    %p89 = por %p87, %p88
    %p90 = scmp.ne.s32.totalorder %s78, %s79
    %p91 = scmp.eq.s32.totalorder %s15, 3
    %p92 = por %p90, %p91
    %p94 = scmp.ne.s32.totalorder %s79, %s93
    %p95 = scmp.eq.s32.totalorder %s15, 0
    %p96 = por %p94, %p95
    %s97 = ssub.s32 %s16, %s28
    %s98 = ssub.s32 %s17, %s24
    %s99 = sor.u32 %s97, %s98
    %p100 = scmp.eq.s32.totalorder %s99, 0
    %s102 = sadd.s32 %s101, 1
    %s103 = scalar_select %p100, %s101, %s102
    %p106 = pneg %p100
    %p107 = scmp.eq.s32.totalorder %s9, 3
    %p108 = por %p106, %p107
    %p109 = scmp.ne.s32.totalorder %s101, %s104
    %p110 = scmp.eq.s32.totalorder %s9, 0
    %p111 = por %p109, %p110
    %p112 = scmp.ne.s32.totalorder %s101, %s104
    %p113 = scmp.eq.s32.totalorder %s14, 3
    %p114 = por %p112, %p113
    %p115 = scmp.ne.s32.totalorder %s104, %s105
    %p116 = scmp.eq.s32.totalorder %s14, 0
    %p117 = por %p115, %p116
    %p118 = scmp.ne.s32.totalorder %s104, %s105
    %p119 = scmp.eq.s32.totalorder %s15, 3
    %p120 = por %p118, %p119
    %p122 = scmp.ne.s32.totalorder %s105, %s121
    %p123 = scmp.eq.s32.totalorder %s15, 0
    %p124 = por %p122, %p123
    %p125 = scmp.le.s32.totalorder 1, %s9
    %p126 = scmp.lt.s32.totalorder %s9, 5
    %p127 = pnand %p125, %p126
    %p128 = pneg %p127
    // Predicated region
    $region9: #{cnn_forward.6} parent=5 // pred_check
      _
    $region10: #{cnn_forward.6} parent=5 // pred_check_branch
      %130 = sbr.rel (%p127) target = $region12
    $region11: #{cnn_forward.6} parent=5 // pred_region
      %s131 = ssub.s32 %s9, 1
      // Predicated region
      $region13: #{cnn_forward.6} parent=11 // pred_check
        %p132 = pneg %p68
      $region14: #{cnn_forward.6} parent=11 // pred_check_branch
        %134 = sbr.rel (%p132) target = $region16
      $region15: #{cnn_forward.6} parent=11 // pred_region
        _
      $region16: #{cnn_forward.6} parent=11 // pred_fallthru
        _
      // Predicated region
      $region17: #{cnn_forward.6} parent=11 // pred_check
        %p135 = pneg %p89
      $region18: #{cnn_forward.6} parent=11 // pred_check_branch
        %137 = sbr.rel (%p135) target = $region20
      $region19: #{cnn_forward.6} parent=11 // pred_region
        _
      $region20: #{cnn_forward.6} parent=11 // pred_fallthru
        _
    $region12: #{cnn_forward.6} parent=5 // pred_fallthru
      _
    %p138 = scmp.lt.s32.totalorder %s9, 4
    // Predicated region
    $region21: #{cnn_forward.6} parent=5 // pred_check
      %p139 = pneg %p138
    $region22: #{cnn_forward.6} parent=5 // pred_check_branch
      %141 = sbr.rel (%p139) target = $region24
    $region23: #{cnn_forward.6} parent=5 // pred_region
      // Predicated region
      $region25: #{cnn_forward.6} parent=23 // pred_check
        %p142 = pneg %p41
      $region26: #{cnn_forward.6} parent=23 // pred_check_branch
        %144 = sbr.rel (%p142) target = $region28
      $region27: #{cnn_forward.6} parent=23 // pred_region
        %p145 = scmp.lt.s32.totalorder %s16, 1
        %s146 = scalar_select %p145, %s16, 1
        %s147 = smul.addr %s146, 54
        %s148 = smul.addr %s147, 4
        %s149 = scalar_lea.vmem %s0, %s148
      $region28: #{cnn_forward.6} parent=23 // pred_fallthru
        _
    $region24: #{cnn_forward.6} parent=5 // pred_fallthru
      _
    %p150 = scmp.le.s32.totalorder 1, %s9
    %p151 = scmp.lt.s32.totalorder %s9, 5
    %p152 = pnand %p150, %p151
    %p153 = pneg %p152
    // Predicated region
    $region29: #{cnn_forward.6} parent=5 // pred_check
      _
    $region30: #{cnn_forward.6} parent=5 // pred_check_branch
      %155 = sbr.rel (%p152) target = $region32
    $region31: #{cnn_forward.6} parent=5 // pred_region
      %s156 = ssub.s32 %s9, 1
      %p157 = scmp.lt.s32.totalorder %s18, 1
      %s158 = scalar_select %p157, %s18, 1
      %s159 = smul.addr %s158, 54
      %s160 = smul.addr %s159, 4
      %s161 = scalar_lea.vmem %s0, %s160
      %p162 = pneg %p47
      %p163 = pneg %p44
      %p164 = pneg %p68
      %p165 = pneg %p65
      %p166 = pneg %p89
      %p167 = pneg %p86
      %p168 = pneg %p117
      %p169 = pneg %p114
      %s170 = smul.u32 8, %s19
      %p171 = scmp.lt.s32.totalorder %s18, 1
      %s172 = scalar_select %p171, %s18, 1
      %p173 = scmp.lt.s32.totalorder %s170, 15
      %s174 = scalar_select %p173, %s170, 15
      %s175 = smul.addr %s174, 2
      %s176 = smul.addr %s172, 32
      %s177 = sadd.s32 %s175, %s176
      %s178 = smul.addr %s177, 4
      %s179 = scalar_lea.vmem %s3, %s178
      %p180 = scmp.lt.s32.totalorder %s18, 1
      %s181 = scalar_select %p180, %s18, 1
      %s182 = smul.addr %s181, 54
      %s183 = smul.addr %s182, 4
      %s184 = scalar_lea.vmem %s0, %s183
      %s185 = smul.u32 8, %s19
      %p186 = scmp.lt.s32.totalorder %s18, 1
      %s187 = scalar_select %p186, %s18, 1
      %p188 = scmp.lt.s32.totalorder %s185, 15
      %s189 = scalar_select %p188, %s185, 15
      %s190 = smul.addr %s189, 2
      %s191 = smul.addr %s187, 32
      %s192 = sadd.s32 %s190, %s191
      %s193 = smul.addr %s192, 4
      %s194 = scalar_lea.vmem %s3, %s193
      %s195 = smul.u32 8, %s19
      %vm197 = vcmask 261120
      %198 = vst.msk [vmem:[#allocation2] sm:$0xff] %vm197, 0.0
      %199 = vst.msk [vmem:[#allocation2 + $0x8] sm:$0xff] %vm197, 0.0
      %200 = vst.msk [vmem:[#allocation2 + $0x10] sm:$0xff] %vm197, 0.0
      %201 = vst.msk [vmem:[#allocation2 + $0x18] sm:$0xff] %vm197, 0.0
      %202 = vst.msk [vmem:[#allocation2 + $0x20] sm:$0xff] %vm197, 0.0
      %203 = vst.msk [vmem:[#allocation2 + $0x28] sm:$0xff] %vm197, 0.0
      %204 = vst.msk [vmem:[#allocation2 + $0x30] sm:$0xff] %vm197, 0.0
      %205 = vst.msk [vmem:[#allocation2 + $0x38] sm:$0xff] %vm197, 0.0
      %206 = vst.msk [vmem:[#allocation2 + $0x40] sm:$0xff] %vm197, 0.0
      %207 = vst.msk [vmem:[#allocation2 + $0x48] sm:$0xff] %vm197, 0.0
      %208 = vst.msk [vmem:[#allocation2 + $0x50] sm:$0xff] %vm197, 0.0
      %209 = vst.msk [vmem:[#allocation2 + $0x58] sm:$0xff] %vm197, 0.0
      %210 = vst.msk [vmem:[#allocation2 + $0x60] sm:$0xff] %vm197, 0.0
      %211 = vst.msk [vmem:[#allocation2 + $0x68] sm:$0xff] %vm197, 0.0
      %212 = vst.msk [vmem:[#allocation2 + $0x70] sm:$0xff] %vm197, 0.0
      %213 = vst.msk [vmem:[#allocation2 + $0x78] sm:$0xff] %vm197, 0.0
      %s214 = smul.u32 %s19, 8
      %s215 = smul.u32 %s214, 3
      %s216 = smul.addr %s215, 4
      %s217 = scalar_lea.vmem %s184, %s216
      %v218 = vld [vmem:[%s217] sm:$0xf]
      %v219 = vld [vmem:[%s217 + $0x4] sm:$0xf]
      %v220 = vld [vmem:[%s217 + $0x8] sm:$0x1]
      %v221 = vld [vmem:[%s217 + $0xc] sm:$0xf]
      %v222 = vld [vmem:[%s217 + $0x10] sm:$0xf]
      %v223 = vld [vmem:[%s217 + $0x14] sm:$0x1]
      %v224 = vld [vmem:[%s217 + $0x18] sm:$0xf]
      %v225 = vld [vmem:[%s217 + $0x1c] sm:$0xf]
      %v226 = vld [vmem:[%s217 + $0x20] sm:$0x1]
      %v227 = vld [vmem:[%s217 + $0x24] sm:$0xf]
      %v228 = vld [vmem:[%s217 + $0x28] sm:$0xf]
      %v229 = vld [vmem:[%s217 + $0x2c] sm:$0x1]
      %v230 = vld [vmem:[%s217 + $0x30] sm:$0xf]
      %v231 = vld [vmem:[%s217 + $0x34] sm:$0xf]
      %v232 = vld [vmem:[%s217 + $0x38] sm:$0x1]
      %v233 = vld [vmem:[%s217 + $0x3c] sm:$0xf]
      %v234 = vld [vmem:[%s217 + $0x40] sm:$0xf]
      %v235 = vld [vmem:[%s217 + $0x44] sm:$0x1]
      %v236 = vld [vmem:[%s217 + $0x48] sm:$0xf]
      %v237 = vld [vmem:[%s217 + $0x4c] sm:$0xf]
      %v238 = vld [vmem:[%s217 + $0x50] sm:$0x1]
      %v239 = vld [vmem:[%s217 + $0x54] sm:$0xf]
      %v240 = vld [vmem:[%s217 + $0x58] sm:$0xf]
      %v241 = vld [vmem:[%s217 + $0x5c] sm:$0x1]
      %v242 = vld [vmem:[#allocation2] sm:$0xff]
      %v243 = vld [vmem:[#allocation2 + $0x8] sm:$0xff]
      %v244 = vld [vmem:[#allocation2 + $0x10] sm:$0xff]
      %v245 = vld [vmem:[#allocation2 + $0x18] sm:$0xff]
      %v246 = vld [vmem:[#allocation2 + $0x20] sm:$0xff]
      %v247 = vld [vmem:[#allocation2 + $0x28] sm:$0xff]
      %v248 = vld [vmem:[#allocation2 + $0x30] sm:$0xff]
      %v249 = vld [vmem:[#allocation2 + $0x38] sm:$0xff]
      %v250 = vld [vmem:[#allocation2 + $0x40] sm:$0xff]
      %v251 = vld [vmem:[#allocation2 + $0x48] sm:$0xff]
      %v252 = vld [vmem:[#allocation2 + $0x50] sm:$0xff]
      %v253 = vld [vmem:[#allocation2 + $0x58] sm:$0xff]
      %v254 = vld [vmem:[#allocation2 + $0x60] sm:$0xff]
      %v255 = vld [vmem:[#allocation2 + $0x68] sm:$0xff]
      %v256 = vld [vmem:[#allocation2 + $0x70] sm:$0xff]
      %v257 = vld [vmem:[#allocation2 + $0x78] sm:$0xff]
      %v258 = vld [vmem:[%s1] sm:$0xf]
      %v275 = vunpack.c.l.b16 %v218
      %v276 = vunpack.c.l.b16 %v219
      %v277 = vunpack.c.l.b16 %v221
      %v278 = vunpack.c.l.b16 %v222
      %v279 = vunpack.c.l.b16 %v224
      %v280 = vunpack.c.l.b16 %v225
      %v281 = vunpack.c.l.b16 %v227
      %v282 = vunpack.c.l.b16 %v228
      %v283 = vunpack.c.l.b16 %v230
      %v284 = vunpack.c.l.b16 %v231
      %v285 = vunpack.c.l.b16 %v233
      %v286 = vunpack.c.l.b16 %v234
      %v287 = vunpack.c.l.b16 %v236
      %v288 = vunpack.c.l.b16 %v237
      %v289 = vunpack.c.l.b16 %v239
      %v290 = vunpack.c.l.b16 %v240
      %v291 = vpack.c.b16 %v276, %v275
      %v292 = vpack.c.b16 %v278, %v277
      %v293 = vpack.c.b16 %v280, %v279
      %v294 = vpack.c.b16 %v282, %v281
      %v295 = vpack.c.b16 %v284, %v283
      %v296 = vpack.c.b16 %v286, %v285
      %v297 = vpack.c.b16 %v288, %v287
      %v298 = vpack.c.b16 %v290, %v289
      %vm299 = vcmask 64512
      %v301 = vsel %vm299, %v291, 0
      %v304 = vsel %vm299, %v292, 0
      %v307 = vsel %vm299, %v293, 0
      %v310 = vsel %vm299, %v294, 0
      %v313 = vsel %vm299, %v295, 0
      %v316 = vsel %vm299, %v296, 0
      %v319 = vsel %vm299, %v297, 0
      %v322 = vsel %vm299, %v298, 0
      %vm324 = vcmask 1043456
      %v326 = vsel %vm324, %v258, 0
      %328 = vmatprep.subr.bf16.mxu0 0
      %329 = vmatpush1.bf16.msra.mxu0 %v326
      %330 = vmatprep.subr.bf16.mxu0 0
      %331 = vmatpush1.bf16.msra.mxu0 0
      %332 = vmatprep.subr.bf16.mxu0 0
      %333 = vmatpush1.bf16.msra.mxu0 0
      %334 = vmatprep.subr.bf16.mxu0 0
      %335 = vmatpush1.bf16.msra.mxu0 0
      %336 = vmatprep.subr.bf16.mxu0 0
      %337 = vmatpush1.bf16.msra.mxu0 0
      %338 = vmatprep.subr.bf16.mxu0 0
      %339 = vmatpush1.bf16.msra.mxu0 0
      %340 = vmatprep.subr.bf16.mxu0 0
      %341 = vmatpush1.bf16.msra.mxu0 0
      %342 = vmatprep.subr.bf16.mxu0 0
      %343 = vmatpush1.bf16.msra.mxu0 0
      %344 = vmatprep.subr.bf16.mxu0 0
      %345 = vmatpush1.bf16.msra.mxu0 0
      %346 = vmatprep.subr.bf16.mxu0 0
      %347 = vmatpush1.bf16.msra.mxu0 0
      %348 = vmatprep.subr.bf16.mxu0 0
      %349 = vmatpush1.bf16.msra.mxu0 0
      %350 = vmatprep.subr.bf16.mxu0 0
      %351 = vmatpush1.bf16.msra.mxu0 0
      %352 = vmatprep.subr.bf16.mxu0 0
      %353 = vmatpush1.bf16.msra.mxu0 0
      %354 = vmatprep.subr.bf16.mxu0 0
      %355 = vmatpush1.bf16.msra.mxu0 0
      %356 = vmatprep.subr.bf16.mxu0 0
      %357 = vmatpush1.bf16.msra.mxu0 0
      %358 = vmatprep.subr.bf16.mxu0 0
      %359 = vmatpush1.bf16.msra.mxu0 0
      %360 = vmatprep.mubr.bf16.mxu0 0
      %361 = vmatmul.mubr.bf16.gmra.mrb[0].mxu0 %v301
      %v362 = vpop.f32.mrb[0].mxu0
      %v363 = vadd.f32 0.0, %v362
      %v364 = vpop.f32.mrb[0].mxu0
      %v365 = vpop.f32.mrb[0].mxu0
      %v366 = vadd.f32 0.0, %v365
      %v367 = vpop.f32.mrb[0].mxu0
      %368 = vmatprep.mubr.bf16.mxu0 0
      %369 = vmatmul.mubr.bf16.gmra.mrb[0].mxu0 %v304
      %v370 = vpop.f32.mrb[0].mxu0
      %v371 = vadd.f32 0.0, %v370
      %v372 = vpop.f32.mrb[0].mxu0
      %v373 = vpop.f32.mrb[0].mxu0
      %v374 = vadd.f32 0.0, %v373
      %v375 = vpop.f32.mrb[0].mxu0
      %376 = vmatprep.mubr.bf16.mxu0 0
      %377 = vmatmul.mubr.bf16.gmra.mrb[0].mxu0 %v307
      %v378 = vpop.f32.mrb[0].mxu0
      %v379 = vadd.f32 0.0, %v378
      %v380 = vpop.f32.mrb[0].mxu0
      %v381 = vpop.f32.mrb[0].mxu0
      %v382 = vadd.f32 0.0, %v381
      %v383 = vpop.f32.mrb[0].mxu0
      %384 = vmatprep.mubr.bf16.mxu0 0
      %385 = vmatmul.mubr.bf16.gmra.mrb[0].mxu0 %v310
      %v386 = vpop.f32.mrb[0].mxu0
      %v387 = vadd.f32 0.0, %v386
      %v388 = vpop.f32.mrb[0].mxu0
      %v389 = vpop.f32.mrb[0].mxu0
      %v390 = vadd.f32 0.0, %v389
      %v391 = vpop.f32.mrb[0].mxu0
      %392 = vmatprep.mubr.bf16.mxu0 0
      %393 = vmatmul.mubr.bf16.gmra.mrb[0].mxu0 %v313
      %v394 = vpop.f32.mrb[0].mxu0
      %v395 = vadd.f32 0.0, %v394
      %v396 = vpop.f32.mrb[0].mxu0
      %v397 = vpop.f32.mrb[0].mxu0
      %v398 = vadd.f32 0.0, %v397
      %v399 = vpop.f32.mrb[0].mxu0
      %400 = vmatprep.mubr.bf16.mxu0 0
      %401 = vmatmul.mubr.bf16.gmra.mrb[0].mxu0 %v316
      %v402 = vpop.f32.mrb[0].mxu0
      %v403 = vadd.f32 0.0, %v402
      %v404 = vpop.f32.mrb[0].mxu0
      %v405 = vpop.f32.mrb[0].mxu0
      %v406 = vadd.f32 0.0, %v405
      %v407 = vpop.f32.mrb[0].mxu0
      %408 = vmatprep.mubr.bf16.mxu0 0
      %409 = vmatmul.mubr.bf16.gmra.mrb[0].mxu0 %v319
      %v410 = vpop.f32.mrb[0].mxu0
      %v411 = vadd.f32 0.0, %v410
      %v412 = vpop.f32.mrb[0].mxu0
      %v413 = vpop.f32.mrb[0].mxu0
      %v414 = vadd.f32 0.0, %v413
      %v415 = vpop.f32.mrb[0].mxu0
      %416 = vmatprep.mubr.bf16.mxu0 0
      %417 = vmatmul.mubr.bf16.gmra.mrb[0].mxu0 %v322
      %v418 = vpop.f32.mrb[0].mxu0
      %v419 = vadd.f32 0.0, %v418
      %v420 = vpop.f32.mrb[0].mxu0
      %v421 = vpop.f32.mrb[0].mxu0
      %v422 = vadd.f32 0.0, %v421
      %v423 = vpop.f32.mrb[0].mxu0
      %424 = vdwg.mxu0
      %v425 = vadd.f32 %v242, %v363
      %v426 = vadd.f32 %v243, %v366
      %v427 = vadd.f32 %v244, %v371
      %v428 = vadd.f32 %v245, %v374
      %v429 = vadd.f32 %v246, %v379
      %v430 = vadd.f32 %v247, %v382
      %v431 = vadd.f32 %v248, %v387
      %v432 = vadd.f32 %v249, %v390
      %v433 = vadd.f32 %v250, %v395
      %v434 = vadd.f32 %v251, %v398
      %v435 = vadd.f32 %v252, %v403
      %v436 = vadd.f32 %v253, %v406
      %v437 = vadd.f32 %v254, %v411
      %v438 = vadd.f32 %v255, %v414
      %v439 = vadd.f32 %v256, %v419
      %v440 = vadd.f32 %v257, %v422
      %441 = vst.msk [vmem:[#allocation2] sm:$0xff] %vm197, %v425
      %442 = vst.msk [vmem:[#allocation2 + $0x8] sm:$0xff] %vm197, %v426
      %443 = vst.msk [vmem:[#allocation2 + $0x10] sm:$0xff] %vm197, %v427
      %444 = vst.msk [vmem:[#allocation2 + $0x18] sm:$0xff] %vm197, %v428
      %445 = vst.msk [vmem:[#allocation2 + $0x20] sm:$0xff] %vm197, %v429
      %446 = vst.msk [vmem:[#allocation2 + $0x28] sm:$0xff] %vm197, %v430
      %447 = vst.msk [vmem:[#allocation2 + $0x30] sm:$0xff] %vm197, %v431
      %448 = vst.msk [vmem:[#allocation2 + $0x38] sm:$0xff] %vm197, %v432
      %449 = vst.msk [vmem:[#allocation2 + $0x40] sm:$0xff] %vm197, %v433
      %450 = vst.msk [vmem:[#allocation2 + $0x48] sm:$0xff] %vm197, %v434
      %451 = vst.msk [vmem:[#allocation2 + $0x50] sm:$0xff] %vm197, %v435
      %452 = vst.msk [vmem:[#allocation2 + $0x58] sm:$0xff] %vm197, %v436
      %453 = vst.msk [vmem:[#allocation2 + $0x60] sm:$0xff] %vm197, %v437
      %454 = vst.msk [vmem:[#allocation2 + $0x68] sm:$0xff] %vm197, %v438
      %455 = vst.msk [vmem:[#allocation2 + $0x70] sm:$0xff] %vm197, %v439
      %456 = vst.msk [vmem:[#allocation2 + $0x78] sm:$0xff] %vm197, %v440
      %vm457 = vsmask.f32 3328
      %vm458 = vsmask.f32 7440
      %vm459 = vmor %vm457, %vm458
      %v461 = vshrl.u32 %v218, 16
      %v463 = vrot.slane %v461, 4
      %v464 = vshll.u32 %v218, 16
      %v466 = vrot.slane %v464, 5
      %v467 = vor.u32 %v463, %v466
      %v468 = vrot.slane %v467, 4
      %v470 = vshll.u32 %v219, 16
      %v472 = vrot.slane %v470, 5
      %v473 = vsel %vm459, %v468, %v472
      %v474 = vshrl.u32 %v219, 16
      %v476 = vrot.slane %v474, 4
      %v477 = vor.u32 %v476, %v472
      %v478 = vrot.slane %v477, 4
      %v480 = vshll.u32 %v220, 16
      %v482 = vrot.slane %v480, 5
      %v483 = vsel %vm459, %v478, %v482
      %v485 = vshrl.u32 %v221, 16
      %v487 = vrot.slane %v485, 4
      %v488 = vshll.u32 %v221, 16
      %v490 = vrot.slane %v488, 5
      %v491 = vor.u32 %v487, %v490
      %v492 = vrot.slane %v491, 4
      %v494 = vshll.u32 %v222, 16
      %v496 = vrot.slane %v494, 5
      %v497 = vsel %vm459, %v492, %v496
      %v498 = vshrl.u32 %v222, 16
      %v500 = vrot.slane %v498, 4
      %v501 = vor.u32 %v500, %v496
      %v502 = vrot.slane %v501, 4
      %v504 = vshll.u32 %v223, 16
      %v506 = vrot.slane %v504, 5
      %v507 = vsel %vm459, %v502, %v506
      %v509 = vshrl.u32 %v224, 16
      %v511 = vrot.slane %v509, 4
      %v512 = vshll.u32 %v224, 16
      %v514 = vrot.slane %v512, 5
      %v515 = vor.u32 %v511, %v514
      %v516 = vrot.slane %v515, 4
      %v518 = vshll.u32 %v225, 16
      %v520 = vrot.slane %v518, 5
      %v521 = vsel %vm459, %v516, %v520
      %v522 = vshrl.u32 %v225, 16
      %v524 = vrot.slane %v522, 4
      %v525 = vor.u32 %v524, %v520
      %v526 = vrot.slane %v525, 4
      %v528 = vshll.u32 %v226, 16
      %v530 = vrot.slane %v528, 5
      %v531 = vsel %vm459, %v526, %v530
      %v533 = vshrl.u32 %v227, 16
      %v535 = vrot.slane %v533, 4
      %v536 = vshll.u32 %v227, 16
      %v538 = vrot.slane %v536, 5
      %v539 = vor.u32 %v535, %v538
      %v540 = vrot.slane %v539, 4
      %v542 = vshll.u32 %v228, 16
      %v544 = vrot.slane %v542, 5
      %v545 = vsel %vm459, %v540, %v544
      %v546 = vshrl.u32 %v228, 16
      %v548 = vrot.slane %v546, 4
      %v549 = vor.u32 %v548, %v544
      %v550 = vrot.slane %v549, 4
      %v552 = vshll.u32 %v229, 16
      %v554 = vrot.slane %v552, 5
      %v555 = vsel %vm459, %v550, %v554
      %v557 = vshrl.u32 %v230, 16
      %v559 = vrot.slane %v557, 4
      %v560 = vshll.u32 %v230, 16
      %v562 = vrot.slane %v560, 5
      %v563 = vor.u32 %v559, %v562
      %v564 = vrot.slane %v563, 4
      %v566 = vshll.u32 %v231, 16
      %v568 = vrot.slane %v566, 5
      %v569 = vsel %vm459, %v564, %v568
      %v570 = vshrl.u32 %v231, 16
      %v572 = vrot.slane %v570, 4
      %v573 = vor.u32 %v572, %v568
      %v574 = vrot.slane %v573, 4
      %v576 = vshll.u32 %v232, 16
      %v578 = vrot.slane %v576, 5
      %v579 = vsel %vm459, %v574, %v578
      %v581 = vshrl.u32 %v233, 16
      %v583 = vrot.slane %v581, 4
      %v584 = vshll.u32 %v233, 16
      %v586 = vrot.slane %v584, 5
      %v587 = vor.u32 %v583, %v586
      %v588 = vrot.slane %v587, 4
      %v590 = vshll.u32 %v234, 16
      %v592 = vrot.slane %v590, 5
      %v593 = vsel %vm459, %v588, %v592
      %v594 = vshrl.u32 %v234, 16
      %v596 = vrot.slane %v594, 4
      %v597 = vor.u32 %v596, %v592
      %v598 = vrot.slane %v597, 4
      %v600 = vshll.u32 %v235, 16
      %v602 = vrot.slane %v600, 5
      %v603 = vsel %vm459, %v598, %v602
      %v605 = vshrl.u32 %v236, 16
      %v607 = vrot.slane %v605, 4
      %v608 = vshll.u32 %v236, 16
      %v610 = vrot.slane %v608, 5
      %v611 = vor.u32 %v607, %v610
      %v612 = vrot.slane %v611, 4
      %v614 = vshll.u32 %v237, 16
      %v616 = vrot.slane %v614, 5
      %v617 = vsel %vm459, %v612, %v616
      %v618 = vshrl.u32 %v237, 16
      %v620 = vrot.slane %v618, 4
      %v621 = vor.u32 %v620, %v616
      %v622 = vrot.slane %v621, 4
      %v624 = vshll.u32 %v238, 16
      %v626 = vrot.slane %v624, 5
      %v627 = vsel %vm459, %v622, %v626
      %v629 = vshrl.u32 %v239, 16
      %v631 = vrot.slane %v629, 4
      %v632 = vshll.u32 %v239, 16
      %v634 = vrot.slane %v632, 5
      %v635 = vor.u32 %v631, %v634
      %v636 = vrot.slane %v635, 4
      %v638 = vshll.u32 %v240, 16
      %v640 = vrot.slane %v638, 5
      %v641 = vsel %vm459, %v636, %v640
      %v642 = vshrl.u32 %v240, 16
      %v644 = vrot.slane %v642, 4
      %v645 = vor.u32 %v644, %v640
      %v646 = vrot.slane %v645, 4
      %v648 = vshll.u32 %v241, 16
      %v650 = vrot.slane %v648, 5
      %v651 = vsel %vm459, %v646, %v650
      %v652 = vld [vmem:[#allocation2] sm:$0xff]
      %v653 = vld [vmem:[#allocation2 + $0x8] sm:$0xff]
      %v654 = vld [vmem:[#allocation2 + $0x10] sm:$0xff]
      %v655 = vld [vmem:[#allocation2 + $0x18] sm:$0xff]
      %v656 = vld [vmem:[#allocation2 + $0x20] sm:$0xff]
      %v657 = vld [vmem:[#allocation2 + $0x28] sm:$0xff]
      %v658 = vld [vmem:[#allocation2 + $0x30] sm:$0xff]
      %v659 = vld [vmem:[#allocation2 + $0x38] sm:$0xff]
      %v660 = vld [vmem:[#allocation2 + $0x40] sm:$0xff]
      %v661 = vld [vmem:[#allocation2 + $0x48] sm:$0xff]
      %v662 = vld [vmem:[#allocation2 + $0x50] sm:$0xff]
      %v663 = vld [vmem:[#allocation2 + $0x58] sm:$0xff]
      %v664 = vld [vmem:[#allocation2 + $0x60] sm:$0xff]
      %v665 = vld [vmem:[#allocation2 + $0x68] sm:$0xff]
      %v666 = vld [vmem:[#allocation2 + $0x70] sm:$0xff]
      %v667 = vld [vmem:[#allocation2 + $0x78] sm:$0xff]
      %s668 = scalar_lea.vmem %s1, 4
      %v669 = vld [vmem:[%s668] sm:$0xf]
      %v670 = vunpack.c.l.b16 %v473
      %v671 = vunpack.c.l.b16 %v483
      %v672 = vunpack.c.l.b16 %v497
      %v673 = vunpack.c.l.b16 %v507
      %v674 = vunpack.c.l.b16 %v521
      %v675 = vunpack.c.l.b16 %v531
      %v676 = vunpack.c.l.b16 %v545
      %v677 = vunpack.c.l.b16 %v555
      %v678 = vunpack.c.l.b16 %v569
      %v679 = vunpack.c.l.b16 %v579
      %v680 = vunpack.c.l.b16 %v593
      %v681 = vunpack.c.l.b16 %v603
      %v682 = vunpack.c.l.b16 %v617
      %v683 = vunpack.c.l.b16 %v627
      %v684 = vunpack.c.l.b16 %v641
      %v685 = vunpack.c.l.b16 %v651
      %v686 = vpack.c.b16 %v671, %v670
      %v687 = vpack.c.b16 %v673, %v672
      %v688 = vpack.c.b16 %v675, %v674
      %v689 = vpack.c.b16 %v677, %v676
      %v690 = vpack.c.b16 %v679, %v678
      %v691 = vpack.c.b16 %v681, %v680
      %v692 = vpack.c.b16 %v683, %v682
      %v693 = vpack.c.b16 %v685, %v684
      %v695 = vsel %vm299, %v686, 0
      %v698 = vsel %vm299, %v687, 0
      %v701 = vsel %vm299, %v688, 0
      %v704 = vsel %vm299, %v689, 0
      %v707 = vsel %vm299, %v690, 0
      %v710 = vsel %vm299, %v691, 0
      %v713 = vsel %vm299, %v692, 0
      %v716 = vsel %vm299, %v693, 0
      %v719 = vsel %vm324, %v669, 0
      %721 = vmatprep.subr.bf16.mxu0 0
      %722 = vmatpush1.bf16.msra.mxu0 %v719
      %723 = vmatprep.subr.bf16.mxu0 0
      %724 = vmatpush1.bf16.msra.mxu0 0
      %725 = vmatprep.subr.bf16.mxu0 0
      %726 = vmatpush1.bf16.msra.mxu0 0
      %727 = vmatprep.subr.bf16.mxu0 0
      %728 = vmatpush1.bf16.msra.mxu0 0
      %729 = vmatprep.subr.bf16.mxu0 0
      %730 = vmatpush1.bf16.msra.mxu0 0
      %731 = vmatprep.subr.bf16.mxu0 0
      %732 = vmatpush1.bf16.msra.mxu0 0
      %733 = vmatprep.subr.bf16.mxu0 0
      %734 = vmatpush1.bf16.msra.mxu0 0
      %735 = vmatprep.subr.bf16.mxu0 0
      %736 = vmatpush1.bf16.msra.mxu0 0
      %737 = vmatprep.subr.bf16.mxu0 0
      %738 = vmatpush1.bf16.msra.mxu0 0
      %739 = vmatprep.subr.bf16.mxu0 0
      %740 = vmatpush1.bf16.msra.mxu0 0
      %741 = vmatprep.subr.bf16.mxu0 0
      %742 = vmatpush1.bf16.msra.mxu0 0
      %743 = vmatprep.subr.bf16.mxu0 0
      %744 = vmatpush1.bf16.msra.mxu0 0
      %745 = vmatprep.subr.bf16.mxu0 0
      %746 = vmatpush1.bf16.msra.mxu0 0
      %747 = vmatprep.subr.bf16.mxu0 0
      %748 = vmatpush1.bf16.msra.mxu0 0
      %749 = vmatprep.subr.bf16.mxu0 0
      %750 = vmatpush1.bf16.msra.mxu0 0
      %751 = vmatprep.subr.bf16.mxu0 0
      %752 = vmatpush1.bf16.msra.mxu0 0
      %753 = vmatprep.mubr.bf16.mxu0 0
      %754 = vmatmul.mubr.bf16.gmra.mrb[0].mxu0 %v695
      %v755 = vpop.f32.mrb[0].mxu0
      %v756 = vadd.f32 0.0, %v755
      %v757 = vpop.f32.mrb[0].mxu0
      %v758 = vpop.f32.mrb[0].mxu0
      %v759 = vadd.f32 0.0, %v758
      %v760 = vpop.f32.mrb[0].mxu0
      %761 = vmatprep.mubr.bf16.mxu0 0
      %762 = vmatmul.mubr.bf16.gmra.mrb[0].mxu0 %v698
      %v763 = vpop.f32.mrb[0].mxu0
      %v764 = vadd.f32 0.0, %v763
      %v765 = vpop.f32.mrb[0].mxu0
      %v766 = vpop.f32.mrb[0].mxu0
      %v767 = vadd.f32 0.0, %v766
      %v768 = vpop.f32.mrb[0].mxu0
      %769 = vmatprep.mubr.bf16.mxu0 0
      %770 = vmatmul.mubr.bf16.gmra.mrb[0].mxu0 %v701
      %v771 = vpop.f32.mrb[0].mxu0
      %v772 = vadd.f32 0.0, %v771
      %v773 = vpop.f32.mrb[0].mxu0
      %v774 = vpop.f32.mrb[0].mxu0
      %v775 = vadd.f32 0.0, %v774
      %v776 = vpop.f32.mrb[0].mxu0
      %777 = vmatprep.mubr.bf16.mxu0 0
      %778 = vmatmul.mubr.bf16.gmra.mrb[0].mxu0 %v704
      %v779 = vpop.f32.mrb[0].mxu0
      %v780 = vadd.f32 0.0, %v779
      %v781 = vpop.f32.mrb[0].mxu0
      %v782 = vpop.f32.mrb[0].mxu0
      %v783 = vadd.f32 0.0, %v782
      %v784 = vpop.f32.mrb[0].mxu0
      %785 = vmatprep.mubr.bf16.mxu0 0
      %786 = vmatmul.mubr.bf16.gmra.mrb[0].mxu0 %v707
      %v787 = vpop.f32.mrb[0].mxu0
      %v788 = vadd.f32 0.0, %v787
      %v789 = vpop.f32.mrb[0].mxu0
      %v790 = vpop.f32.mrb[0].mxu0
      %v791 = vadd.f32 0.0, %v790
      %v792 = vpop.f32.mrb[0].mxu0
      %793 = vmatprep.mubr.bf16.mxu0 0
      %794 = vmatmul.mubr.bf16.gmra.mrb[0].mxu0 %v710
      %v795 = vpop.f32.mrb[0].mxu0
      %v796 = vadd.f32 0.0, %v795
      %v797 = vpop.f32.mrb[0].mxu0
      %v798 = vpop.f32.mrb[0].mxu0
      %v799 = vadd.f32 0.0, %v798
      %v800 = vpop.f32.mrb[0].mxu0
      %801 = vmatprep.mubr.bf16.mxu0 0
      %802 = vmatmul.mubr.bf16.gmra.mrb[0].mxu0 %v713
      %v803 = vpop.f32.mrb[0].mxu0
      %v804 = vadd.f32 0.0, %v803
      %v805 = vpop.f32.mrb[0].mxu0
      %v806 = vpop.f32.mrb[0].mxu0
      %v807 = vadd.f32 0.0, %v806
      %v808 = vpop.f32.mrb[0].mxu0
      %809 = vmatprep.mubr.bf16.mxu0 0
      %810 = vmatmul.mubr.bf16.gmra.mrb[0].mxu0 %v716
      %v811 = vpop.f32.mrb[0].mxu0
      %v812 = vadd.f32 0.0, %v811
      %v813 = vpop.f32.mrb[0].mxu0
      %v814 = vpop.f32.mrb[0].mxu0
      %v815 = vadd.f32 0.0, %v814
      %v816 = vpop.f32.mrb[0].mxu0
      %817 = vdwg.mxu0
      %v818 = vadd.f32 %v652, %v756
      %v819 = vadd.f32 %v653, %v759
      %v820 = vadd.f32 %v654, %v764
      %v821 = vadd.f32 %v655, %v767
      %v822 = vadd.f32 %v656, %v772
      %v823 = vadd.f32 %v657, %v775
      %v824 = vadd.f32 %v658, %v780
      %v825 = vadd.f32 %v659, %v783
      %v826 = vadd.f32 %v660, %v788
      %v827 = vadd.f32 %v661, %v791
      %v828 = vadd.f32 %v662, %v796
      %v829 = vadd.f32 %v663, %v799
      %v830 = vadd.f32 %v664, %v804
      %v831 = vadd.f32 %v665, %v807
      %v832 = vadd.f32 %v666, %v812
      %v833 = vadd.f32 %v667, %v815
      %834 = vst.msk [vmem:[#allocation2] sm:$0xff] %vm197, %v818
      %835 = vst.msk [vmem:[#allocation2 + $0x8] sm:$0xff] %vm197, %v819
      %836 = vst.msk [vmem:[#allocation2 + $0x10] sm:$0xff] %vm197, %v820
      %837 = vst.msk [vmem:[#allocation2 + $0x18] sm:$0xff] %vm197, %v821
      %838 = vst.msk [vmem:[#allocation2 + $0x20] sm:$0xff] %vm197, %v822
      %839 = vst.msk [vmem:[#allocation2 + $0x28] sm:$0xff] %vm197, %v823
      %840 = vst.msk [vmem:[#allocation2 + $0x30] sm:$0xff] %vm197, %v824
      %841 = vst.msk [vmem:[#allocation2 + $0x38] sm:$0xff] %vm197, %v825
      %842 = vst.msk [vmem:[#allocation2 + $0x40] sm:$0xff] %vm197, %v826
      %843 = vst.msk [vmem:[#allocation2 + $0x48] sm:$0xff] %vm197, %v827
      %844 = vst.msk [vmem:[#allocation2 + $0x50] sm:$0xff] %vm197, %v828
      %845 = vst.msk [vmem:[#allocation2 + $0x58] sm:$0xff] %vm197, %v829
      %846 = vst.msk [vmem:[#allocation2 + $0x60] sm:$0xff] %vm197, %v830
      %847 = vst.msk [vmem:[#allocation2 + $0x68] sm:$0xff] %vm197, %v831
      %848 = vst.msk [vmem:[#allocation2 + $0x70] sm:$0xff] %vm197, %v832
      %849 = vst.msk [vmem:[#allocation2 + $0x78] sm:$0xff] %vm197, %v833
      %vm858 = vcmask 1042432
      %vm859 = vcmask 1046532
      %vm860 = vmor %vm858, %vm859
      %v861 = vrot.slane %v218, 5
      %v862 = vrot.slane %v861, 4
      %v863 = vrot.slane %v219, 5
      %v864 = vsel %vm860, %v862, %v863
      %v865 = vrot.slane %v863, 4
      %v866 = vrot.slane %v220, 5
      %v867 = vsel %vm860, %v865, %v866
      %v868 = vrot.slane %v221, 5
      %v869 = vrot.slane %v868, 4
      %v870 = vrot.slane %v222, 5
      %v871 = vsel %vm860, %v869, %v870
      %v872 = vrot.slane %v870, 4
      %v873 = vrot.slane %v223, 5
      %v874 = vsel %vm860, %v872, %v873
      %v875 = vrot.slane %v224, 5
      %v876 = vrot.slane %v875, 4
      %v877 = vrot.slane %v225, 5
      %v878 = vsel %vm860, %v876, %v877
      %v879 = vrot.slane %v877, 4
      %v880 = vrot.slane %v226, 5
      %v881 = vsel %vm860, %v879, %v880
      %v882 = vrot.slane %v227, 5
      %v883 = vrot.slane %v882, 4
      %v884 = vrot.slane %v228, 5
      %v885 = vsel %vm860, %v883, %v884
      %v886 = vrot.slane %v884, 4
      %v887 = vrot.slane %v229, 5
      %v888 = vsel %vm860, %v886, %v887
      %v889 = vrot.slane %v230, 5
      %v890 = vrot.slane %v889, 4
      %v891 = vrot.slane %v231, 5
      %v892 = vsel %vm860, %v890, %v891
      %v893 = vrot.slane %v891, 4
      %v894 = vrot.slane %v232, 5
      %v895 = vsel %vm860, %v893, %v894
      %v896 = vrot.slane %v233, 5
      %v897 = vrot.slane %v896, 4
      %v898 = vrot.slane %v234, 5
      %v899 = vsel %vm860, %v897, %v898
      %v900 = vrot.slane %v898, 4
      %v901 = vrot.slane %v235, 5
      %v902 = vsel %vm860, %v900, %v901
      %v903 = vrot.slane %v236, 5
      %v904 = vrot.slane %v903, 4
      %v905 = vrot.slane %v237, 5
      %v906 = vsel %vm860, %v904, %v905
      %v907 = vrot.slane %v905, 4
      %v908 = vrot.slane %v238, 5
      %v909 = vsel %vm860, %v907, %v908
      %v910 = vrot.slane %v239, 5
      %v911 = vrot.slane %v910, 4
      %v912 = vrot.slane %v240, 5
      %v913 = vsel %vm860, %v911, %v912
      %v914 = vrot.slane %v912, 4
      %v915 = vrot.slane %v241, 5
      %v916 = vsel %vm860, %v914, %v915
      %v917 = vld [vmem:[#allocation2] sm:$0xff]
      %v918 = vld [vmem:[#allocation2 + $0x8] sm:$0xff]
      %v919 = vld [vmem:[#allocation2 + $0x10] sm:$0xff]
      %v920 = vld [vmem:[#allocation2 + $0x18] sm:$0xff]
      %v921 = vld [vmem:[#allocation2 + $0x20] sm:$0xff]
      %v922 = vld [vmem:[#allocation2 + $0x28] sm:$0xff]
      %v923 = vld [vmem:[#allocation2 + $0x30] sm:$0xff]
      %v924 = vld [vmem:[#allocation2 + $0x38] sm:$0xff]
      %v925 = vld [vmem:[#allocation2 + $0x40] sm:$0xff]
      %v926 = vld [vmem:[#allocation2 + $0x48] sm:$0xff]
      %v927 = vld [vmem:[#allocation2 + $0x50] sm:$0xff]
      %v928 = vld [vmem:[#allocation2 + $0x58] sm:$0xff]
      %v929 = vld [vmem:[#allocation2 + $0x60] sm:$0xff]
      %v930 = vld [vmem:[#allocation2 + $0x68] sm:$0xff]
      %v931 = vld [vmem:[#allocation2 + $0x70] sm:$0xff]
      %v932 = vld [vmem:[#allocation2 + $0x78] sm:$0xff]
      %s933 = scalar_lea.vmem %s1, 8
      %v934 = vld [vmem:[%s933] sm:$0xf]
      %v935 = vunpack.c.l.b16 %v864
      %v936 = vunpack.c.l.b16 %v867
      %v937 = vunpack.c.l.b16 %v871
      %v938 = vunpack.c.l.b16 %v874
      %v939 = vunpack.c.l.b16 %v878
      %v940 = vunpack.c.l.b16 %v881
      %v941 = vunpack.c.l.b16 %v885
      %v942 = vunpack.c.l.b16 %v888
      %v943 = vunpack.c.l.b16 %v892
      %v944 = vunpack.c.l.b16 %v895
      %v945 = vunpack.c.l.b16 %v899
      %v946 = vunpack.c.l.b16 %v902
      %v947 = vunpack.c.l.b16 %v906
      %v948 = vunpack.c.l.b16 %v909
      %v949 = vunpack.c.l.b16 %v913
      %v950 = vunpack.c.l.b16 %v916
      %v951 = vpack.c.b16 %v936, %v935
      %v952 = vpack.c.b16 %v938, %v937
      %v953 = vpack.c.b16 %v940, %v939
      %v954 = vpack.c.b16 %v942, %v941
      %v955 = vpack.c.b16 %v944, %v943
      %v956 = vpack.c.b16 %v946, %v945
      %v957 = vpack.c.b16 %v948, %v947
      %v958 = vpack.c.b16 %v950, %v949
      %v960 = vsel %vm299, %v951, 0
      %v963 = vsel %vm299, %v952, 0
      %v966 = vsel %vm299, %v953, 0
      %v969 = vsel %vm299, %v954, 0
      %v972 = vsel %vm299, %v955, 0
      %v975 = vsel %vm299, %v956, 0
      %v978 = vsel %vm299, %v957, 0
      %v981 = vsel %vm299, %v958, 0
      %v984 = vsel %vm324, %v934, 0
      %986 = vmatprep.subr.bf16.mxu0 0
      %987 = vmatpush1.bf16.msra.mxu0 %v984
      %988 = vmatprep.subr.bf16.mxu0 0
      %989 = vmatpush1.bf16.msra.mxu0 0
      %990 = vmatprep.subr.bf16.mxu0 0
      %991 = vmatpush1.bf16.msra.mxu0 0
      %992 = vmatprep.subr.bf16.mxu0 0
      %993 = vmatpush1.bf16.msra.mxu0 0
      %994 = vmatprep.subr.bf16.mxu0 0
      %995 = vmatpush1.bf16.msra.mxu0 0
      %996 = vmatprep.subr.bf16.mxu0 0
      %997 = vmatpush1.bf16.msra.mxu0 0
      %998 = vmatprep.subr.bf16.mxu0 0
      %999 = vmatpush1.bf16.msra.mxu0 0
      %1000 = vmatprep.subr.bf16.mxu0 0
      %1001 = vmatpush1.bf16.msra.mxu0 0
      %1002 = vmatprep.subr.bf16.mxu0 0
      %1003 = vmatpush1.bf16.msra.mxu0 0
      %1004 = vmatprep.subr.bf16.mxu0 0
      %1005 = vmatpush1.bf16.msra.mxu0 0
      %1006 = vmatprep.subr.bf16.mxu0 0
      %1007 = vmatpush1.bf16.msra.mxu0 0
      %1008 = vmatprep.subr.bf16.mxu0 0
      %1009 = vmatpush1.bf16.msra.mxu0 0
      %1010 = vmatprep.subr.bf16.mxu0 0
      %1011 = vmatpush1.bf16.msra.mxu0 0
      %1012 = vmatprep.subr.bf16.mxu0 0
      %1013 = vmatpush1.bf16.msra.mxu0 0
      %1014 = vmatprep.subr.bf16.mxu0 0
      %1015 = vmatpush1.bf16.msra.mxu0 0
      %1016 = vmatprep.subr.bf16.mxu0 0
      %1017 = vmatpush1.bf16.msra.mxu0 0
      %1018 = vmatprep.mubr.bf16.mxu0 0
      %1019 = vmatmul.mubr.bf16.gmra.mrb[0].mxu0 %v960
      %v1020 = vpop.f32.mrb[0].mxu0
      %v1021 = vadd.f32 0.0, %v1020
      %v1022 = vpop.f32.mrb[0].mxu0
      %v1023 = vpop.f32.mrb[0].mxu0
      %v1024 = vadd.f32 0.0, %v1023
      %v1025 = vpop.f32.mrb[0].mxu0
      %1026 = vmatprep.mubr.bf16.mxu0 0
      %1027 = vmatmul.mubr.bf16.gmra.mrb[0].mxu0 %v963
      %v1028 = vpop.f32.mrb[0].mxu0
      %v1029 = vadd.f32 0.0, %v1028
      %v1030 = vpop.f32.mrb[0].mxu0
      %v1031 = vpop.f32.mrb[0].mxu0
      %v1032 = vadd.f32 0.0, %v1031
      %v1033 = vpop.f32.mrb[0].mxu0
      %1034 = vmatprep.mubr.bf16.mxu0 0
      %1035 = vmatmul.mubr.bf16.gmra.mrb[0].mxu0 %v966
      %v1036 = vpop.f32.mrb[0].mxu0
      %v1037 = vadd.f32 0.0, %v1036
      %v1038 = vpop.f32.mrb[0].mxu0
      %v1039 = vpop.f32.mrb[0].mxu0
      %v1040 = vadd.f32 0.0, %v1039
      %v1041 = vpop.f32.mrb[0].mxu0
      %1042 = vmatprep.mubr.bf16.mxu0 0
      %1043 = vmatmul.mubr.bf16.gmra.mrb[0].mxu0 %v969
      %v1044 = vpop.f32.mrb[0].mxu0
      %v1045 = vadd.f32 0.0, %v1044
      %v1046 = vpop.f32.mrb[0].mxu0
      %v1047 = vpop.f32.mrb[0].mxu0
      %v1048 = vadd.f32 0.0, %v1047
      %v1049 = vpop.f32.mrb[0].mxu0
      %1050 = vmatprep.mubr.bf16.mxu0 0
      %1051 = vmatmul.mubr.bf16.gmra.mrb[0].mxu0 %v972
      %v1052 = vpop.f32.mrb[0].mxu0
      %v1053 = vadd.f32 0.0, %v1052
      %v1054 = vpop.f32.mrb[0].mxu0
      %v1055 = vpop.f32.mrb[0].mxu0
      %v1056 = vadd.f32 0.0, %v1055
      %v1057 = vpop.f32.mrb[0].mxu0
      %1058 = vmatprep.mubr.bf16.mxu0 0
      %1059 = vmatmul.mubr.bf16.gmra.mrb[0].mxu0 %v975
      %v1060 = vpop.f32.mrb[0].mxu0
      %v1061 = vadd.f32 0.0, %v1060
      %v1062 = vpop.f32.mrb[0].mxu0
      %v1063 = vpop.f32.mrb[0].mxu0
      %v1064 = vadd.f32 0.0, %v1063
      %v1065 = vpop.f32.mrb[0].mxu0
      %1066 = vmatprep.mubr.bf16.mxu0 0
      %1067 = vmatmul.mubr.bf16.gmra.mrb[0].mxu0 %v978
      %v1068 = vpop.f32.mrb[0].mxu0
      %v1069 = vadd.f32 0.0, %v1068
      %v1070 = vpop.f32.mrb[0].mxu0
      %v1071 = vpop.f32.mrb[0].mxu0
      %v1072 = vadd.f32 0.0, %v1071
      %v1073 = vpop.f32.mrb[0].mxu0
      %1074 = vmatprep.mubr.bf16.mxu0 0
      %1075 = vmatmul.mubr.bf16.gmra.mrb[0].mxu0 %v981
      %v1076 = vpop.f32.mrb[0].mxu0
      %v1077 = vadd.f32 0.0, %v1076
      %v1078 = vpop.f32.mrb[0].mxu0
      %v1079 = vpop.f32.mrb[0].mxu0
      %v1080 = vadd.f32 0.0, %v1079
      %v1081 = vpop.f32.mrb[0].mxu0
      %1082 = vdwg.mxu0
      %v1083 = vadd.f32 %v917, %v1021
      %v1084 = vadd.f32 %v918, %v1024
      %v1085 = vadd.f32 %v919, %v1029
      %v1086 = vadd.f32 %v920, %v1032
      %v1087 = vadd.f32 %v921, %v1037
      %v1088 = vadd.f32 %v922, %v1040
      %v1089 = vadd.f32 %v923, %v1045
      %v1090 = vadd.f32 %v924, %v1048
      %v1091 = vadd.f32 %v925, %v1053
      %v1092 = vadd.f32 %v926, %v1056
      %v1093 = vadd.f32 %v927, %v1061
      %v1094 = vadd.f32 %v928, %v1064
      %v1095 = vadd.f32 %v929, %v1069
      %v1096 = vadd.f32 %v930, %v1072
      %v1097 = vadd.f32 %v931, %v1077
      %v1098 = vadd.f32 %v932, %v1080
      %1099 = vst.msk [vmem:[#allocation2] sm:$0xff] %vm197, %v1083
      %1100 = vst.msk [vmem:[#allocation2 + $0x8] sm:$0xff] %vm197, %v1084
      %1101 = vst.msk [vmem:[#allocation2 + $0x10] sm:$0xff] %vm197, %v1085
      %1102 = vst.msk [vmem:[#allocation2 + $0x18] sm:$0xff] %vm197, %v1086
      %1103 = vst.msk [vmem:[#allocation2 + $0x20] sm:$0xff] %vm197, %v1087
      %1104 = vst.msk [vmem:[#allocation2 + $0x28] sm:$0xff] %vm197, %v1088
      %1105 = vst.msk [vmem:[#allocation2 + $0x30] sm:$0xff] %vm197, %v1089
      %1106 = vst.msk [vmem:[#allocation2 + $0x38] sm:$0xff] %vm197, %v1090
      %1107 = vst.msk [vmem:[#allocation2 + $0x40] sm:$0xff] %vm197, %v1091
      %1108 = vst.msk [vmem:[#allocation2 + $0x48] sm:$0xff] %vm197, %v1092
      %1109 = vst.msk [vmem:[#allocation2 + $0x50] sm:$0xff] %vm197, %v1093
      %1110 = vst.msk [vmem:[#allocation2 + $0x58] sm:$0xff] %vm197, %v1094
      %1111 = vst.msk [vmem:[#allocation2 + $0x60] sm:$0xff] %vm197, %v1095
      %1112 = vst.msk [vmem:[#allocation2 + $0x68] sm:$0xff] %vm197, %v1096
      %1113 = vst.msk [vmem:[#allocation2 + $0x70] sm:$0xff] %vm197, %v1097
      %1114 = vst.msk [vmem:[#allocation2 + $0x78] sm:$0xff] %vm197, %v1098
      %s1115 = sadd.s32 %s214, 1
      %s1116 = smul.u32 %s1115, 3
      %s1117 = smul.addr %s1116, 4
      %s1118 = scalar_lea.vmem %s184, %s1117
      %v1119 = vld [vmem:[%s1118] sm:$0xf]
      %v1120 = vld [vmem:[%s1118 + $0x4] sm:$0xf]
      %v1121 = vld [vmem:[%s1118 + $0x8] sm:$0x1]
      %v1122 = vld [vmem:[%s1118 + $0xc] sm:$0xf]
      %v1123 = vld [vmem:[%s1118 + $0x10] sm:$0xf]
      %v1124 = vld [vmem:[%s1118 + $0x14] sm:$0x1]
      %v1125 = vld [vmem:[%s1118 + $0x18] sm:$0xf]
      %v1126 = vld [vmem:[%s1118 + $0x1c] sm:$0xf]
      %v1127 = vld [vmem:[%s1118 + $0x20] sm:$0x1]
      %v1128 = vld [vmem:[%s1118 + $0x24] sm:$0xf]
      %v1129 = vld [vmem:[%s1118 + $0x28] sm:$0xf]
      %v1130 = vld [vmem:[%s1118 + $0x2c] sm:$0x1]
      %v1131 = vld [vmem:[%s1118 + $0x30] sm:$0xf]
      %v1132 = vld [vmem:[%s1118 + $0x34] sm:$0xf]
      %v1133 = vld [vmem:[%s1118 + $0x38] sm:$0x1]
      %v1134 = vld [vmem:[%s1118 + $0x3c] sm:$0xf]
      %v1135 = vld [vmem:[%s1118 + $0x40] sm:$0xf]
      %v1136 = vld [vmem:[%s1118 + $0x44] sm:$0x1]
      %v1137 = vld [vmem:[%s1118 + $0x48] sm:$0xf]
      %v1138 = vld [vmem:[%s1118 + $0x4c] sm:$0xf]
      %v1139 = vld [vmem:[%s1118 + $0x50] sm:$0x1]
      %v1140 = vld [vmem:[%s1118 + $0x54] sm:$0xf]
      %v1141 = vld [vmem:[%s1118 + $0x58] sm:$0xf]
      %v1142 = vld [vmem:[%s1118 + $0x5c] sm:$0x1]
      %v1143 = vld [vmem:[#allocation2] sm:$0xff]
      %v1144 = vld [vmem:[#allocation2 + $0x8] sm:$0xff]
      %v1145 = vld [vmem:[#allocation2 + $0x10] sm:$0xff]
      %v1146 = vld [vmem:[#allocation2 + $0x18] sm:$0xff]
      %v1147 = vld [vmem:[#allocation2 + $0x20] sm:$0xff]
      %v1148 = vld [vmem:[#allocation2 + $0x28] sm:$0xff]
      %v1149 = vld [vmem:[#allocation2 + $0x30] sm:$0xff]
      %v1150 = vld [vmem:[#allocation2 + $0x38] sm:$0xff]
      %v1151 = vld [vmem:[#allocation2 + $0x40] sm:$0xff]
      %v1152 = vld [vmem:[#allocation2 + $0x48] sm:$0xff]
      %v1153 = vld [vmem:[#allocation2 + $0x50] sm:$0xff]
      %v1154 = vld [vmem:[#allocation2 + $0x58] sm:$0xff]
      %v1155 = vld [vmem:[#allocation2 + $0x60] sm:$0xff]
      %v1156 = vld [vmem:[#allocation2 + $0x68] sm:$0xff]
      %v1157 = vld [vmem:[#allocation2 + $0x70] sm:$0xff]
      %v1158 = vld [vmem:[#allocation2 + $0x78] sm:$0xff]
      %s1159 = scalar_lea.vmem %s1, 12
      %v1160 = vld [vmem:[%s1159] sm:$0xf]
      %v1177 = vunpack.c.l.b16 %v1119
      %v1178 = vunpack.c.l.b16 %v1120
      %v1179 = vunpack.c.l.b16 %v1122
      %v1180 = vunpack.c.l.b16 %v1123
      %v1181 = vunpack.c.l.b16 %v1125
      %v1182 = vunpack.c.l.b16 %v1126
      %v1183 = vunpack.c.l.b16 %v1128
      %v1184 = vunpack.c.l.b16 %v1129
      %v1185 = vunpack.c.l.b16 %v1131
      %v1186 = vunpack.c.l.b16 %v1132
      %v1187 = vunpack.c.l.b16 %v1134
      %v1188 = vunpack.c.l.b16 %v1135
      %v1189 = vunpack.c.l.b16 %v1137
      %v1190 = vunpack.c.l.b16 %v1138
      %v1191 = vunpack.c.l.b16 %v1140
      %v1192 = vunpack.c.l.b16 %v1141
      %v1193 = vpack.c.b16 %v1178, %v1177
      %v1194 = vpack.c.b16 %v1180, %v1179
      %v1195 = vpack.c.b16 %v1182, %v1181
      %v1196 = vpack.c.b16 %v1184, %v1183
      %v1197 = vpack.c.b16 %v1186, %v1185
      %v1198 = vpack.c.b16 %v1188, %v1187
      %v1199 = vpack.c.b16 %v1190, %v1189
      %v1200 = vpack.c.b16 %v1192, %v1191
      %v1202 = vsel %vm299, %v1193, 0
      %v1205 = vsel %vm299, %v1194, 0
      %v1208 = vsel %vm299, %v1195, 0
      %v1211 = vsel %vm299, %v1196, 0
      %v1214 = vsel %vm299, %v1197, 0
      %v1217 = vsel %vm299, %v1198, 0
      %v1220 = vsel %vm299, %v1199, 0
      %v1223 = vsel %vm299, %v1200, 0
      %v1226 = vsel %vm324, %v1160, 0
      %1228 = vmatprep.subr.bf16.mxu0 0
      %1229 = vmatpush1.bf16.msra.mxu0 %v1226
      %1230 = vmatprep.subr.bf16.mxu0 0
      %1231 = vmatpush1.bf16.msra.mxu0 0
      %1232 = vmatprep.subr.bf16.mxu0 0
      %1233 = vmatpush1.bf16.msra.mxu0 0
      %1234 = vmatprep.subr.bf16.mxu0 0
      %1235 = vmatpush1.bf16.msra.mxu0 0
      %1236 = vmatprep.subr.bf16.mxu0 0
      %1237 = vmatpush1.bf16.msra.mxu0 0
      %1238 = vmatprep.subr.bf16.mxu0 0
      %1239 = vmatpush1.bf16.msra.mxu0 0
      %1240 = vmatprep.subr.bf16.mxu0 0
      %1241 = vmatpush1.bf16.msra.mxu0 0
      %1242 = vmatprep.subr.bf16.mxu0 0
      %1243 = vmatpush1.bf16.msra.mxu0 0
      %1244 = vmatprep.subr.bf16.mxu0 0
      %1245 = vmatpush1.bf16.msra.mxu0 0
      %1246 = vmatprep.subr.bf16.mxu0 0
      %1247 = vmatpush1.bf16.msra.mxu0 0
      %1248 = vmatprep.subr.bf16.mxu0 0
      %1249 = vmatpush1.bf16.msra.mxu0 0
      %1250 = vmatprep.subr.bf16.mxu0 0
      %1251 = vmatpush1.bf16.msra.mxu0 0
      %1252 = vmatprep.subr.bf16.mxu0 0
      %1253 = vmatpush1.bf16.msra.mxu0 0
      %1254 = vmatprep.subr.bf16.mxu0 0
      %1255 = vmatpush1.bf16.msra.mxu0 0
      %1256 = vmatprep.subr.bf16.mxu0 0
      %1257 = vmatpush1.bf16.msra.mxu0 0
      %1258 = vmatprep.subr.bf16.mxu0 0
      %1259 = vmatpush1.bf16.msra.mxu0 0
      %1260 = vmatprep.mubr.bf16.mxu0 0
      %1261 = vmatmul.mubr.bf16.gmra.mrb[0].mxu0 %v1202
      %v1262 = vpop.f32.mrb[0].mxu0
      %v1263 = vadd.f32 0.0, %v1262
      %v1264 = vpop.f32.mrb[0].mxu0
      %v1265 = vpop.f32.mrb[0].mxu0
      %v1266 = vadd.f32 0.0, %v1265
      %v1267 = vpop.f32.mrb[0].mxu0
      %1268 = vmatprep.mubr.bf16.mxu0 0
      %1269 = vmatmul.mubr.bf16.gmra.mrb[0].mxu0 %v1205
      %v1270 = vpop.f32.mrb[0].mxu0
      %v1271 = vadd.f32 0.0, %v1270
      %v1272 = vpop.f32.mrb[0].mxu0
      %v1273 = vpop.f32.mrb[0].mxu0
      %v1274 = vadd.f32 0.0, %v1273
      %v1275 = vpop.f32.mrb[0].mxu0
      %1276 = vmatprep.mubr.bf16.mxu0 0
      %1277 = vmatmul.mubr.bf16.gmra.mrb[0].mxu0 %v1208
      %v1278 = vpop.f32.mrb[0].mxu0
      %v1279 = vadd.f32 0.0, %v1278
      %v1280 = vpop.f32.mrb[0].mxu0
      %v1281 = vpop.f32.mrb[0].mxu0
      %v1282 = vadd.f32 0.0, %v1281
      %v1283 = vpop.f32.mrb[0].mxu0
      %1284 = vmatprep.mubr.bf16.mxu0 0
      %1285 = vmatmul.mubr.bf16.gmra.mrb[0].mxu0 %v1211
      %v1286 = vpop.f32.mrb[0].mxu0
      %v1287 = vadd.f32 0.0, %v1286
      %v1288 = vpop.f32.mrb[0].mxu0
      %v1289 = vpop.f32.mrb[0].mxu0
      %v1290 = vadd.f32 0.0, %v1289
      %v1291 = vpop.f32.mrb[0].mxu0
      %1292 = vmatprep.mubr.bf16.mxu0 0
      %1293 = vmatmul.mubr.bf16.gmra.mrb[0].mxu0 %v1214
      %v1294 = vpop.f32.mrb[0].mxu0
      %v1295 = vadd.f32 0.0, %v1294
      %v1296 = vpop.f32.mrb[0].mxu0
      %v1297 = vpop.f32.mrb[0].mxu0
      %v1298 = vadd.f32 0.0, %v1297
      %v1299 = vpop.f32.mrb[0].mxu0
      %1300 = vmatprep.mubr.bf16.mxu0 0
      %1301 = vmatmul.mubr.bf16.gmra.mrb[0].mxu0 %v1217
      %v1302 = vpop.f32.mrb[0].mxu0
      %v1303 = vadd.f32 0.0, %v1302
      %v1304 = vpop.f32.mrb[0].mxu0
      %v1305 = vpop.f32.mrb[0].mxu0
      %v1306 = vadd.f32 0.0, %v1305
      %v1307 = vpop.f32.mrb[0].mxu0
      %1308 = vmatprep.mubr.bf16.mxu0 0
      %1309 = vmatmul.mubr.bf16.gmra.mrb[0].mxu0 %v1220
      %v1310 = vpop.f32.mrb[0].mxu0
      %v1311 = vadd.f32 0.0, %v1310
      %v1312 = vpop.f32.mrb[0].mxu0
      %v1313 = vpop.f32.mrb[0].mxu0
      %v1314 = vadd.f32 0.0, %v1313
      %v1315 = vpop.f32.mrb[0].mxu0
      %1316 = vmatprep.mubr.bf16.mxu0 0
      %1317 = vmatmul.mubr.bf16.gmra.mrb[0].mxu0 %v1223
      %v1318 = vpop.f32.mrb[0].mxu0
      %v1319 = vadd.f32 0.0, %v1318
      %v1320 = vpop.f32.mrb[0].mxu0
      %v1321 = vpop.f32.mrb[0].mxu0
      %v1322 = vadd.f32 0.0, %v1321
      %v1323 = vpop.f32.mrb[0].mxu0
      %1324 = vdwg.mxu0
      %v1325 = vadd.f32 %v1143, %v1263
      %v1326 = vadd.f32 %v1144, %v1266
      %v1327 = vadd.f32 %v1145, %v1271
      %v1328 = vadd.f32 %v1146, %v1274
      %v1329 = vadd.f32 %v1147, %v1279
      %v1330 = vadd.f32 %v1148, %v1282
      %v1331 = vadd.f32 %v1149, %v1287
      %v1332 = vadd.f32 %v1150, %v1290
      %v1333 = vadd.f32 %v1151, %v1295
      %v1334 = vadd.f32 %v1152, %v1298
      %v1335 = vadd.f32 %v1153, %v1303
      %v1336 = vadd.f32 %v1154, %v1306
      %v1337 = vadd.f32 %v1155, %v1311
      %v1338 = vadd.f32 %v1156, %v1314
      %v1339 = vadd.f32 %v1157, %v1319
      %v1340 = vadd.f32 %v1158, %v1322
      %1341 = vst.msk [vmem:[#allocation2] sm:$0xff] %vm197, %v1325
      %1342 = vst.msk [vmem:[#allocation2 + $0x8] sm:$0xff] %vm197, %v1326
      %1343 = vst.msk [vmem:[#allocation2 + $0x10] sm:$0xff] %vm197, %v1327
      %1344 = vst.msk [vmem:[#allocation2 + $0x18] sm:$0xff] %vm197, %v1328
      %1345 = vst.msk [vmem:[#allocation2 + $0x20] sm:$0xff] %vm197, %v1329
      %1346 = vst.msk [vmem:[#allocation2 + $0x28] sm:$0xff] %vm197, %v1330
      %1347 = vst.msk [vmem:[#allocation2 + $0x30] sm:$0xff] %vm197, %v1331
      %1348 = vst.msk [vmem:[#allocation2 + $0x38] sm:$0xff] %vm197, %v1332
      %1349 = vst.msk [vmem:[#allocation2 + $0x40] sm:$0xff] %vm197, %v1333
      %1350 = vst.msk [vmem:[#allocation2 + $0x48] sm:$0xff] %vm197, %v1334
      %1351 = vst.msk [vmem:[#allocation2 + $0x50] sm:$0xff] %vm197, %v1335
      %1352 = vst.msk [vmem:[#allocation2 + $0x58] sm:$0xff] %vm197, %v1336
      %1353 = vst.msk [vmem:[#allocation2 + $0x60] sm:$0xff] %vm197, %v1337
      %1354 = vst.msk [vmem:[#allocation2 + $0x68] sm:$0xff] %vm197, %v1338
      %1355 = vst.msk [vmem:[#allocation2 + $0x70] sm:$0xff] %vm197, %v1339
      %1356 = vst.msk [vmem:[#allocation2 + $0x78] sm:$0xff] %vm197, %v1340
      %v1358 = vshrl.u32 %v1119, 16
      %v1360 = vrot.slane %v1358, 4
      %v1361 = vshll.u32 %v1119, 16
      %v1363 = vrot.slane %v1361, 5
      %v1364 = vor.u32 %v1360, %v1363
      %v1365 = vrot.slane %v1364, 4
      %v1367 = vshll.u32 %v1120, 16
      %v1369 = vrot.slane %v1367, 5
      %v1370 = vsel %vm459, %v1365, %v1369
      %v1371 = vshrl.u32 %v1120, 16
      %v1373 = vrot.slane %v1371, 4
      %v1374 = vor.u32 %v1373, %v1369
      %v1375 = vrot.slane %v1374, 4
      %v1377 = vshll.u32 %v1121, 16
      %v1379 = vrot.slane %v1377, 5
      %v1380 = vsel %vm459, %v1375, %v1379
      %v1382 = vshrl.u32 %v1122, 16
      %v1384 = vrot.slane %v1382, 4
      %v1385 = vshll.u32 %v1122, 16
      %v1387 = vrot.slane %v1385, 5
      %v1388 = vor.u32 %v1384, %v1387
      %v1389 = vrot.slane %v1388, 4
      %v1391 = vshll.u32 %v1123, 16
      %v1393 = vrot.slane %v1391, 5
      %v1394 = vsel %vm459, %v1389, %v1393
      %v1395 = vshrl.u32 %v1123, 16
      %v1397 = vrot.slane %v1395, 4
      %v1398 = vor.u32 %v1397, %v1393
      %v1399 = vrot.slane %v1398, 4
      %v1401 = vshll.u32 %v1124, 16
      %v1403 = vrot.slane %v1401, 5
      %v1404 = vsel %vm459, %v1399, %v1403
      %v1406 = vshrl.u32 %v1125, 16
      %v1408 = vrot.slane %v1406, 4
      %v1409 = vshll.u32 %v1125, 16
      %v1411 = vrot.slane %v1409, 5
      %v1412 = vor.u32 %v1408, %v1411
      %v1413 = vrot.slane %v1412, 4
      %v1415 = vshll.u32 %v1126, 16
      %v1417 = vrot.slane %v1415, 5
      %v1418 = vsel %vm459, %v1413, %v1417
      %v1419 = vshrl.u32 %v1126, 16
      %v1421 = vrot.slane %v1419, 4
      %v1422 = vor.u32 %v1421, %v1417
      %v1423 = vrot.slane %v1422, 4
      %v1425 = vshll.u32 %v1127, 16
      %v1427 = vrot.slane %v1425, 5
      %v1428 = vsel %vm459, %v1423, %v1427
      %v1430 = vshrl.u32 %v1128, 16
      %v1432 = vrot.slane %v1430, 4
      %v1433 = vshll.u32 %v1128, 16
      %v1435 = vrot.slane %v1433, 5
      %v1436 = vor.u32 %v1432, %v1435
      %v1437 = vrot.slane %v1436, 4
      %v1439 = vshll.u32 %v1129, 16
      %v1441 = vrot.slane %v1439, 5
      %v1442 = vsel %vm459, %v1437, %v1441
      %v1443 = vshrl.u32 %v1129, 16
      %v1445 = vrot.slane %v1443, 4
      %v1446 = vor.u32 %v1445, %v1441
      %v1447 = vrot.slane %v1446, 4
      %v1449 = vshll.u32 %v1130, 16
      %v1451 = vrot.slane %v1449, 5
      %v1452 = vsel %vm459, %v1447, %v1451
      %v1454 = vshrl.u32 %v1131, 16
      %v1456 = vrot.slane %v1454, 4
      %v1457 = vshll.u32 %v1131, 16
      %v1459 = vrot.slane %v1457, 5
      %v1460 = vor.u32 %v1456, %v1459
      %v1461 = vrot.slane %v1460, 4
      %v1463 = vshll.u32 %v1132, 16
      %v1465 = vrot.slane %v1463, 5
      %v1466 = vsel %vm459, %v1461, %v1465
      %v1467 = vshrl.u32 %v1132, 16
      %v1469 = vrot.slane %v1467, 4
      %v1470 = vor.u32 %v1469, %v1465
      %v1471 = vrot.slane %v1470, 4
      %v1473 = vshll.u32 %v1133, 16
      %v1475 = vrot.slane %v1473, 5
      %v1476 = vsel %vm459, %v1471, %v1475
      %v1478 = vshrl.u32 %v1134, 16
      %v1480 = vrot.slane %v1478, 4
      %v1481 = vshll.u32 %v1134, 16
      %v1483 = vrot.slane %v1481, 5
      %v1484 = vor.u32 %v1480, %v1483
      %v1485 = vrot.slane %v1484, 4
      %v1487 = vshll.u32 %v1135, 16
      %v1489 = vrot.slane %v1487, 5
      %v1490 = vsel %vm459, %v1485, %v1489
      %v1491 = vshrl.u32 %v1135, 16
      %v1493 = vrot.slane %v1491, 4
      %v1494 = vor.u32 %v1493, %v1489
      %v1495 = vrot.slane %v1494, 4
      %v1497 = vshll.u32 %v1136, 16
      %v1499 = vrot.slane %v1497, 5
      %v1500 = vsel %vm459, %v1495, %v1499
      %v1502 = vshrl.u32 %v1137, 16
      %v1504 = vrot.slane %v1502, 4
      %v1505 = vshll.u32 %v1137, 16
      %v1507 = vrot.slane %v1505, 5
      %v1508 = vor.u32 %v1504, %v1507
      %v1509 = vrot.slane %v1508, 4
      %v1511 = vshll.u32 %v1138, 16
      %v1513 = vrot.slane %v1511, 5
      %v1514 = vsel %vm459, %v1509, %v1513
      %v1515 = vshrl.u32 %v1138, 16
      %v1517 = vrot.slane %v1515, 4
      %v1518 = vor.u32 %v1517, %v1513
      %v1519 = vrot.slane %v1518, 4
      %v1521 = vshll.u32 %v1139, 16
      %v1523 = vrot.slane %v1521, 5
      %v1524 = vsel %vm459, %v1519, %v1523
      %v1526 = vshrl.u32 %v1140, 16
      %v1528 = vrot.slane %v1526, 4
      %v1529 = vshll.u32 %v1140, 16
      %v1531 = vrot.slane %v1529, 5
      %v1532 = vor.u32 %v1528, %v1531
      %v1533 = vrot.slane %v1532, 4
      %v1535 = vshll.u32 %v1141, 16
      %v1537 = vrot.slane %v1535, 5
      %v1538 = vsel %vm459, %v1533, %v1537
      %v1539 = vshrl.u32 %v1141, 16
      %v1541 = vrot.slane %v1539, 4
      %v1542 = vor.u32 %v1541, %v1537
      %v1543 = vrot.slane %v1542, 4
      %v1545 = vshll.u32 %v1142, 16
      %v1547 = vrot.slane %v1545, 5
      %v1548 = vsel %vm459, %v1543, %v1547
      %v1549 = vld [vmem:[#allocation2] sm:$0xff]
      %v1550 = vld [vmem:[#allocation2 + $0x8] sm:$0xff]
      %v1551 = vld [vmem:[#allocation2 + $0x10] sm:$0xff]
      %v1552 = vld [vmem:[#allocation2 + $0x18] sm:$0xff]
      %v1553 = vld [vmem:[#allocation2 + $0x20] sm:$0xff]
      %v1554 = vld [vmem:[#allocation2 + $0x28] sm:$0xff]
      %v1555 = vld [vmem:[#allocation2 + $0x30] sm:$0xff]
      %v1556 = vld [vmem:[#allocation2 + $0x38] sm:$0xff]
      %v1557 = vld [vmem:[#allocation2 + $0x40] sm:$0xff]
      %v1558 = vld [vmem:[#allocation2 + $0x48] sm:$0xff]
      %v1559 = vld [vmem:[#allocation2 + $0x50] sm:$0xff]
      %v1560 = vld [vmem:[#allocation2 + $0x58] sm:$0xff]
      %v1561 = vld [vmem:[#allocation2 + $0x60] sm:$0xff]
      %v1562 = vld [vmem:[#allocation2 + $0x68] sm:$0xff]
      %v1563 = vld [vmem:[#allocation2 + $0x70] sm:$0xff]
      %v1564 = vld [vmem:[#allocation2 + $0x78] sm:$0xff]
      %s1565 = scalar_lea.vmem %s1, 16
      %v1566 = vld [vmem:[%s1565] sm:$0xf]
      %v1567 = vunpack.c.l.b16 %v1370
      %v1568 = vunpack.c.l.b16 %v1380
      %v1569 = vunpack.c.l.b16 %v1394
      %v1570 = vunpack.c.l.b16 %v1404
      %v1571 = vunpack.c.l.b16 %v1418
      %v1572 = vunpack.c.l.b16 %v1428
      %v1573 = vunpack.c.l.b16 %v1442
      %v1574 = vunpack.c.l.b16 %v1452
      %v1575 = vunpack.c.l.b16 %v1466
      %v1576 = vunpack.c.l.b16 %v1476
      %v1577 = vunpack.c.l.b16 %v1490
      %v1578 = vunpack.c.l.b16 %v1500
      %v1579 = vunpack.c.l.b16 %v1514
      %v1580 = vunpack.c.l.b16 %v1524
      %v1581 = vunpack.c.l.b16 %v1538
      %v1582 = vunpack.c.l.b16 %v1548
      %v1583 = vpack.c.b16 %v1568, %v1567
      %v1584 = vpack.c.b16 %v1570, %v1569
      %v1585 = vpack.c.b16 %v1572, %v1571
      %v1586 = vpack.c.b16 %v1574, %v1573
      %v1587 = vpack.c.b16 %v1576, %v1575
      %v1588 = vpack.c.b16 %v1578, %v1577
      %v1589 = vpack.c.b16 %v1580, %v1579
      %v1590 = vpack.c.b16 %v1582, %v1581
      %v1592 = vsel %vm299, %v1583, 0
      %v1595 = vsel %vm299, %v1584, 0
      %v1598 = vsel %vm299, %v1585, 0
      %v1601 = vsel %vm299, %v1586, 0
      %v1604 = vsel %vm299, %v1587, 0
      %v1607 = vsel %vm299, %v1588, 0
      %v1610 = vsel %vm299, %v1589, 0
      %v1613 = vsel %vm299, %v1590, 0
      %v1616 = vsel %vm324, %v1566, 0
      %1618 = vmatprep.subr.bf16.mxu0 0
      %1619 = vmatpush1.bf16.msra.mxu0 %v1616
      %1620 = vmatprep.subr.bf16.mxu0 0
      %1621 = vmatpush1.bf16.msra.mxu0 0
      %1622 = vmatprep.subr.bf16.mxu0 0
      %1623 = vmatpush1.bf16.msra.mxu0 0
      %1624 = vmatprep.subr.bf16.mxu0 0
      %1625 = vmatpush1.bf16.msra.mxu0 0
      %1626 = vmatprep.subr.bf16.mxu0 0
      %1627 = vmatpush1.bf16.msra.mxu0 0
      %1628 = vmatprep.subr.bf16.mxu0 0
      %1629 = vmatpush1.bf16.msra.mxu0 0
      %1630 = vmatprep.subr.bf16.mxu0 0
      %1631 = vmatpush1.bf16.msra.mxu0 0
      %1632 = vmatprep.subr.bf16.mxu0 0
      %1633 = vmatpush1.bf16.msra.mxu0 0
      %1634 = vmatprep.subr.bf16.mxu0 0
      %1635 = vmatpush1.bf16.msra.mxu0 0
      %1636 = vmatprep.subr.bf16.mxu0 0
      %1637 = vmatpush1.bf16.msra.mxu0 0
      %1638 = vmatprep.subr.bf16.mxu0 0
      %1639 = vmatpush1.bf16.msra.mxu0 0
      %1640 = vmatprep.subr.bf16.mxu0 0
      %1641 = vmatpush1.bf16.msra.mxu0 0
      %1642 = vmatprep.subr.bf16.mxu0 0
      %1643 = vmatpush1.bf16.msra.mxu0 0
      %1644 = vmatprep.subr.bf16.mxu0 0
      %1645 = vmatpush1.bf16.msra.mxu0 0
      %1646 = vmatprep.subr.bf16.mxu0 0
      %1647 = vmatpush1.bf16.msra.mxu0 0
      %1648 = vmatprep.subr.bf16.mxu0 0
      %1649 = vmatpush1.bf16.msra.mxu0 0
      %1650 = vmatprep.mubr.bf16.mxu0 0
      %1651 = vmatmul.mubr.bf16.gmra.mrb[0].mxu0 %v1592
      %v1652 = vpop.f32.mrb[0].mxu0
      %v1653 = vadd.f32 0.0, %v1652
      %v1654 = vpop.f32.mrb[0].mxu0
      %v1655 = vpop.f32.mrb[0].mxu0
      %v1656 = vadd.f32 0.0, %v1655
      %v1657 = vpop.f32.mrb[0].mxu0
      %1658 = vmatprep.mubr.bf16.mxu0 0
      %1659 = vmatmul.mubr.bf16.gmra.mrb[0].mxu0 %v1595
      %v1660 = vpop.f32.mrb[0].mxu0
      %v1661 = vadd.f32 0.0, %v1660
      %v1662 = vpop.f32.mrb[0].mxu0
      %v1663 = vpop.f32.mrb[0].mxu0
      %v1664 = vadd.f32 0.0, %v1663
      %v1665 = vpop.f32.mrb[0].mxu0
      %1666 = vmatprep.mubr.bf16.mxu0 0
      %1667 = vmatmul.mubr.bf16.gmra.mrb[0].mxu0 %v1598
      %v1668 = vpop.f32.mrb[0].mxu0
      %v1669 = vadd.f32 0.0, %v1668
      %v1670 = vpop.f32.mrb[0].mxu0
      %v1671 = vpop.f32.mrb[0].mxu0
      %v1672 = vadd.f32 0.0, %v1671
      %v1673 = vpop.f32.mrb[0].mxu0
      %1674 = vmatprep.mubr.bf16.mxu0 0
      %1675 = vmatmul.mubr.bf16.gmra.mrb[0].mxu0 %v1601
      %v1676 = vpop.f32.mrb[0].mxu0
      %v1677 = vadd.f32 0.0, %v1676
      %v1678 = vpop.f32.mrb[0].mxu0
      %v1679 = vpop.f32.mrb[0].mxu0
      %v1680 = vadd.f32 0.0, %v1679
      %v1681 = vpop.f32.mrb[0].mxu0
      %1682 = vmatprep.mubr.bf16.mxu0 0
      %1683 = vmatmul.mubr.bf16.gmra.mrb[0].mxu0 %v1604
      %v1684 = vpop.f32.mrb[0].mxu0
      %v1685 = vadd.f32 0.0, %v1684
      %v1686 = vpop.f32.mrb[0].mxu0
      %v1687 = vpop.f32.mrb[0].mxu0
      %v1688 = vadd.f32 0.0, %v1687
      %v1689 = vpop.f32.mrb[0].mxu0
      %1690 = vmatprep.mubr.bf16.mxu0 0
      %1691 = vmatmul.mubr.bf16.gmra.mrb[0].mxu0 %v1607
      %v1692 = vpop.f32.mrb[0].mxu0
      %v1693 = vadd.f32 0.0, %v1692
      %v1694 = vpop.f32.mrb[0].mxu0
      %v1695 = vpop.f32.mrb[0].mxu0
      %v1696 = vadd.f32 0.0, %v1695
      %v1697 = vpop.f32.mrb[0].mxu0
      %1698 = vmatprep.mubr.bf16.mxu0 0
      %1699 = vmatmul.mubr.bf16.gmra.mrb[0].mxu0 %v1610
      %v1700 = vpop.f32.mrb[0].mxu0
      %v1701 = vadd.f32 0.0, %v1700
      %v1702 = vpop.f32.mrb[0].mxu0
      %v1703 = vpop.f32.mrb[0].mxu0
      %v1704 = vadd.f32 0.0, %v1703
      %v1705 = vpop.f32.mrb[0].mxu0
      %1706 = vmatprep.mubr.bf16.mxu0 0
      %1707 = vmatmul.mubr.bf16.gmra.mrb[0].mxu0 %v1613
      %v1708 = vpop.f32.mrb[0].mxu0
      %v1709 = vadd.f32 0.0, %v1708
      %v1710 = vpop.f32.mrb[0].mxu0
      %v1711 = vpop.f32.mrb[0].mxu0
      %v1712 = vadd.f32 0.0, %v1711
      %v1713 = vpop.f32.mrb[0].mxu0
      %1714 = vdwg.mxu0
      %v1715 = vadd.f32 %v1549, %v1653
      %v1716 = vadd.f32 %v1550, %v1656
      %v1717 = vadd.f32 %v1551, %v1661
      %v1718 = vadd.f32 %v1552, %v1664
      %v1719 = vadd.f32 %v1553, %v1669
      %v1720 = vadd.f32 %v1554, %v1672
      %v1721 = vadd.f32 %v1555, %v1677
      %v1722 = vadd.f32 %v1556, %v1680
      %v1723 = vadd.f32 %v1557, %v1685
      %v1724 = vadd.f32 %v1558, %v1688
      %v1725 = vadd.f32 %v1559, %v1693
      %v1726 = vadd.f32 %v1560, %v1696
      %v1727 = vadd.f32 %v1561, %v1701
      %v1728 = vadd.f32 %v1562, %v1704
      %v1729 = vadd.f32 %v1563, %v1709
      %v1730 = vadd.f32 %v1564, %v1712
      %1731 = vst.msk [vmem:[#allocation2] sm:$0xff] %vm197, %v1715
      %1732 = vst.msk [vmem:[#allocation2 + $0x8] sm:$0xff] %vm197, %v1716
      %1733 = vst.msk [vmem:[#allocation2 + $0x10] sm:$0xff] %vm197, %v1717
      %1734 = vst.msk [vmem:[#allocation2 + $0x18] sm:$0xff] %vm197, %v1718
      %1735 = vst.msk [vmem:[#allocation2 + $0x20] sm:$0xff] %vm197, %v1719
      %1736 = vst.msk [vmem:[#allocation2 + $0x28] sm:$0xff] %vm197, %v1720
      %1737 = vst.msk [vmem:[#allocation2 + $0x30] sm:$0xff] %vm197, %v1721
      %1738 = vst.msk [vmem:[#allocation2 + $0x38] sm:$0xff] %vm197, %v1722
      %1739 = vst.msk [vmem:[#allocation2 + $0x40] sm:$0xff] %vm197, %v1723
      %1740 = vst.msk [vmem:[#allocation2 + $0x48] sm:$0xff] %vm197, %v1724
      %1741 = vst.msk [vmem:[#allocation2 + $0x50] sm:$0xff] %vm197, %v1725
      %1742 = vst.msk [vmem:[#allocation2 + $0x58] sm:$0xff] %vm197, %v1726
      %1743 = vst.msk [vmem:[#allocation2 + $0x60] sm:$0xff] %vm197, %v1727
      %1744 = vst.msk [vmem:[#allocation2 + $0x68] sm:$0xff] %vm197, %v1728
      %1745 = vst.msk [vmem:[#allocation2 + $0x70] sm:$0xff] %vm197, %v1729
      %1746 = vst.msk [vmem:[#allocation2 + $0x78] sm:$0xff] %vm197, %v1730
      %v1755 = vrot.slane %v1119, 5
      %v1756 = vrot.slane %v1755, 4
      %v1757 = vrot.slane %v1120, 5
      %v1758 = vsel %vm860, %v1756, %v1757
      %v1759 = vrot.slane %v1757, 4
      %v1760 = vrot.slane %v1121, 5
      %v1761 = vsel %vm860, %v1759, %v1760
      %v1762 = vrot.slane %v1122, 5
      %v1763 = vrot.slane %v1762, 4
      %v1764 = vrot.slane %v1123, 5
      %v1765 = vsel %vm860, %v1763, %v1764
      %v1766 = vrot.slane %v1764, 4
      %v1767 = vrot.slane %v1124, 5
      %v1768 = vsel %vm860, %v1766, %v1767
      %v1769 = vrot.slane %v1125, 5
      %v1770 = vrot.slane %v1769, 4
      %v1771 = vrot.slane %v1126, 5
      %v1772 = vsel %vm860, %v1770, %v1771
      %v1773 = vrot.slane %v1771, 4
      %v1774 = vrot.slane %v1127, 5
      %v1775 = vsel %vm860, %v1773, %v1774
      %v1776 = vrot.slane %v1128, 5
      %v1777 = vrot.slane %v1776, 4
      %v1778 = vrot.slane %v1129, 5
      %v1779 = vsel %vm860, %v1777, %v1778
      %v1780 = vrot.slane %v1778, 4
      %v1781 = vrot.slane %v1130, 5
      %v1782 = vsel %vm860, %v1780, %v1781
      %v1783 = vrot.slane %v1131, 5
      %v1784 = vrot.slane %v1783, 4
      %v1785 = vrot.slane %v1132, 5
      %v1786 = vsel %vm860, %v1784, %v1785
      %v1787 = vrot.slane %v1785, 4
      %v1788 = vrot.slane %v1133, 5
      %v1789 = vsel %vm860, %v1787, %v1788
      %v1790 = vrot.slane %v1134, 5
      %v1791 = vrot.slane %v1790, 4
      %v1792 = vrot.slane %v1135, 5
      %v1793 = vsel %vm860, %v1791, %v1792
      %v1794 = vrot.slane %v1792, 4
      %v1795 = vrot.slane %v1136, 5
      %v1796 = vsel %vm860, %v1794, %v1795
      %v1797 = vrot.slane %v1137, 5
      %v1798 = vrot.slane %v1797, 4
      %v1799 = vrot.slane %v1138, 5
      %v1800 = vsel %vm860, %v1798, %v1799
      %v1801 = vrot.slane %v1799, 4
      %v1802 = vrot.slane %v1139, 5
      %v1803 = vsel %vm860, %v1801, %v1802
      %v1804 = vrot.slane %v1140, 5
      %v1805 = vrot.slane %v1804, 4
      %v1806 = vrot.slane %v1141, 5
      %v1807 = vsel %vm860, %v1805, %v1806
      %v1808 = vrot.slane %v1806, 4
      %v1809 = vrot.slane %v1142, 5
      %v1810 = vsel %vm860, %v1808, %v1809
      %v1811 = vld [vmem:[#allocation2] sm:$0xff]
      %v1812 = vld [vmem:[#allocation2 + $0x8] sm:$0xff]
      %v1813 = vld [vmem:[#allocation2 + $0x10] sm:$0xff]
      %v1814 = vld [vmem:[#allocation2 + $0x18] sm:$0xff]
      %v1815 = vld [vmem:[#allocation2 + $0x20] sm:$0xff]
      %v1816 = vld [vmem:[#allocation2 + $0x28] sm:$0xff]
      %v1817 = vld [vmem:[#allocation2 + $0x30] sm:$0xff]
      %v1818 = vld [vmem:[#allocation2 + $0x38] sm:$0xff]
      %v1819 = vld [vmem:[#allocation2 + $0x40] sm:$0xff]
      %v1820 = vld [vmem:[#allocation2 + $0x48] sm:$0xff]
      %v1821 = vld [vmem:[#allocation2 + $0x50] sm:$0xff]
      %v1822 = vld [vmem:[#allocation2 + $0x58] sm:$0xff]
      %v1823 = vld [vmem:[#allocation2 + $0x60] sm:$0xff]
      %v1824 = vld [vmem:[#allocation2 + $0x68] sm:$0xff]
      %v1825 = vld [vmem:[#allocation2 + $0x70] sm:$0xff]
      %v1826 = vld [vmem:[#allocation2 + $0x78] sm:$0xff]
      %s1827 = scalar_lea.vmem %s1, 20
      %v1828 = vld [vmem:[%s1827] sm:$0xf]
      %v1829 = vunpack.c.l.b16 %v1758
      %v1830 = vunpack.c.l.b16 %v1761
      %v1831 = vunpack.c.l.b16 %v1765
      %v1832 = vunpack.c.l.b16 %v1768
      %v1833 = vunpack.c.l.b16 %v1772
      %v1834 = vunpack.c.l.b16 %v1775
      %v1835 = vunpack.c.l.b16 %v1779
      %v1836 = vunpack.c.l.b16 %v1782
      %v1837 = vunpack.c.l.b16 %v1786
      %v1838 = vunpack.c.l.b16 %v1789
      %v1839 = vunpack.c.l.b16 %v1793
      %v1840 = vunpack.c.l.b16 %v1796
      %v1841 = vunpack.c.l.b16 %v1800
      %v1842 = vunpack.c.l.b16 %v1803
      %v1843 = vunpack.c.l.b16 %v1807
      %v1844 = vunpack.c.l.b16 %v1810
      %v1845 = vpack.c.b16 %v1830, %v1829
      %v1846 = vpack.c.b16 %v1832, %v1831
      %v1847 = vpack.c.b16 %v1834, %v1833
      %v1848 = vpack.c.b16 %v1836, %v1835
      %v1849 = vpack.c.b16 %v1838, %v1837
      %v1850 = vpack.c.b16 %v1840, %v1839
      %v1851 = vpack.c.b16 %v1842, %v1841
      %v1852 = vpack.c.b16 %v1844, %v1843
      %v1854 = vsel %vm299, %v1845, 0
      %v1857 = vsel %vm299, %v1846, 0
      %v1860 = vsel %vm299, %v1847, 0
      %v1863 = vsel %vm299, %v1848, 0
      %v1866 = vsel %vm299, %v1849, 0
      %v1869 = vsel %vm299, %v1850, 0
      %v1872 = vsel %vm299, %v1851, 0
      %v1875 = vsel %vm299, %v1852, 0
      %v1878 = vsel %vm324, %v1828, 0
      %1880 = vmatprep.subr.bf16.mxu0 0
      %1881 = vmatpush1.bf16.msra.mxu0 %v1878
      %1882 = vmatprep.subr.bf16.mxu0 0
      %1883 = vmatpush1.bf16.msra.mxu0 0
      %1884 = vmatprep.subr.bf16.mxu0 0
      %1885 = vmatpush1.bf16.msra.mxu0 0
      %1886 = vmatprep.subr.bf16.mxu0 0
      %1887 = vmatpush1.bf16.msra.mxu0 0
      %1888 = vmatprep.subr.bf16.mxu0 0
      %1889 = vmatpush1.bf16.msra.mxu0 0
      %1890 = vmatprep.subr.bf16.mxu0 0
      %1891 = vmatpush1.bf16.msra.mxu0 0
      %1892 = vmatprep.subr.bf16.mxu0 0
      %1893 = vmatpush1.bf16.msra.mxu0 0
      %1894 = vmatprep.subr.bf16.mxu0 0
      %1895 = vmatpush1.bf16.msra.mxu0 0
      %1896 = vmatprep.subr.bf16.mxu0 0
      %1897 = vmatpush1.bf16.msra.mxu0 0
      %1898 = vmatprep.subr.bf16.mxu0 0
      %1899 = vmatpush1.bf16.msra.mxu0 0
      %1900 = vmatprep.subr.bf16.mxu0 0
      %1901 = vmatpush1.bf16.msra.mxu0 0
      %1902 = vmatprep.subr.bf16.mxu0 0
      %1903 = vmatpush1.bf16.msra.mxu0 0
      %1904 = vmatprep.subr.bf16.mxu0 0
      %1905 = vmatpush1.bf16.msra.mxu0 0
      %1906 = vmatprep.subr.bf16.mxu0 0
      %1907 = vmatpush1.bf16.msra.mxu0 0
      %1908 = vmatprep.subr.bf16.mxu0 0
      %1909 = vmatpush1.bf16.msra.mxu0 0
      %1910 = vmatprep.subr.bf16.mxu0 0
      %1911 = vmatpush1.bf16.msra.mxu0 0
      %1912 = vmatprep.mubr.bf16.mxu0 0
      %1913 = vmatmul.mubr.bf16.gmra.mrb[0].mxu0 %v1854
      %v1914 = vpop.f32.mrb[0].mxu0
      %v1915 = vadd.f32 0.0, %v1914
      %v1916 = vpop.f32.mrb[0].mxu0
      %v1917 = vpop.f32.mrb[0].mxu0
      %v1918 = vadd.f32 0.0, %v1917
      %v1919 = vpop.f32.mrb[0].mxu0
      %1920 = vmatprep.mubr.bf16.mxu0 0
      %1921 = vmatmul.mubr.bf16.gmra.mrb[0].mxu0 %v1857
      %v1922 = vpop.f32.mrb[0].mxu0
      %v1923 = vadd.f32 0.0, %v1922
      %v1924 = vpop.f32.mrb[0].mxu0
      %v1925 = vpop.f32.mrb[0].mxu0
      %v1926 = vadd.f32 0.0, %v1925
      %v1927 = vpop.f32.mrb[0].mxu0
      %1928 = vmatprep.mubr.bf16.mxu0 0
      %1929 = vmatmul.mubr.bf16.gmra.mrb[0].mxu0 %v1860
      %v1930 = vpop.f32.mrb[0].mxu0
      %v1931 = vadd.f32 0.0, %v1930
      %v1932 = vpop.f32.mrb[0].mxu0
      %v1933 = vpop.f32.mrb[0].mxu0
      %v1934 = vadd.f32 0.0, %v1933
      %v1935 = vpop.f32.mrb[0].mxu0
      %1936 = vmatprep.mubr.bf16.mxu0 0
      %1937 = vmatmul.mubr.bf16.gmra.mrb[0].mxu0 %v1863
      %v1938 = vpop.f32.mrb[0].mxu0
      %v1939 = vadd.f32 0.0, %v1938
      %v1940 = vpop.f32.mrb[0].mxu0
      %v1941 = vpop.f32.mrb[0].mxu0
      %v1942 = vadd.f32 0.0, %v1941
      %v1943 = vpop.f32.mrb[0].mxu0
      %1944 = vmatprep.mubr.bf16.mxu0 0
      %1945 = vmatmul.mubr.bf16.gmra.mrb[0].mxu0 %v1866
      %v1946 = vpop.f32.mrb[0].mxu0
      %v1947 = vadd.f32 0.0, %v1946
      %v1948 = vpop.f32.mrb[0].mxu0
      %v1949 = vpop.f32.mrb[0].mxu0
      %v1950 = vadd.f32 0.0, %v1949
      %v1951 = vpop.f32.mrb[0].mxu0
      %1952 = vmatprep.mubr.bf16.mxu0 0
      %1953 = vmatmul.mubr.bf16.gmra.mrb[0].mxu0 %v1869
      %v1954 = vpop.f32.mrb[0].mxu0
      %v1955 = vadd.f32 0.0, %v1954
      %v1956 = vpop.f32.mrb[0].mxu0
      %v1957 = vpop.f32.mrb[0].mxu0
      %v1958 = vadd.f32 0.0, %v1957
      %v1959 = vpop.f32.mrb[0].mxu0
      %1960 = vmatprep.mubr.bf16.mxu0 0
      %1961 = vmatmul.mubr.bf16.gmra.mrb[0].mxu0 %v1872
      %v1962 = vpop.f32.mrb[0].mxu0
      %v1963 = vadd.f32 0.0, %v1962
      %v1964 = vpop.f32.mrb[0].mxu0
      %v1965 = vpop.f32.mrb[0].mxu0
      %v1966 = vadd.f32 0.0, %v1965
      %v1967 = vpop.f32.mrb[0].mxu0
      %1968 = vmatprep.mubr.bf16.mxu0 0
      %1969 = vmatmul.mubr.bf16.gmra.mrb[0].mxu0 %v1875
      %v1970 = vpop.f32.mrb[0].mxu0
      %v1971 = vadd.f32 0.0, %v1970
      %v1972 = vpop.f32.mrb[0].mxu0
      %v1973 = vpop.f32.mrb[0].mxu0
      %v1974 = vadd.f32 0.0, %v1973
      %v1975 = vpop.f32.mrb[0].mxu0
      %1976 = vdwg.mxu0
      %v1977 = vadd.f32 %v1811, %v1915
      %v1978 = vadd.f32 %v1812, %v1918
      %v1979 = vadd.f32 %v1813, %v1923
      %v1980 = vadd.f32 %v1814, %v1926
      %v1981 = vadd.f32 %v1815, %v1931
      %v1982 = vadd.f32 %v1816, %v1934
      %v1983 = vadd.f32 %v1817, %v1939
      %v1984 = vadd.f32 %v1818, %v1942
      %v1985 = vadd.f32 %v1819, %v1947
      %v1986 = vadd.f32 %v1820, %v1950
      %v1987 = vadd.f32 %v1821, %v1955
      %v1988 = vadd.f32 %v1822, %v1958
      %v1989 = vadd.f32 %v1823, %v1963
      %v1990 = vadd.f32 %v1824, %v1966
      %v1991 = vadd.f32 %v1825, %v1971
      %v1992 = vadd.f32 %v1826, %v1974
      %1993 = vst.msk [vmem:[#allocation2] sm:$0xff] %vm197, %v1977
      %1994 = vst.msk [vmem:[#allocation2 + $0x8] sm:$0xff] %vm197, %v1978
      %1995 = vst.msk [vmem:[#allocation2 + $0x10] sm:$0xff] %vm197, %v1979
      %1996 = vst.msk [vmem:[#allocation2 + $0x18] sm:$0xff] %vm197, %v1980
      %1997 = vst.msk [vmem:[#allocation2 + $0x20] sm:$0xff] %vm197, %v1981
      %1998 = vst.msk [vmem:[#allocation2 + $0x28] sm:$0xff] %vm197, %v1982
      %1999 = vst.msk [vmem:[#allocation2 + $0x30] sm:$0xff] %vm197, %v1983
      %2000 = vst.msk [vmem:[#allocation2 + $0x38] sm:$0xff] %vm197, %v1984
      %2001 = vst.msk [vmem:[#allocation2 + $0x40] sm:$0xff] %vm197, %v1985
      %2002 = vst.msk [vmem:[#allocation2 + $0x48] sm:$0xff] %vm197, %v1986
      %2003 = vst.msk [vmem:[#allocation2 + $0x50] sm:$0xff] %vm197, %v1987
      %2004 = vst.msk [vmem:[#allocation2 + $0x58] sm:$0xff] %vm197, %v1988
      %2005 = vst.msk [vmem:[#allocation2 + $0x60] sm:$0xff] %vm197, %v1989
      %2006 = vst.msk [vmem:[#allocation2 + $0x68] sm:$0xff] %vm197, %v1990
      %2007 = vst.msk [vmem:[#allocation2 + $0x70] sm:$0xff] %vm197, %v1991
      %2008 = vst.msk [vmem:[#allocation2 + $0x78] sm:$0xff] %vm197, %v1992
      %s2009 = sadd.s32 %s214, 2
      %s2010 = smul.u32 %s2009, 3
      %s2011 = smul.addr %s2010, 4
      %s2012 = scalar_lea.vmem %s184, %s2011
      %v2013 = vld [vmem:[%s2012] sm:$0xf]
      %v2014 = vld [vmem:[%s2012 + $0x4] sm:$0xf]
      %v2015 = vld [vmem:[%s2012 + $0x8] sm:$0x1]
      %v2016 = vld [vmem:[%s2012 + $0xc] sm:$0xf]
      %v2017 = vld [vmem:[%s2012 + $0x10] sm:$0xf]
      %v2018 = vld [vmem:[%s2012 + $0x14] sm:$0x1]
      %v2019 = vld [vmem:[%s2012 + $0x18] sm:$0xf]
      %v2020 = vld [vmem:[%s2012 + $0x1c] sm:$0xf]
      %v2021 = vld [vmem:[%s2012 + $0x20] sm:$0x1]
      %v2022 = vld [vmem:[%s2012 + $0x24] sm:$0xf]
      %v2023 = vld [vmem:[%s2012 + $0x28] sm:$0xf]
      %v2024 = vld [vmem:[%s2012 + $0x2c] sm:$0x1]
      %v2025 = vld [vmem:[%s2012 + $0x30] sm:$0xf]
      %v2026 = vld [vmem:[%s2012 + $0x34] sm:$0xf]
      %v2027 = vld [vmem:[%s2012 + $0x38] sm:$0x1]
      %v2028 = vld [vmem:[%s2012 + $0x3c] sm:$0xf]
      %v2029 = vld [vmem:[%s2012 + $0x40] sm:$0xf]
      %v2030 = vld [vmem:[%s2012 + $0x44] sm:$0x1]
      %v2031 = vld [vmem:[%s2012 + $0x48] sm:$0xf]
      %v2032 = vld [vmem:[%s2012 + $0x4c] sm:$0xf]
      %v2033 = vld [vmem:[%s2012 + $0x50] sm:$0x1]
      %v2034 = vld [vmem:[%s2012 + $0x54] sm:$0xf]
      %v2035 = vld [vmem:[%s2012 + $0x58] sm:$0xf]
      %v2036 = vld [vmem:[%s2012 + $0x5c] sm:$0x1]
      %v2037 = vld [vmem:[#allocation2] sm:$0xff]
      %v2038 = vld [vmem:[#allocation2 + $0x8] sm:$0xff]
      %v2039 = vld [vmem:[#allocation2 + $0x10] sm:$0xff]
      %v2040 = vld [vmem:[#allocation2 + $0x18] sm:$0xff]
      %v2041 = vld [vmem:[#allocation2 + $0x20] sm:$0xff]
      %v2042 = vld [vmem:[#allocation2 + $0x28] sm:$0xff]
      %v2043 = vld [vmem:[#allocation2 + $0x30] sm:$0xff]
      %v2044 = vld [vmem:[#allocation2 + $0x38] sm:$0xff]
      %v2045 = vld [vmem:[#allocation2 + $0x40] sm:$0xff]
      %v2046 = vld [vmem:[#allocation2 + $0x48] sm:$0xff]
      %v2047 = vld [vmem:[#allocation2 + $0x50] sm:$0xff]
      %v2048 = vld [vmem:[#allocation2 + $0x58] sm:$0xff]
      %v2049 = vld [vmem:[#allocation2 + $0x60] sm:$0xff]
      %v2050 = vld [vmem:[#allocation2 + $0x68] sm:$0xff]
      %v2051 = vld [vmem:[#allocation2 + $0x70] sm:$0xff]
      %v2052 = vld [vmem:[#allocation2 + $0x78] sm:$0xff]
      %s2053 = scalar_lea.vmem %s1, 24
      %v2054 = vld [vmem:[%s2053] sm:$0xf]
      %v2071 = vunpack.c.l.b16 %v2013
      %v2072 = vunpack.c.l.b16 %v2014
      %v2073 = vunpack.c.l.b16 %v2016
      %v2074 = vunpack.c.l.b16 %v2017
      %v2075 = vunpack.c.l.b16 %v2019
      %v2076 = vunpack.c.l.b16 %v2020
      %v2077 = vunpack.c.l.b16 %v2022
      %v2078 = vunpack.c.l.b16 %v2023
      %v2079 = vunpack.c.l.b16 %v2025
      %v2080 = vunpack.c.l.b16 %v2026
      %v2081 = vunpack.c.l.b16 %v2028
      %v2082 = vunpack.c.l.b16 %v2029
      %v2083 = vunpack.c.l.b16 %v2031
      %v2084 = vunpack.c.l.b16 %v2032
      %v2085 = vunpack.c.l.b16 %v2034
      %v2086 = vunpack.c.l.b16 %v2035
      %v2087 = vpack.c.b16 %v2072, %v2071
      %v2088 = vpack.c.b16 %v2074, %v2073
      %v2089 = vpack.c.b16 %v2076, %v2075
      %v2090 = vpack.c.b16 %v2078, %v2077
      %v2091 = vpack.c.b16 %v2080, %v2079
      %v2092 = vpack.c.b16 %v2082, %v2081
      %v2093 = vpack.c.b16 %v2084, %v2083
      %v2094 = vpack.c.b16 %v2086, %v2085
      %v2096 = vsel %vm299, %v2087, 0
      %v2099 = vsel %vm299, %v2088, 0
      %v2102 = vsel %vm299, %v2089, 0
      %v2105 = vsel %vm299, %v2090, 0
      %v2108 = vsel %vm299, %v2091, 0
      %v2111 = vsel %vm299, %v2092, 0
      %v2114 = vsel %vm299, %v2093, 0
      %v2117 = vsel %vm299, %v2094, 0
      %v2120 = vsel %vm324, %v2054, 0
      %2122 = vmatprep.subr.bf16.mxu0 0
      %2123 = vmatpush1.bf16.msra.mxu0 %v2120
      %2124 = vmatprep.subr.bf16.mxu0 0
      %2125 = vmatpush1.bf16.msra.mxu0 0
      %2126 = vmatprep.subr.bf16.mxu0 0
      %2127 = vmatpush1.bf16.msra.mxu0 0
      %2128 = vmatprep.subr.bf16.mxu0 0
      %2129 = vmatpush1.bf16.msra.mxu0 0
      %2130 = vmatprep.subr.bf16.mxu0 0
      %2131 = vmatpush1.bf16.msra.mxu0 0
      %2132 = vmatprep.subr.bf16.mxu0 0
      %2133 = vmatpush1.bf16.msra.mxu0 0
      %2134 = vmatprep.subr.bf16.mxu0 0
      %2135 = vmatpush1.bf16.msra.mxu0 0
      %2136 = vmatprep.subr.bf16.mxu0 0
      %2137 = vmatpush1.bf16.msra.mxu0 0
      %2138 = vmatprep.subr.bf16.mxu0 0
      %2139 = vmatpush1.bf16.msra.mxu0 0
      %2140 = vmatprep.subr.bf16.mxu0 0
      %2141 = vmatpush1.bf16.msra.mxu0 0
      %2142 = vmatprep.subr.bf16.mxu0 0
      %2143 = vmatpush1.bf16.msra.mxu0 0
      %2144 = vmatprep.subr.bf16.mxu0 0
      %2145 = vmatpush1.bf16.msra.mxu0 0
      %2146 = vmatprep.subr.bf16.mxu0 0
      %2147 = vmatpush1.bf16.msra.mxu0 0
      %2148 = vmatprep.subr.bf16.mxu0 0
      %2149 = vmatpush1.bf16.msra.mxu0 0
      %2150 = vmatprep.subr.bf16.mxu0 0
      %2151 = vmatpush1.bf16.msra.mxu0 0
      %2152 = vmatprep.subr.bf16.mxu0 0
      %2153 = vmatpush1.bf16.msra.mxu0 0
      %2154 = vmatprep.mubr.bf16.mxu0 0
      %2155 = vmatmul.mubr.bf16.gmra.mrb[0].mxu0 %v2096
      %v2156 = vpop.f32.mrb[0].mxu0
      %v2157 = vadd.f32 0.0, %v2156
      %v2158 = vpop.f32.mrb[0].mxu0
      %v2159 = vpop.f32.mrb[0].mxu0
      %v2160 = vadd.f32 0.0, %v2159
      %v2161 = vpop.f32.mrb[0].mxu0
      %2162 = vmatprep.mubr.bf16.mxu0 0
      %2163 = vmatmul.mubr.bf16.gmra.mrb[0].mxu0 %v2099
      %v2164 = vpop.f32.mrb[0].mxu0
      %v2165 = vadd.f32 0.0, %v2164
      %v2166 = vpop.f32.mrb[0].mxu0
      %v2167 = vpop.f32.mrb[0].mxu0
      %v2168 = vadd.f32 0.0, %v2167
      %v2169 = vpop.f32.mrb[0].mxu0
      %2170 = vmatprep.mubr.bf16.mxu0 0
      %2171 = vmatmul.mubr.bf16.gmra.mrb[0].mxu0 %v2102
      %v2172 = vpop.f32.mrb[0].mxu0
      %v2173 = vadd.f32 0.0, %v2172
      %v2174 = vpop.f32.mrb[0].mxu0
      %v2175 = vpop.f32.mrb[0].mxu0
      %v2176 = vadd.f32 0.0, %v2175
      %v2177 = vpop.f32.mrb[0].mxu0
      %2178 = vmatprep.mubr.bf16.mxu0 0
      %2179 = vmatmul.mubr.bf16.gmra.mrb[0].mxu0 %v2105
      %v2180 = vpop.f32.mrb[0].mxu0
      %v2181 = vadd.f32 0.0, %v2180
      %v2182 = vpop.f32.mrb[0].mxu0
      %v2183 = vpop.f32.mrb[0].mxu0
      %v2184 = vadd.f32 0.0, %v2183
      %v2185 = vpop.f32.mrb[0].mxu0
      %2186 = vmatprep.mubr.bf16.mxu0 0
      %2187 = vmatmul.mubr.bf16.gmra.mrb[0].mxu0 %v2108
      %v2188 = vpop.f32.mrb[0].mxu0
      %v2189 = vadd.f32 0.0, %v2188
      %v2190 = vpop.f32.mrb[0].mxu0
      %v2191 = vpop.f32.mrb[0].mxu0
      %v2192 = vadd.f32 0.0, %v2191
      %v2193 = vpop.f32.mrb[0].mxu0
      %2194 = vmatprep.mubr.bf16.mxu0 0
      %2195 = vmatmul.mubr.bf16.gmra.mrb[0].mxu0 %v2111
      %v2196 = vpop.f32.mrb[0].mxu0
      %v2197 = vadd.f32 0.0, %v2196
      %v2198 = vpop.f32.mrb[0].mxu0
      %v2199 = vpop.f32.mrb[0].mxu0
      %v2200 = vadd.f32 0.0, %v2199
      %v2201 = vpop.f32.mrb[0].mxu0
      %2202 = vmatprep.mubr.bf16.mxu0 0
      %2203 = vmatmul.mubr.bf16.gmra.mrb[0].mxu0 %v2114
      %v2204 = vpop.f32.mrb[0].mxu0
      %v2205 = vadd.f32 0.0, %v2204
      %v2206 = vpop.f32.mrb[0].mxu0
      %v2207 = vpop.f32.mrb[0].mxu0
      %v2208 = vadd.f32 0.0, %v2207
      %v2209 = vpop.f32.mrb[0].mxu0
      %2210 = vmatprep.mubr.bf16.mxu0 0
      %2211 = vmatmul.mubr.bf16.gmra.mrb[0].mxu0 %v2117
      %v2212 = vpop.f32.mrb[0].mxu0
      %v2213 = vadd.f32 0.0, %v2212
      %v2214 = vpop.f32.mrb[0].mxu0
      %v2215 = vpop.f32.mrb[0].mxu0
      %v2216 = vadd.f32 0.0, %v2215
      %v2217 = vpop.f32.mrb[0].mxu0
      %2218 = vdwg.mxu0
      %v2219 = vadd.f32 %v2037, %v2157
      %v2220 = vadd.f32 %v2038, %v2160
      %v2221 = vadd.f32 %v2039, %v2165
      %v2222 = vadd.f32 %v2040, %v2168
      %v2223 = vadd.f32 %v2041, %v2173
      %v2224 = vadd.f32 %v2042, %v2176
      %v2225 = vadd.f32 %v2043, %v2181
      %v2226 = vadd.f32 %v2044, %v2184
      %v2227 = vadd.f32 %v2045, %v2189
      %v2228 = vadd.f32 %v2046, %v2192
      %v2229 = vadd.f32 %v2047, %v2197
      %v2230 = vadd.f32 %v2048, %v2200
      %v2231 = vadd.f32 %v2049, %v2205
      %v2232 = vadd.f32 %v2050, %v2208
      %v2233 = vadd.f32 %v2051, %v2213
      %v2234 = vadd.f32 %v2052, %v2216
      %2235 = vst.msk [vmem:[#allocation2] sm:$0xff] %vm197, %v2219
      %2236 = vst.msk [vmem:[#allocation2 + $0x8] sm:$0xff] %vm197, %v2220
      %2237 = vst.msk [vmem:[#allocation2 + $0x10] sm:$0xff] %vm197, %v2221
      %2238 = vst.msk [vmem:[#allocation2 + $0x18] sm:$0xff] %vm197, %v2222
      %2239 = vst.msk [vmem:[#allocation2 + $0x20] sm:$0xff] %vm197, %v2223
      %2240 = vst.msk [vmem:[#allocation2 + $0x28] sm:$0xff] %vm197, %v2224
      %2241 = vst.msk [vmem:[#allocation2 + $0x30] sm:$0xff] %vm197, %v2225
      %2242 = vst.msk [vmem:[#allocation2 + $0x38] sm:$0xff] %vm197, %v2226
      %2243 = vst.msk [vmem:[#allocation2 + $0x40] sm:$0xff] %vm197, %v2227
      %2244 = vst.msk [vmem:[#allocation2 + $0x48] sm:$0xff] %vm197, %v2228
      %2245 = vst.msk [vmem:[#allocation2 + $0x50] sm:$0xff] %vm197, %v2229
      %2246 = vst.msk [vmem:[#allocation2 + $0x58] sm:$0xff] %vm197, %v2230
      %2247 = vst.msk [vmem:[#allocation2 + $0x60] sm:$0xff] %vm197, %v2231
      %2248 = vst.msk [vmem:[#allocation2 + $0x68] sm:$0xff] %vm197, %v2232
      %2249 = vst.msk [vmem:[#allocation2 + $0x70] sm:$0xff] %vm197, %v2233
      %2250 = vst.msk [vmem:[#allocation2 + $0x78] sm:$0xff] %vm197, %v2234
      %v2252 = vshrl.u32 %v2013, 16
      %v2254 = vrot.slane %v2252, 4
      %v2255 = vshll.u32 %v2013, 16
      %v2257 = vrot.slane %v2255, 5
      %v2258 = vor.u32 %v2254, %v2257
      %v2259 = vrot.slane %v2258, 4
      %v2261 = vshll.u32 %v2014, 16
      %v2263 = vrot.slane %v2261, 5
      %v2264 = vsel %vm459, %v2259, %v2263
      %v2265 = vshrl.u32 %v2014, 16
      %v2267 = vrot.slane %v2265, 4
      %v2268 = vor.u32 %v2267, %v2263
      %v2269 = vrot.slane %v2268, 4
      %v2271 = vshll.u32 %v2015, 16
      %v2273 = vrot.slane %v2271, 5
      %v2274 = vsel %vm459, %v2269, %v2273
      %v2276 = vshrl.u32 %v2016, 16
      %v2278 = vrot.slane %v2276, 4
      %v2279 = vshll.u32 %v2016, 16
      %v2281 = vrot.slane %v2279, 5
      %v2282 = vor.u32 %v2278, %v2281
      %v2283 = vrot.slane %v2282, 4
      %v2285 = vshll.u32 %v2017, 16
      %v2287 = vrot.slane %v2285, 5
      %v2288 = vsel %vm459, %v2283, %v2287
      %v2289 = vshrl.u32 %v2017, 16
      %v2291 = vrot.slane %v2289, 4
      %v2292 = vor.u32 %v2291, %v2287
      %v2293 = vrot.slane %v2292, 4
      %v2295 = vshll.u32 %v2018, 16
      %v2297 = vrot.slane %v2295, 5
      %v2298 = vsel %vm459, %v2293, %v2297
      %v2300 = vshrl.u32 %v2019, 16
      %v2302 = vrot.slane %v2300, 4
      %v2303 = vshll.u32 %v2019, 16
      %v2305 = vrot.slane %v2303, 5
      %v2306 = vor.u32 %v2302, %v2305
      %v2307 = vrot.slane %v2306, 4
      %v2309 = vshll.u32 %v2020, 16
      %v2311 = vrot.slane %v2309, 5
      %v2312 = vsel %vm459, %v2307, %v2311
      %v2313 = vshrl.u32 %v2020, 16
      %v2315 = vrot.slane %v2313, 4
      %v2316 = vor.u32 %v2315, %v2311
      %v2317 = vrot.slane %v2316, 4
      %v2319 = vshll.u32 %v2021, 16
      %v2321 = vrot.slane %v2319, 5
      %v2322 = vsel %vm459, %v2317, %v2321
      %v2324 = vshrl.u32 %v2022, 16
      %v2326 = vrot.slane %v2324, 4
      %v2327 = vshll.u32 %v2022, 16
      %v2329 = vrot.slane %v2327, 5
      %v2330 = vor.u32 %v2326, %v2329
      %v2331 = vrot.slane %v2330, 4
      %v2333 = vshll.u32 %v2023, 16
      %v2335 = vrot.slane %v2333, 5
      %v2336 = vsel %vm459, %v2331, %v2335
      %v2337 = vshrl.u32 %v2023, 16
      %v2339 = vrot.slane %v2337, 4
      %v2340 = vor.u32 %v2339, %v2335
      %v2341 = vrot.slane %v2340, 4
      %v2343 = vshll.u32 %v2024, 16
      %v2345 = vrot.slane %v2343, 5
      %v2346 = vsel %vm459, %v2341, %v2345
      %v2348 = vshrl.u32 %v2025, 16
      %v2350 = vrot.slane %v2348, 4
      %v2351 = vshll.u32 %v2025, 16
      %v2353 = vrot.slane %v2351, 5
      %v2354 = vor.u32 %v2350, %v2353
      %v2355 = vrot.slane %v2354, 4
      %v2357 = vshll.u32 %v2026, 16
      %v2359 = vrot.slane %v2357, 5
      %v2360 = vsel %vm459, %v2355, %v2359
      %v2361 = vshrl.u32 %v2026, 16
      %v2363 = vrot.slane %v2361, 4
      %v2364 = vor.u32 %v2363, %v2359
      %v2365 = vrot.slane %v2364, 4
      %v2367 = vshll.u32 %v2027, 16
      %v2369 = vrot.slane %v2367, 5
      %v2370 = vsel %vm459, %v2365, %v2369
      %v2372 = vshrl.u32 %v2028, 16
      %v2374 = vrot.slane %v2372, 4
      %v2375 = vshll.u32 %v2028, 16
      %v2377 = vrot.slane %v2375, 5
      %v2378 = vor.u32 %v2374, %v2377
      %v2379 = vrot.slane %v2378, 4
      %v2381 = vshll.u32 %v2029, 16
      %v2383 = vrot.slane %v2381, 5
      %v2384 = vsel %vm459, %v2379, %v2383
      %v2385 = vshrl.u32 %v2029, 16
      %v2387 = vrot.slane %v2385, 4
      %v2388 = vor.u32 %v2387, %v2383
      %v2389 = vrot.slane %v2388, 4
      %v2391 = vshll.u32 %v2030, 16
      %v2393 = vrot.slane %v2391, 5
      %v2394 = vsel %vm459, %v2389, %v2393
      %v2396 = vshrl.u32 %v2031, 16
      %v2398 = vrot.slane %v2396, 4
      %v2399 = vshll.u32 %v2031, 16
      %v2401 = vrot.slane %v2399, 5
      %v2402 = vor.u32 %v2398, %v2401
      %v2403 = vrot.slane %v2402, 4
      %v2405 = vshll.u32 %v2032, 16
      %v2407 = vrot.slane %v2405, 5
      %v2408 = vsel %vm459, %v2403, %v2407
      %v2409 = vshrl.u32 %v2032, 16
      %v2411 = vrot.slane %v2409, 4
      %v2412 = vor.u32 %v2411, %v2407
      %v2413 = vrot.slane %v2412, 4
      %v2415 = vshll.u32 %v2033, 16
      %v2417 = vrot.slane %v2415, 5
      %v2418 = vsel %vm459, %v2413, %v2417
      %v2420 = vshrl.u32 %v2034, 16
      %v2422 = vrot.slane %v2420, 4
      %v2423 = vshll.u32 %v2034, 16
      %v2425 = vrot.slane %v2423, 5
      %v2426 = vor.u32 %v2422, %v2425
      %v2427 = vrot.slane %v2426, 4
      %v2429 = vshll.u32 %v2035, 16
      %v2431 = vrot.slane %v2429, 5
      %v2432 = vsel %vm459, %v2427, %v2431
      %v2433 = vshrl.u32 %v2035, 16
      %v2435 = vrot.slane %v2433, 4
      %v2436 = vor.u32 %v2435, %v2431
      %v2437 = vrot.slane %v2436, 4
      %v2439 = vshll.u32 %v2036, 16
      %v2441 = vrot.slane %v2439, 5
      %v2442 = vsel %vm459, %v2437, %v2441
      %v2443 = vld [vmem:[#allocation2] sm:$0xff]
      %v2444 = vld [vmem:[#allocation2 + $0x8] sm:$0xff]
      %v2445 = vld [vmem:[#allocation2 + $0x10] sm:$0xff]
      %v2446 = vld [vmem:[#allocation2 + $0x18] sm:$0xff]
      %v2447 = vld [vmem:[#allocation2 + $0x20] sm:$0xff]
      %v2448 = vld [vmem:[#allocation2 + $0x28] sm:$0xff]
      %v2449 = vld [vmem:[#allocation2 + $0x30] sm:$0xff]
      %v2450 = vld [vmem:[#allocation2 + $0x38] sm:$0xff]
      %v2451 = vld [vmem:[#allocation2 + $0x40] sm:$0xff]
      %v2452 = vld [vmem:[#allocation2 + $0x48] sm:$0xff]
      %v2453 = vld [vmem:[#allocation2 + $0x50] sm:$0xff]
      %v2454 = vld [vmem:[#allocation2 + $0x58] sm:$0xff]
      %v2455 = vld [vmem:[#allocation2 + $0x60] sm:$0xff]
      %v2456 = vld [vmem:[#allocation2 + $0x68] sm:$0xff]
      %v2457 = vld [vmem:[#allocation2 + $0x70] sm:$0xff]
      %v2458 = vld [vmem:[#allocation2 + $0x78] sm:$0xff]
      %s2459 = scalar_lea.vmem %s1, 28
      %v2460 = vld [vmem:[%s2459] sm:$0xf]
      %v2461 = vunpack.c.l.b16 %v2264
      %v2462 = vunpack.c.l.b16 %v2274
      %v2463 = vunpack.c.l.b16 %v2288
      %v2464 = vunpack.c.l.b16 %v2298
      %v2465 = vunpack.c.l.b16 %v2312
      %v2466 = vunpack.c.l.b16 %v2322
      %v2467 = vunpack.c.l.b16 %v2336
      %v2468 = vunpack.c.l.b16 %v2346
      %v2469 = vunpack.c.l.b16 %v2360
      %v2470 = vunpack.c.l.b16 %v2370
      %v2471 = vunpack.c.l.b16 %v2384
      %v2472 = vunpack.c.l.b16 %v2394
      %v2473 = vunpack.c.l.b16 %v2408
      %v2474 = vunpack.c.l.b16 %v2418
      %v2475 = vunpack.c.l.b16 %v2432
      %v2476 = vunpack.c.l.b16 %v2442
      %v2477 = vpack.c.b16 %v2462, %v2461
      %v2478 = vpack.c.b16 %v2464, %v2463
      %v2479 = vpack.c.b16 %v2466, %v2465
      %v2480 = vpack.c.b16 %v2468, %v2467
      %v2481 = vpack.c.b16 %v2470, %v2469
      %v2482 = vpack.c.b16 %v2472, %v2471
      %v2483 = vpack.c.b16 %v2474, %v2473
      %v2484 = vpack.c.b16 %v2476, %v2475
      %v2486 = vsel %vm299, %v2477, 0
      %v2489 = vsel %vm299, %v2478, 0
      %v2492 = vsel %vm299, %v2479, 0
      %v2495 = vsel %vm299, %v2480, 0
      %v2498 = vsel %vm299, %v2481, 0
      %v2501 = vsel %vm299, %v2482, 0
      %v2504 = vsel %vm299, %v2483, 0
      %v2507 = vsel %vm299, %v2484, 0
      %v2510 = vsel %vm324, %v2460, 0
      %2512 = vmatprep.subr.bf16.mxu0 0
      %2513 = vmatpush1.bf16.msra.mxu0 %v2510
      %2514 = vmatprep.subr.bf16.mxu0 0
      %2515 = vmatpush1.bf16.msra.mxu0 0
      %2516 = vmatprep.subr.bf16.mxu0 0
      %2517 = vmatpush1.bf16.msra.mxu0 0
      %2518 = vmatprep.subr.bf16.mxu0 0
      %2519 = vmatpush1.bf16.msra.mxu0 0
      %2520 = vmatprep.subr.bf16.mxu0 0
      %2521 = vmatpush1.bf16.msra.mxu0 0
      %2522 = vmatprep.subr.bf16.mxu0 0
      %2523 = vmatpush1.bf16.msra.mxu0 0
      %2524 = vmatprep.subr.bf16.mxu0 0
      %2525 = vmatpush1.bf16.msra.mxu0 0
      %2526 = vmatprep.subr.bf16.mxu0 0
      %2527 = vmatpush1.bf16.msra.mxu0 0
      %2528 = vmatprep.subr.bf16.mxu0 0
      %2529 = vmatpush1.bf16.msra.mxu0 0
      %2530 = vmatprep.subr.bf16.mxu0 0
      %2531 = vmatpush1.bf16.msra.mxu0 0
      %2532 = vmatprep.subr.bf16.mxu0 0
      %2533 = vmatpush1.bf16.msra.mxu0 0
      %2534 = vmatprep.subr.bf16.mxu0 0
      %2535 = vmatpush1.bf16.msra.mxu0 0
      %2536 = vmatprep.subr.bf16.mxu0 0
      %2537 = vmatpush1.bf16.msra.mxu0 0
      %2538 = vmatprep.subr.bf16.mxu0 0
      %2539 = vmatpush1.bf16.msra.mxu0 0
      %2540 = vmatprep.subr.bf16.mxu0 0
      %2541 = vmatpush1.bf16.msra.mxu0 0
      %2542 = vmatprep.subr.bf16.mxu0 0
      %2543 = vmatpush1.bf16.msra.mxu0 0
      %2544 = vmatprep.mubr.bf16.mxu0 0
      %2545 = vmatmul.mubr.bf16.gmra.mrb[0].mxu0 %v2486
      %v2546 = vpop.f32.mrb[0].mxu0
      %v2547 = vadd.f32 0.0, %v2546
      %v2548 = vpop.f32.mrb[0].mxu0
      %v2549 = vpop.f32.mrb[0].mxu0
      %v2550 = vadd.f32 0.0, %v2549
      %v2551 = vpop.f32.mrb[0].mxu0
      %2552 = vmatprep.mubr.bf16.mxu0 0
      %2553 = vmatmul.mubr.bf16.gmra.mrb[0].mxu0 %v2489
      %v2554 = vpop.f32.mrb[0].mxu0
      %v2555 = vadd.f32 0.0, %v2554
      %v2556 = vpop.f32.mrb[0].mxu0
      %v2557 = vpop.f32.mrb[0].mxu0
      %v2558 = vadd.f32 0.0, %v2557
      %v2559 = vpop.f32.mrb[0].mxu0
      %2560 = vmatprep.mubr.bf16.mxu0 0
      %2561 = vmatmul.mubr.bf16.gmra.mrb[0].mxu0 %v2492
      %v2562 = vpop.f32.mrb[0].mxu0
      %v2563 = vadd.f32 0.0, %v2562
      %v2564 = vpop.f32.mrb[0].mxu0
      %v2565 = vpop.f32.mrb[0].mxu0
      %v2566 = vadd.f32 0.0, %v2565
      %v2567 = vpop.f32.mrb[0].mxu0
      %2568 = vmatprep.mubr.bf16.mxu0 0
      %2569 = vmatmul.mubr.bf16.gmra.mrb[0].mxu0 %v2495
      %v2570 = vpop.f32.mrb[0].mxu0
      %v2571 = vadd.f32 0.0, %v2570
      %v2572 = vpop.f32.mrb[0].mxu0
      %v2573 = vpop.f32.mrb[0].mxu0
      %v2574 = vadd.f32 0.0, %v2573
      %v2575 = vpop.f32.mrb[0].mxu0
      %2576 = vmatprep.mubr.bf16.mxu0 0
      %2577 = vmatmul.mubr.bf16.gmra.mrb[0].mxu0 %v2498
      %v2578 = vpop.f32.mrb[0].mxu0
      %v2579 = vadd.f32 0.0, %v2578
      %v2580 = vpop.f32.mrb[0].mxu0
      %v2581 = vpop.f32.mrb[0].mxu0
      %v2582 = vadd.f32 0.0, %v2581
      %v2583 = vpop.f32.mrb[0].mxu0
      %2584 = vmatprep.mubr.bf16.mxu0 0
      %2585 = vmatmul.mubr.bf16.gmra.mrb[0].mxu0 %v2501
      %v2586 = vpop.f32.mrb[0].mxu0
      %v2587 = vadd.f32 0.0, %v2586
      %v2588 = vpop.f32.mrb[0].mxu0
      %v2589 = vpop.f32.mrb[0].mxu0
      %v2590 = vadd.f32 0.0, %v2589
      %v2591 = vpop.f32.mrb[0].mxu0
      %2592 = vmatprep.mubr.bf16.mxu0 0
      %2593 = vmatmul.mubr.bf16.gmra.mrb[0].mxu0 %v2504
      %v2594 = vpop.f32.mrb[0].mxu0
      %v2595 = vadd.f32 0.0, %v2594
      %v2596 = vpop.f32.mrb[0].mxu0
      %v2597 = vpop.f32.mrb[0].mxu0
      %v2598 = vadd.f32 0.0, %v2597
      %v2599 = vpop.f32.mrb[0].mxu0
      %2600 = vmatprep.mubr.bf16.mxu0 0
      %2601 = vmatmul.mubr.bf16.gmra.mrb[0].mxu0 %v2507
      %v2602 = vpop.f32.mrb[0].mxu0
      %v2603 = vadd.f32 0.0, %v2602
      %v2604 = vpop.f32.mrb[0].mxu0
      %v2605 = vpop.f32.mrb[0].mxu0
      %v2606 = vadd.f32 0.0, %v2605
      %v2607 = vpop.f32.mrb[0].mxu0
      %2608 = vdwg.mxu0
      %v2609 = vadd.f32 %v2443, %v2547
      %v2610 = vadd.f32 %v2444, %v2550
      %v2611 = vadd.f32 %v2445, %v2555
      %v2612 = vadd.f32 %v2446, %v2558
      %v2613 = vadd.f32 %v2447, %v2563
      %v2614 = vadd.f32 %v2448, %v2566
      %v2615 = vadd.f32 %v2449, %v2571
      %v2616 = vadd.f32 %v2450, %v2574
      %v2617 = vadd.f32 %v2451, %v2579
      %v2618 = vadd.f32 %v2452, %v2582
      %v2619 = vadd.f32 %v2453, %v2587
      %v2620 = vadd.f32 %v2454, %v2590
      %v2621 = vadd.f32 %v2455, %v2595
      %v2622 = vadd.f32 %v2456, %v2598
      %v2623 = vadd.f32 %v2457, %v2603
      %v2624 = vadd.f32 %v2458, %v2606
      %2625 = vst.msk [vmem:[#allocation2] sm:$0xff] %vm197, %v2609
      %2626 = vst.msk [vmem:[#allocation2 + $0x8] sm:$0xff] %vm197, %v2610
      %2627 = vst.msk [vmem:[#allocation2 + $0x10] sm:$0xff] %vm197, %v2611
      %2628 = vst.msk [vmem:[#allocation2 + $0x18] sm:$0xff] %vm197, %v2612
      %2629 = vst.msk [vmem:[#allocation2 + $0x20] sm:$0xff] %vm197, %v2613
      %2630 = vst.msk [vmem:[#allocation2 + $0x28] sm:$0xff] %vm197, %v2614
      %2631 = vst.msk [vmem:[#allocation2 + $0x30] sm:$0xff] %vm197, %v2615
      %2632 = vst.msk [vmem:[#allocation2 + $0x38] sm:$0xff] %vm197, %v2616
      %2633 = vst.msk [vmem:[#allocation2 + $0x40] sm:$0xff] %vm197, %v2617
      %2634 = vst.msk [vmem:[#allocation2 + $0x48] sm:$0xff] %vm197, %v2618
      %2635 = vst.msk [vmem:[#allocation2 + $0x50] sm:$0xff] %vm197, %v2619
      %2636 = vst.msk [vmem:[#allocation2 + $0x58] sm:$0xff] %vm197, %v2620
      %2637 = vst.msk [vmem:[#allocation2 + $0x60] sm:$0xff] %vm197, %v2621
      %2638 = vst.msk [vmem:[#allocation2 + $0x68] sm:$0xff] %vm197, %v2622
      %2639 = vst.msk [vmem:[#allocation2 + $0x70] sm:$0xff] %vm197, %v2623
      %2640 = vst.msk [vmem:[#allocation2 + $0x78] sm:$0xff] %vm197, %v2624
      %v2649 = vrot.slane %v2013, 5
      %v2650 = vrot.slane %v2649, 4
      %v2651 = vrot.slane %v2014, 5
      %v2652 = vsel %vm860, %v2650, %v2651
      %v2653 = vrot.slane %v2651, 4
      %v2654 = vrot.slane %v2015, 5
      %v2655 = vsel %vm860, %v2653, %v2654
      %v2656 = vrot.slane %v2016, 5
      %v2657 = vrot.slane %v2656, 4
      %v2658 = vrot.slane %v2017, 5
      %v2659 = vsel %vm860, %v2657, %v2658
      %v2660 = vrot.slane %v2658, 4
      %v2661 = vrot.slane %v2018, 5
      %v2662 = vsel %vm860, %v2660, %v2661
      %v2663 = vrot.slane %v2019, 5
      %v2664 = vrot.slane %v2663, 4
      %v2665 = vrot.slane %v2020, 5
      %v2666 = vsel %vm860, %v2664, %v2665
      %v2667 = vrot.slane %v2665, 4
      %v2668 = vrot.slane %v2021, 5
      %v2669 = vsel %vm860, %v2667, %v2668
      %v2670 = vrot.slane %v2022, 5
      %v2671 = vrot.slane %v2670, 4
      %v2672 = vrot.slane %v2023, 5
      %v2673 = vsel %vm860, %v2671, %v2672
      %v2674 = vrot.slane %v2672, 4
      %v2675 = vrot.slane %v2024, 5
      %v2676 = vsel %vm860, %v2674, %v2675
      %v2677 = vrot.slane %v2025, 5
      %v2678 = vrot.slane %v2677, 4
      %v2679 = vrot.slane %v2026, 5
      %v2680 = vsel %vm860, %v2678, %v2679
      %v2681 = vrot.slane %v2679, 4
      %v2682 = vrot.slane %v2027, 5
      %v2683 = vsel %vm860, %v2681, %v2682
      %v2684 = vrot.slane %v2028, 5
      %v2685 = vrot.slane %v2684, 4
      %v2686 = vrot.slane %v2029, 5
      %v2687 = vsel %vm860, %v2685, %v2686
      %v2688 = vrot.slane %v2686, 4
      %v2689 = vrot.slane %v2030, 5
      %v2690 = vsel %vm860, %v2688, %v2689
      %v2691 = vrot.slane %v2031, 5
      %v2692 = vrot.slane %v2691, 4
      %v2693 = vrot.slane %v2032, 5
      %v2694 = vsel %vm860, %v2692, %v2693
      %v2695 = vrot.slane %v2693, 4
      %v2696 = vrot.slane %v2033, 5
      %v2697 = vsel %vm860, %v2695, %v2696
      %v2698 = vrot.slane %v2034, 5
      %v2699 = vrot.slane %v2698, 4
      %v2700 = vrot.slane %v2035, 5
      %v2701 = vsel %vm860, %v2699, %v2700
      %v2702 = vrot.slane %v2700, 4
      %v2703 = vrot.slane %v2036, 5
      %v2704 = vsel %vm860, %v2702, %v2703
      %v2705 = vld [vmem:[#allocation2] sm:$0xff]
      %v2706 = vld [vmem:[#allocation2 + $0x8] sm:$0xff]
      %v2707 = vld [vmem:[#allocation2 + $0x10] sm:$0xff]
      %v2708 = vld [vmem:[#allocation2 + $0x18] sm:$0xff]
      %v2709 = vld [vmem:[#allocation2 + $0x20] sm:$0xff]
      %v2710 = vld [vmem:[#allocation2 + $0x28] sm:$0xff]
      %v2711 = vld [vmem:[#allocation2 + $0x30] sm:$0xff]
      %v2712 = vld [vmem:[#allocation2 + $0x38] sm:$0xff]
      %v2713 = vld [vmem:[#allocation2 + $0x40] sm:$0xff]
      %v2714 = vld [vmem:[#allocation2 + $0x48] sm:$0xff]
      %v2715 = vld [vmem:[#allocation2 + $0x50] sm:$0xff]
      %v2716 = vld [vmem:[#allocation2 + $0x58] sm:$0xff]
      %v2717 = vld [vmem:[#allocation2 + $0x60] sm:$0xff]
      %v2718 = vld [vmem:[#allocation2 + $0x68] sm:$0xff]
      %v2719 = vld [vmem:[#allocation2 + $0x70] sm:$0xff]
      %v2720 = vld [vmem:[#allocation2 + $0x78] sm:$0xff]
      %s2721 = scalar_lea.vmem %s1, 32
      %v2722 = vld [vmem:[%s2721] sm:$0xf]
      %v2723 = vunpack.c.l.b16 %v2652
      %v2724 = vunpack.c.l.b16 %v2655
      %v2725 = vunpack.c.l.b16 %v2659
      %v2726 = vunpack.c.l.b16 %v2662
      %v2727 = vunpack.c.l.b16 %v2666
      %v2728 = vunpack.c.l.b16 %v2669
      %v2729 = vunpack.c.l.b16 %v2673
      %v2730 = vunpack.c.l.b16 %v2676
      %v2731 = vunpack.c.l.b16 %v2680
      %v2732 = vunpack.c.l.b16 %v2683
      %v2733 = vunpack.c.l.b16 %v2687
      %v2734 = vunpack.c.l.b16 %v2690
      %v2735 = vunpack.c.l.b16 %v2694
      %v2736 = vunpack.c.l.b16 %v2697
      %v2737 = vunpack.c.l.b16 %v2701
      %v2738 = vunpack.c.l.b16 %v2704
      %v2739 = vpack.c.b16 %v2724, %v2723
      %v2740 = vpack.c.b16 %v2726, %v2725
      %v2741 = vpack.c.b16 %v2728, %v2727
      %v2742 = vpack.c.b16 %v2730, %v2729
      %v2743 = vpack.c.b16 %v2732, %v2731
      %v2744 = vpack.c.b16 %v2734, %v2733
      %v2745 = vpack.c.b16 %v2736, %v2735
      %v2746 = vpack.c.b16 %v2738, %v2737
      %v2748 = vsel %vm299, %v2739, 0
      %v2751 = vsel %vm299, %v2740, 0
      %v2754 = vsel %vm299, %v2741, 0
      %v2757 = vsel %vm299, %v2742, 0
      %v2760 = vsel %vm299, %v2743, 0
      %v2763 = vsel %vm299, %v2744, 0
      %v2766 = vsel %vm299, %v2745, 0
      %v2769 = vsel %vm299, %v2746, 0
      %v2772 = vsel %vm324, %v2722, 0
      %2774 = vmatprep.subr.bf16.mxu0 0
      %2775 = vmatpush1.bf16.msra.mxu0 %v2772
      %2776 = vmatprep.subr.bf16.mxu0 0
      %2777 = vmatpush1.bf16.msra.mxu0 0
      %2778 = vmatprep.subr.bf16.mxu0 0
      %2779 = vmatpush1.bf16.msra.mxu0 0
      %2780 = vmatprep.subr.bf16.mxu0 0
      %2781 = vmatpush1.bf16.msra.mxu0 0
      %2782 = vmatprep.subr.bf16.mxu0 0
      %2783 = vmatpush1.bf16.msra.mxu0 0
      %2784 = vmatprep.subr.bf16.mxu0 0
      %2785 = vmatpush1.bf16.msra.mxu0 0
      %2786 = vmatprep.subr.bf16.mxu0 0
      %2787 = vmatpush1.bf16.msra.mxu0 0
      %2788 = vmatprep.subr.bf16.mxu0 0
      %2789 = vmatpush1.bf16.msra.mxu0 0
      %2790 = vmatprep.subr.bf16.mxu0 0
      %2791 = vmatpush1.bf16.msra.mxu0 0
      %2792 = vmatprep.subr.bf16.mxu0 0
      %2793 = vmatpush1.bf16.msra.mxu0 0
      %2794 = vmatprep.subr.bf16.mxu0 0
      %2795 = vmatpush1.bf16.msra.mxu0 0
      %2796 = vmatprep.subr.bf16.mxu0 0
      %2797 = vmatpush1.bf16.msra.mxu0 0
      %2798 = vmatprep.subr.bf16.mxu0 0
      %2799 = vmatpush1.bf16.msra.mxu0 0
      %2800 = vmatprep.subr.bf16.mxu0 0
      %2801 = vmatpush1.bf16.msra.mxu0 0
      %2802 = vmatprep.subr.bf16.mxu0 0
      %2803 = vmatpush1.bf16.msra.mxu0 0
      %2804 = vmatprep.subr.bf16.mxu0 0
      %2805 = vmatpush1.bf16.msra.mxu0 0
      %2806 = vmatprep.mubr.bf16.mxu0 0
      %2807 = vmatmul.mubr.bf16.gmra.mrb[0].mxu0 %v2748
      %v2808 = vpop.f32.mrb[0].mxu0
      %v2809 = vadd.f32 0.0, %v2808
      %v2810 = vpop.f32.mrb[0].mxu0
      %v2811 = vpop.f32.mrb[0].mxu0
      %v2812 = vadd.f32 0.0, %v2811
      %v2813 = vpop.f32.mrb[0].mxu0
      %2814 = vmatprep.mubr.bf16.mxu0 0
      %2815 = vmatmul.mubr.bf16.gmra.mrb[0].mxu0 %v2751
      %v2816 = vpop.f32.mrb[0].mxu0
      %v2817 = vadd.f32 0.0, %v2816
      %v2818 = vpop.f32.mrb[0].mxu0
      %v2819 = vpop.f32.mrb[0].mxu0
      %v2820 = vadd.f32 0.0, %v2819
      %v2821 = vpop.f32.mrb[0].mxu0
      %2822 = vmatprep.mubr.bf16.mxu0 0
      %2823 = vmatmul.mubr.bf16.gmra.mrb[0].mxu0 %v2754
      %v2824 = vpop.f32.mrb[0].mxu0
      %v2825 = vadd.f32 0.0, %v2824
      %v2826 = vpop.f32.mrb[0].mxu0
      %v2827 = vpop.f32.mrb[0].mxu0
      %v2828 = vadd.f32 0.0, %v2827
      %v2829 = vpop.f32.mrb[0].mxu0
      %2830 = vmatprep.mubr.bf16.mxu0 0
      %2831 = vmatmul.mubr.bf16.gmra.mrb[0].mxu0 %v2757
      %v2832 = vpop.f32.mrb[0].mxu0
      %v2833 = vadd.f32 0.0, %v2832
      %v2834 = vpop.f32.mrb[0].mxu0
      %v2835 = vpop.f32.mrb[0].mxu0
      %v2836 = vadd.f32 0.0, %v2835
      %v2837 = vpop.f32.mrb[0].mxu0
      %2838 = vmatprep.mubr.bf16.mxu0 0
      %2839 = vmatmul.mubr.bf16.gmra.mrb[0].mxu0 %v2760
      %v2840 = vpop.f32.mrb[0].mxu0
      %v2841 = vadd.f32 0.0, %v2840
      %v2842 = vpop.f32.mrb[0].mxu0
      %v2843 = vpop.f32.mrb[0].mxu0
      %v2844 = vadd.f32 0.0, %v2843
      %v2845 = vpop.f32.mrb[0].mxu0
      %2846 = vmatprep.mubr.bf16.mxu0 0
      %2847 = vmatmul.mubr.bf16.gmra.mrb[0].mxu0 %v2763
      %v2848 = vpop.f32.mrb[0].mxu0
      %v2849 = vadd.f32 0.0, %v2848
      %v2850 = vpop.f32.mrb[0].mxu0
      %v2851 = vpop.f32.mrb[0].mxu0
      %v2852 = vadd.f32 0.0, %v2851
      %v2853 = vpop.f32.mrb[0].mxu0
      %2854 = vmatprep.mubr.bf16.mxu0 0
      %2855 = vmatmul.mubr.bf16.gmra.mrb[0].mxu0 %v2766
      %v2856 = vpop.f32.mrb[0].mxu0
      %v2857 = vadd.f32 0.0, %v2856
      %v2858 = vpop.f32.mrb[0].mxu0
      %v2859 = vpop.f32.mrb[0].mxu0
      %v2860 = vadd.f32 0.0, %v2859
      %v2861 = vpop.f32.mrb[0].mxu0
      %2862 = vmatprep.mubr.bf16.mxu0 0
      %2863 = vmatmul.mubr.bf16.gmra.mrb[0].mxu0 %v2769
      %v2864 = vpop.f32.mrb[0].mxu0
      %v2865 = vadd.f32 0.0, %v2864
      %v2866 = vpop.f32.mrb[0].mxu0
      %v2867 = vpop.f32.mrb[0].mxu0
      %v2868 = vadd.f32 0.0, %v2867
      %v2869 = vpop.f32.mrb[0].mxu0
      %2870 = vdwg.mxu0
      %v2871 = vadd.f32 %v2705, %v2809
      %v2872 = vadd.f32 %v2706, %v2812
      %v2873 = vadd.f32 %v2707, %v2817
      %v2874 = vadd.f32 %v2708, %v2820
      %v2875 = vadd.f32 %v2709, %v2825
      %v2876 = vadd.f32 %v2710, %v2828
      %v2877 = vadd.f32 %v2711, %v2833
      %v2878 = vadd.f32 %v2712, %v2836
      %v2879 = vadd.f32 %v2713, %v2841
      %v2880 = vadd.f32 %v2714, %v2844
      %v2881 = vadd.f32 %v2715, %v2849
      %v2882 = vadd.f32 %v2716, %v2852
      %v2883 = vadd.f32 %v2717, %v2857
      %v2884 = vadd.f32 %v2718, %v2860
      %v2885 = vadd.f32 %v2719, %v2865
      %v2886 = vadd.f32 %v2720, %v2868
      %2887 = vst.msk [vmem:[#allocation2] sm:$0xff] %vm197, %v2871
      %2888 = vst.msk [vmem:[#allocation2 + $0x8] sm:$0xff] %vm197, %v2872
      %2889 = vst.msk [vmem:[#allocation2 + $0x10] sm:$0xff] %vm197, %v2873
      %2890 = vst.msk [vmem:[#allocation2 + $0x18] sm:$0xff] %vm197, %v2874
      %2891 = vst.msk [vmem:[#allocation2 + $0x20] sm:$0xff] %vm197, %v2875
      %2892 = vst.msk [vmem:[#allocation2 + $0x28] sm:$0xff] %vm197, %v2876
      %2893 = vst.msk [vmem:[#allocation2 + $0x30] sm:$0xff] %vm197, %v2877
      %2894 = vst.msk [vmem:[#allocation2 + $0x38] sm:$0xff] %vm197, %v2878
      %2895 = vst.msk [vmem:[#allocation2 + $0x40] sm:$0xff] %vm197, %v2879
      %2896 = vst.msk [vmem:[#allocation2 + $0x48] sm:$0xff] %vm197, %v2880
      %2897 = vst.msk [vmem:[#allocation2 + $0x50] sm:$0xff] %vm197, %v2881
      %2898 = vst.msk [vmem:[#allocation2 + $0x58] sm:$0xff] %vm197, %v2882
      %2899 = vst.msk [vmem:[#allocation2 + $0x60] sm:$0xff] %vm197, %v2883
      %2900 = vst.msk [vmem:[#allocation2 + $0x68] sm:$0xff] %vm197, %v2884
      %2901 = vst.msk [vmem:[#allocation2 + $0x70] sm:$0xff] %vm197, %v2885
      %2902 = vst.msk [vmem:[#allocation2 + $0x78] sm:$0xff] %vm197, %v2886
      %v2903 = vld [vmem:[#allocation2] sm:$0xff]
      %v2904 = vld [vmem:[#allocation2 + $0x8] sm:$0xff]
      %v2905 = vld [vmem:[#allocation2 + $0x10] sm:$0xff]
      %v2906 = vld [vmem:[#allocation2 + $0x18] sm:$0xff]
      %v2907 = vld [vmem:[#allocation2 + $0x20] sm:$0xff]
      %v2908 = vld [vmem:[#allocation2 + $0x28] sm:$0xff]
      %v2909 = vld [vmem:[#allocation2 + $0x30] sm:$0xff]
      %v2910 = vld [vmem:[#allocation2 + $0x38] sm:$0xff]
      %v2911 = vld [vmem:[#allocation2 + $0x40] sm:$0xff]
      %v2912 = vld [vmem:[#allocation2 + $0x48] sm:$0xff]
      %v2913 = vld [vmem:[#allocation2 + $0x50] sm:$0xff]
      %v2914 = vld [vmem:[#allocation2 + $0x58] sm:$0xff]
      %v2915 = vld [vmem:[#allocation2 + $0x60] sm:$0xff]
      %v2916 = vld [vmem:[#allocation2 + $0x68] sm:$0xff]
      %v2917 = vld [vmem:[#allocation2 + $0x70] sm:$0xff]
      %v2918 = vld [vmem:[#allocation2 + $0x78] sm:$0xff]
      %v2919 = vld [vmem:[%s2] sm:$0x1]
      %v2921 = vlaneseq
      %v2922 = vshrl.u32 %v2921, 7
      %v2923 = vsub.s32 0, %v2922
      %v2924 = vrot.slane %v2919, %v2923
      %v2926 = vadd.f32 %v2903, %v2924
      %v2927 = vadd.f32 %v2904, %v2924
      %v2928 = vadd.f32 %v2905, %v2924
      %v2929 = vadd.f32 %v2906, %v2924
      %v2930 = vadd.f32 %v2907, %v2924
      %v2931 = vadd.f32 %v2908, %v2924
      %v2932 = vadd.f32 %v2909, %v2924
      %v2933 = vadd.f32 %v2910, %v2924
      %v2934 = vadd.f32 %v2911, %v2924
      %v2935 = vadd.f32 %v2912, %v2924
      %v2936 = vadd.f32 %v2913, %v2924
      %v2937 = vadd.f32 %v2914, %v2924
      %v2938 = vadd.f32 %v2915, %v2924
      %v2939 = vadd.f32 %v2916, %v2924
      %v2940 = vadd.f32 %v2917, %v2924
      %v2941 = vadd.f32 %v2918, %v2924
      %v2942 = vmax.f32 %v2926, 0.0
      %v2943 = vmax.f32 %v2927, 0.0
      %v2944 = vmax.f32 %v2928, 0.0
      %v2945 = vmax.f32 %v2929, 0.0
      %v2946 = vmax.f32 %v2930, 0.0
      %v2947 = vmax.f32 %v2931, 0.0
      %v2948 = vmax.f32 %v2932, 0.0
      %v2949 = vmax.f32 %v2933, 0.0
      %v2950 = vmax.f32 %v2934, 0.0
      %v2951 = vmax.f32 %v2935, 0.0
      %v2952 = vmax.f32 %v2936, 0.0
      %v2953 = vmax.f32 %v2937, 0.0
      %v2954 = vmax.f32 %v2938, 0.0
      %v2955 = vmax.f32 %v2939, 0.0
      %v2956 = vmax.f32 %v2940, 0.0
      %v2957 = vmax.f32 %v2941, 0.0
      %v2958 = vpack.c.bf16 %v2943, %v2942
      %v2959 = vpack.c.bf16 %v2945, %v2944
      %v2960 = vpack.c.bf16 %v2947, %v2946
      %v2961 = vpack.c.bf16 %v2949, %v2948
      %v2962 = vpack.c.bf16 %v2951, %v2950
      %v2963 = vpack.c.bf16 %v2953, %v2952
      %v2964 = vpack.c.bf16 %v2955, %v2954
      %v2965 = vpack.c.bf16 %v2957, %v2956
      %v2974 = vunpack.c.l.b16 %v2958
      %v2975 = vunpack.c.h.b16 %v2958
      %v2976 = vunpack.c.l.b16 %v2959
      %v2977 = vunpack.c.h.b16 %v2959
      %v2978 = vunpack.c.l.b16 %v2960
      %v2979 = vunpack.c.h.b16 %v2960
      %v2980 = vunpack.c.l.b16 %v2961
      %v2981 = vunpack.c.h.b16 %v2961
      %v2982 = vunpack.c.l.b16 %v2962
      %v2983 = vunpack.c.h.b16 %v2962
      %v2984 = vunpack.c.l.b16 %v2963
      %v2985 = vunpack.c.h.b16 %v2963
      %v2986 = vunpack.c.l.b16 %v2964
      %v2987 = vunpack.c.h.b16 %v2964
      %v2988 = vunpack.c.l.b16 %v2965
      %v2989 = vunpack.c.h.b16 %v2965
      %v2990 = vpack.c.b16 %v2974, %v2974
      %v2991 = vpack.c.b16 %v2975, %v2975
      %v2992 = vpack.c.b16 %v2976, %v2976
      %v2993 = vpack.c.b16 %v2977, %v2977
      %v2994 = vpack.c.b16 %v2978, %v2978
      %v2995 = vpack.c.b16 %v2979, %v2979
      %v2996 = vpack.c.b16 %v2980, %v2980
      %v2997 = vpack.c.b16 %v2981, %v2981
      %v2998 = vpack.c.b16 %v2982, %v2982
      %v2999 = vpack.c.b16 %v2983, %v2983
      %v3000 = vpack.c.b16 %v2984, %v2984
      %v3001 = vpack.c.b16 %v2985, %v2985
      %v3002 = vpack.c.b16 %v2986, %v2986
      %v3003 = vpack.c.b16 %v2987, %v2987
      %v3004 = vpack.c.b16 %v2988, %v2988
      %v3005 = vpack.c.b16 %v2989, %v2989
      %vm3022 = vcmask 257024
      %3023 = vst.msk [vmem:[%s194] sm:$0xf] %vm3022, %v2990
      %3024 = vst.msk [vmem:[%s194 + $0x4] sm:$0xf] %vm3022, %v2991
      %3025 = vst.msk [vmem:[%s194 + $0x8] sm:$0xf] %vm3022, %v2992
      %3026 = vst.msk [vmem:[%s194 + $0xc] sm:$0xf] %vm3022, %v2993
      %3027 = vst.msk [vmem:[%s194 + $0x10] sm:$0xf] %vm3022, %v2994
      %3028 = vst.msk [vmem:[%s194 + $0x14] sm:$0xf] %vm3022, %v2995
      %3029 = vst.msk [vmem:[%s194 + $0x18] sm:$0xf] %vm3022, %v2996
      %3030 = vst.msk [vmem:[%s194 + $0x1c] sm:$0xf] %vm3022, %v2997
      %3031 = vst.msk [vmem:[%s194 + $0x20] sm:$0xf] %vm3022, %v2998
      %3032 = vst.msk [vmem:[%s194 + $0x24] sm:$0xf] %vm3022, %v2999
      %3033 = vst.msk [vmem:[%s194 + $0x28] sm:$0xf] %vm3022, %v3000
      %3034 = vst.msk [vmem:[%s194 + $0x2c] sm:$0xf] %vm3022, %v3001
      %3035 = vst.msk [vmem:[%s194 + $0x30] sm:$0xf] %vm3022, %v3002
      %3036 = vst.msk [vmem:[%s194 + $0x34] sm:$0xf] %vm3022, %v3003
      %3037 = vst.msk [vmem:[%s194 + $0x38] sm:$0xf] %vm3022, %v3004
      %3038 = vst.msk [vmem:[%s194 + $0x3c] sm:$0xf] %vm3022, %v3005
      %s3039 = smul.u32 8, %s19
      %p3040 = scmp.lt.s32.totalorder %s18, 1
      %s3041 = scalar_select %p3040, %s18, 1
      %p3042 = scmp.lt.s32.totalorder %s3039, 15
      %s3043 = scalar_select %p3042, %s3039, 15
      %s3044 = smul.addr %s3043, 2
      %s3045 = smul.addr %s3041, 32
      %s3046 = sadd.s32 %s3044, %s3045
      %s3047 = smul.addr %s3046, 4
      %s3048 = scalar_lea.vmem %s3, %s3047
      // Predicated region
      $region33: #{cnn_forward.6} parent=31 // pred_check
        %p3049 = pneg %p114
      $region34: #{cnn_forward.6} parent=31 // pred_check_branch
        %3051 = sbr.rel (%p3049) target = $region36
      $region35: #{cnn_forward.6} parent=31 // pred_region
        %s3052 = smul.u32 8, %s19
      $region36: #{cnn_forward.6} parent=31 // pred_fallthru
        _
    $region32: #{cnn_forward.6} parent=5 // pred_fallthru
      _
    %p3053 = scmp.le.s32.totalorder 2, %s9
    // Predicated region
    $region37: #{cnn_forward.6} parent=5 // pred_check
      %p3054 = pneg %p3053
    $region38: #{cnn_forward.6} parent=5 // pred_check_branch
      %3056 = sbr.rel (%p3054) target = $region40
    $region39: #{cnn_forward.6} parent=5 // pred_region
      %s3057 = ssub.s32 %s9, 2
      // Predicated region
      $region41: #{cnn_forward.6} parent=39 // pred_check
        %p3058 = pneg %p120
      $region42: #{cnn_forward.6} parent=39 // pred_check_branch
        %3060 = sbr.rel (%p3058) target = $region44
      $region43: #{cnn_forward.6} parent=39 // pred_region
        %s3061 = smul.u32 8, %s21
        %p3062 = scmp.lt.s32.totalorder %s20, 1
        %s3063 = scalar_select %p3062, %s20, 1
        %p3064 = scmp.lt.s32.totalorder %s3061, 15
        %s3065 = scalar_select %p3064, %s3061, 15
        %s3066 = smul.addr %s3065, 2
        %s3067 = smul.addr %s3063, 32
        %s3068 = sadd.s32 %s3066, %s3067
        %s3069 = smul.addr %s3068, 4
        %s3070 = scalar_lea.vmem %s3, %s3069
      $region44: #{cnn_forward.6} parent=39 // pred_fallthru
        _
    $region40: #{cnn_forward.6} parent=5 // pred_fallthru
      _
  $region6: #{cnn_forward.6} parent=0 // loop_footer
    %s13 = sadd.s32 1, %s9
  $region7: #{cnn_forward.6} parent=0 // loop_footer_branch
    %8 = sbr.rel target = $region3
  $region8: #{cnn_forward.6} parent=0 // loop_exit
    _

// kernel: cnn_forward.10
$region0: #{cnn_forward.10}
  #allocation0 [shape = 'u32[]', space=smem, size = 0x4, offset = 0x4, fixed_abs, tag = 'smem constant byte address 0x4 - core index']
  #allocation1 [shape = 'u32[144,128]{1,0:T(1,128)}', space=vmem, size = 0x12000, scoped, tag = 'internal scratch']
  #allocation2 [shape = 'f32[8,128]{1,0:T(8,128)}', space=vmem, size = 0x1000, scoped, tag = 'scratch operand']
  %s0 = inlined_call_operand.vmem [shape: bf16[8,1024], index: 0, kind: input, shape index: {}]
  %s1 = inlined_call_operand.vmem [shape: bf16[1024,128], index: 1, kind: input, shape index: {}]
  %s2 = inlined_call_operand.vmem [shape: f32[1,128], index: 2, kind: input, shape index: {}]
  %s3 = inlined_call_operand.vmem [shape: f32[8,128], index: 3, kind: output, shape index: {}]
  %s4 = sld [smem:[#allocation0]]
  $region53: #{cnn_forward.10} parent=0
    _
  %s6 = ssub.s32 1, %s4
  %s7 = scalar_select 0, %s6, %s4
  loop: start=0, step=1, limit=4
  $region2: #{cnn_forward.10} parent=0 // loop_pre_header
    _
  $region3: #{cnn_forward.10} parent=0 // loop_header
    %s9 = sphi 0, %s13
    %p10 = scmp.ge.s32.totalorder %s9, 4
    %s16 = sphi 0, %s35
    %s17 = sphi 0, %s31
    %s18 = sphi 0, %s27
    %s19 = sphi 0, %s16
    %s20 = sphi 0, %s17
    %s21 = sphi 0, %s18
    %s22 = sphi 0, %s19
    %s23 = sphi 0, %s20
    %s24 = sphi 0, %s21
    %s40 = sphi 0, %s42
    %s43 = sphi 0, %s40
    %s44 = sphi 0, %s43
    %s60 = sphi 0, %s44
    %s68 = sphi 0, %s70
    %s71 = sphi 0, %s68
    %s72 = sphi 0, %s71
    %s88 = sphi 0, %s72
    %s94 = sphi 0, %s96
    %s97 = sphi 0, %s94
    %s98 = sphi 0, %s97
    %s114 = sphi 0, %s98
    %s122 = sphi 0, %s124
    %s125 = sphi 0, %s122
    %s126 = sphi 0, %s125
    %s142 = sphi 0, %s126
  $region4: #{cnn_forward.10} parent=0 // loop_header_branch
    %12 = sbr.rel (%p10) target = $region8
  $region5: #{cnn_forward.10} parent=0 // loop_body
    %s14 = ssub.s32 %s9, 1
    %s15 = ssub.s32 %s9, 2
    %s25 = sadd.s32 1, %s18
    %p26 = scmp.ge.s32.totalorder %s25, 2
    %s27 = scalar_select %p26, 0, %s25
    %s28 = sadd.s32 1, %s17
    %s29 = scalar_select %p26, %s28, %s17
    %p30 = scmp.ge.s32.totalorder %s29, 1
    %s31 = scalar_select %p30, 0, %s29
    %s32 = sadd.s32 1, %s16
    %s33 = scalar_select %p30, %s32, %s16
    %p34 = scmp.ge.s32.totalorder %s33, 1
    %s35 = scalar_select %p34, 0, %s33
    %s36 = ssub.s32 %s16, %s35
    %s37 = ssub.s32 %s18, %s27
    %s38 = sor.u32 %s36, %s37
    %p39 = scmp.eq.s32.totalorder %s38, 0
    %s41 = sadd.s32 %s40, 1
    %s42 = scalar_select %p39, %s40, %s41
    %p45 = pneg %p39
    %p46 = scmp.eq.s32.totalorder %s9, 1
    %p47 = por %p45, %p46
    %p48 = scmp.ne.s32.totalorder %s40, %s43
    %p49 = scmp.eq.s32.totalorder %s9, 0
    %p50 = por %p48, %p49
    %p51 = scmp.ne.s32.totalorder %s40, %s43
    %p52 = scmp.eq.s32.totalorder %s14, 1
    %p53 = por %p51, %p52
    %p54 = scmp.ne.s32.totalorder %s43, %s44
    %p55 = scmp.eq.s32.totalorder %s14, 0
    %p56 = por %p54, %p55
    %p57 = scmp.ne.s32.totalorder %s43, %s44
    %p58 = scmp.eq.s32.totalorder %s15, 1
    %p59 = por %p57, %p58
    %p61 = scmp.ne.s32.totalorder %s44, %s60
    %p62 = scmp.eq.s32.totalorder %s15, 0
    %p63 = por %p61, %p62
    %s64 = ssub.s32 %s18, %s27
    %s65 = ssub.s32 %s17, %s31
    %s66 = sor.u32 %s64, %s65
    %p67 = scmp.eq.s32.totalorder %s66, 0
    %s69 = sadd.s32 %s68, 1
    %s70 = scalar_select %p67, %s68, %s69
    %p73 = pneg %p67
    %p74 = scmp.eq.s32.totalorder %s9, 1
    %p75 = por %p73, %p74
    %p76 = scmp.ne.s32.totalorder %s68, %s71
    %p77 = scmp.eq.s32.totalorder %s9, 0
    %p78 = por %p76, %p77
    %p79 = scmp.ne.s32.totalorder %s68, %s71
    %p80 = scmp.eq.s32.totalorder %s14, 1
    %p81 = por %p79, %p80
    %p82 = scmp.ne.s32.totalorder %s71, %s72
    %p83 = scmp.eq.s32.totalorder %s14, 0
    %p84 = por %p82, %p83
    %p85 = scmp.ne.s32.totalorder %s71, %s72
    %p86 = scmp.eq.s32.totalorder %s15, 1
    %p87 = por %p85, %p86
    %p89 = scmp.ne.s32.totalorder %s72, %s88
    %p90 = scmp.eq.s32.totalorder %s15, 0
    %p91 = por %p89, %p90
    %s92 = ssub.s32 %s17, %s31
    %p93 = scmp.eq.s32.totalorder %s92, 0
    %s95 = sadd.s32 %s94, 1
    %s96 = scalar_select %p93, %s94, %s95
    %p99 = pneg %p93
    %p100 = scmp.eq.s32.totalorder %s9, 1
    %p101 = por %p99, %p100
    %p102 = scmp.ne.s32.totalorder %s94, %s97
    %p103 = scmp.eq.s32.totalorder %s9, 0
    %p104 = por %p102, %p103
    %p105 = scmp.ne.s32.totalorder %s94, %s97
    %p106 = scmp.eq.s32.totalorder %s14, 1
    %p107 = por %p105, %p106
    %p108 = scmp.ne.s32.totalorder %s97, %s98
    %p109 = scmp.eq.s32.totalorder %s14, 0
    %p110 = por %p108, %p109
    %p111 = scmp.ne.s32.totalorder %s97, %s98
    %p112 = scmp.eq.s32.totalorder %s15, 1
    %p113 = por %p111, %p112
    %p115 = scmp.ne.s32.totalorder %s98, %s114
    %p116 = scmp.eq.s32.totalorder %s15, 0
    %p117 = por %p115, %p116
    %s118 = ssub.s32 %s16, %s35
    %s119 = ssub.s32 %s17, %s31
    %s120 = sor.u32 %s118, %s119
    %p121 = scmp.eq.s32.totalorder %s120, 0
    %s123 = sadd.s32 %s122, 1
    %s124 = scalar_select %p121, %s122, %s123
    %p127 = pneg %p121
    %p128 = scmp.eq.s32.totalorder %s9, 1
    %p129 = por %p127, %p128
    %p130 = scmp.ne.s32.totalorder %s122, %s125
    %p131 = scmp.eq.s32.totalorder %s9, 0
    %p132 = por %p130, %p131
    %p133 = scmp.ne.s32.totalorder %s122, %s125
    %p134 = scmp.eq.s32.totalorder %s14, 1
    %p135 = por %p133, %p134
    %p136 = scmp.ne.s32.totalorder %s125, %s126
    %p137 = scmp.eq.s32.totalorder %s14, 0
    %p138 = por %p136, %p137
    %p139 = scmp.ne.s32.totalorder %s125, %s126
    %p140 = scmp.eq.s32.totalorder %s15, 1
    %p141 = por %p139, %p140
    %p143 = scmp.ne.s32.totalorder %s126, %s142
    %p144 = scmp.eq.s32.totalorder %s15, 0
    %p145 = por %p143, %p144
    %p146 = scmp.le.s32.totalorder 1, %s9
    %p147 = scmp.lt.s32.totalorder %s9, 3
    %p148 = pnand %p146, %p147
    %p149 = pneg %p148
    // Predicated region
    $region9: #{cnn_forward.10} parent=5 // pred_check
      _
    $region10: #{cnn_forward.10} parent=5 // pred_check_branch
      %151 = sbr.rel (%p148) target = $region12
    $region11: #{cnn_forward.10} parent=5 // pred_region
      %s152 = ssub.s32 %s9, 1
      // Predicated region
      $region13: #{cnn_forward.10} parent=11 // pred_check
        %p153 = pneg %p110
      $region14: #{cnn_forward.10} parent=11 // pred_check_branch
        %155 = sbr.rel (%p153) target = $region16
      $region15: #{cnn_forward.10} parent=11 // pred_region
        %p156 = scmp.lt.s32.totalorder %s20, 0
        %s157 = scalar_select %p156, %s20, 0
        %s158 = scalar_lea.vmem %s2, %s157
      $region16: #{cnn_forward.10} parent=11 // pred_fallthru
        _
    $region12: #{cnn_forward.10} parent=5 // pred_fallthru
      _
    %p159 = scmp.lt.s32.totalorder %s9, 2
    // Predicated region
    $region17: #{cnn_forward.10} parent=5 // pred_check
      %p160 = pneg %p159
    $region18: #{cnn_forward.10} parent=5 // pred_check_branch
      %162 = sbr.rel (%p160) target = $region20
    $region19: #{cnn_forward.10} parent=5 // pred_region
      // Predicated region
      $region21: #{cnn_forward.10} parent=19 // pred_check
        %p163 = pneg %p50
      $region22: #{cnn_forward.10} parent=19 // pred_check_branch
        %165 = sbr.rel (%p163) target = $region24
      $region23: #{cnn_forward.10} parent=19 // pred_region
        %s166 = smul.u32 4, %s18
        %p167 = scmp.lt.s32.totalorder %s16, 0
        %s168 = scalar_select %p167, %s16, 0
        %p169 = scmp.lt.s32.totalorder %s166, 7
        %s170 = scalar_select %p169, %s166, 7
        %s171 = smul.addr %s168, 8
        %s172 = sadd.s32 %s170, %s171
        %s173 = smul.addr %s172, 4
        %s174 = scalar_lea.vmem %s0, %s173
        %s175 = smul.u32 4, %s18
      $region24: #{cnn_forward.10} parent=19 // pred_fallthru
        _
      // Predicated region
      $region25: #{cnn_forward.10} parent=19 // pred_check
        %p176 = pneg %p78
      $region26: #{cnn_forward.10} parent=19 // pred_check_branch
        %178 = sbr.rel (%p176) target = $region28
      $region27: #{cnn_forward.10} parent=19 // pred_region
        %s179 = smul.u32 64, %s18
        %p180 = scmp.lt.s32.totalorder %s179, 127
        %s181 = scalar_select %p180, %s179, 127
        %p182 = scmp.lt.s32.totalorder %s17, 0
        %s183 = scalar_select %p182, %s17, 0
        %s184 = sadd.s32 %s183, %s181
        %s185 = smul.addr %s184, 4
        %s186 = scalar_lea.vmem %s1, %s185
        %s187 = smul.u32 64, %s18
      $region28: #{cnn_forward.10} parent=19 // pred_fallthru
        _
    $region20: #{cnn_forward.10} parent=5 // pred_fallthru
      _
    %p188 = scmp.le.s32.totalorder 1, %s9
    %p189 = scmp.lt.s32.totalorder %s9, 3
    %p190 = pnand %p188, %p189
    %p191 = pneg %p190
    // Predicated region
    $region29: #{cnn_forward.10} parent=5 // pred_check
      _
    $region30: #{cnn_forward.10} parent=5 // pred_check_branch
      %193 = sbr.rel (%p190) target = $region32
    $region31: #{cnn_forward.10} parent=5 // pred_region
      %s194 = ssub.s32 %s9, 1
      %s195 = smul.u32 4, %s21
      %p196 = scmp.lt.s32.totalorder %s19, 0
      %s197 = scalar_select %p196, %s19, 0
      %p198 = scmp.lt.s32.totalorder %s195, 7
      %s199 = scalar_select %p198, %s195, 7
      %s200 = smul.addr %s197, 8
      %s201 = sadd.s32 %s199, %s200
      %s202 = smul.addr %s201, 4
      %s203 = scalar_lea.vmem %s0, %s202
      %p204 = pneg %p56
      %p205 = pneg %p53
      %s206 = smul.u32 64, %s21
      %p207 = scmp.lt.s32.totalorder %s206, 127
      %s208 = scalar_select %p207, %s206, 127
      %p209 = scmp.lt.s32.totalorder %s20, 0
      %s210 = scalar_select %p209, %s20, 0
      %s211 = sadd.s32 %s210, %s208
      %s212 = smul.addr %s211, 4
      %s213 = scalar_lea.vmem %s1, %s212
      %p214 = pneg %p84
      %p215 = pneg %p81
      %p216 = scmp.lt.s32.totalorder %s20, 0
      %s217 = scalar_select %p216, %s20, 0
      %s218 = scalar_lea.vmem %s2, %s217
      %p219 = pneg %p110
      %p220 = pneg %p107
      %p221 = pneg %p138
      %p222 = pneg %p135
      %p223 = scmp.lt.s32.totalorder %s19, 0
      %s224 = scalar_select %p223, %s19, 0
      %p225 = scmp.lt.s32.totalorder %s20, 0
      %s226 = scalar_select %p225, %s20, 0
      %s227 = sadd.s32 %s226, %s224
      %s228 = smul.addr %s227, 8
      %s229 = scalar_lea.vmem %s3, %s228
      %s230 = smul.u32 4, %s21
      %p231 = scmp.lt.s32.totalorder %s19, 0
      %s232 = scalar_select %p231, %s19, 0
      %p233 = scmp.lt.s32.totalorder %s230, 7
      %s234 = scalar_select %p233, %s230, 7
      %s235 = smul.addr %s232, 8
      %s236 = sadd.s32 %s234, %s235
      %s237 = smul.addr %s236, 4
      %s238 = scalar_lea.vmem %s0, %s237
      %s239 = smul.u32 4, %s21
      %s240 = smul.u32 64, %s21
      %p241 = scmp.lt.s32.totalorder %s240, 127
      %s242 = scalar_select %p241, %s240, 127
      %p243 = scmp.lt.s32.totalorder %s20, 0
      %s244 = scalar_select %p243, %s20, 0
      %s245 = sadd.s32 %s244, %s242
      %s246 = smul.addr %s245, 4
      %s247 = scalar_lea.vmem %s1, %s246
      %s248 = smul.u32 64, %s21
      %p249 = scmp.lt.s32.totalorder %s20, 0
      %s250 = scalar_select %p249, %s20, 0
      %s251 = scalar_lea.vmem %s2, %s250
      %p252 = scmp.lt.s32.totalorder %s19, 0
      %s253 = scalar_select %p252, %s19, 0
      %p254 = scmp.lt.s32.totalorder %s20, 0
      %s255 = scalar_select %p254, %s20, 0
      %s256 = sadd.s32 %s255, %s253
      %s257 = smul.addr %s256, 8
      %s258 = scalar_lea.vmem %s3, %s257
      %p260 = scmp.eq.s32.totalorder %s21, 0
      // Predicated region
      $region33: #{cnn_forward.10} parent=31 // pred_check
        %p261 = pneg %p260
      $region34: #{cnn_forward.10} parent=31 // pred_check_branch
        %263 = sbr.rel (%p261) target = $region36
      $region35: #{cnn_forward.10} parent=31 // pred_region
        %264 = vst [vmem:[#allocation2] sm:$0xff] 0.0
      $region36: #{cnn_forward.10} parent=31 // pred_fallthru
        _
      %v265 = vld [vmem:[#allocation2] sm:$0xff]
      %v266 = vld [vmem:[%s238] sm:$0xff]
      %v267 = vld [vmem:[%s238 + $0x8] sm:$0xff]
      %v268 = vld [vmem:[%s247] sm:$0xf]
      %v269 = vld [vmem:[%s247 + $0x4] sm:$0xf]
      %v270 = vld [vmem:[%s247 + $0x8] sm:$0xf]
      %v271 = vld [vmem:[%s247 + $0xc] sm:$0xf]
      %v272 = vld [vmem:[%s247 + $0x10] sm:$0xf]
      %v273 = vld [vmem:[%s247 + $0x14] sm:$0xf]
      %v274 = vld [vmem:[%s247 + $0x18] sm:$0xf]
      %v275 = vld [vmem:[%s247 + $0x1c] sm:$0xf]
      %v276 = vld [vmem:[%s247 + $0x20] sm:$0xf]
      %v277 = vld [vmem:[%s247 + $0x24] sm:$0xf]
      %v278 = vld [vmem:[%s247 + $0x28] sm:$0xf]
      %v279 = vld [vmem:[%s247 + $0x2c] sm:$0xf]
      %v280 = vld [vmem:[%s247 + $0x30] sm:$0xf]
      %v281 = vld [vmem:[%s247 + $0x34] sm:$0xf]
      %v282 = vld [vmem:[%s247 + $0x38] sm:$0xf]
      %v283 = vld [vmem:[%s247 + $0x3c] sm:$0xf]
      %v284 = vld [vmem:[%s247 + $0x40] sm:$0xf]
      %v285 = vld [vmem:[%s247 + $0x44] sm:$0xf]
      %v286 = vld [vmem:[%s247 + $0x48] sm:$0xf]
      %v287 = vld [vmem:[%s247 + $0x4c] sm:$0xf]
      %v288 = vld [vmem:[%s247 + $0x50] sm:$0xf]
      %v289 = vld [vmem:[%s247 + $0x54] sm:$0xf]
      %v290 = vld [vmem:[%s247 + $0x58] sm:$0xf]
      %v291 = vld [vmem:[%s247 + $0x5c] sm:$0xf]
      %v292 = vld [vmem:[%s247 + $0x60] sm:$0xf]
      %v293 = vld [vmem:[%s247 + $0x64] sm:$0xf]
      %v294 = vld [vmem:[%s247 + $0x68] sm:$0xf]
      %v295 = vld [vmem:[%s247 + $0x6c] sm:$0xf]
      %v296 = vld [vmem:[%s247 + $0x70] sm:$0xf]
      %v297 = vld [vmem:[%s247 + $0x74] sm:$0xf]
      %v298 = vld [vmem:[%s247 + $0x78] sm:$0xf]
      %v299 = vld [vmem:[%s247 + $0x7c] sm:$0xf]
      %v300 = vld [vmem:[%s247 + $0x80] sm:$0xf]
      %v301 = vld [vmem:[%s247 + $0x84] sm:$0xf]
      %v302 = vld [vmem:[%s247 + $0x88] sm:$0xf]
      %v303 = vld [vmem:[%s247 + $0x8c] sm:$0xf]
      %v304 = vld [vmem:[%s247 + $0x90] sm:$0xf]
      %v305 = vld [vmem:[%s247 + $0x94] sm:$0xf]
      %v306 = vld [vmem:[%s247 + $0x98] sm:$0xf]
      %v307 = vld [vmem:[%s247 + $0x9c] sm:$0xf]
      %v308 = vld [vmem:[%s247 + $0xa0] sm:$0xf]
      %v309 = vld [vmem:[%s247 + $0xa4] sm:$0xf]
      %v310 = vld [vmem:[%s247 + $0xa8] sm:$0xf]
      %v311 = vld [vmem:[%s247 + $0xac] sm:$0xf]
      %v312 = vld [vmem:[%s247 + $0xb0] sm:$0xf]
      %v313 = vld [vmem:[%s247 + $0xb4] sm:$0xf]
      %v314 = vld [vmem:[%s247 + $0xb8] sm:$0xf]
      %v315 = vld [vmem:[%s247 + $0xbc] sm:$0xf]
      %v316 = vld [vmem:[%s247 + $0xc0] sm:$0xf]
      %v317 = vld [vmem:[%s247 + $0xc4] sm:$0xf]
      %v318 = vld [vmem:[%s247 + $0xc8] sm:$0xf]
      %v319 = vld [vmem:[%s247 + $0xcc] sm:$0xf]
      %v320 = vld [vmem:[%s247 + $0xd0] sm:$0xf]
      %v321 = vld [vmem:[%s247 + $0xd4] sm:$0xf]
      %v322 = vld [vmem:[%s247 + $0xd8] sm:$0xf]
      %v323 = vld [vmem:[%s247 + $0xdc] sm:$0xf]
      %v324 = vld [vmem:[%s247 + $0xe0] sm:$0xf]
      %v325 = vld [vmem:[%s247 + $0xe4] sm:$0xf]
      %v326 = vld [vmem:[%s247 + $0xe8] sm:$0xf]
      %v327 = vld [vmem:[%s247 + $0xec] sm:$0xf]
      %v328 = vld [vmem:[%s247 + $0xf0] sm:$0xf]
      %v329 = vld [vmem:[%s247 + $0xf4] sm:$0xf]
      %v330 = vld [vmem:[%s247 + $0xf8] sm:$0xf]
      %v331 = vld [vmem:[%s247 + $0xfc] sm:$0xf]
      %v334 = vunpack.c.l.b16 %v266
      %v335 = vunpack.c.h.b16 %v266
      %v336 = vunpack.c.l.b16 %v267
      %v337 = vunpack.c.h.b16 %v267
      %v338 = vpack.c.b16 %v334, %v334
      %v339 = vpack.c.b16 %v335, %v335
      %v340 = vpack.c.b16 %v336, %v336
      %v341 = vpack.c.b16 %v337, %v337
      %v410 = vunpack.c.l.b16 %v268
      %v411 = vunpack.c.l.b16 %v269
      %v412 = vunpack.c.l.b16 %v270
      %v413 = vunpack.c.l.b16 %v271
      %v414 = vunpack.c.l.b16 %v272
      %v415 = vunpack.c.l.b16 %v273
      %v416 = vunpack.c.l.b16 %v274
      %v417 = vunpack.c.l.b16 %v275
      %v418 = vunpack.c.l.b16 %v276
      %v419 = vunpack.c.l.b16 %v277
      %v420 = vunpack.c.l.b16 %v278
      %v421 = vunpack.c.l.b16 %v279
      %v422 = vunpack.c.l.b16 %v280
      %v423 = vunpack.c.l.b16 %v281
      %v424 = vunpack.c.l.b16 %v282
      %v425 = vunpack.c.l.b16 %v283
      %v426 = vunpack.c.l.b16 %v284
      %v427 = vunpack.c.l.b16 %v285
      %v428 = vunpack.c.l.b16 %v286
      %v429 = vunpack.c.l.b16 %v287
      %v430 = vunpack.c.l.b16 %v288
      %v431 = vunpack.c.l.b16 %v289
      %v432 = vunpack.c.l.b16 %v290
      %v433 = vunpack.c.l.b16 %v291
      %v434 = vunpack.c.l.b16 %v292
      %v435 = vunpack.c.l.b16 %v293
      %v436 = vunpack.c.l.b16 %v294
      %v437 = vunpack.c.l.b16 %v295
      %v438 = vunpack.c.l.b16 %v296
      %v439 = vunpack.c.l.b16 %v297
      %v440 = vunpack.c.l.b16 %v298
      %v441 = vunpack.c.l.b16 %v299
      %v442 = vunpack.c.l.b16 %v300
      %v443 = vunpack.c.l.b16 %v301
      %v444 = vunpack.c.l.b16 %v302
      %v445 = vunpack.c.l.b16 %v303
      %v446 = vunpack.c.l.b16 %v304
      %v447 = vunpack.c.l.b16 %v305
      %v448 = vunpack.c.l.b16 %v306
      %v449 = vunpack.c.l.b16 %v307
      %v450 = vunpack.c.l.b16 %v308
      %v451 = vunpack.c.l.b16 %v309
      %v452 = vunpack.c.l.b16 %v310
      %v453 = vunpack.c.l.b16 %v311
      %v454 = vunpack.c.l.b16 %v312
      %v455 = vunpack.c.l.b16 %v313
      %v456 = vunpack.c.l.b16 %v314
      %v457 = vunpack.c.l.b16 %v315
      %v458 = vunpack.c.l.b16 %v316
      %v459 = vunpack.c.l.b16 %v317
      %v460 = vunpack.c.l.b16 %v318
      %v461 = vunpack.c.l.b16 %v319
      %v462 = vunpack.c.l.b16 %v320
      %v463 = vunpack.c.l.b16 %v321
      %v464 = vunpack.c.l.b16 %v322
      %v465 = vunpack.c.l.b16 %v323
      %v466 = vunpack.c.l.b16 %v324
      %v467 = vunpack.c.l.b16 %v325
      %v468 = vunpack.c.l.b16 %v326
      %v469 = vunpack.c.l.b16 %v327
      %v470 = vunpack.c.l.b16 %v328
      %v471 = vunpack.c.l.b16 %v329
      %v472 = vunpack.c.l.b16 %v330
      %v473 = vunpack.c.l.b16 %v331
      %v474 = vpack.c.b16 %v411, %v410
      %v475 = vpack.c.b16 %v413, %v412
      %v476 = vpack.c.b16 %v415, %v414
      %v477 = vpack.c.b16 %v417, %v416
      %v478 = vpack.c.b16 %v419, %v418
      %v479 = vpack.c.b16 %v421, %v420
      %v480 = vpack.c.b16 %v423, %v422
      %v481 = vpack.c.b16 %v425, %v424
      %v482 = vpack.c.b16 %v427, %v426
      %v483 = vpack.c.b16 %v429, %v428
      %v484 = vpack.c.b16 %v431, %v430
      %v485 = vpack.c.b16 %v433, %v432
      %v486 = vpack.c.b16 %v435, %v434
      %v487 = vpack.c.b16 %v437, %v436
      %v488 = vpack.c.b16 %v439, %v438
      %v489 = vpack.c.b16 %v441, %v440
      %v490 = vpack.c.b16 %v443, %v442
      %v491 = vpack.c.b16 %v445, %v444
      %v492 = vpack.c.b16 %v447, %v446
      %v493 = vpack.c.b16 %v449, %v448
      %v494 = vpack.c.b16 %v451, %v450
      %v495 = vpack.c.b16 %v453, %v452
      %v496 = vpack.c.b16 %v455, %v454
      %v497 = vpack.c.b16 %v457, %v456
      %v498 = vpack.c.b16 %v459, %v458
      %v499 = vpack.c.b16 %v461, %v460
      %v500 = vpack.c.b16 %v463, %v462
      %v501 = vpack.c.b16 %v465, %v464
      %v502 = vpack.c.b16 %v467, %v466
      %v503 = vpack.c.b16 %v469, %v468
      %v504 = vpack.c.b16 %v471, %v470
      %v505 = vpack.c.b16 %v473, %v472
      %538 = vmatprep.subr.bf16.mxu0 0
      %539 = vmatpush1.bf16.msra.mxu0 %v474
      %540 = vmatprep.subr.bf16.mxu0 0
      %541 = vmatpush1.bf16.msra.mxu0 %v475
      %542 = vmatprep.subr.bf16.mxu0 0
      %543 = vmatpush1.bf16.msra.mxu0 %v476
      %544 = vmatprep.subr.bf16.mxu0 0
      %545 = vmatpush1.bf16.msra.mxu0 %v477
      %546 = vmatprep.subr.bf16.mxu0 0
      %547 = vmatpush1.bf16.msra.mxu0 %v478
      %548 = vmatprep.subr.bf16.mxu0 0
      %549 = vmatpush1.bf16.msra.mxu0 %v479
      %550 = vmatprep.subr.bf16.mxu0 0
      %551 = vmatpush1.bf16.msra.mxu0 %v480
      %552 = vmatprep.subr.bf16.mxu0 0
      %553 = vmatpush1.bf16.msra.mxu0 %v481
      %554 = vmatprep.subr.bf16.mxu0 0
      %555 = vmatpush1.bf16.msra.mxu0 %v482
      %556 = vmatprep.subr.bf16.mxu0 0
      %557 = vmatpush1.bf16.msra.mxu0 %v483
      %558 = vmatprep.subr.bf16.mxu0 0
      %559 = vmatpush1.bf16.msra.mxu0 %v484
      %560 = vmatprep.subr.bf16.mxu0 0
      %561 = vmatpush1.bf16.msra.mxu0 %v485
      %562 = vmatprep.subr.bf16.mxu0 0
      %563 = vmatpush1.bf16.msra.mxu0 %v486
      %564 = vmatprep.subr.bf16.mxu0 0
      %565 = vmatpush1.bf16.msra.mxu0 %v487
      %566 = vmatprep.subr.bf16.mxu0 0
      %567 = vmatpush1.bf16.msra.mxu0 %v488
      %568 = vmatprep.subr.bf16.mxu0 0
      %569 = vmatpush1.bf16.msra.mxu0 %v489
      %570 = vmatprep.mubr.bf16.mxu0 %v339
      %571 = vmatmul.mubr.bf16.gmra.mrb[0].mxu0 %v338
      %v572 = vpop.f32.mrb[0].mxu0
      %v573 = vadd.f32 0.0, %v572
      %v574 = vpop.f32.mrb[0].mxu0
      %v575 = vpop.f32.mrb[0].mxu0
      %v576 = vpop.f32.mrb[0].mxu0
      %577 = vdwg.mxu0
      %578 = vmatprep.subr.bf16.mxu0 0
      %579 = vmatpush1.bf16.msra.mxu0 %v490
      %580 = vmatprep.subr.bf16.mxu0 0
      %581 = vmatpush1.bf16.msra.mxu0 %v491
      %582 = vmatprep.subr.bf16.mxu0 0
      %583 = vmatpush1.bf16.msra.mxu0 %v492
      %584 = vmatprep.subr.bf16.mxu0 0
      %585 = vmatpush1.bf16.msra.mxu0 %v493
      %586 = vmatprep.subr.bf16.mxu0 0
      %587 = vmatpush1.bf16.msra.mxu0 %v494
      %588 = vmatprep.subr.bf16.mxu0 0
      %589 = vmatpush1.bf16.msra.mxu0 %v495
      %590 = vmatprep.subr.bf16.mxu0 0
      %591 = vmatpush1.bf16.msra.mxu0 %v496
      %592 = vmatprep.subr.bf16.mxu0 0
      %593 = vmatpush1.bf16.msra.mxu0 %v497
      %594 = vmatprep.subr.bf16.mxu0 0
      %595 = vmatpush1.bf16.msra.mxu0 %v498
      %596 = vmatprep.subr.bf16.mxu0 0
      %597 = vmatpush1.bf16.msra.mxu0 %v499
      %598 = vmatprep.subr.bf16.mxu0 0
      %599 = vmatpush1.bf16.msra.mxu0 %v500
      %600 = vmatprep.subr.bf16.mxu0 0
      %601 = vmatpush1.bf16.msra.mxu0 %v501
      %602 = vmatprep.subr.bf16.mxu0 0
      %603 = vmatpush1.bf16.msra.mxu0 %v502
      %604 = vmatprep.subr.bf16.mxu0 0
      %605 = vmatpush1.bf16.msra.mxu0 %v503
      %606 = vmatprep.subr.bf16.mxu0 0
      %607 = vmatpush1.bf16.msra.mxu0 %v504
      %608 = vmatprep.subr.bf16.mxu0 0
      %609 = vmatpush1.bf16.msra.mxu0 %v505
      %610 = vmatprep.mubr.bf16.mxu0 %v341
      %611 = vmatmul.mubr.bf16.gmra.mrb[0].mxu0 %v340
      %v612 = vpop.f32.mrb[0].mxu0
      %v613 = vadd.f32 %v573, %v612
      %v614 = vpop.f32.mrb[0].mxu0
      %v615 = vpop.f32.mrb[0].mxu0
      %v616 = vpop.f32.mrb[0].mxu0
      %617 = vdwg.mxu0
      %v618 = vadd.f32 %v265, %v613
      %619 = vst [vmem:[#allocation2] sm:$0xff] %v618
      %p620 = scmp.eq.s32.totalorder %s21, 1
      // Predicated region
      $region37: #{cnn_forward.10} parent=31 // pred_check
        %p621 = pneg %p620
      $region38: #{cnn_forward.10} parent=31 // pred_check_branch
        %623 = sbr.rel (%p621) target = $region40
      $region39: #{cnn_forward.10} parent=31 // pred_region
        %v624 = vld [vmem:[#allocation2] sm:$0xff]
        %v625 = vld [vmem:[%s251] sm:$0x1]
        %v627 = vlaneseq
        %v628 = vshrl.u32 %v627, 7
        %v629 = vsub.s32 0, %v628
        %v630 = vrot.slane %v625, %v629
        %v632 = vadd.f32 %v624, %v630
        %v633 = vmax.f32 %v632, 0.0
        %634 = vst [vmem:[%s258] sm:$0xff] %v633
      $region40: #{cnn_forward.10} parent=31 // pred_fallthru
        _
      %p635 = scmp.lt.s32.totalorder %s19, 0
      %s636 = scalar_select %p635, %s19, 0
      %p637 = scmp.lt.s32.totalorder %s20, 0
      %s638 = scalar_select %p637, %s20, 0
      %s639 = sadd.s32 %s638, %s636
      %s640 = smul.addr %s639, 8
      %s641 = scalar_lea.vmem %s3, %s640
      // Predicated region
      $region41: #{cnn_forward.10} parent=31 // pred_check
        %p642 = pneg %p135
      $region42: #{cnn_forward.10} parent=31 // pred_check_branch
        %644 = sbr.rel (%p642) target = $region44
      $region43: #{cnn_forward.10} parent=31 // pred_region
        _
      $region44: #{cnn_forward.10} parent=31 // pred_fallthru
        _
      // Predicated region
      $region45: #{cnn_forward.10} parent=31 // pred_check
        %p645 = pneg %p135
      $region46: #{cnn_forward.10} parent=31 // pred_check_branch
        %647 = sbr.rel (%p645) target = $region48
      $region47: #{cnn_forward.10} parent=31 // pred_region
        %p648 = scmp.lt.s32.totalorder %s19, 0
        %s649 = scalar_select %p648, %s19, 0
        %p650 = scmp.lt.s32.totalorder %s20, 0
        %s651 = scalar_select %p650, %s20, 0
        %s652 = sadd.s32 %s651, %s649
        %s653 = smul.addr %s652, 8
        %s654 = scalar_lea.vmem %s3, %s653
      $region48: #{cnn_forward.10} parent=31 // pred_fallthru
        _
    $region32: #{cnn_forward.10} parent=5 // pred_fallthru
      _
    %p655 = scmp.le.s32.totalorder 2, %s9
    // Predicated region
    $region49: #{cnn_forward.10} parent=5 // pred_check
      %p656 = pneg %p655
    $region50: #{cnn_forward.10} parent=5 // pred_check_branch
      %658 = sbr.rel (%p656) target = $region52
    $region51: #{cnn_forward.10} parent=5 // pred_region
      %s659 = ssub.s32 %s9, 2
    $region52: #{cnn_forward.10} parent=5 // pred_fallthru
      _
  $region6: #{cnn_forward.10} parent=0 // loop_footer
    %s13 = sadd.s32 1, %s9
  $region7: #{cnn_forward.10} parent=0 // loop_footer_branch
    %8 = sbr.rel target = $region3
  $region8: #{cnn_forward.10} parent=0 // loop_exit
    _

// kernel: cnn_forward.11
$region0: #{cnn_forward.11}
  #allocation0 [shape = 'u32[]', space=smem, size = 0x4, offset = 0x4, fixed_abs, tag = 'smem constant byte address 0x4 - core index']
  #allocation1 [shape = 'u32[144,128]{1,0:T(1,128)}', space=vmem, size = 0x12000, scoped, tag = 'internal scratch']
  #allocation2 [shape = 'f32[8,128]{1,0:T(8,128)}', space=vmem, size = 0x1000, scoped, tag = 'scratch operand']
  %s0 = inlined_call_operand.vmem [shape: bf16[8,128], index: 0, kind: input, shape index: {}]
  %s1 = inlined_call_operand.vmem [shape: bf16[128,128], index: 1, kind: input, shape index: {}]
  %s2 = inlined_call_operand.vmem [shape: f32[1,128], index: 2, kind: input, shape index: {}]
  %s3 = inlined_call_operand.vmem [shape: f32[8,128], index: 3, kind: output, shape index: {}]
  %s4 = sld [smem:[#allocation0]]
  $region30: #{cnn_forward.11} parent=0
    _
  %s6 = ssub.s32 1, %s4
  %s7 = scalar_select 0, %s6, %s4
  // Predicated region
  $region2: #{cnn_forward.11} parent=0 // pred_check
    _
  $region3: #{cnn_forward.11} parent=0 // pred_check_branch
    %9 = sbr.rel (0) target = $region5
  $region4: #{cnn_forward.11} parent=0 // pred_region
    _
  $region5: #{cnn_forward.11} parent=0 // pred_fallthru
    _
  // Predicated region
  $region6: #{cnn_forward.11} parent=0 // pred_check
    _
  $region7: #{cnn_forward.11} parent=0 // pred_check_branch
    %11 = sbr.rel (0) target = $region9
  $region8: #{cnn_forward.11} parent=0 // pred_region
    _
  $region9: #{cnn_forward.11} parent=0 // pred_fallthru
    _
  // Predicated region
  $region10: #{cnn_forward.11} parent=0 // pred_check
    _
  $region11: #{cnn_forward.11} parent=0 // pred_check_branch
    %13 = sbr.rel (0) target = $region13
  $region12: #{cnn_forward.11} parent=0 // pred_region
    _
  $region13: #{cnn_forward.11} parent=0 // pred_fallthru
    _
  %p15 = scmp.eq.s32.totalorder 0, 0
  // Predicated region
  $region14: #{cnn_forward.11} parent=0 // pred_check
    %p16 = pneg %p15
  $region15: #{cnn_forward.11} parent=0 // pred_check_branch
    %18 = sbr.rel (%p16) target = $region17
  $region16: #{cnn_forward.11} parent=0 // pred_region
    %19 = vst [vmem:[#allocation2] sm:$0xff] 0.0
  $region17: #{cnn_forward.11} parent=0 // pred_fallthru
    _
  %v20 = vld [vmem:[#allocation2] sm:$0xff]
  %v21 = vld [vmem:[%s0] sm:$0xf]
  %v22 = vld [vmem:[%s1] sm:$0xf]
  %v23 = vld [vmem:[%s1 + $0x4] sm:$0xf]
  %v24 = vld [vmem:[%s1 + $0x8] sm:$0xf]
  %v25 = vld [vmem:[%s1 + $0xc] sm:$0xf]
  %v26 = vld [vmem:[%s1 + $0x10] sm:$0xf]
  %v27 = vld [vmem:[%s1 + $0x14] sm:$0xf]
  %v28 = vld [vmem:[%s1 + $0x18] sm:$0xf]
  %v29 = vld [vmem:[%s1 + $0x1c] sm:$0xf]
  %v30 = vld [vmem:[%s1 + $0x20] sm:$0xf]
  %v31 = vld [vmem:[%s1 + $0x24] sm:$0xf]
  %v32 = vld [vmem:[%s1 + $0x28] sm:$0xf]
  %v33 = vld [vmem:[%s1 + $0x2c] sm:$0xf]
  %v34 = vld [vmem:[%s1 + $0x30] sm:$0xf]
  %v35 = vld [vmem:[%s1 + $0x34] sm:$0xf]
  %v36 = vld [vmem:[%s1 + $0x38] sm:$0xf]
  %v37 = vld [vmem:[%s1 + $0x3c] sm:$0xf]
  %v54 = vunpack.c.l.b16 %v22
  %v55 = vunpack.c.l.b16 %v23
  %v56 = vunpack.c.l.b16 %v24
  %v57 = vunpack.c.l.b16 %v25
  %v58 = vunpack.c.l.b16 %v26
  %v59 = vunpack.c.l.b16 %v27
  %v60 = vunpack.c.l.b16 %v28
  %v61 = vunpack.c.l.b16 %v29
  %v62 = vunpack.c.l.b16 %v30
  %v63 = vunpack.c.l.b16 %v31
  %v64 = vunpack.c.l.b16 %v32
  %v65 = vunpack.c.l.b16 %v33
  %v66 = vunpack.c.l.b16 %v34
  %v67 = vunpack.c.l.b16 %v35
  %v68 = vunpack.c.l.b16 %v36
  %v69 = vunpack.c.l.b16 %v37
  %v70 = vpack.c.b16 %v55, %v54
  %v71 = vpack.c.b16 %v57, %v56
  %v72 = vpack.c.b16 %v59, %v58
  %v73 = vpack.c.b16 %v61, %v60
  %v74 = vpack.c.b16 %v63, %v62
  %v75 = vpack.c.b16 %v65, %v64
  %v76 = vpack.c.b16 %v67, %v66
  %v77 = vpack.c.b16 %v69, %v68
  %86 = vmatprep.subr.bf16.mxu0 0
  %87 = vmatpush1.bf16.msra.mxu0 %v70
  %88 = vmatprep.subr.bf16.mxu0 0
  %89 = vmatpush1.bf16.msra.mxu0 %v71
  %90 = vmatprep.subr.bf16.mxu0 0
  %91 = vmatpush1.bf16.msra.mxu0 %v72
  %92 = vmatprep.subr.bf16.mxu0 0
  %93 = vmatpush1.bf16.msra.mxu0 %v73
  %94 = vmatprep.subr.bf16.mxu0 0
  %95 = vmatpush1.bf16.msra.mxu0 %v74
  %96 = vmatprep.subr.bf16.mxu0 0
  %97 = vmatpush1.bf16.msra.mxu0 %v75
  %98 = vmatprep.subr.bf16.mxu0 0
  %99 = vmatpush1.bf16.msra.mxu0 %v76
  %100 = vmatprep.subr.bf16.mxu0 0
  %101 = vmatpush1.bf16.msra.mxu0 %v77
  %102 = vmatprep.subr.bf16.mxu0 0
  %103 = vmatpush1.bf16.msra.mxu0 0
  %104 = vmatprep.subr.bf16.mxu0 0
  %105 = vmatpush1.bf16.msra.mxu0 0
  %106 = vmatprep.subr.bf16.mxu0 0
  %107 = vmatpush1.bf16.msra.mxu0 0
  %108 = vmatprep.subr.bf16.mxu0 0
  %109 = vmatpush1.bf16.msra.mxu0 0
  %110 = vmatprep.subr.bf16.mxu0 0
  %111 = vmatpush1.bf16.msra.mxu0 0
  %112 = vmatprep.subr.bf16.mxu0 0
  %113 = vmatpush1.bf16.msra.mxu0 0
  %114 = vmatprep.subr.bf16.mxu0 0
  %115 = vmatpush1.bf16.msra.mxu0 0
  %116 = vmatprep.subr.bf16.mxu0 0
  %117 = vmatpush1.bf16.msra.mxu0 0
  %118 = vmatprep.mubr.bf16.mxu0 0
  %119 = vmatmul.mubr.bf16.gmra.mrb[0].mxu0 %v21
  %v120 = vpop.f32.mrb[0].mxu0
  %v121 = vadd.f32 0.0, %v120
  %v122 = vpop.f32.mrb[0].mxu0
  %v123 = vpop.f32.mrb[0].mxu0
  %v124 = vpop.f32.mrb[0].mxu0
  %125 = vdwg.mxu0
  %v126 = vadd.f32 %v20, %v121
  %127 = vst [vmem:[#allocation2] sm:$0xff] %v126
  // Predicated region
  $region18: #{cnn_forward.11} parent=0 // pred_check
    %p128 = pneg %p15
  $region19: #{cnn_forward.11} parent=0 // pred_check_branch
    %130 = sbr.rel (%p128) target = $region21
  $region20: #{cnn_forward.11} parent=0 // pred_region
    %v131 = vld [vmem:[#allocation2] sm:$0xff]
    %v132 = vld [vmem:[%s2] sm:$0x1]
    %v134 = vlaneseq
    %v135 = vshrl.u32 %v134, 7
    %v136 = vsub.s32 0, %v135
    %v137 = vrot.slane %v132, %v136
    %v139 = vadd.f32 %v131, %v137
    %140 = vst [vmem:[%s3] sm:$0xff] %v139
  $region21: #{cnn_forward.11} parent=0 // pred_fallthru
    _
  // Predicated region
  $region22: #{cnn_forward.11} parent=0 // pred_check
    _
  $region23: #{cnn_forward.11} parent=0 // pred_check_branch
    %142 = sbr.rel (0) target = $region25
  $region24: #{cnn_forward.11} parent=0 // pred_region
    _
  $region25: #{cnn_forward.11} parent=0 // pred_fallthru
    _
  // Predicated region
  $region26: #{cnn_forward.11} parent=0 // pred_check
    _
  $region27: #{cnn_forward.11} parent=0 // pred_check_branch
    %144 = sbr.rel (0) target = $region29
  $region28: #{cnn_forward.11} parent=0 // pred_region
    _
  $region29: #{cnn_forward.11} parent=0 // pred_fallthru
    _

</llo_original>
